<compile_context>
chip_gen: v7x
topology: tpu7x:2x2x1
jax: 0.10.0
libtpu: 0.0.40
codegen_flags: <defaults>
</compile_context>

<pallas_src>
import functools

import jax
import jax.numpy as jnp
import numpy as np
from jax.experimental import pallas as pl
from jax.experimental.pallas import tpu as pltpu


def _round_up(x, m):
    return (x + m - 1) // m * m


_VMEM = pl.BlockSpec(memory_space=pltpu.MemorySpace.VMEM)

# (output phase r, 3x3 patch row u) -> ConvTranspose2d tap kh used by that
# phase at that patch row (stride=2, K=4, pad=1).  Patch row u reads input row
# y+u-1 of the zero-padded input; (r, u) pairs not listed contribute nothing.
# The same table applies to columns (phase c, patch col v) -> kw by symmetry.
_TAP = {(0, 0): 3, (0, 1): 1, (1, 1): 2, (1, 2): 0}


# ----------------------------------------------------------------------------
# Pallas kernels: fused GEMM + BatchNorm(batch stats) + ReLU / bias + sigmoid
# ----------------------------------------------------------------------------
def _gemm_bn_relu_kernel(a_ref, w_ref, o_ref, *, cout, n_real):
    """o = relu(batchnorm(a @ w)).

    a: (M, K) bf16, w: (K, Npad) bf16 with group-outer / channel-inner column
    layout (lane l holds channel l % cout).  BatchNorm uses training-mode
    batch statistics (biased variance, eps=1e-5, gamma=1, beta=0) over the
    n_real real output positions per channel; padded lanes carry zero weights
    so they add nothing to the sums and are sliced off by the caller."""
    z = jnp.dot(a_ref[...], w_ref[...], preferred_element_type=jnp.float32)
    s = jnp.sum(z, axis=0, keepdims=True)            # (1, Npad) per-lane sum
    ss = jnp.sum(z * z, axis=0, keepdims=True)       # (1, Npad) per-lane sumsq
    npad = z.shape[-1]
    shift = cout
    while shift < npad:                               # log-tree over the lane
        s = s + pltpu.roll(s, shift=shift, axis=1)    # groups that hold the
        ss = ss + pltpu.roll(ss, shift=shift, axis=1)  # same channel
        shift *= 2
    inv_n = 1.0 / float(n_real)
    mean = s * inv_n
    var = jnp.maximum(ss * inv_n - mean * mean, 0.0)
    inv_std = jax.lax.rsqrt(var + 1e-5)
    o_ref[...] = jnp.maximum((z - mean) * inv_std, 0.0).astype(o_ref.dtype)


def _gemm_bias_sigmoid_kernel(a_ref, w_ref, b_ref, o_ref):
    z = jnp.dot(a_ref[...], w_ref[...], preferred_element_type=jnp.float32)
    o_ref[...] = jax.nn.sigmoid(z + b_ref[...]).astype(o_ref.dtype)


def fused_gemm_bn_relu(a, w, *, cout, n_real):
    """Single un-gridded pallas_call: whole operands stay VMEM-resident."""
    # TODO(synk): grid over M with two-phase statistics once B*H*W*C outgrows
    # VMEM (matters first on v7x's 64 MiB); unnecessary at these sizes.
    m, n = a.shape[0], w.shape[1]
    return pl.pallas_call(
        functools.partial(_gemm_bn_relu_kernel, cout=cout, n_real=n_real),
        out_shape=jax.ShapeDtypeStruct((m, n), jnp.bfloat16),
        in_specs=[_VMEM, _VMEM],
        out_specs=_VMEM,
    )(a, w)


def fused_gemm_bias_sigmoid(a, w, b):
    m, n = a.shape[0], w.shape[1]
    return pl.pallas_call(
        _gemm_bias_sigmoid_kernel,
        out_shape=jax.ShapeDtypeStruct((m, n), jnp.float32),
        in_specs=[_VMEM, _VMEM, _VMEM],
        out_specs=_VMEM,
    )(a, w, b)


# ----------------------------------------------------------------------------
# Thin XLA glue: 3x3 im2col and 2x depth-to-space
# ----------------------------------------------------------------------------
def _im2col_3x3(x_nhwc):
    """(B, H, W, C) -> (B*H*W, 9*C): zero-padded 3x3 patches, taps-outer /
    channel-inner (matches the phase-GEMM weight layout)."""
    b, h, w, c = x_nhwc.shape
    xp = jnp.pad(x_nhwc, ((0, 0), (1, 1), (1, 1), (0, 0)))
    taps = [xp[:, u:u + h, v:v + w, :] for u in range(3) for v in range(3)]
    return jnp.concatenate(taps, axis=-1).reshape(b * h * w, 9 * c)


def _depth_to_space2(z, b, h, w, cout):
    """(B*H*W, 4*Cout) phase-major columns -> (B, 2H, 2W, Cout)."""
    z = z.reshape(b, h, w, 2, 2, cout)
    z = jnp.transpose(z, (0, 1, 3, 2, 4, 5))
    return z.reshape(b, 2 * h, 2 * w, cout)


# ----------------------------------------------------------------------------
# One-time parameter preparation (hoisted out of the forward hot path)
# ----------------------------------------------------------------------------
def _phase_weight(w):
    """ConvTranspose2d weight (Cin, Cout, 4, 4), stride 2, pad 1 ->  sub-pixel
    GEMM weight (9*Cin, Npad) with Npad = round_up(4*Cout, 128).  Column
    (r*2+c)*Cout + co produces output pixel (2y+r, 2x+c), channel co."""
    w = np.asarray(w, np.float32)
    cin, cout = w.shape[0], w.shape[1]
    npad = _round_up(4 * cout, 128)
    wp = np.zeros((3, 3, cin, npad), np.float32)
    for (r, u), kh in _TAP.items():
        for (c, v), kw in _TAP.items():
            col = (r * 2 + c) * cout
            wp[u, v, :, col:col + cout] = w[:, :, kh, kw]
    return jnp.asarray(wp.reshape(9 * cin, npad), dtype=jnp.bfloat16)


def prepare_decoder_params(params):
    """Precompute GEMM-ready weights once (flatten, lane-pad to 128, bf16).

    The conv biases of the BN layers are dropped: with training-mode batch
    statistics and gamma=1/beta=0 a per-channel bias shifts the batch mean and
    cancels exactly in the normalization, so only the last layer's bias is
    materialized."""
    (w1, _b1), (w2, _b2), (w3, _b3), (w4, _b4), (w5, b5) = params

    # Layer 1 (1x1 input, stride 1, pad 0): plain taps-outer/channel-inner
    # flatten; K padded to a multiple of 16 for bf16 sublane packing.
    w1 = np.asarray(w1, np.float32)
    cin1, c1 = w1.shape[0], w1.shape[1]
    k1 = _round_up(cin1, 16)
    w1p = np.zeros((k1, 16 * c1), np.float32)
    w1p[:cin1] = w1.transpose(0, 2, 3, 1).reshape(cin1, 16 * c1)

    c5 = np.asarray(w5).shape[1]
    n5 = _round_up(4 * c5, 128)
    b5p = np.zeros((1, n5), np.float32)
    b5p[0, :4 * c5] = np.tile(np.asarray(b5, np.float32), 4)

    return (jnp.asarray(w1p, dtype=jnp.bfloat16),
            _phase_weight(w2), _phase_weight(w3), _phase_weight(w4),
            _phase_weight(w5), jnp.asarray(b5p))


# ----------------------------------------------------------------------------
# Decoder init + forward
# ----------------------------------------------------------------------------
def init_decoder_params(key, inD, d):
    """ConvTranspose2d weights (Cin, Cout, 4, 4) ~ N(0, 0.02), biases = 0
    (matches Decoder.weight_init(0.0, 0.02); BatchNorm affine stays at the
    default gamma=1/beta=0 because normal_init only touches conv layers)."""
    specs = [(inD, d * 8), (d * 8, d * 4), (d * 4, d * 2), (d * 2, d), (d, 3)]
    params = []
    for cin, cout in specs:
        key, sub = jax.random.split(key)
        w = 0.02 * jax.random.normal(sub, (cin, cout, 4, 4), jnp.float32)
        b = jnp.zeros((cout,), jnp.float32)
        params.append((w, b))
    return params


def decoder_forward(couts, weights, scene_nchw, pose_nchw):
    """Decoder.forward with training-mode BatchNorm (the nn.Module default):
    1x1 codes -> 64x64 RGB, NCHW in / NCHW out."""
    w1p, w2p, w3p, w4p, w5p, b5p = weights
    c1, c2, c3, c4, c5 = couts

    x = jnp.concatenate([scene_nchw, pose_nchw], axis=1)       # (B, inD, 1, 1)
    b, ind = x.shape[0], x.shape[1]
    x = x.reshape(b, ind)

    # Layer 1: ConvT(inD -> 8d, 4, 1, 0) + BN + ReLU.  With a 1x1 input the
    # col2im is a pure reshape.  Rows padded to >=8 and K padded to match the
    # prepared weight; padded rows/cols are zero so batch stats are untouched.
    mpad = max(b, 8)
    a = jnp.pad(x, ((0, mpad - b), (0, w1p.shape[0] - ind))).astype(jnp.bfloat16)
    z = fused_gemm_bn_relu(a, w1p, cout=c1, n_real=b * 16)      # (mpad, 16*c1)
    x = z[:b].reshape(b, 4, 4, c1)

    # Layers 2-4: stride-2 ConvT as output-phase GEMM + fused BN + ReLU.
    h = w = 4
    for wp, cout in ((w2p, c2), (w3p, c3), (w4p, c4)):
        a = _im2col_3x3(x)                                      # (B*H*W, 9*Cin)
        z = fused_gemm_bn_relu(a, wp, cout=cout, n_real=b * h * w * 4)
        x = _depth_to_space2(z[:, :4 * cout], b, h, w, cout)
        h, w = 2 * h, 2 * w

    # Layer 5: stride-2 ConvT + bias + sigmoid (lane padding sliced only here).
    a = _im2col_3x3(x)
    z = fused_gemm_bias_sigmoid(a, w5p, b5p)
    x = _depth_to_space2(z[:, :4 * c5], b, h, w, c5)            # (B, 64, 64, 3)
    return jnp.transpose(x, (0, 3, 1, 2))                       # -> NCHW


if __name__ == "__main__":
    # Small-but-consistent shapes: Decoder(inD=16+5, d=16), batch=2.
    d = 16
    scene_ch, pose_ch = 16, 5
    inD = scene_ch + pose_ch

    key = jax.random.PRNGKey(0)
    k1, k2, k3 = jax.random.split(key, 3)
    sceneCode = jax.random.normal(k1, (2, scene_ch, 1, 1), jnp.float32)
    poseCode = jax.random.normal(k2, (2, pose_ch, 1, 1), jnp.float32)

    params = init_decoder_params(k3, inD, d)
    weights = prepare_decoder_params(params)          # hoisted weight prep
    couts = (d * 8, d * 4, d * 2, d, 3)

    fwd = jax.jit(functools.partial(decoder_forward, couts))
    out = jax.block_until_ready(fwd(weights, sceneCode, poseCode))

    assert out.shape == (2, 3, 64, 64), out.shape
    assert bool(jnp.all(jnp.isfinite(out)))
    assert bool(jnp.all((out >= 0.0) & (out <= 1.0)))           # sigmoid range
    print("KERNEL_OK")
</pallas_src>

<mosaic_0001>
module attributes {stable_mosaic.version = 11 : i64} {
  func.func @_gemm_bn_relu_kernel(%arg0: memref<8x32xbf16, #tpu.memory_space<vmem>>, %arg1: memref<32x2048xbf16, #tpu.memory_space<vmem>>, %arg2: memref<8x2048xbf16, #tpu.memory_space<vmem>>) attributes {dimension_semantics = [], scalar_prefetch = 0 : i64, scratch_operands = 0 : i64, tpu.core_type = #tpu.core_type<tc>} {
    %c0 = arith.constant 0 : index
    %c0_0 = arith.constant 0 : index
    %0 = vector.load %arg0[%c0, %c0_0] : memref<8x32xbf16, #tpu.memory_space<vmem>>, vector<8x32xbf16>
    %c0_1 = arith.constant 0 : index
    %c0_2 = arith.constant 0 : index
    %1 = vector.load %arg1[%c0_1, %c0_2] : memref<32x2048xbf16, #tpu.memory_space<vmem>>, vector<32x2048xbf16>
    %cst = arith.constant dense<0.000000e+00> : vector<8x2048xf32>
    %2 = tpu.matmul %0, %1, %cst {dimension_numbers = #tpu.dot_dimension_numbers<[1], [0], [0], [1], [0, 0, 1, 1], [], []>} : vector<8x32xbf16>, vector<32x2048xbf16>, vector<8x2048xf32> -> vector<8x2048xf32>
    %cst_3 = arith.constant dense<0.000000e+00> : vector<2048xf32>
    %3 = vector.multi_reduction <add>, %2, %cst_3 [0] : vector<8x2048xf32> to vector<2048xf32>
    %4 = vector.shape_cast %3 : vector<2048xf32> to vector<1x2048xf32>
    %5 = arith.mulf %2, %2 : vector<8x2048xf32>
    %cst_4 = arith.constant dense<0.000000e+00> : vector<2048xf32>
    %6 = vector.multi_reduction <add>, %5, %cst_4 [0] : vector<8x2048xf32> to vector<2048xf32>
    %7 = vector.shape_cast %6 : vector<2048xf32> to vector<1x2048xf32>
    %c128_i32 = arith.constant 128 : i32
    %8 = tpu.dynamic_rotate %4 by %c128_i32 dim 1 : vector<1x2048xf32>, i32 -> vector<1x2048xf32>
    %9 = arith.addf %4, %8 : vector<1x2048xf32>
    %c128_i32_5 = arith.constant 128 : i32
    %10 = tpu.dynamic_rotate %7 by %c128_i32_5 dim 1 : vector<1x2048xf32>, i32 -> vector<1x2048xf32>
    %11 = arith.addf %7, %10 : vector<1x2048xf32>
    %c256_i32 = arith.constant 256 : i32
    %12 = tpu.dynamic_rotate %9 by %c256_i32 dim 1 : vector<1x2048xf32>, i32 -> vector<1x2048xf32>
    %13 = arith.addf %9, %12 : vector<1x2048xf32>
    %c256_i32_6 = arith.constant 256 : i32
    %14 = tpu.dynamic_rotate %11 by %c256_i32_6 dim 1 : vector<1x2048xf32>, i32 -> vector<1x2048xf32>
    %15 = arith.addf %11, %14 : vector<1x2048xf32>
    %c512_i32 = arith.constant 512 : i32
    %16 = tpu.dynamic_rotate %13 by %c512_i32 dim 1 : vector<1x2048xf32>, i32 -> vector<1x2048xf32>
    %17 = arith.addf %13, %16 : vector<1x2048xf32>
    %c512_i32_7 = arith.constant 512 : i32
    %18 = tpu.dynamic_rotate %15 by %c512_i32_7 dim 1 : vector<1x2048xf32>, i32 -> vector<1x2048xf32>
    %19 = arith.addf %15, %18 : vector<1x2048xf32>
    %c1024_i32 = arith.constant 1024 : i32
    %20 = tpu.dynamic_rotate %17 by %c1024_i32 dim 1 : vector<1x2048xf32>, i32 -> vector<1x2048xf32>
    %21 = arith.addf %17, %20 : vector<1x2048xf32>
    %c1024_i32_8 = arith.constant 1024 : i32
    %22 = tpu.dynamic_rotate %19 by %c1024_i32_8 dim 1 : vector<1x2048xf32>, i32 -> vector<1x2048xf32>
    %23 = arith.addf %19, %22 : vector<1x2048xf32>
    %cst_9 = arith.constant 3.125000e-02 : f32
    %24 = vector.broadcast %cst_9 : f32 to vector<1x2048xf32>
    %25 = arith.mulf %21, %24 : vector<1x2048xf32>
    %cst_10 = arith.constant 3.125000e-02 : f32
    %26 = vector.broadcast %cst_10 : f32 to vector<1x2048xf32>
    %27 = arith.mulf %23, %26 : vector<1x2048xf32>
    %28 = arith.mulf %25, %25 : vector<1x2048xf32>
    %29 = arith.subf %27, %28 : vector<1x2048xf32>
    %cst_11 = arith.constant 0.000000e+00 : f32
    %30 = vector.broadcast %cst_11 : f32 to vector<1x2048xf32>
    %31 = arith.maximumf %29, %30 : vector<1x2048xf32>
    %cst_12 = arith.constant 9.99999974E-6 : f32
    %32 = vector.broadcast %cst_12 : f32 to vector<1x2048xf32>
    %33 = arith.addf %31, %32 : vector<1x2048xf32>
    %34 = math.rsqrt %33 : vector<1x2048xf32>
    %35 = vector.broadcast %25 : vector<1x2048xf32> to vector<8x2048xf32>
    %36 = arith.subf %2, %35 : vector<8x2048xf32>
    %37 = vector.broadcast %34 : vector<1x2048xf32> to vector<8x2048xf32>
    %38 = arith.mulf %36, %37 : vector<8x2048xf32>
    %cst_13 = arith.constant 0.000000e+00 : f32
    %39 = vector.broadcast %cst_13 : f32 to vector<8x2048xf32>
    %40 = arith.maximumf %38, %39 : vector<8x2048xf32>
    %41 = arith.truncf %40 : vector<8x2048xf32> to vector<8x2048xbf16>
    %c0_14 = arith.constant 0 : index
    %c0_15 = arith.constant 0 : index
    %42 = vector.load %arg2[%c0_14, %c0_15] : memref<8x2048xbf16, #tpu.memory_space<vmem>>, vector<8x2048xbf16>
    tpu.vector_store %arg2[%c0_14, %c0_15], %41 {strides = array<i32>} : memref<8x2048xbf16, #tpu.memory_space<vmem>>, vector<8x2048xbf16>,
    return
  }
}

module attributes {stable_mosaic.version = 11 : i64} {
  func.func @_gemm_bn_relu_kernel(%arg0: memref<32x1152xbf16, #tpu.memory_space<vmem>>, %arg1: memref<1152x256xbf16, #tpu.memory_space<vmem>>, %arg2: memref<32x256xbf16, #tpu.memory_space<vmem>>) attributes {dimension_semantics = [], scalar_prefetch = 0 : i64, scratch_operands = 0 : i64, tpu.core_type = #tpu.core_type<tc>} {
    %c0 = arith.constant 0 : index
    %c0_0 = arith.constant 0 : index
    %0 = vector.load %arg0[%c0, %c0_0] : memref<32x1152xbf16, #tpu.memory_space<vmem>>, vector<32x1152xbf16>
    %c0_1 = arith.constant 0 : index
    %c0_2 = arith.constant 0 : index
    %1 = vector.load %arg1[%c0_1, %c0_2] : memref<1152x256xbf16, #tpu.memory_space<vmem>>, vector<1152x256xbf16>
    %cst = arith.constant dense<0.000000e+00> : vector<32x256xf32>
    %2 = tpu.matmul %0, %1, %cst {dimension_numbers = #tpu.dot_dimension_numbers<[1], [0], [0], [1], [0, 0, 1, 1], [], []>} : vector<32x1152xbf16>, vector<1152x256xbf16>, vector<32x256xf32> -> vector<32x256xf32>
    %cst_3 = arith.constant dense<0.000000e+00> : vector<256xf32>
    %3 = vector.multi_reduction <add>, %2, %cst_3 [0] : vector<32x256xf32> to vector<256xf32>
    %4 = vector.shape_cast %3 : vector<256xf32> to vector<1x256xf32>
    %5 = arith.mulf %2, %2 : vector<32x256xf32>
    %cst_4 = arith.constant dense<0.000000e+00> : vector<256xf32>
    %6 = vector.multi_reduction <add>, %5, %cst_4 [0] : vector<32x256xf32> to vector<256xf32>
    %7 = vector.shape_cast %6 : vector<256xf32> to vector<1x256xf32>
    %c64_i32 = arith.constant 64 : i32
    %8 = tpu.dynamic_rotate %4 by %c64_i32 dim 1 : vector<1x256xf32>, i32 -> vector<1x256xf32>
    %9 = arith.addf %4, %8 : vector<1x256xf32>
    %c64_i32_5 = arith.constant 64 : i32
    %10 = tpu.dynamic_rotate %7 by %c64_i32_5 dim 1 : vector<1x256xf32>, i32 -> vector<1x256xf32>
    %11 = arith.addf %7, %10 : vector<1x256xf32>
    %c128_i32 = arith.constant 128 : i32
    %12 = tpu.dynamic_rotate %9 by %c128_i32 dim 1 : vector<1x256xf32>, i32 -> vector<1x256xf32>
    %13 = arith.addf %9, %12 : vector<1x256xf32>
    %c128_i32_6 = arith.constant 128 : i32
    %14 = tpu.dynamic_rotate %11 by %c128_i32_6 dim 1 : vector<1x256xf32>, i32 -> vector<1x256xf32>
    %15 = arith.addf %11, %14 : vector<1x256xf32>
    %cst_7 = arith.constant 7.812500e-03 : f32
    %16 = vector.broadcast %cst_7 : f32 to vector<1x256xf32>
    %17 = arith.mulf %13, %16 : vector<1x256xf32>
    %cst_8 = arith.constant 7.812500e-03 : f32
    %18 = vector.broadcast %cst_8 : f32 to vector<1x256xf32>
    %19 = arith.mulf %15, %18 : vector<1x256xf32>
    %20 = arith.mulf %17, %17 : vector<1x256xf32>
    %21 = arith.subf %19, %20 : vector<1x256xf32>
    %cst_9 = arith.constant 0.000000e+00 : f32
    %22 = vector.broadcast %cst_9 : f32 to vector<1x256xf32>
    %23 = arith.maximumf %21, %22 : vector<1x256xf32>
    %cst_10 = arith.constant 9.99999974E-6 : f32
    %24 = vector.broadcast %cst_10 : f32 to vector<1x256xf32>
    %25 = arith.addf %23, %24 : vector<1x256xf32>
    %26 = math.rsqrt %25 : vector<1x256xf32>
    %27 = vector.broadcast %17 : vector<1x256xf32> to vector<32x256xf32>
    %28 = arith.subf %2, %27 : vector<32x256xf32>
    %29 = vector.broadcast %26 : vector<1x256xf32> to vector<32x256xf32>
    %30 = arith.mulf %28, %29 : vector<32x256xf32>
    %cst_11 = arith.constant 0.000000e+00 : f32
    %31 = vector.broadcast %cst_11 : f32 to vector<32x256xf32>
    %32 = arith.maximumf %30, %31 : vector<32x256xf32>
    %33 = arith.truncf %32 : vector<32x256xf32> to vector<32x256xbf16>
    %c0_12 = arith.constant 0 : index
    %c0_13 = arith.constant 0 : index
    %34 = vector.load %arg2[%c0_12, %c0_13] : memref<32x256xbf16, #tpu.memory_space<vmem>>, vector<32x256xbf16>
    tpu.vector_store %arg2[%c0_12, %c0_13], %33 {strides = array<i32>} : memref<32x256xbf16, #tpu.memory_space<vmem>>, vector<32x256xbf16>,
    return
  }
}

module attributes {stable_mosaic.version = 11 : i64} {
  func.func @_gemm_bn_relu_kernel(%arg0: memref<128x576xbf16, #tpu.memory_space<vmem>>, %arg1: memref<576x128xbf16, #tpu.memory_space<vmem>>, %arg2: memref<128x128xbf16, #tpu.memory_space<vmem>>) attributes {dimension_semantics = [], scalar_prefetch = 0 : i64, scratch_operands = 0 : i64, tpu.core_type = #tpu.core_type<tc>} {
    %c0 = arith.constant 0 : index
    %c0_0 = arith.constant 0 : index
    %0 = vector.load %arg0[%c0, %c0_0] : memref<128x576xbf16, #tpu.memory_space<vmem>>, vector<128x576xbf16>
    %c0_1 = arith.constant 0 : index
    %c0_2 = arith.constant 0 : index
    %1 = vector.load %arg1[%c0_1, %c0_2] : memref<576x128xbf16, #tpu.memory_space<vmem>>, vector<576x128xbf16>
    %cst = arith.constant dense<0.000000e+00> : vector<128x128xf32>
    %2 = tpu.matmul %0, %1, %cst {dimension_numbers = #tpu.dot_dimension_numbers<[1], [0], [0], [1], [0, 0, 1, 1], [], []>} : vector<128x576xbf16>, vector<576x128xbf16>, vector<128x128xf32> -> vector<128x128xf32>
    %cst_3 = arith.constant dense<0.000000e+00> : vector<128xf32>
    %3 = vector.multi_reduction <add>, %2, %cst_3 [0] : vector<128x128xf32> to vector<128xf32>
    %4 = vector.shape_cast %3 : vector<128xf32> to vector<1x128xf32>
    %5 = arith.mulf %2, %2 : vector<128x128xf32>
    %cst_4 = arith.constant dense<0.000000e+00> : vector<128xf32>
    %6 = vector.multi_reduction <add>, %5, %cst_4 [0] : vector<128x128xf32> to vector<128xf32>
    %7 = vector.shape_cast %6 : vector<128xf32> to vector<1x128xf32>
    %c32_i32 = arith.constant 32 : i32
    %8 = tpu.dynamic_rotate %4 by %c32_i32 dim 1 : vector<1x128xf32>, i32 -> vector<1x128xf32>
    %9 = arith.addf %4, %8 : vector<1x128xf32>
    %c32_i32_5 = arith.constant 32 : i32
    %10 = tpu.dynamic_rotate %7 by %c32_i32_5 dim 1 : vector<1x128xf32>, i32 -> vector<1x128xf32>
    %11 = arith.addf %7, %10 : vector<1x128xf32>
    %c64_i32 = arith.constant 64 : i32
    %12 = tpu.dynamic_rotate %9 by %c64_i32 dim 1 : vector<1x128xf32>, i32 -> vector<1x128xf32>
    %13 = arith.addf %9, %12 : vector<1x128xf32>
    %c64_i32_6 = arith.constant 64 : i32
    %14 = tpu.dynamic_rotate %11 by %c64_i32_6 dim 1 : vector<1x128xf32>, i32 -> vector<1x128xf32>
    %15 = arith.addf %11, %14 : vector<1x128xf32>
    %cst_7 = arith.constant 0.001953125 : f32
    %16 = vector.broadcast %cst_7 : f32 to vector<1x128xf32>
    %17 = arith.mulf %13, %16 : vector<1x128xf32>
    %cst_8 = arith.constant 0.001953125 : f32
    %18 = vector.broadcast %cst_8 : f32 to vector<1x128xf32>
    %19 = arith.mulf %15, %18 : vector<1x128xf32>
    %20 = arith.mulf %17, %17 : vector<1x128xf32>
    %21 = arith.subf %19, %20 : vector<1x128xf32>
    %cst_9 = arith.constant 0.000000e+00 : f32
    %22 = vector.broadcast %cst_9 : f32 to vector<1x128xf32>
    %23 = arith.maximumf %21, %22 : vector<1x128xf32>
    %cst_10 = arith.constant 9.99999974E-6 : f32
    %24 = vector.broadcast %cst_10 : f32 to vector<1x128xf32>
    %25 = arith.addf %23, %24 : vector<1x128xf32>
    %26 = math.rsqrt %25 : vector<1x128xf32>
    %27 = vector.broadcast %17 : vector<1x128xf32> to vector<128x128xf32>
    %28 = arith.subf %2, %27 : vector<128x128xf32>
    %29 = vector.broadcast %26 : vector<1x128xf32> to vector<128x128xf32>
    %30 = arith.mulf %28, %29 : vector<128x128xf32>
    %cst_11 = arith.constant 0.000000e+00 : f32
    %31 = vector.broadcast %cst_11 : f32 to vector<128x128xf32>
    %32 = arith.maximumf %30, %31 : vector<128x128xf32>
    %33 = arith.truncf %32 : vector<128x128xf32> to vector<128x128xbf16>
    %c0_12 = arith.constant 0 : index
    %c0_13 = arith.constant 0 : index
    %34 = vector.load %arg2[%c0_12, %c0_13] : memref<128x128xbf16, #tpu.memory_space<vmem>>, vector<128x128xbf16>
    tpu.vector_store %arg2[%c0_12, %c0_13], %33 {strides = array<i32>} : memref<128x128xbf16, #tpu.memory_space<vmem>>, vector<128x128xbf16>,
    return
  }
}

module attributes {stable_mosaic.version = 11 : i64} {
  func.func @_gemm_bn_relu_kernel(%arg0: memref<512x288xbf16, #tpu.memory_space<vmem>>, %arg1: memref<288x128xbf16, #tpu.memory_space<vmem>>, %arg2: memref<512x128xbf16, #tpu.memory_space<vmem>>) attributes {dimension_semantics = [], scalar_prefetch = 0 : i64, scratch_operands = 0 : i64, tpu.core_type = #tpu.core_type<tc>} {
    %c0 = arith.constant 0 : index
    %c0_0 = arith.constant 0 : index
    %0 = vector.load %arg0[%c0, %c0_0] : memref<512x288xbf16, #tpu.memory_space<vmem>>, vector<512x288xbf16>
    %c0_1 = arith.constant 0 : index
    %c0_2 = arith.constant 0 : index
    %1 = vector.load %arg1[%c0_1, %c0_2] : memref<288x128xbf16, #tpu.memory_space<vmem>>, vector<288x128xbf16>
    %cst = arith.constant dense<0.000000e+00> : vector<512x128xf32>
    %2 = tpu.matmul %0, %1, %cst {dimension_numbers = #tpu.dot_dimension_numbers<[1], [0], [0], [1], [0, 0, 1, 1], [], []>} : vector<512x288xbf16>, vector<288x128xbf16>, vector<512x128xf32> -> vector<512x128xf32>
    %cst_3 = arith.constant dense<0.000000e+00> : vector<128xf32>
    %3 = vector.multi_reduction <add>, %2, %cst_3 [0] : vector<512x128xf32> to vector<128xf32>
    %4 = vector.shape_cast %3 : vector<128xf32> to vector<1x128xf32>
    %5 = arith.mulf %2, %2 : vector<512x128xf32>
    %cst_4 = arith.constant dense<0.000000e+00> : vector<128xf32>
    %6 = vector.multi_reduction <add>, %5, %cst_4 [0] : vector<512x128xf32> to vector<128xf32>
    %7 = vector.shape_cast %6 : vector<128xf32> to vector<1x128xf32>
    %c16_i32 = arith.constant 16 : i32
    %8 = tpu.dynamic_rotate %4 by %c16_i32 dim 1 : vector<1x128xf32>, i32 -> vector<1x128xf32>
    %9 = arith.addf %4, %8 : vector<1x128xf32>
    %c16_i32_5 = arith.constant 16 : i32
    %10 = tpu.dynamic_rotate %7 by %c16_i32_5 dim 1 : vector<1x128xf32>, i32 -> vector<1x128xf32>
    %11 = arith.addf %7, %10 : vector<1x128xf32>
    %c32_i32 = arith.constant 32 : i32
    %12 = tpu.dynamic_rotate %9 by %c32_i32 dim 1 : vector<1x128xf32>, i32 -> vector<1x128xf32>
    %13 = arith.addf %9, %12 : vector<1x128xf32>
    %c32_i32_6 = arith.constant 32 : i32
    %14 = tpu.dynamic_rotate %11 by %c32_i32_6 dim 1 : vector<1x128xf32>, i32 -> vector<1x128xf32>
    %15 = arith.addf %11, %14 : vector<1x128xf32>
    %c64_i32 = arith.constant 64 : i32
    %16 = tpu.dynamic_rotate %13 by %c64_i32 dim 1 : vector<1x128xf32>, i32 -> vector<1x128xf32>
    %17 = arith.addf %13, %16 : vector<1x128xf32>
    %c64_i32_7 = arith.constant 64 : i32
    %18 = tpu.dynamic_rotate %15 by %c64_i32_7 dim 1 : vector<1x128xf32>, i32 -> vector<1x128xf32>
    %19 = arith.addf %15, %18 : vector<1x128xf32>
    %cst_8 = arith.constant 4.8828125E-4 : f32
    %20 = vector.broadcast %cst_8 : f32 to vector<1x128xf32>
    %21 = arith.mulf %17, %20 : vector<1x128xf32>
    %cst_9 = arith.constant 4.8828125E-4 : f32
    %22 = vector.broadcast %cst_9 : f32 to vector<1x128xf32>
    %23 = arith.mulf %19, %22 : vector<1x128xf32>
    %24 = arith.mulf %21, %21 : vector<1x128xf32>
    %25 = arith.subf %23, %24 : vector<1x128xf32>
    %cst_10 = arith.constant 0.000000e+00 : f32
    %26 = vector.broadcast %cst_10 : f32 to vector<1x128xf32>
    %27 = arith.maximumf %25, %26 : vector<1x128xf32>
    %cst_11 = arith.constant 9.99999974E-6 : f32
    %28 = vector.broadcast %cst_11 : f32 to vector<1x128xf32>
    %29 = arith.addf %27, %28 : vector<1x128xf32>
    %30 = math.rsqrt %29 : vector<1x128xf32>
    %31 = vector.broadcast %21 : vector<1x128xf32> to vector<512x128xf32>
    %32 = arith.subf %2, %31 : vector<512x128xf32>
    %33 = vector.broadcast %30 : vector<1x128xf32> to vector<512x128xf32>
    %34 = arith.mulf %32, %33 : vector<512x128xf32>
    %cst_12 = arith.constant 0.000000e+00 : f32
    %35 = vector.broadcast %cst_12 : f32 to vector<512x128xf32>
    %36 = arith.maximumf %34, %35 : vector<512x128xf32>
    %37 = arith.truncf %36 : vector<512x128xf32> to vector<512x128xbf16>
    %c0_13 = arith.constant 0 : index
    %c0_14 = arith.constant 0 : index
    %38 = vector.load %arg2[%c0_13, %c0_14] : memref<512x128xbf16, #tpu.memory_space<vmem>>, vector<512x128xbf16>
    tpu.vector_store %arg2[%c0_13, %c0_14], %37 {strides = array<i32>} : memref<512x128xbf16, #tpu.memory_space<vmem>>, vector<512x128xbf16>,
    return
  }
}

module attributes {stable_mosaic.version = 11 : i64} {
  func.func @_gemm_bias_sigmoid_kernel(%arg0: memref<2048x144xbf16, #tpu.memory_space<vmem>>, %arg1: memref<144x128xbf16, #tpu.memory_space<vmem>>, %arg2: memref<1x128xf32, #tpu.memory_space<vmem>>, %arg3: memref<2048x128xf32, #tpu.memory_space<vmem>>) attributes {dimension_semantics = [], scalar_prefetch = 0 : i64, scratch_operands = 0 : i64, tpu.core_type = #tpu.core_type<tc>} {
    %c0 = arith.constant 0 : index
    %c0_0 = arith.constant 0 : index
    %0 = vector.load %arg0[%c0, %c0_0] : memref<2048x144xbf16, #tpu.memory_space<vmem>>, vector<2048x144xbf16>
    %c0_1 = arith.constant 0 : index
    %c0_2 = arith.constant 0 : index
    %1 = vector.load %arg1[%c0_1, %c0_2] : memref<144x128xbf16, #tpu.memory_space<vmem>>, vector<144x128xbf16>
    %cst = arith.constant dense<0.000000e+00> : vector<2048x128xf32>
    %2 = tpu.matmul %0, %1, %cst {dimension_numbers = #tpu.dot_dimension_numbers<[1], [0], [0], [1], [0, 0, 1, 1], [], []>} : vector<2048x144xbf16>, vector<144x128xbf16>, vector<2048x128xf32> -> vector<2048x128xf32>
    %c0_3 = arith.constant 0 : index
    %c0_4 = arith.constant 0 : index
    %3 = vector.load %arg2[%c0_3, %c0_4] : memref<1x128xf32, #tpu.memory_space<vmem>>, vector<1x128xf32>
    %4 = vector.broadcast %3 : vector<1x128xf32> to vector<2048x128xf32>
    %5 = arith.addf %2, %4 : vector<2048x128xf32>
    %6 = arith.negf %5 : vector<2048x128xf32>
    %7 = math.exp %6 : vector<2048x128xf32>
    %cst_5 = arith.constant 1.000000e+00 : f32
    %8 = vector.broadcast %cst_5 : f32 to vector<2048x128xf32>
    %9 = arith.addf %8, %7 : vector<2048x128xf32>
    %10 = arith.divf %8, %9 : vector<2048x128xf32>
    %c0_6 = arith.constant 0 : index
    %c0_7 = arith.constant 0 : index
    %11 = vector.load %arg3[%c0_6, %c0_7] : memref<2048x128xf32, #tpu.memory_space<vmem>>, vector<2048x128xf32>
    tpu.vector_store %arg3[%c0_6, %c0_7], %10 {strides = array<i32>} : memref<2048x128xf32, #tpu.memory_space<vmem>>, vector<2048x128xf32>,
    return
  }
}

</mosaic_0001>

<llo_original>
// kernel: decoder_forward.5
$region0: #{decoder_forward.5}
  #allocation0 [shape = 'u32[]', space=smem, size = 0x4, offset = 0x4, fixed_abs, tag = 'smem constant byte address 0x4 - core index']
  #allocation1 [shape = 'u32[144,128]{1,0:T(1,128)}', space=vmem, size = 0x12000, scoped, tag = 'internal scratch']
  %s0 = inlined_call_operand.vmem [shape: bf16[8,32], index: 0, kind: input, shape index: {}]
  %s1 = inlined_call_operand.hbm [shape: bf16[32,2048], index: 1, kind: input, shape index: {}]
  %s2 = inlined_call_operand.vmem [shape: bf16[8,2048], index: 2, kind: output, shape index: {}]
  %s3 = sld [smem:[#allocation0]]
  $region22: #{decoder_forward.5} parent=0
    _
  %s5 = ssub.s32 1, %s3
  %s6 = scalar_select 0, %s5, %s3
  $region1: #{decoder_forward.5} parent=0
    #allocation2 [shape = 'u8[131072]{0}', space=vmem, size = 0x20000, scoped, tag = 'input window, operand 1, single buffered']
    #allocation3 [shape = 's32[1]{0}', space=sflag, size = 0x4, scoped, tag = 'scoped memory for decoder_forward.5']
    %7 = vsyncpa [#allocation3], 0
    // Predicated region
    $region2: #{decoder_forward.5} parent=1 // pred_check
      _
    $region3: #{decoder_forward.5} parent=1 // pred_check_branch
      %9 = sbr.rel (0) target = $region5
    $region4: #{decoder_forward.5} parent=1 // pred_region
      _
    $region5: #{decoder_forward.5} parent=1 // pred_fallthru
      _
    // Predicated region
    $region6: #{decoder_forward.5} parent=1 // pred_check
      _
    $region7: #{decoder_forward.5} parent=1 // pred_check_branch
      %11 = sbr.rel (0) target = $region9
    $region8: #{decoder_forward.5} parent=1 // pred_region
      %s13 = ssub.s32 4096, 4096
      %14 = vsyncadd [#allocation3], %s13
      %s15 = sshll.u32 [#allocation2], 4
      %s16 = int_to_ptr.vmem [resolvable:$true] %s15
      %21 = dma.hbm_to_vmem [thread:$0]  %s1, 4096, %s16, [#allocation3], 1024, 1024, 64
    $region9: #{decoder_forward.5} parent=1 // pred_fallthru
      _
    // Predicated region
    $region10: #{decoder_forward.5} parent=1 // pred_check
      _
    $region11: #{decoder_forward.5} parent=1 // pred_check_branch
      %23 = sbr.rel (0) target = $region13
    $region12: #{decoder_forward.5} parent=1 // pred_region
      %24 = dma.done [#allocation3], 4096
    $region13: #{decoder_forward.5} parent=1 // pred_fallthru
      _
    %v26 = vld [vmem:[%s0] sm:$0xf]
    %v27 = vld [vmem:[#allocation2] sm:$0xff]
    %v28 = vld [vmem:[#allocation2 + $0x8] sm:$0xff]
    %v29 = vld [vmem:[#allocation2 + $0x10] sm:$0xff]
    %v30 = vld [vmem:[#allocation2 + $0x18] sm:$0xff]
    %v31 = vld [vmem:[#allocation2 + $0x20] sm:$0xff]
    %v32 = vld [vmem:[#allocation2 + $0x28] sm:$0xff]
    %v33 = vld [vmem:[#allocation2 + $0x30] sm:$0xff]
    %v34 = vld [vmem:[#allocation2 + $0x38] sm:$0xff]
    %v35 = vld [vmem:[#allocation2 + $0x40] sm:$0xff]
    %v36 = vld [vmem:[#allocation2 + $0x48] sm:$0xff]
    %v37 = vld [vmem:[#allocation2 + $0x50] sm:$0xff]
    %v38 = vld [vmem:[#allocation2 + $0x58] sm:$0xff]
    %v39 = vld [vmem:[#allocation2 + $0x60] sm:$0xff]
    %v40 = vld [vmem:[#allocation2 + $0x68] sm:$0xff]
    %v41 = vld [vmem:[#allocation2 + $0x70] sm:$0xff]
    %v42 = vld [vmem:[#allocation2 + $0x78] sm:$0xff]
    %v43 = vld [vmem:[#allocation2 + $0x80] sm:$0xff]
    %v44 = vld [vmem:[#allocation2 + $0x88] sm:$0xff]
    %v45 = vld [vmem:[#allocation2 + $0x90] sm:$0xff]
    %v46 = vld [vmem:[#allocation2 + $0x98] sm:$0xff]
    %v47 = vld [vmem:[#allocation2 + $0xa0] sm:$0xff]
    %v48 = vld [vmem:[#allocation2 + $0xa8] sm:$0xff]
    %v49 = vld [vmem:[#allocation2 + $0xb0] sm:$0xff]
    %v50 = vld [vmem:[#allocation2 + $0xb8] sm:$0xff]
    %v51 = vld [vmem:[#allocation2 + $0xc0] sm:$0xff]
    %v52 = vld [vmem:[#allocation2 + $0xc8] sm:$0xff]
    %v53 = vld [vmem:[#allocation2 + $0xd0] sm:$0xff]
    %v54 = vld [vmem:[#allocation2 + $0xd8] sm:$0xff]
    %v55 = vld [vmem:[#allocation2 + $0xe0] sm:$0xff]
    %v56 = vld [vmem:[#allocation2 + $0xe8] sm:$0xff]
    %v57 = vld [vmem:[#allocation2 + $0xf0] sm:$0xff]
    %v58 = vld [vmem:[#allocation2 + $0xf8] sm:$0xff]
    %v91 = vunpack.c.l.b16 %v27
    %v92 = vunpack.c.h.b16 %v27
    %v93 = vunpack.c.l.b16 %v28
    %v94 = vunpack.c.h.b16 %v28
    %v95 = vunpack.c.l.b16 %v29
    %v96 = vunpack.c.h.b16 %v29
    %v97 = vunpack.c.l.b16 %v30
    %v98 = vunpack.c.h.b16 %v30
    %v99 = vunpack.c.l.b16 %v31
    %v100 = vunpack.c.h.b16 %v31
    %v101 = vunpack.c.l.b16 %v32
    %v102 = vunpack.c.h.b16 %v32
    %v103 = vunpack.c.l.b16 %v33
    %v104 = vunpack.c.h.b16 %v33
    %v105 = vunpack.c.l.b16 %v34
    %v106 = vunpack.c.h.b16 %v34
    %v107 = vunpack.c.l.b16 %v35
    %v108 = vunpack.c.h.b16 %v35
    %v109 = vunpack.c.l.b16 %v36
    %v110 = vunpack.c.h.b16 %v36
    %v111 = vunpack.c.l.b16 %v37
    %v112 = vunpack.c.h.b16 %v37
    %v113 = vunpack.c.l.b16 %v38
    %v114 = vunpack.c.h.b16 %v38
    %v115 = vunpack.c.l.b16 %v39
    %v116 = vunpack.c.h.b16 %v39
    %v117 = vunpack.c.l.b16 %v40
    %v118 = vunpack.c.h.b16 %v40
    %v119 = vunpack.c.l.b16 %v41
    %v120 = vunpack.c.h.b16 %v41
    %v121 = vunpack.c.l.b16 %v42
    %v122 = vunpack.c.h.b16 %v42
    %v123 = vunpack.c.l.b16 %v43
    %v124 = vunpack.c.h.b16 %v43
    %v125 = vunpack.c.l.b16 %v44
    %v126 = vunpack.c.h.b16 %v44
    %v127 = vunpack.c.l.b16 %v45
    %v128 = vunpack.c.h.b16 %v45
    %v129 = vunpack.c.l.b16 %v46
    %v130 = vunpack.c.h.b16 %v46
    %v131 = vunpack.c.l.b16 %v47
    %v132 = vunpack.c.h.b16 %v47
    %v133 = vunpack.c.l.b16 %v48
    %v134 = vunpack.c.h.b16 %v48
    %v135 = vunpack.c.l.b16 %v49
    %v136 = vunpack.c.h.b16 %v49
    %v137 = vunpack.c.l.b16 %v50
    %v138 = vunpack.c.h.b16 %v50
    %v139 = vunpack.c.l.b16 %v51
    %v140 = vunpack.c.h.b16 %v51
    %v141 = vunpack.c.l.b16 %v52
    %v142 = vunpack.c.h.b16 %v52
    %v143 = vunpack.c.l.b16 %v53
    %v144 = vunpack.c.h.b16 %v53
    %v145 = vunpack.c.l.b16 %v54
    %v146 = vunpack.c.h.b16 %v54
    %v147 = vunpack.c.l.b16 %v55
    %v148 = vunpack.c.h.b16 %v55
    %v149 = vunpack.c.l.b16 %v56
    %v150 = vunpack.c.h.b16 %v56
    %v151 = vunpack.c.l.b16 %v57
    %v152 = vunpack.c.h.b16 %v57
    %v153 = vunpack.c.l.b16 %v58
    %v154 = vunpack.c.h.b16 %v58
    %v155 = vpack.c.b16 %v107, %v91
    %v156 = vpack.c.b16 %v108, %v92
    %v157 = vpack.c.b16 %v109, %v93
    %v158 = vpack.c.b16 %v110, %v94
    %v159 = vpack.c.b16 %v111, %v95
    %v160 = vpack.c.b16 %v112, %v96
    %v161 = vpack.c.b16 %v113, %v97
    %v162 = vpack.c.b16 %v114, %v98
    %v163 = vpack.c.b16 %v115, %v99
    %v164 = vpack.c.b16 %v116, %v100
    %v165 = vpack.c.b16 %v117, %v101
    %v166 = vpack.c.b16 %v118, %v102
    %v167 = vpack.c.b16 %v119, %v103
    %v168 = vpack.c.b16 %v120, %v104
    %v169 = vpack.c.b16 %v121, %v105
    %v170 = vpack.c.b16 %v122, %v106
    %v171 = vpack.c.b16 %v139, %v123
    %v172 = vpack.c.b16 %v140, %v124
    %v173 = vpack.c.b16 %v141, %v125
    %v174 = vpack.c.b16 %v142, %v126
    %v175 = vpack.c.b16 %v143, %v127
    %v176 = vpack.c.b16 %v144, %v128
    %v177 = vpack.c.b16 %v145, %v129
    %v178 = vpack.c.b16 %v146, %v130
    %v179 = vpack.c.b16 %v147, %v131
    %v180 = vpack.c.b16 %v148, %v132
    %v181 = vpack.c.b16 %v149, %v133
    %v182 = vpack.c.b16 %v150, %v134
    %v183 = vpack.c.b16 %v151, %v135
    %v184 = vpack.c.b16 %v152, %v136
    %v185 = vpack.c.b16 %v153, %v137
    %v186 = vpack.c.b16 %v154, %v138
    %vm219 = vcmask 261120
    %v221 = vsel %vm219, %v26, 0
    %223 = vmatprep.subr.bf16.mxu0 %v156
    %224 = vmatpush1.bf16.msra.mxu0 %v155
    %225 = vmatprep.subr.bf16.mxu0 %v172
    %226 = vmatpush1.bf16.msra.mxu0 %v171
    %227 = vmatprep.subr.bf16.mxu0 0
    %228 = vmatpush1.bf16.msra.mxu0 0
    %229 = vmatprep.subr.bf16.mxu0 0
    %230 = vmatpush1.bf16.msra.mxu0 0
    %231 = vmatprep.subr.bf16.mxu0 0
    %232 = vmatpush1.bf16.msra.mxu0 0
    %233 = vmatprep.subr.bf16.mxu0 0
    %234 = vmatpush1.bf16.msra.mxu0 0
    %235 = vmatprep.subr.bf16.mxu0 0
    %236 = vmatpush1.bf16.msra.mxu0 0
    %237 = vmatprep.subr.bf16.mxu0 0
    %238 = vmatpush1.bf16.msra.mxu0 0
    %239 = vmatprep.subr.bf16.mxu0 0
    %240 = vmatpush1.bf16.msra.mxu0 0
    %241 = vmatprep.subr.bf16.mxu0 0
    %242 = vmatpush1.bf16.msra.mxu0 0
    %243 = vmatprep.subr.bf16.mxu0 0
    %244 = vmatpush1.bf16.msra.mxu0 0
    %245 = vmatprep.subr.bf16.mxu0 0
    %246 = vmatpush1.bf16.msra.mxu0 0
    %247 = vmatprep.subr.bf16.mxu0 0
    %248 = vmatpush1.bf16.msra.mxu0 0
    %249 = vmatprep.subr.bf16.mxu0 0
    %250 = vmatpush1.bf16.msra.mxu0 0
    %251 = vmatprep.subr.bf16.mxu0 0
    %252 = vmatpush1.bf16.msra.mxu0 0
    %253 = vmatprep.subr.bf16.mxu0 0
    %254 = vmatpush1.bf16.msra.mxu0 0
    %255 = vmatprep.mubr.bf16.mxu0 0
    %256 = vmatmul.mubr.bf16.gmra.mrb[0].mxu0 %v221
    %v257 = vpop.f32.mrb[0].mxu0
    %v258 = vadd.f32 0.0, %v257
    %v259 = vpop.f32.mrb[0].mxu0
    %v260 = vadd.f32 0.0, %v259
    %v261 = vpop.f32.mrb[0].mxu0
    %v262 = vpop.f32.mrb[0].mxu0
    %263 = vdwg.mxu0
    %264 = vmatprep.subr.bf16.mxu0 %v158
    %265 = vmatpush1.bf16.msra.mxu0 %v157
    %266 = vmatprep.subr.bf16.mxu0 %v174
    %267 = vmatpush1.bf16.msra.mxu0 %v173
    %268 = vmatprep.subr.bf16.mxu0 0
    %269 = vmatpush1.bf16.msra.mxu0 0
    %270 = vmatprep.subr.bf16.mxu0 0
    %271 = vmatpush1.bf16.msra.mxu0 0
    %272 = vmatprep.subr.bf16.mxu0 0
    %273 = vmatpush1.bf16.msra.mxu0 0
    %274 = vmatprep.subr.bf16.mxu0 0
    %275 = vmatpush1.bf16.msra.mxu0 0
    %276 = vmatprep.subr.bf16.mxu0 0
    %277 = vmatpush1.bf16.msra.mxu0 0
    %278 = vmatprep.subr.bf16.mxu0 0
    %279 = vmatpush1.bf16.msra.mxu0 0
    %280 = vmatprep.subr.bf16.mxu0 0
    %281 = vmatpush1.bf16.msra.mxu0 0
    %282 = vmatprep.subr.bf16.mxu0 0
    %283 = vmatpush1.bf16.msra.mxu0 0
    %284 = vmatprep.subr.bf16.mxu0 0
    %285 = vmatpush1.bf16.msra.mxu0 0
    %286 = vmatprep.subr.bf16.mxu0 0
    %287 = vmatpush1.bf16.msra.mxu0 0
    %288 = vmatprep.subr.bf16.mxu0 0
    %289 = vmatpush1.bf16.msra.mxu0 0
    %290 = vmatprep.subr.bf16.mxu0 0
    %291 = vmatpush1.bf16.msra.mxu0 0
    %292 = vmatprep.subr.bf16.mxu0 0
    %293 = vmatpush1.bf16.msra.mxu0 0
    %294 = vmatprep.subr.bf16.mxu0 0
    %295 = vmatpush1.bf16.msra.mxu0 0
    %296 = vmatprep.mubr.bf16.mxu0 0
    %297 = vmatmul.mubr.bf16.gmra.mrb[0].mxu0 %v221
    %v298 = vpop.f32.mrb[0].mxu0
    %v299 = vadd.f32 0.0, %v298
    %v300 = vpop.f32.mrb[0].mxu0
    %v301 = vadd.f32 0.0, %v300
    %v302 = vpop.f32.mrb[0].mxu0
    %v303 = vpop.f32.mrb[0].mxu0
    %304 = vdwg.mxu0
    %305 = vmatprep.subr.bf16.mxu0 %v160
    %306 = vmatpush1.bf16.msra.mxu0 %v159
    %307 = vmatprep.subr.bf16.mxu0 %v176
    %308 = vmatpush1.bf16.msra.mxu0 %v175
    %309 = vmatprep.subr.bf16.mxu0 0
    %310 = vmatpush1.bf16.msra.mxu0 0
    %311 = vmatprep.subr.bf16.mxu0 0
    %312 = vmatpush1.bf16.msra.mxu0 0
    %313 = vmatprep.subr.bf16.mxu0 0
    %314 = vmatpush1.bf16.msra.mxu0 0
    %315 = vmatprep.subr.bf16.mxu0 0
    %316 = vmatpush1.bf16.msra.mxu0 0
    %317 = vmatprep.subr.bf16.mxu0 0
    %318 = vmatpush1.bf16.msra.mxu0 0
    %319 = vmatprep.subr.bf16.mxu0 0
    %320 = vmatpush1.bf16.msra.mxu0 0
    %321 = vmatprep.subr.bf16.mxu0 0
    %322 = vmatpush1.bf16.msra.mxu0 0
    %323 = vmatprep.subr.bf16.mxu0 0
    %324 = vmatpush1.bf16.msra.mxu0 0
    %325 = vmatprep.subr.bf16.mxu0 0
    %326 = vmatpush1.bf16.msra.mxu0 0
    %327 = vmatprep.subr.bf16.mxu0 0
    %328 = vmatpush1.bf16.msra.mxu0 0
    %329 = vmatprep.subr.bf16.mxu0 0
    %330 = vmatpush1.bf16.msra.mxu0 0
    %331 = vmatprep.subr.bf16.mxu0 0
    %332 = vmatpush1.bf16.msra.mxu0 0
    %333 = vmatprep.subr.bf16.mxu0 0
    %334 = vmatpush1.bf16.msra.mxu0 0
    %335 = vmatprep.subr.bf16.mxu0 0
    %336 = vmatpush1.bf16.msra.mxu0 0
    %337 = vmatprep.mubr.bf16.mxu0 0
    %338 = vmatmul.mubr.bf16.gmra.mrb[0].mxu0 %v221
    %v339 = vpop.f32.mrb[0].mxu0
    %v340 = vadd.f32 0.0, %v339
    %v341 = vpop.f32.mrb[0].mxu0
    %v342 = vadd.f32 0.0, %v341
    %v343 = vpop.f32.mrb[0].mxu0
    %v344 = vpop.f32.mrb[0].mxu0
    %345 = vdwg.mxu0
    %346 = vmatprep.subr.bf16.mxu0 %v162
    %347 = vmatpush1.bf16.msra.mxu0 %v161
    %348 = vmatprep.subr.bf16.mxu0 %v178
    %349 = vmatpush1.bf16.msra.mxu0 %v177
    %350 = vmatprep.subr.bf16.mxu0 0
    %351 = vmatpush1.bf16.msra.mxu0 0
    %352 = vmatprep.subr.bf16.mxu0 0
    %353 = vmatpush1.bf16.msra.mxu0 0
    %354 = vmatprep.subr.bf16.mxu0 0
    %355 = vmatpush1.bf16.msra.mxu0 0
    %356 = vmatprep.subr.bf16.mxu0 0
    %357 = vmatpush1.bf16.msra.mxu0 0
    %358 = vmatprep.subr.bf16.mxu0 0
    %359 = vmatpush1.bf16.msra.mxu0 0
    %360 = vmatprep.subr.bf16.mxu0 0
    %361 = vmatpush1.bf16.msra.mxu0 0
    %362 = vmatprep.subr.bf16.mxu0 0
    %363 = vmatpush1.bf16.msra.mxu0 0
    %364 = vmatprep.subr.bf16.mxu0 0
    %365 = vmatpush1.bf16.msra.mxu0 0
    %366 = vmatprep.subr.bf16.mxu0 0
    %367 = vmatpush1.bf16.msra.mxu0 0
    %368 = vmatprep.subr.bf16.mxu0 0
    %369 = vmatpush1.bf16.msra.mxu0 0
    %370 = vmatprep.subr.bf16.mxu0 0
    %371 = vmatpush1.bf16.msra.mxu0 0
    %372 = vmatprep.subr.bf16.mxu0 0
    %373 = vmatpush1.bf16.msra.mxu0 0
    %374 = vmatprep.subr.bf16.mxu0 0
    %375 = vmatpush1.bf16.msra.mxu0 0
    %376 = vmatprep.subr.bf16.mxu0 0
    %377 = vmatpush1.bf16.msra.mxu0 0
    %378 = vmatprep.mubr.bf16.mxu0 0
    %379 = vmatmul.mubr.bf16.gmra.mrb[0].mxu0 %v221
    %v380 = vpop.f32.mrb[0].mxu0
    %v381 = vadd.f32 0.0, %v380
    %v382 = vpop.f32.mrb[0].mxu0
    %v383 = vadd.f32 0.0, %v382
    %v384 = vpop.f32.mrb[0].mxu0
    %v385 = vpop.f32.mrb[0].mxu0
    %386 = vdwg.mxu0
    %387 = vmatprep.subr.bf16.mxu0 %v164
    %388 = vmatpush1.bf16.msra.mxu0 %v163
    %389 = vmatprep.subr.bf16.mxu0 %v180
    %390 = vmatpush1.bf16.msra.mxu0 %v179
    %391 = vmatprep.subr.bf16.mxu0 0
    %392 = vmatpush1.bf16.msra.mxu0 0
    %393 = vmatprep.subr.bf16.mxu0 0
    %394 = vmatpush1.bf16.msra.mxu0 0
    %395 = vmatprep.subr.bf16.mxu0 0
    %396 = vmatpush1.bf16.msra.mxu0 0
    %397 = vmatprep.subr.bf16.mxu0 0
    %398 = vmatpush1.bf16.msra.mxu0 0
    %399 = vmatprep.subr.bf16.mxu0 0
    %400 = vmatpush1.bf16.msra.mxu0 0
    %401 = vmatprep.subr.bf16.mxu0 0
    %402 = vmatpush1.bf16.msra.mxu0 0
    %403 = vmatprep.subr.bf16.mxu0 0
    %404 = vmatpush1.bf16.msra.mxu0 0
    %405 = vmatprep.subr.bf16.mxu0 0
    %406 = vmatpush1.bf16.msra.mxu0 0
    %407 = vmatprep.subr.bf16.mxu0 0
    %408 = vmatpush1.bf16.msra.mxu0 0
    %409 = vmatprep.subr.bf16.mxu0 0
    %410 = vmatpush1.bf16.msra.mxu0 0
    %411 = vmatprep.subr.bf16.mxu0 0
    %412 = vmatpush1.bf16.msra.mxu0 0
    %413 = vmatprep.subr.bf16.mxu0 0
    %414 = vmatpush1.bf16.msra.mxu0 0
    %415 = vmatprep.subr.bf16.mxu0 0
    %416 = vmatpush1.bf16.msra.mxu0 0
    %417 = vmatprep.subr.bf16.mxu0 0
    %418 = vmatpush1.bf16.msra.mxu0 0
    %419 = vmatprep.mubr.bf16.mxu0 0
    %420 = vmatmul.mubr.bf16.gmra.mrb[0].mxu0 %v221
    %v421 = vpop.f32.mrb[0].mxu0
    %v422 = vadd.f32 0.0, %v421
    %v423 = vpop.f32.mrb[0].mxu0
    %v424 = vadd.f32 0.0, %v423
    %v425 = vpop.f32.mrb[0].mxu0
    %v426 = vpop.f32.mrb[0].mxu0
    %427 = vdwg.mxu0
    %428 = vmatprep.subr.bf16.mxu0 %v166
    %429 = vmatpush1.bf16.msra.mxu0 %v165
    %430 = vmatprep.subr.bf16.mxu0 %v182
    %431 = vmatpush1.bf16.msra.mxu0 %v181
    %432 = vmatprep.subr.bf16.mxu0 0
    %433 = vmatpush1.bf16.msra.mxu0 0
    %434 = vmatprep.subr.bf16.mxu0 0
    %435 = vmatpush1.bf16.msra.mxu0 0
    %436 = vmatprep.subr.bf16.mxu0 0
    %437 = vmatpush1.bf16.msra.mxu0 0
    %438 = vmatprep.subr.bf16.mxu0 0
    %439 = vmatpush1.bf16.msra.mxu0 0
    %440 = vmatprep.subr.bf16.mxu0 0
    %441 = vmatpush1.bf16.msra.mxu0 0
    %442 = vmatprep.subr.bf16.mxu0 0
    %443 = vmatpush1.bf16.msra.mxu0 0
    %444 = vmatprep.subr.bf16.mxu0 0
    %445 = vmatpush1.bf16.msra.mxu0 0
    %446 = vmatprep.subr.bf16.mxu0 0
    %447 = vmatpush1.bf16.msra.mxu0 0
    %448 = vmatprep.subr.bf16.mxu0 0
    %449 = vmatpush1.bf16.msra.mxu0 0
    %450 = vmatprep.subr.bf16.mxu0 0
    %451 = vmatpush1.bf16.msra.mxu0 0
    %452 = vmatprep.subr.bf16.mxu0 0
    %453 = vmatpush1.bf16.msra.mxu0 0
    %454 = vmatprep.subr.bf16.mxu0 0
    %455 = vmatpush1.bf16.msra.mxu0 0
    %456 = vmatprep.subr.bf16.mxu0 0
    %457 = vmatpush1.bf16.msra.mxu0 0
    %458 = vmatprep.subr.bf16.mxu0 0
    %459 = vmatpush1.bf16.msra.mxu0 0
    %460 = vmatprep.mubr.bf16.mxu0 0
    %461 = vmatmul.mubr.bf16.gmra.mrb[0].mxu0 %v221
    %v462 = vpop.f32.mrb[0].mxu0
    %v463 = vadd.f32 0.0, %v462
    %v464 = vpop.f32.mrb[0].mxu0
    %v465 = vadd.f32 0.0, %v464
    %v466 = vpop.f32.mrb[0].mxu0
    %v467 = vpop.f32.mrb[0].mxu0
    %468 = vdwg.mxu0
    %469 = vmatprep.subr.bf16.mxu0 %v168
    %470 = vmatpush1.bf16.msra.mxu0 %v167
    %471 = vmatprep.subr.bf16.mxu0 %v184
    %472 = vmatpush1.bf16.msra.mxu0 %v183
    %473 = vmatprep.subr.bf16.mxu0 0
    %474 = vmatpush1.bf16.msra.mxu0 0
    %475 = vmatprep.subr.bf16.mxu0 0
    %476 = vmatpush1.bf16.msra.mxu0 0
    %477 = vmatprep.subr.bf16.mxu0 0
    %478 = vmatpush1.bf16.msra.mxu0 0
    %479 = vmatprep.subr.bf16.mxu0 0
    %480 = vmatpush1.bf16.msra.mxu0 0
    %481 = vmatprep.subr.bf16.mxu0 0
    %482 = vmatpush1.bf16.msra.mxu0 0
    %483 = vmatprep.subr.bf16.mxu0 0
    %484 = vmatpush1.bf16.msra.mxu0 0
    %485 = vmatprep.subr.bf16.mxu0 0
    %486 = vmatpush1.bf16.msra.mxu0 0
    %487 = vmatprep.subr.bf16.mxu0 0
    %488 = vmatpush1.bf16.msra.mxu0 0
    %489 = vmatprep.subr.bf16.mxu0 0
    %490 = vmatpush1.bf16.msra.mxu0 0
    %491 = vmatprep.subr.bf16.mxu0 0
    %492 = vmatpush1.bf16.msra.mxu0 0
    %493 = vmatprep.subr.bf16.mxu0 0
    %494 = vmatpush1.bf16.msra.mxu0 0
    %495 = vmatprep.subr.bf16.mxu0 0
    %496 = vmatpush1.bf16.msra.mxu0 0
    %497 = vmatprep.subr.bf16.mxu0 0
    %498 = vmatpush1.bf16.msra.mxu0 0
    %499 = vmatprep.subr.bf16.mxu0 0
    %500 = vmatpush1.bf16.msra.mxu0 0
    %501 = vmatprep.mubr.bf16.mxu0 0
    %502 = vmatmul.mubr.bf16.gmra.mrb[0].mxu0 %v221
    %v503 = vpop.f32.mrb[0].mxu0
    %v504 = vadd.f32 0.0, %v503
    %v505 = vpop.f32.mrb[0].mxu0
    %v506 = vadd.f32 0.0, %v505
    %v507 = vpop.f32.mrb[0].mxu0
    %v508 = vpop.f32.mrb[0].mxu0
    %509 = vdwg.mxu0
    %510 = vmatprep.subr.bf16.mxu0 %v170
    %511 = vmatpush1.bf16.msra.mxu0 %v169
    %512 = vmatprep.subr.bf16.mxu0 %v186
    %513 = vmatpush1.bf16.msra.mxu0 %v185
    %514 = vmatprep.subr.bf16.mxu0 0
    %515 = vmatpush1.bf16.msra.mxu0 0
    %516 = vmatprep.subr.bf16.mxu0 0
    %517 = vmatpush1.bf16.msra.mxu0 0
    %518 = vmatprep.subr.bf16.mxu0 0
    %519 = vmatpush1.bf16.msra.mxu0 0
    %520 = vmatprep.subr.bf16.mxu0 0
    %521 = vmatpush1.bf16.msra.mxu0 0
    %522 = vmatprep.subr.bf16.mxu0 0
    %523 = vmatpush1.bf16.msra.mxu0 0
    %524 = vmatprep.subr.bf16.mxu0 0
    %525 = vmatpush1.bf16.msra.mxu0 0
    %526 = vmatprep.subr.bf16.mxu0 0
    %527 = vmatpush1.bf16.msra.mxu0 0
    %528 = vmatprep.subr.bf16.mxu0 0
    %529 = vmatpush1.bf16.msra.mxu0 0
    %530 = vmatprep.subr.bf16.mxu0 0
    %531 = vmatpush1.bf16.msra.mxu0 0
    %532 = vmatprep.subr.bf16.mxu0 0
    %533 = vmatpush1.bf16.msra.mxu0 0
    %534 = vmatprep.subr.bf16.mxu0 0
    %535 = vmatpush1.bf16.msra.mxu0 0
    %536 = vmatprep.subr.bf16.mxu0 0
    %537 = vmatpush1.bf16.msra.mxu0 0
    %538 = vmatprep.subr.bf16.mxu0 0
    %539 = vmatpush1.bf16.msra.mxu0 0
    %540 = vmatprep.subr.bf16.mxu0 0
    %541 = vmatpush1.bf16.msra.mxu0 0
    %542 = vmatprep.mubr.bf16.mxu0 0
    %543 = vmatmul.mubr.bf16.gmra.mrb[0].mxu0 %v221
    %v544 = vpop.f32.mrb[0].mxu0
    %v545 = vadd.f32 0.0, %v544
    %v546 = vpop.f32.mrb[0].mxu0
    %v547 = vadd.f32 0.0, %v546
    %v548 = vpop.f32.mrb[0].mxu0
    %v549 = vpop.f32.mrb[0].mxu0
    %550 = vdwg.mxu0
    %v551 = vrot.slane %v258, 4
    %v552 = vadd.f32 %v258, %v551
    %v553 = vrot.slane %v552, 2
    %v554 = vadd.f32 %v552, %v553
    %v555 = vrot.slane %v554, 1
    %v556 = vadd.f32 %v554, %v555
    %v557 = vrot.slane %v260, 4
    %v558 = vadd.f32 %v260, %v557
    %v559 = vrot.slane %v558, 2
    %v560 = vadd.f32 %v558, %v559
    %v561 = vrot.slane %v560, 1
    %v562 = vadd.f32 %v560, %v561
    %v563 = vrot.slane %v299, 4
    %v564 = vadd.f32 %v299, %v563
    %v565 = vrot.slane %v564, 2
    %v566 = vadd.f32 %v564, %v565
    %v567 = vrot.slane %v566, 1
    %v568 = vadd.f32 %v566, %v567
    %v569 = vrot.slane %v301, 4
    %v570 = vadd.f32 %v301, %v569
    %v571 = vrot.slane %v570, 2
    %v572 = vadd.f32 %v570, %v571
    %v573 = vrot.slane %v572, 1
    %v574 = vadd.f32 %v572, %v573
    %v575 = vrot.slane %v340, 4
    %v576 = vadd.f32 %v340, %v575
    %v577 = vrot.slane %v576, 2
    %v578 = vadd.f32 %v576, %v577
    %v579 = vrot.slane %v578, 1
    %v580 = vadd.f32 %v578, %v579
    %v581 = vrot.slane %v342, 4
    %v582 = vadd.f32 %v342, %v581
    %v583 = vrot.slane %v582, 2
    %v584 = vadd.f32 %v582, %v583
    %v585 = vrot.slane %v584, 1
    %v586 = vadd.f32 %v584, %v585
    %v587 = vrot.slane %v381, 4
    %v588 = vadd.f32 %v381, %v587
    %v589 = vrot.slane %v588, 2
    %v590 = vadd.f32 %v588, %v589
    %v591 = vrot.slane %v590, 1
    %v592 = vadd.f32 %v590, %v591
    %v593 = vrot.slane %v383, 4
    %v594 = vadd.f32 %v383, %v593
    %v595 = vrot.slane %v594, 2
    %v596 = vadd.f32 %v594, %v595
    %v597 = vrot.slane %v596, 1
    %v598 = vadd.f32 %v596, %v597
    %v599 = vrot.slane %v422, 4
    %v600 = vadd.f32 %v422, %v599
    %v601 = vrot.slane %v600, 2
    %v602 = vadd.f32 %v600, %v601
    %v603 = vrot.slane %v602, 1
    %v604 = vadd.f32 %v602, %v603
    %v605 = vrot.slane %v424, 4
    %v606 = vadd.f32 %v424, %v605
    %v607 = vrot.slane %v606, 2
    %v608 = vadd.f32 %v606, %v607
    %v609 = vrot.slane %v608, 1
    %v610 = vadd.f32 %v608, %v609
    %v611 = vrot.slane %v463, 4
    %v612 = vadd.f32 %v463, %v611
    %v613 = vrot.slane %v612, 2
    %v614 = vadd.f32 %v612, %v613
    %v615 = vrot.slane %v614, 1
    %v616 = vadd.f32 %v614, %v615
    %v617 = vrot.slane %v465, 4
    %v618 = vadd.f32 %v465, %v617
    %v619 = vrot.slane %v618, 2
    %v620 = vadd.f32 %v618, %v619
    %v621 = vrot.slane %v620, 1
    %v622 = vadd.f32 %v620, %v621
    %v623 = vrot.slane %v504, 4
    %v624 = vadd.f32 %v504, %v623
    %v625 = vrot.slane %v624, 2
    %v626 = vadd.f32 %v624, %v625
    %v627 = vrot.slane %v626, 1
    %v628 = vadd.f32 %v626, %v627
    %v629 = vrot.slane %v506, 4
    %v630 = vadd.f32 %v506, %v629
    %v631 = vrot.slane %v630, 2
    %v632 = vadd.f32 %v630, %v631
    %v633 = vrot.slane %v632, 1
    %v634 = vadd.f32 %v632, %v633
    %v635 = vrot.slane %v545, 4
    %v636 = vadd.f32 %v545, %v635
    %v637 = vrot.slane %v636, 2
    %v638 = vadd.f32 %v636, %v637
    %v639 = vrot.slane %v638, 1
    %v640 = vadd.f32 %v638, %v639
    %v641 = vrot.slane %v547, 4
    %v642 = vadd.f32 %v547, %v641
    %v643 = vrot.slane %v642, 2
    %v644 = vadd.f32 %v642, %v643
    %v645 = vrot.slane %v644, 1
    %v646 = vadd.f32 %v644, %v645
    %v647 = vmul.f32 %v258, %v258
    %v648 = vmul.f32 %v260, %v260
    %v649 = vmul.f32 %v299, %v299
    %v650 = vmul.f32 %v301, %v301
    %v651 = vmul.f32 %v340, %v340
    %v652 = vmul.f32 %v342, %v342
    %v653 = vmul.f32 %v381, %v381
    %v654 = vmul.f32 %v383, %v383
    %v655 = vmul.f32 %v422, %v422
    %v656 = vmul.f32 %v424, %v424
    %v657 = vmul.f32 %v463, %v463
    %v658 = vmul.f32 %v465, %v465
    %v659 = vmul.f32 %v504, %v504
    %v660 = vmul.f32 %v506, %v506
    %v661 = vmul.f32 %v545, %v545
    %v662 = vmul.f32 %v547, %v547
    %v663 = vrot.slane %v647, 4
    %v664 = vadd.f32 %v647, %v663
    %v665 = vrot.slane %v664, 2
    %v666 = vadd.f32 %v664, %v665
    %v667 = vrot.slane %v666, 1
    %v668 = vadd.f32 %v666, %v667
    %v669 = vrot.slane %v648, 4
    %v670 = vadd.f32 %v648, %v669
    %v671 = vrot.slane %v670, 2
    %v672 = vadd.f32 %v670, %v671
    %v673 = vrot.slane %v672, 1
    %v674 = vadd.f32 %v672, %v673
    %v675 = vrot.slane %v649, 4
    %v676 = vadd.f32 %v649, %v675
    %v677 = vrot.slane %v676, 2
    %v678 = vadd.f32 %v676, %v677
    %v679 = vrot.slane %v678, 1
    %v680 = vadd.f32 %v678, %v679
    %v681 = vrot.slane %v650, 4
    %v682 = vadd.f32 %v650, %v681
    %v683 = vrot.slane %v682, 2
    %v684 = vadd.f32 %v682, %v683
    %v685 = vrot.slane %v684, 1
    %v686 = vadd.f32 %v684, %v685
    %v687 = vrot.slane %v651, 4
    %v688 = vadd.f32 %v651, %v687
    %v689 = vrot.slane %v688, 2
    %v690 = vadd.f32 %v688, %v689
    %v691 = vrot.slane %v690, 1
    %v692 = vadd.f32 %v690, %v691
    %v693 = vrot.slane %v652, 4
    %v694 = vadd.f32 %v652, %v693
    %v695 = vrot.slane %v694, 2
    %v696 = vadd.f32 %v694, %v695
    %v697 = vrot.slane %v696, 1
    %v698 = vadd.f32 %v696, %v697
    %v699 = vrot.slane %v653, 4
    %v700 = vadd.f32 %v653, %v699
    %v701 = vrot.slane %v700, 2
    %v702 = vadd.f32 %v700, %v701
    %v703 = vrot.slane %v702, 1
    %v704 = vadd.f32 %v702, %v703
    %v705 = vrot.slane %v654, 4
    %v706 = vadd.f32 %v654, %v705
    %v707 = vrot.slane %v706, 2
    %v708 = vadd.f32 %v706, %v707
    %v709 = vrot.slane %v708, 1
    %v710 = vadd.f32 %v708, %v709
    %v711 = vrot.slane %v655, 4
    %v712 = vadd.f32 %v655, %v711
    %v713 = vrot.slane %v712, 2
    %v714 = vadd.f32 %v712, %v713
    %v715 = vrot.slane %v714, 1
    %v716 = vadd.f32 %v714, %v715
    %v717 = vrot.slane %v656, 4
    %v718 = vadd.f32 %v656, %v717
    %v719 = vrot.slane %v718, 2
    %v720 = vadd.f32 %v718, %v719
    %v721 = vrot.slane %v720, 1
    %v722 = vadd.f32 %v720, %v721
    %v723 = vrot.slane %v657, 4
    %v724 = vadd.f32 %v657, %v723
    %v725 = vrot.slane %v724, 2
    %v726 = vadd.f32 %v724, %v725
    %v727 = vrot.slane %v726, 1
    %v728 = vadd.f32 %v726, %v727
    %v729 = vrot.slane %v658, 4
    %v730 = vadd.f32 %v658, %v729
    %v731 = vrot.slane %v730, 2
    %v732 = vadd.f32 %v730, %v731
    %v733 = vrot.slane %v732, 1
    %v734 = vadd.f32 %v732, %v733
    %v735 = vrot.slane %v659, 4
    %v736 = vadd.f32 %v659, %v735
    %v737 = vrot.slane %v736, 2
    %v738 = vadd.f32 %v736, %v737
    %v739 = vrot.slane %v738, 1
    %v740 = vadd.f32 %v738, %v739
    %v741 = vrot.slane %v660, 4
    %v742 = vadd.f32 %v660, %v741
    %v743 = vrot.slane %v742, 2
    %v744 = vadd.f32 %v742, %v743
    %v745 = vrot.slane %v744, 1
    %v746 = vadd.f32 %v744, %v745
    %v747 = vrot.slane %v661, 4
    %v748 = vadd.f32 %v661, %v747
    %v749 = vrot.slane %v748, 2
    %v750 = vadd.f32 %v748, %v749
    %v751 = vrot.slane %v750, 1
    %v752 = vadd.f32 %v750, %v751
    %v753 = vrot.slane %v662, 4
    %v754 = vadd.f32 %v662, %v753
    %v755 = vrot.slane %v754, 2
    %v756 = vadd.f32 %v754, %v755
    %v757 = vrot.slane %v756, 1
    %v758 = vadd.f32 %v756, %v757
    %v759 = vadd.f32 %v556, %v646
    %v760 = vadd.f32 %v562, %v556
    %v761 = vadd.f32 %v568, %v562
    %v762 = vadd.f32 %v574, %v568
    %v763 = vadd.f32 %v580, %v574
    %v764 = vadd.f32 %v586, %v580
    %v765 = vadd.f32 %v592, %v586
    %v766 = vadd.f32 %v598, %v592
    %v767 = vadd.f32 %v604, %v598
    %v768 = vadd.f32 %v610, %v604
    %v769 = vadd.f32 %v616, %v610
    %v770 = vadd.f32 %v622, %v616
    %v771 = vadd.f32 %v628, %v622
    %v772 = vadd.f32 %v634, %v628
    %v773 = vadd.f32 %v640, %v634
    %v774 = vadd.f32 %v646, %v640
    %v775 = vadd.f32 %v668, %v758
    %v776 = vadd.f32 %v674, %v668
    %v777 = vadd.f32 %v680, %v674
    %v778 = vadd.f32 %v686, %v680
    %v779 = vadd.f32 %v692, %v686
    %v780 = vadd.f32 %v698, %v692
    %v781 = vadd.f32 %v704, %v698
    %v782 = vadd.f32 %v710, %v704
    %v783 = vadd.f32 %v716, %v710
    %v784 = vadd.f32 %v722, %v716
    %v785 = vadd.f32 %v728, %v722
    %v786 = vadd.f32 %v734, %v728
    %v787 = vadd.f32 %v740, %v734
    %v788 = vadd.f32 %v746, %v740
    %v789 = vadd.f32 %v752, %v746
    %v790 = vadd.f32 %v758, %v752
    %v791 = vadd.f32 %v759, %v773
    %v792 = vadd.f32 %v760, %v774
    %v793 = vadd.f32 %v761, %v759
    %v794 = vadd.f32 %v762, %v760
    %v795 = vadd.f32 %v763, %v761
    %v796 = vadd.f32 %v764, %v762
    %v797 = vadd.f32 %v765, %v763
    %v798 = vadd.f32 %v766, %v764
    %v799 = vadd.f32 %v767, %v765
    %v800 = vadd.f32 %v768, %v766
    %v801 = vadd.f32 %v769, %v767
    %v802 = vadd.f32 %v770, %v768
    %v803 = vadd.f32 %v771, %v769
    %v804 = vadd.f32 %v772, %v770
    %v805 = vadd.f32 %v773, %v771
    %v806 = vadd.f32 %v774, %v772
    %v807 = vadd.f32 %v775, %v789
    %v808 = vadd.f32 %v776, %v790
    %v809 = vadd.f32 %v777, %v775
    %v810 = vadd.f32 %v778, %v776
    %v811 = vadd.f32 %v779, %v777
    %v812 = vadd.f32 %v780, %v778
    %v813 = vadd.f32 %v781, %v779
    %v814 = vadd.f32 %v782, %v780
    %v815 = vadd.f32 %v783, %v781
    %v816 = vadd.f32 %v784, %v782
    %v817 = vadd.f32 %v785, %v783
    %v818 = vadd.f32 %v786, %v784
    %v819 = vadd.f32 %v787, %v785
    %v820 = vadd.f32 %v788, %v786
    %v821 = vadd.f32 %v789, %v787
    %v822 = vadd.f32 %v790, %v788
    %v823 = vadd.f32 %v791, %v803
    %v824 = vadd.f32 %v792, %v804
    %v825 = vadd.f32 %v793, %v805
    %v826 = vadd.f32 %v794, %v806
    %v827 = vadd.f32 %v795, %v791
    %v828 = vadd.f32 %v796, %v792
    %v829 = vadd.f32 %v797, %v793
    %v830 = vadd.f32 %v798, %v794
    %v831 = vadd.f32 %v799, %v795
    %v832 = vadd.f32 %v800, %v796
    %v833 = vadd.f32 %v801, %v797
    %v834 = vadd.f32 %v802, %v798
    %v835 = vadd.f32 %v803, %v799
    %v836 = vadd.f32 %v804, %v800
    %v837 = vadd.f32 %v805, %v801
    %v838 = vadd.f32 %v806, %v802
    %v839 = vadd.f32 %v807, %v819
    %v840 = vadd.f32 %v808, %v820
    %v841 = vadd.f32 %v809, %v821
    %v842 = vadd.f32 %v810, %v822
    %v843 = vadd.f32 %v811, %v807
    %v844 = vadd.f32 %v812, %v808
    %v845 = vadd.f32 %v813, %v809
    %v846 = vadd.f32 %v814, %v810
    %v847 = vadd.f32 %v815, %v811
    %v848 = vadd.f32 %v816, %v812
    %v849 = vadd.f32 %v817, %v813
    %v850 = vadd.f32 %v818, %v814
    %v851 = vadd.f32 %v819, %v815
    %v852 = vadd.f32 %v820, %v816
    %v853 = vadd.f32 %v821, %v817
    %v854 = vadd.f32 %v822, %v818
    %v855 = vadd.f32 %v823, %v831
    %v856 = vadd.f32 %v824, %v832
    %v857 = vadd.f32 %v825, %v833
    %v858 = vadd.f32 %v826, %v834
    %v859 = vadd.f32 %v827, %v835
    %v860 = vadd.f32 %v828, %v836
    %v861 = vadd.f32 %v829, %v837
    %v862 = vadd.f32 %v830, %v838
    %v863 = vadd.f32 %v839, %v847
    %v864 = vadd.f32 %v840, %v848
    %v865 = vadd.f32 %v841, %v849
    %v866 = vadd.f32 %v842, %v850
    %v867 = vadd.f32 %v843, %v851
    %v868 = vadd.f32 %v844, %v852
    %v869 = vadd.f32 %v845, %v853
    %v870 = vadd.f32 %v846, %v854
    %v871 = vmul.f32 %v855, 0.03125
    %v872 = vmul.f32 %v856, 0.03125
    %v873 = vmul.f32 %v857, 0.03125
    %v874 = vmul.f32 %v858, 0.03125
    %v875 = vmul.f32 %v859, 0.03125
    %v876 = vmul.f32 %v860, 0.03125
    %v877 = vmul.f32 %v861, 0.03125
    %v878 = vmul.f32 %v862, 0.03125
    %v879 = vmul.f32 %v863, 0.03125
    %v880 = vmul.f32 %v864, 0.03125
    %v881 = vmul.f32 %v865, 0.03125
    %v882 = vmul.f32 %v866, 0.03125
    %v883 = vmul.f32 %v867, 0.03125
    %v884 = vmul.f32 %v868, 0.03125
    %v885 = vmul.f32 %v869, 0.03125
    %v886 = vmul.f32 %v870, 0.03125
    %v887 = vmul.f32 %v871, %v871
    %v888 = vmul.f32 %v872, %v872
    %v889 = vmul.f32 %v873, %v873
    %v890 = vmul.f32 %v874, %v874
    %v891 = vmul.f32 %v875, %v875
    %v892 = vmul.f32 %v876, %v876
    %v893 = vmul.f32 %v877, %v877
    %v894 = vmul.f32 %v878, %v878
    %v895 = vsub.f32 %v879, %v887
    %v896 = vsub.f32 %v880, %v888
    %v897 = vsub.f32 %v881, %v889
    %v898 = vsub.f32 %v882, %v890
    %v899 = vsub.f32 %v883, %v891
    %v900 = vsub.f32 %v884, %v892
    %v901 = vsub.f32 %v885, %v893
    %v902 = vsub.f32 %v886, %v894
    %v903 = vmax.f32 %v895, 0.0
    %v904 = vmax.f32 %v896, 0.0
    %v905 = vmax.f32 %v897, 0.0
    %v906 = vmax.f32 %v898, 0.0
    %v907 = vmax.f32 %v899, 0.0
    %v908 = vmax.f32 %v900, 0.0
    %v909 = vmax.f32 %v901, 0.0
    %v910 = vmax.f32 %v902, 0.0
    %v911 = vadd.f32 %v903, 1e-05
    %v912 = vadd.f32 %v904, 1e-05
    %v913 = vadd.f32 %v905, 1e-05
    %v914 = vadd.f32 %v906, 1e-05
    %v915 = vadd.f32 %v907, 1e-05
    %v916 = vadd.f32 %v908, 1e-05
    %v917 = vadd.f32 %v909, 1e-05
    %v918 = vadd.f32 %v910, 1e-05
    %v919 = vrsqrt.pop %v911
    %v920 = vrsqrt.pop %v912
    %v921 = vrsqrt.pop %v913
    %v922 = vrsqrt.pop %v914
    %v923 = vrsqrt.pop %v915
    %v924 = vrsqrt.pop %v916
    %v925 = vrsqrt.pop %v917
    %v926 = vrsqrt.pop %v918
    %v927 = vlaneseq
    %v928 = vshrl.u32 %v927, 7
    %v929 = vsub.s32 0, %v928
    %v930 = vrot.slane %v871, %v929
    %v931 = vlaneseq
    %v932 = vshrl.u32 %v931, 7
    %v933 = vsub.s32 0, %v932
    %v934 = vrot.slane %v872, %v933
    %v935 = vlaneseq
    %v936 = vshrl.u32 %v935, 7
    %v937 = vsub.s32 0, %v936
    %v938 = vrot.slane %v873, %v937
    %v939 = vlaneseq
    %v940 = vshrl.u32 %v939, 7
    %v941 = vsub.s32 0, %v940
    %v942 = vrot.slane %v874, %v941
    %v943 = vlaneseq
    %v944 = vshrl.u32 %v943, 7
    %v945 = vsub.s32 0, %v944
    %v946 = vrot.slane %v875, %v945
    %v947 = vlaneseq
    %v948 = vshrl.u32 %v947, 7
    %v949 = vsub.s32 0, %v948
    %v950 = vrot.slane %v876, %v949
    %v951 = vlaneseq
    %v952 = vshrl.u32 %v951, 7
    %v953 = vsub.s32 0, %v952
    %v954 = vrot.slane %v877, %v953
    %v955 = vlaneseq
    %v956 = vshrl.u32 %v955, 7
    %v957 = vsub.s32 0, %v956
    %v958 = vrot.slane %v878, %v957
    %v959 = vsub.f32 %v258, %v930
    %v960 = vsub.f32 %v260, %v934
    %v961 = vsub.f32 %v299, %v938
    %v962 = vsub.f32 %v301, %v942
    %v963 = vsub.f32 %v340, %v946
    %v964 = vsub.f32 %v342, %v950
    %v965 = vsub.f32 %v381, %v954
    %v966 = vsub.f32 %v383, %v958
    %v967 = vsub.f32 %v422, %v930
    %v968 = vsub.f32 %v424, %v934
    %v969 = vsub.f32 %v463, %v938
    %v970 = vsub.f32 %v465, %v942
    %v971 = vsub.f32 %v504, %v946
    %v972 = vsub.f32 %v506, %v950
    %v973 = vsub.f32 %v545, %v954
    %v974 = vsub.f32 %v547, %v958
    %v975 = vlaneseq
    %v976 = vshrl.u32 %v975, 7
    %v977 = vsub.s32 0, %v976
    %v978 = vrot.slane %v919, %v977
    %v979 = vlaneseq
    %v980 = vshrl.u32 %v979, 7
    %v981 = vsub.s32 0, %v980
    %v982 = vrot.slane %v920, %v981
    %v983 = vlaneseq
    %v984 = vshrl.u32 %v983, 7
    %v985 = vsub.s32 0, %v984
    %v986 = vrot.slane %v921, %v985
    %v987 = vlaneseq
    %v988 = vshrl.u32 %v987, 7
    %v989 = vsub.s32 0, %v988
    %v990 = vrot.slane %v922, %v989
    %v991 = vlaneseq
    %v992 = vshrl.u32 %v991, 7
    %v993 = vsub.s32 0, %v992
    %v994 = vrot.slane %v923, %v993
    %v995 = vlaneseq
    %v996 = vshrl.u32 %v995, 7
    %v997 = vsub.s32 0, %v996
    %v998 = vrot.slane %v924, %v997
    %v999 = vlaneseq
    %v1000 = vshrl.u32 %v999, 7
    %v1001 = vsub.s32 0, %v1000
    %v1002 = vrot.slane %v925, %v1001
    %v1003 = vlaneseq
    %v1004 = vshrl.u32 %v1003, 7
    %v1005 = vsub.s32 0, %v1004
    %v1006 = vrot.slane %v926, %v1005
    %v1007 = vmul.f32 %v959, %v978
    %v1008 = vmul.f32 %v960, %v982
    %v1009 = vmul.f32 %v961, %v986
    %v1010 = vmul.f32 %v962, %v990
    %v1011 = vmul.f32 %v963, %v994
    %v1012 = vmul.f32 %v964, %v998
    %v1013 = vmul.f32 %v965, %v1002
    %v1014 = vmul.f32 %v966, %v1006
    %v1015 = vmul.f32 %v967, %v978
    %v1016 = vmul.f32 %v968, %v982
    %v1017 = vmul.f32 %v969, %v986
    %v1018 = vmul.f32 %v970, %v990
    %v1019 = vmul.f32 %v971, %v994
    %v1020 = vmul.f32 %v972, %v998
    %v1021 = vmul.f32 %v973, %v1002
    %v1022 = vmul.f32 %v974, %v1006
    %v1023 = vmax.f32 %v1007, 0.0
    %v1024 = vmax.f32 %v1008, 0.0
    %v1025 = vmax.f32 %v1009, 0.0
    %v1026 = vmax.f32 %v1010, 0.0
    %v1027 = vmax.f32 %v1011, 0.0
    %v1028 = vmax.f32 %v1012, 0.0
    %v1029 = vmax.f32 %v1013, 0.0
    %v1030 = vmax.f32 %v1014, 0.0
    %v1031 = vmax.f32 %v1015, 0.0
    %v1032 = vmax.f32 %v1016, 0.0
    %v1033 = vmax.f32 %v1017, 0.0
    %v1034 = vmax.f32 %v1018, 0.0
    %v1035 = vmax.f32 %v1019, 0.0
    %v1036 = vmax.f32 %v1020, 0.0
    %v1037 = vmax.f32 %v1021, 0.0
    %v1038 = vmax.f32 %v1022, 0.0
    %v1039 = vpack.c.bf16 %v1023, %v1023
    %v1040 = vpack.c.bf16 %v1024, %v1024
    %v1041 = vpack.c.bf16 %v1025, %v1025
    %v1042 = vpack.c.bf16 %v1026, %v1026
    %v1043 = vpack.c.bf16 %v1027, %v1027
    %v1044 = vpack.c.bf16 %v1028, %v1028
    %v1045 = vpack.c.bf16 %v1029, %v1029
    %v1046 = vpack.c.bf16 %v1030, %v1030
    %v1047 = vpack.c.bf16 %v1031, %v1031
    %v1048 = vpack.c.bf16 %v1032, %v1032
    %v1049 = vpack.c.bf16 %v1033, %v1033
    %v1050 = vpack.c.bf16 %v1034, %v1034
    %v1051 = vpack.c.bf16 %v1035, %v1035
    %v1052 = vpack.c.bf16 %v1036, %v1036
    %v1053 = vpack.c.bf16 %v1037, %v1037
    %v1054 = vpack.c.bf16 %v1038, %v1038
    %v1071 = vunpack.c.l.b16 %v1039
    %v1072 = vunpack.c.l.b16 %v1040
    %v1073 = vunpack.c.l.b16 %v1041
    %v1074 = vunpack.c.l.b16 %v1042
    %v1075 = vunpack.c.l.b16 %v1043
    %v1076 = vunpack.c.l.b16 %v1044
    %v1077 = vunpack.c.l.b16 %v1045
    %v1078 = vunpack.c.l.b16 %v1046
    %v1079 = vunpack.c.l.b16 %v1047
    %v1080 = vunpack.c.l.b16 %v1048
    %v1081 = vunpack.c.l.b16 %v1049
    %v1082 = vunpack.c.l.b16 %v1050
    %v1083 = vunpack.c.l.b16 %v1051
    %v1084 = vunpack.c.l.b16 %v1052
    %v1085 = vunpack.c.l.b16 %v1053
    %v1086 = vunpack.c.l.b16 %v1054
    %v1087 = vpack.c.b16 %v1072, %v1071
    %v1088 = vpack.c.b16 %v1074, %v1073
    %v1089 = vpack.c.b16 %v1076, %v1075
    %v1090 = vpack.c.b16 %v1078, %v1077
    %v1091 = vpack.c.b16 %v1080, %v1079
    %v1092 = vpack.c.b16 %v1082, %v1081
    %v1093 = vpack.c.b16 %v1084, %v1083
    %v1094 = vpack.c.b16 %v1086, %v1085
    %1103 = vst [vmem:[%s2] sm:$0xff] %v1087
    %1104 = vst [vmem:[%s2 + $0x8] sm:$0xff] %v1088
    %1105 = vst [vmem:[%s2 + $0x10] sm:$0xff] %v1089
    %1106 = vst [vmem:[%s2 + $0x18] sm:$0xff] %v1090
    %1107 = vst [vmem:[%s2 + $0x20] sm:$0xff] %v1091
    %1108 = vst [vmem:[%s2 + $0x28] sm:$0xff] %v1092
    %1109 = vst [vmem:[%s2 + $0x30] sm:$0xff] %v1093
    %1110 = vst [vmem:[%s2 + $0x38] sm:$0xff] %v1094
    // Predicated region
    $region14: #{decoder_forward.5} parent=1 // pred_check
      _
    $region15: #{decoder_forward.5} parent=1 // pred_check_branch
      %1112 = sbr.rel (0) target = $region17
    $region16: #{decoder_forward.5} parent=1 // pred_region
      _
    $region17: #{decoder_forward.5} parent=1 // pred_fallthru
      _
    // Predicated region
    $region18: #{decoder_forward.5} parent=1 // pred_check
      _
    $region19: #{decoder_forward.5} parent=1 // pred_check_branch
      %1114 = sbr.rel (0) target = $region21
    $region20: #{decoder_forward.5} parent=1 // pred_region
      _
    $region21: #{decoder_forward.5} parent=1 // pred_fallthru
      _
    %1115 = vsyncpa [#allocation3], 1

// kernel: decoder_forward.6
$region0: #{decoder_forward.6}
  #allocation0 [shape = 'u32[]', space=smem, size = 0x4, offset = 0x4, fixed_abs, tag = 'smem constant byte address 0x4 - core index']
  #allocation1 [shape = 'u32[144,128]{1,0:T(1,128)}', space=vmem, size = 0x12000, scoped, tag = 'internal scratch']
  %s0 = inlined_call_operand.vmem [shape: bf16[32,1152], index: 0, kind: input, shape index: {}]
  %s1 = inlined_call_operand.hbm [shape: bf16[1152,256], index: 1, kind: input, shape index: {}]
  %s2 = inlined_call_operand.vmem [shape: bf16[32,256], index: 2, kind: output, shape index: {}]
  %s3 = sld [smem:[#allocation0]]
  $region22: #{decoder_forward.6} parent=0
    _
  %s5 = ssub.s32 1, %s3
  %s6 = scalar_select 0, %s5, %s3
  $region1: #{decoder_forward.6} parent=0
    #allocation2 [shape = 'u8[589824]{0}', space=vmem, size = 0x90000, scoped, tag = 'input window, operand 1, single buffered']
    #allocation3 [shape = 's32[1]{0}', space=sflag, size = 0x4, scoped, tag = 'scoped memory for decoder_forward.6']
    %7 = vsyncpa [#allocation3], 0
    // Predicated region
    $region2: #{decoder_forward.6} parent=1 // pred_check
      _
    $region3: #{decoder_forward.6} parent=1 // pred_check_branch
      %9 = sbr.rel (0) target = $region5
    $region4: #{decoder_forward.6} parent=1 // pred_region
      _
    $region5: #{decoder_forward.6} parent=1 // pred_fallthru
      _
    // Predicated region
    $region6: #{decoder_forward.6} parent=1 // pred_check
      _
    $region7: #{decoder_forward.6} parent=1 // pred_check_branch
      %11 = sbr.rel (0) target = $region9
    $region8: #{decoder_forward.6} parent=1 // pred_region
      %s13 = ssub.s32 18432, 18432
      %14 = vsyncadd [#allocation3], %s13
      %s15 = sshll.u32 [#allocation2], 4
      %s16 = int_to_ptr.vmem [resolvable:$true] %s15
      %21 = dma.hbm_to_vmem [thread:$0]  %s1, 18432, %s16, [#allocation3], 128, 128, 8
    $region9: #{decoder_forward.6} parent=1 // pred_fallthru
      _
    // Predicated region
    $region10: #{decoder_forward.6} parent=1 // pred_check
      _
    $region11: #{decoder_forward.6} parent=1 // pred_check_branch
      %23 = sbr.rel (0) target = $region13
    $region12: #{decoder_forward.6} parent=1 // pred_region
      %24 = dma.done [#allocation3], 18432
    $region13: #{decoder_forward.6} parent=1 // pred_fallthru
      _
    %v26 = vld [vmem:[%s0] sm:$0xff]
    %v27 = vld [vmem:[%s0 + $0x8] sm:$0xff]
    %v28 = vld [vmem:[%s0 + $0x10] sm:$0xff]
    %v29 = vld [vmem:[%s0 + $0x18] sm:$0xff]
    %v30 = vld [vmem:[%s0 + $0x20] sm:$0xf]
    %v31 = vld [vmem:[%s0 + $0x24] sm:$0xff]
    %v32 = vld [vmem:[%s0 + $0x2c] sm:$0xff]
    %v33 = vld [vmem:[%s0 + $0x34] sm:$0xff]
    %v34 = vld [vmem:[%s0 + $0x3c] sm:$0xff]
    %v35 = vld [vmem:[%s0 + $0x44] sm:$0xf]
    %v36 = vld [vmem:[%s0 + $0x48] sm:$0xff]
    %v37 = vld [vmem:[%s0 + $0x50] sm:$0xff]
    %v38 = vld [vmem:[%s0 + $0x58] sm:$0xff]
    %v39 = vld [vmem:[%s0 + $0x60] sm:$0xff]
    %v40 = vld [vmem:[%s0 + $0x68] sm:$0xf]
    %v41 = vld [vmem:[%s0 + $0x6c] sm:$0xff]
    %v42 = vld [vmem:[%s0 + $0x74] sm:$0xff]
    %v43 = vld [vmem:[%s0 + $0x7c] sm:$0xff]
    %v44 = vld [vmem:[%s0 + $0x84] sm:$0xff]
    %v45 = vld [vmem:[%s0 + $0x8c] sm:$0xf]
    %v46 = vld [vmem:[#allocation2] sm:$0xff]
    %v47 = vld [vmem:[#allocation2 + $0x8] sm:$0xff]
    %v48 = vld [vmem:[#allocation2 + $0x10] sm:$0xff]
    %v49 = vld [vmem:[#allocation2 + $0x18] sm:$0xff]
    %v50 = vld [vmem:[#allocation2 + $0x20] sm:$0xff]
    %v51 = vld [vmem:[#allocation2 + $0x28] sm:$0xff]
    %v52 = vld [vmem:[#allocation2 + $0x30] sm:$0xff]
    %v53 = vld [vmem:[#allocation2 + $0x38] sm:$0xff]
    %v54 = vld [vmem:[#allocation2 + $0x40] sm:$0xff]
    %v55 = vld [vmem:[#allocation2 + $0x48] sm:$0xff]
    %v56 = vld [vmem:[#allocation2 + $0x50] sm:$0xff]
    %v57 = vld [vmem:[#allocation2 + $0x58] sm:$0xff]
    %v58 = vld [vmem:[#allocation2 + $0x60] sm:$0xff]
    %v59 = vld [vmem:[#allocation2 + $0x68] sm:$0xff]
    %v60 = vld [vmem:[#allocation2 + $0x70] sm:$0xff]
    %v61 = vld [vmem:[#allocation2 + $0x78] sm:$0xff]
    %v62 = vld [vmem:[#allocation2 + $0x80] sm:$0xff]
    %v63 = vld [vmem:[#allocation2 + $0x88] sm:$0xff]
    %v64 = vld [vmem:[#allocation2 + $0x90] sm:$0xff]
    %v65 = vld [vmem:[#allocation2 + $0x98] sm:$0xff]
    %v66 = vld [vmem:[#allocation2 + $0xa0] sm:$0xff]
    %v67 = vld [vmem:[#allocation2 + $0xa8] sm:$0xff]
    %v68 = vld [vmem:[#allocation2 + $0xb0] sm:$0xff]
    %v69 = vld [vmem:[#allocation2 + $0xb8] sm:$0xff]
    %v70 = vld [vmem:[#allocation2 + $0xc0] sm:$0xff]
    %v71 = vld [vmem:[#allocation2 + $0xc8] sm:$0xff]
    %v72 = vld [vmem:[#allocation2 + $0xd0] sm:$0xff]
    %v73 = vld [vmem:[#allocation2 + $0xd8] sm:$0xff]
    %v74 = vld [vmem:[#allocation2 + $0xe0] sm:$0xff]
    %v75 = vld [vmem:[#allocation2 + $0xe8] sm:$0xff]
    %v76 = vld [vmem:[#allocation2 + $0xf0] sm:$0xff]
    %v77 = vld [vmem:[#allocation2 + $0xf8] sm:$0xff]
    %v78 = vld [vmem:[#allocation2 + $0x100] sm:$0xff]
    %v79 = vld [vmem:[#allocation2 + $0x108] sm:$0xff]
    %v80 = vld [vmem:[#allocation2 + $0x110] sm:$0xff]
    %v81 = vld [vmem:[#allocation2 + $0x118] sm:$0xff]
    %v82 = vld [vmem:[#allocation2 + $0x120] sm:$0xff]
    %v83 = vld [vmem:[#allocation2 + $0x128] sm:$0xff]
    %v84 = vld [vmem:[#allocation2 + $0x130] sm:$0xff]
    %v85 = vld [vmem:[#allocation2 + $0x138] sm:$0xff]
    %v86 = vld [vmem:[#allocation2 + $0x140] sm:$0xff]
    %v87 = vld [vmem:[#allocation2 + $0x148] sm:$0xff]
    %v88 = vld [vmem:[#allocation2 + $0x150] sm:$0xff]
    %v89 = vld [vmem:[#allocation2 + $0x158] sm:$0xff]
    %v90 = vld [vmem:[#allocation2 + $0x160] sm:$0xff]
    %v91 = vld [vmem:[#allocation2 + $0x168] sm:$0xff]
    %v92 = vld [vmem:[#allocation2 + $0x170] sm:$0xff]
    %v93 = vld [vmem:[#allocation2 + $0x178] sm:$0xff]
    %v94 = vld [vmem:[#allocation2 + $0x180] sm:$0xff]
    %v95 = vld [vmem:[#allocation2 + $0x188] sm:$0xff]
    %v96 = vld [vmem:[#allocation2 + $0x190] sm:$0xff]
    %v97 = vld [vmem:[#allocation2 + $0x198] sm:$0xff]
    %v98 = vld [vmem:[#allocation2 + $0x1a0] sm:$0xff]
    %v99 = vld [vmem:[#allocation2 + $0x1a8] sm:$0xff]
    %v100 = vld [vmem:[#allocation2 + $0x1b0] sm:$0xff]
    %v101 = vld [vmem:[#allocation2 + $0x1b8] sm:$0xff]
    %v102 = vld [vmem:[#allocation2 + $0x1c0] sm:$0xff]
    %v103 = vld [vmem:[#allocation2 + $0x1c8] sm:$0xff]
    %v104 = vld [vmem:[#allocation2 + $0x1d0] sm:$0xff]
    %v105 = vld [vmem:[#allocation2 + $0x1d8] sm:$0xff]
    %v106 = vld [vmem:[#allocation2 + $0x1e0] sm:$0xff]
    %v107 = vld [vmem:[#allocation2 + $0x1e8] sm:$0xff]
    %v108 = vld [vmem:[#allocation2 + $0x1f0] sm:$0xff]
    %v109 = vld [vmem:[#allocation2 + $0x1f8] sm:$0xff]
    %v110 = vld [vmem:[#allocation2 + $0x200] sm:$0xff]
    %v111 = vld [vmem:[#allocation2 + $0x208] sm:$0xff]
    %v112 = vld [vmem:[#allocation2 + $0x210] sm:$0xff]
    %v113 = vld [vmem:[#allocation2 + $0x218] sm:$0xff]
    %v114 = vld [vmem:[#allocation2 + $0x220] sm:$0xff]
    %v115 = vld [vmem:[#allocation2 + $0x228] sm:$0xff]
    %v116 = vld [vmem:[#allocation2 + $0x230] sm:$0xff]
    %v117 = vld [vmem:[#allocation2 + $0x238] sm:$0xff]
    %v118 = vld [vmem:[#allocation2 + $0x240] sm:$0xff]
    %v119 = vld [vmem:[#allocation2 + $0x248] sm:$0xff]
    %v120 = vld [vmem:[#allocation2 + $0x250] sm:$0xff]
    %v121 = vld [vmem:[#allocation2 + $0x258] sm:$0xff]
    %v122 = vld [vmem:[#allocation2 + $0x260] sm:$0xff]
    %v123 = vld [vmem:[#allocation2 + $0x268] sm:$0xff]
    %v124 = vld [vmem:[#allocation2 + $0x270] sm:$0xff]
    %v125 = vld [vmem:[#allocation2 + $0x278] sm:$0xff]
    %v126 = vld [vmem:[#allocation2 + $0x280] sm:$0xff]
    %v127 = vld [vmem:[#allocation2 + $0x288] sm:$0xff]
    %v128 = vld [vmem:[#allocation2 + $0x290] sm:$0xff]
    %v129 = vld [vmem:[#allocation2 + $0x298] sm:$0xff]
    %v130 = vld [vmem:[#allocation2 + $0x2a0] sm:$0xff]
    %v131 = vld [vmem:[#allocation2 + $0x2a8] sm:$0xff]
    %v132 = vld [vmem:[#allocation2 + $0x2b0] sm:$0xff]
    %v133 = vld [vmem:[#allocation2 + $0x2b8] sm:$0xff]
    %v134 = vld [vmem:[#allocation2 + $0x2c0] sm:$0xff]
    %v135 = vld [vmem:[#allocation2 + $0x2c8] sm:$0xff]
    %v136 = vld [vmem:[#allocation2 + $0x2d0] sm:$0xff]
    %v137 = vld [vmem:[#allocation2 + $0x2d8] sm:$0xff]
    %v138 = vld [vmem:[#allocation2 + $0x2e0] sm:$0xff]
    %v139 = vld [vmem:[#allocation2 + $0x2e8] sm:$0xff]
    %v140 = vld [vmem:[#allocation2 + $0x2f0] sm:$0xff]
    %v141 = vld [vmem:[#allocation2 + $0x2f8] sm:$0xff]
    %v142 = vld [vmem:[#allocation2 + $0x300] sm:$0xff]
    %v143 = vld [vmem:[#allocation2 + $0x308] sm:$0xff]
    %v144 = vld [vmem:[#allocation2 + $0x310] sm:$0xff]
    %v145 = vld [vmem:[#allocation2 + $0x318] sm:$0xff]
    %v146 = vld [vmem:[#allocation2 + $0x320] sm:$0xff]
    %v147 = vld [vmem:[#allocation2 + $0x328] sm:$0xff]
    %v148 = vld [vmem:[#allocation2 + $0x330] sm:$0xff]
    %v149 = vld [vmem:[#allocation2 + $0x338] sm:$0xff]
    %v150 = vld [vmem:[#allocation2 + $0x340] sm:$0xff]
    %v151 = vld [vmem:[#allocation2 + $0x348] sm:$0xff]
    %v152 = vld [vmem:[#allocation2 + $0x350] sm:$0xff]
    %v153 = vld [vmem:[#allocation2 + $0x358] sm:$0xff]
    %v154 = vld [vmem:[#allocation2 + $0x360] sm:$0xff]
    %v155 = vld [vmem:[#allocation2 + $0x368] sm:$0xff]
    %v156 = vld [vmem:[#allocation2 + $0x370] sm:$0xff]
    %v157 = vld [vmem:[#allocation2 + $0x378] sm:$0xff]
    %v158 = vld [vmem:[#allocation2 + $0x380] sm:$0xff]
    %v159 = vld [vmem:[#allocation2 + $0x388] sm:$0xff]
    %v160 = vld [vmem:[#allocation2 + $0x390] sm:$0xff]
    %v161 = vld [vmem:[#allocation2 + $0x398] sm:$0xff]
    %v162 = vld [vmem:[#allocation2 + $0x3a0] sm:$0xff]
    %v163 = vld [vmem:[#allocation2 + $0x3a8] sm:$0xff]
    %v164 = vld [vmem:[#allocation2 + $0x3b0] sm:$0xff]
    %v165 = vld [vmem:[#allocation2 + $0x3b8] sm:$0xff]
    %v166 = vld [vmem:[#allocation2 + $0x3c0] sm:$0xff]
    %v167 = vld [vmem:[#allocation2 + $0x3c8] sm:$0xff]
    %v168 = vld [vmem:[#allocation2 + $0x3d0] sm:$0xff]
    %v169 = vld [vmem:[#allocation2 + $0x3d8] sm:$0xff]
    %v170 = vld [vmem:[#allocation2 + $0x3e0] sm:$0xff]
    %v171 = vld [vmem:[#allocation2 + $0x3e8] sm:$0xff]
    %v172 = vld [vmem:[#allocation2 + $0x3f0] sm:$0xff]
    %v173 = vld [vmem:[#allocation2 + $0x3f8] sm:$0xff]
    %v174 = vld [vmem:[#allocation2 + $0x400] sm:$0xff]
    %v175 = vld [vmem:[#allocation2 + $0x408] sm:$0xff]
    %v176 = vld [vmem:[#allocation2 + $0x410] sm:$0xff]
    %v177 = vld [vmem:[#allocation2 + $0x418] sm:$0xff]
    %v178 = vld [vmem:[#allocation2 + $0x420] sm:$0xff]
    %v179 = vld [vmem:[#allocation2 + $0x428] sm:$0xff]
    %v180 = vld [vmem:[#allocation2 + $0x430] sm:$0xff]
    %v181 = vld [vmem:[#allocation2 + $0x438] sm:$0xff]
    %v182 = vld [vmem:[#allocation2 + $0x440] sm:$0xff]
    %v183 = vld [vmem:[#allocation2 + $0x448] sm:$0xff]
    %v184 = vld [vmem:[#allocation2 + $0x450] sm:$0xff]
    %v185 = vld [vmem:[#allocation2 + $0x458] sm:$0xff]
    %v186 = vld [vmem:[#allocation2 + $0x460] sm:$0xff]
    %v187 = vld [vmem:[#allocation2 + $0x468] sm:$0xff]
    %v188 = vld [vmem:[#allocation2 + $0x470] sm:$0xff]
    %v189 = vld [vmem:[#allocation2 + $0x478] sm:$0xff]
    %v210 = vunpack.c.l.b16 %v26
    %v211 = vunpack.c.h.b16 %v26
    %v212 = vunpack.c.l.b16 %v27
    %v213 = vunpack.c.h.b16 %v27
    %v214 = vunpack.c.l.b16 %v28
    %v215 = vunpack.c.h.b16 %v28
    %v216 = vunpack.c.l.b16 %v29
    %v217 = vunpack.c.h.b16 %v29
    %v218 = vunpack.c.l.b16 %v30
    %v219 = vunpack.c.l.b16 %v31
    %v220 = vunpack.c.h.b16 %v31
    %v221 = vunpack.c.l.b16 %v32
    %v222 = vunpack.c.h.b16 %v32
    %v223 = vunpack.c.l.b16 %v33
    %v224 = vunpack.c.h.b16 %v33
    %v225 = vunpack.c.l.b16 %v34
    %v226 = vunpack.c.h.b16 %v34
    %v227 = vunpack.c.l.b16 %v35
    %v228 = vunpack.c.l.b16 %v36
    %v229 = vunpack.c.h.b16 %v36
    %v230 = vunpack.c.l.b16 %v37
    %v231 = vunpack.c.h.b16 %v37
    %v232 = vunpack.c.l.b16 %v38
    %v233 = vunpack.c.h.b16 %v38
    %v234 = vunpack.c.l.b16 %v39
    %v235 = vunpack.c.h.b16 %v39
    %v236 = vunpack.c.l.b16 %v40
    %v237 = vunpack.c.l.b16 %v41
    %v238 = vunpack.c.h.b16 %v41
    %v239 = vunpack.c.l.b16 %v42
    %v240 = vunpack.c.h.b16 %v42
    %v241 = vunpack.c.l.b16 %v43
    %v242 = vunpack.c.h.b16 %v43
    %v243 = vunpack.c.l.b16 %v44
    %v244 = vunpack.c.h.b16 %v44
    %v245 = vunpack.c.l.b16 %v45
    %v246 = vpack.c.b16 %v219, %v210
    %v247 = vpack.c.b16 %v220, %v211
    %v248 = vpack.c.b16 %v221, %v212
    %v249 = vpack.c.b16 %v222, %v213
    %v250 = vpack.c.b16 %v223, %v214
    %v251 = vpack.c.b16 %v224, %v215
    %v252 = vpack.c.b16 %v225, %v216
    %v253 = vpack.c.b16 %v226, %v217
    %v254 = vpack.c.b16 %v227, %v218
    %v255 = vpack.c.b16 %v237, %v228
    %v256 = vpack.c.b16 %v238, %v229
    %v257 = vpack.c.b16 %v239, %v230
    %v258 = vpack.c.b16 %v240, %v231
    %v259 = vpack.c.b16 %v241, %v232
    %v260 = vpack.c.b16 %v242, %v233
    %v261 = vpack.c.b16 %v243, %v234
    %v262 = vpack.c.b16 %v244, %v235
    %v263 = vpack.c.b16 %v245, %v236
    %v426 = vunpack.c.l.b16 %v46
    %v427 = vunpack.c.h.b16 %v46
    %v428 = vunpack.c.l.b16 %v47
    %v429 = vunpack.c.h.b16 %v47
    %v430 = vunpack.c.l.b16 %v48
    %v431 = vunpack.c.h.b16 %v48
    %v432 = vunpack.c.l.b16 %v49
    %v433 = vunpack.c.h.b16 %v49
    %v434 = vunpack.c.l.b16 %v50
    %v435 = vunpack.c.h.b16 %v50
    %v436 = vunpack.c.l.b16 %v51
    %v437 = vunpack.c.h.b16 %v51
    %v438 = vunpack.c.l.b16 %v52
    %v439 = vunpack.c.h.b16 %v52
    %v440 = vunpack.c.l.b16 %v53
    %v441 = vunpack.c.h.b16 %v53
    %v442 = vunpack.c.l.b16 %v54
    %v443 = vunpack.c.h.b16 %v54
    %v444 = vunpack.c.l.b16 %v55
    %v445 = vunpack.c.h.b16 %v55
    %v446 = vunpack.c.l.b16 %v56
    %v447 = vunpack.c.h.b16 %v56
    %v448 = vunpack.c.l.b16 %v57
    %v449 = vunpack.c.h.b16 %v57
    %v450 = vunpack.c.l.b16 %v58
    %v451 = vunpack.c.h.b16 %v58
    %v452 = vunpack.c.l.b16 %v59
    %v453 = vunpack.c.h.b16 %v59
    %v454 = vunpack.c.l.b16 %v60
    %v455 = vunpack.c.h.b16 %v60
    %v456 = vunpack.c.l.b16 %v61
    %v457 = vunpack.c.h.b16 %v61
    %v458 = vunpack.c.l.b16 %v62
    %v459 = vunpack.c.h.b16 %v62
    %v460 = vunpack.c.l.b16 %v63
    %v461 = vunpack.c.h.b16 %v63
    %v462 = vunpack.c.l.b16 %v64
    %v463 = vunpack.c.h.b16 %v64
    %v464 = vunpack.c.l.b16 %v65
    %v465 = vunpack.c.h.b16 %v65
    %v466 = vunpack.c.l.b16 %v66
    %v467 = vunpack.c.h.b16 %v66
    %v468 = vunpack.c.l.b16 %v67
    %v469 = vunpack.c.h.b16 %v67
    %v470 = vunpack.c.l.b16 %v68
    %v471 = vunpack.c.h.b16 %v68
    %v472 = vunpack.c.l.b16 %v69
    %v473 = vunpack.c.h.b16 %v69
    %v474 = vunpack.c.l.b16 %v70
    %v475 = vunpack.c.h.b16 %v70
    %v476 = vunpack.c.l.b16 %v71
    %v477 = vunpack.c.h.b16 %v71
    %v478 = vunpack.c.l.b16 %v72
    %v479 = vunpack.c.h.b16 %v72
    %v480 = vunpack.c.l.b16 %v73
    %v481 = vunpack.c.h.b16 %v73
    %v482 = vunpack.c.l.b16 %v74
    %v483 = vunpack.c.h.b16 %v74
    %v484 = vunpack.c.l.b16 %v75
    %v485 = vunpack.c.h.b16 %v75
    %v486 = vunpack.c.l.b16 %v76
    %v487 = vunpack.c.h.b16 %v76
    %v488 = vunpack.c.l.b16 %v77
    %v489 = vunpack.c.h.b16 %v77
    %v490 = vunpack.c.l.b16 %v78
    %v491 = vunpack.c.h.b16 %v78
    %v492 = vunpack.c.l.b16 %v79
    %v493 = vunpack.c.h.b16 %v79
    %v494 = vunpack.c.l.b16 %v80
    %v495 = vunpack.c.h.b16 %v80
    %v496 = vunpack.c.l.b16 %v81
    %v497 = vunpack.c.h.b16 %v81
    %v498 = vunpack.c.l.b16 %v82
    %v499 = vunpack.c.h.b16 %v82
    %v500 = vunpack.c.l.b16 %v83
    %v501 = vunpack.c.h.b16 %v83
    %v502 = vunpack.c.l.b16 %v84
    %v503 = vunpack.c.h.b16 %v84
    %v504 = vunpack.c.l.b16 %v85
    %v505 = vunpack.c.h.b16 %v85
    %v506 = vunpack.c.l.b16 %v86
    %v507 = vunpack.c.h.b16 %v86
    %v508 = vunpack.c.l.b16 %v87
    %v509 = vunpack.c.h.b16 %v87
    %v510 = vunpack.c.l.b16 %v88
    %v511 = vunpack.c.h.b16 %v88
    %v512 = vunpack.c.l.b16 %v89
    %v513 = vunpack.c.h.b16 %v89
    %v514 = vunpack.c.l.b16 %v90
    %v515 = vunpack.c.h.b16 %v90
    %v516 = vunpack.c.l.b16 %v91
    %v517 = vunpack.c.h.b16 %v91
    %v518 = vunpack.c.l.b16 %v92
    %v519 = vunpack.c.h.b16 %v92
    %v520 = vunpack.c.l.b16 %v93
    %v521 = vunpack.c.h.b16 %v93
    %v522 = vunpack.c.l.b16 %v94
    %v523 = vunpack.c.h.b16 %v94
    %v524 = vunpack.c.l.b16 %v95
    %v525 = vunpack.c.h.b16 %v95
    %v526 = vunpack.c.l.b16 %v96
    %v527 = vunpack.c.h.b16 %v96
    %v528 = vunpack.c.l.b16 %v97
    %v529 = vunpack.c.h.b16 %v97
    %v530 = vunpack.c.l.b16 %v98
    %v531 = vunpack.c.h.b16 %v98
    %v532 = vunpack.c.l.b16 %v99
    %v533 = vunpack.c.h.b16 %v99
    %v534 = vunpack.c.l.b16 %v100
    %v535 = vunpack.c.h.b16 %v100
    %v536 = vunpack.c.l.b16 %v101
    %v537 = vunpack.c.h.b16 %v101
    %v538 = vunpack.c.l.b16 %v102
    %v539 = vunpack.c.h.b16 %v102
    %v540 = vunpack.c.l.b16 %v103
    %v541 = vunpack.c.h.b16 %v103
    %v542 = vunpack.c.l.b16 %v104
    %v543 = vunpack.c.h.b16 %v104
    %v544 = vunpack.c.l.b16 %v105
    %v545 = vunpack.c.h.b16 %v105
    %v546 = vunpack.c.l.b16 %v106
    %v547 = vunpack.c.h.b16 %v106
    %v548 = vunpack.c.l.b16 %v107
    %v549 = vunpack.c.h.b16 %v107
    %v550 = vunpack.c.l.b16 %v108
    %v551 = vunpack.c.h.b16 %v108
    %v552 = vunpack.c.l.b16 %v109
    %v553 = vunpack.c.h.b16 %v109
    %v554 = vunpack.c.l.b16 %v110
    %v555 = vunpack.c.h.b16 %v110
    %v556 = vunpack.c.l.b16 %v111
    %v557 = vunpack.c.h.b16 %v111
    %v558 = vunpack.c.l.b16 %v112
    %v559 = vunpack.c.h.b16 %v112
    %v560 = vunpack.c.l.b16 %v113
    %v561 = vunpack.c.h.b16 %v113
    %v562 = vunpack.c.l.b16 %v114
    %v563 = vunpack.c.h.b16 %v114
    %v564 = vunpack.c.l.b16 %v115
    %v565 = vunpack.c.h.b16 %v115
    %v566 = vunpack.c.l.b16 %v116
    %v567 = vunpack.c.h.b16 %v116
    %v568 = vunpack.c.l.b16 %v117
    %v569 = vunpack.c.h.b16 %v117
    %v570 = vunpack.c.l.b16 %v118
    %v571 = vunpack.c.h.b16 %v118
    %v572 = vunpack.c.l.b16 %v119
    %v573 = vunpack.c.h.b16 %v119
    %v574 = vunpack.c.l.b16 %v120
    %v575 = vunpack.c.h.b16 %v120
    %v576 = vunpack.c.l.b16 %v121
    %v577 = vunpack.c.h.b16 %v121
    %v578 = vunpack.c.l.b16 %v122
    %v579 = vunpack.c.h.b16 %v122
    %v580 = vunpack.c.l.b16 %v123
    %v581 = vunpack.c.h.b16 %v123
    %v582 = vunpack.c.l.b16 %v124
    %v583 = vunpack.c.h.b16 %v124
    %v584 = vunpack.c.l.b16 %v125
    %v585 = vunpack.c.h.b16 %v125
    %v586 = vunpack.c.l.b16 %v126
    %v587 = vunpack.c.h.b16 %v126
    %v588 = vunpack.c.l.b16 %v127
    %v589 = vunpack.c.h.b16 %v127
    %v590 = vunpack.c.l.b16 %v128
    %v591 = vunpack.c.h.b16 %v128
    %v592 = vunpack.c.l.b16 %v129
    %v593 = vunpack.c.h.b16 %v129
    %v594 = vunpack.c.l.b16 %v130
    %v595 = vunpack.c.h.b16 %v130
    %v596 = vunpack.c.l.b16 %v131
    %v597 = vunpack.c.h.b16 %v131
    %v598 = vunpack.c.l.b16 %v132
    %v599 = vunpack.c.h.b16 %v132
    %v600 = vunpack.c.l.b16 %v133
    %v601 = vunpack.c.h.b16 %v133
    %v602 = vunpack.c.l.b16 %v134
    %v603 = vunpack.c.h.b16 %v134
    %v604 = vunpack.c.l.b16 %v135
    %v605 = vunpack.c.h.b16 %v135
    %v606 = vunpack.c.l.b16 %v136
    %v607 = vunpack.c.h.b16 %v136
    %v608 = vunpack.c.l.b16 %v137
    %v609 = vunpack.c.h.b16 %v137
    %v610 = vunpack.c.l.b16 %v138
    %v611 = vunpack.c.h.b16 %v138
    %v612 = vunpack.c.l.b16 %v139
    %v613 = vunpack.c.h.b16 %v139
    %v614 = vunpack.c.l.b16 %v140
    %v615 = vunpack.c.h.b16 %v140
    %v616 = vunpack.c.l.b16 %v141
    %v617 = vunpack.c.h.b16 %v141
    %v618 = vunpack.c.l.b16 %v142
    %v619 = vunpack.c.h.b16 %v142
    %v620 = vunpack.c.l.b16 %v143
    %v621 = vunpack.c.h.b16 %v143
    %v622 = vunpack.c.l.b16 %v144
    %v623 = vunpack.c.h.b16 %v144
    %v624 = vunpack.c.l.b16 %v145
    %v625 = vunpack.c.h.b16 %v145
    %v626 = vunpack.c.l.b16 %v146
    %v627 = vunpack.c.h.b16 %v146
    %v628 = vunpack.c.l.b16 %v147
    %v629 = vunpack.c.h.b16 %v147
    %v630 = vunpack.c.l.b16 %v148
    %v631 = vunpack.c.h.b16 %v148
    %v632 = vunpack.c.l.b16 %v149
    %v633 = vunpack.c.h.b16 %v149
    %v634 = vunpack.c.l.b16 %v150
    %v635 = vunpack.c.h.b16 %v150
    %v636 = vunpack.c.l.b16 %v151
    %v637 = vunpack.c.h.b16 %v151
    %v638 = vunpack.c.l.b16 %v152
    %v639 = vunpack.c.h.b16 %v152
    %v640 = vunpack.c.l.b16 %v153
    %v641 = vunpack.c.h.b16 %v153
    %v642 = vunpack.c.l.b16 %v154
    %v643 = vunpack.c.h.b16 %v154
    %v644 = vunpack.c.l.b16 %v155
    %v645 = vunpack.c.h.b16 %v155
    %v646 = vunpack.c.l.b16 %v156
    %v647 = vunpack.c.h.b16 %v156
    %v648 = vunpack.c.l.b16 %v157
    %v649 = vunpack.c.h.b16 %v157
    %v650 = vunpack.c.l.b16 %v158
    %v651 = vunpack.c.h.b16 %v158
    %v652 = vunpack.c.l.b16 %v159
    %v653 = vunpack.c.h.b16 %v159
    %v654 = vunpack.c.l.b16 %v160
    %v655 = vunpack.c.h.b16 %v160
    %v656 = vunpack.c.l.b16 %v161
    %v657 = vunpack.c.h.b16 %v161
    %v658 = vunpack.c.l.b16 %v162
    %v659 = vunpack.c.h.b16 %v162
    %v660 = vunpack.c.l.b16 %v163
    %v661 = vunpack.c.h.b16 %v163
    %v662 = vunpack.c.l.b16 %v164
    %v663 = vunpack.c.h.b16 %v164
    %v664 = vunpack.c.l.b16 %v165
    %v665 = vunpack.c.h.b16 %v165
    %v666 = vunpack.c.l.b16 %v166
    %v667 = vunpack.c.h.b16 %v166
    %v668 = vunpack.c.l.b16 %v167
    %v669 = vunpack.c.h.b16 %v167
    %v670 = vunpack.c.l.b16 %v168
    %v671 = vunpack.c.h.b16 %v168
    %v672 = vunpack.c.l.b16 %v169
    %v673 = vunpack.c.h.b16 %v169
    %v674 = vunpack.c.l.b16 %v170
    %v675 = vunpack.c.h.b16 %v170
    %v676 = vunpack.c.l.b16 %v171
    %v677 = vunpack.c.h.b16 %v171
    %v678 = vunpack.c.l.b16 %v172
    %v679 = vunpack.c.h.b16 %v172
    %v680 = vunpack.c.l.b16 %v173
    %v681 = vunpack.c.h.b16 %v173
    %v682 = vunpack.c.l.b16 %v174
    %v683 = vunpack.c.h.b16 %v174
    %v684 = vunpack.c.l.b16 %v175
    %v685 = vunpack.c.h.b16 %v175
    %v686 = vunpack.c.l.b16 %v176
    %v687 = vunpack.c.h.b16 %v176
    %v688 = vunpack.c.l.b16 %v177
    %v689 = vunpack.c.h.b16 %v177
    %v690 = vunpack.c.l.b16 %v178
    %v691 = vunpack.c.h.b16 %v178
    %v692 = vunpack.c.l.b16 %v179
    %v693 = vunpack.c.h.b16 %v179
    %v694 = vunpack.c.l.b16 %v180
    %v695 = vunpack.c.h.b16 %v180
    %v696 = vunpack.c.l.b16 %v181
    %v697 = vunpack.c.h.b16 %v181
    %v698 = vunpack.c.l.b16 %v182
    %v699 = vunpack.c.h.b16 %v182
    %v700 = vunpack.c.l.b16 %v183
    %v701 = vunpack.c.h.b16 %v183
    %v702 = vunpack.c.l.b16 %v184
    %v703 = vunpack.c.h.b16 %v184
    %v704 = vunpack.c.l.b16 %v185
    %v705 = vunpack.c.h.b16 %v185
    %v706 = vunpack.c.l.b16 %v186
    %v707 = vunpack.c.h.b16 %v186
    %v708 = vunpack.c.l.b16 %v187
    %v709 = vunpack.c.h.b16 %v187
    %v710 = vunpack.c.l.b16 %v188
    %v711 = vunpack.c.h.b16 %v188
    %v712 = vunpack.c.l.b16 %v189
    %v713 = vunpack.c.h.b16 %v189
    %v714 = vpack.c.b16 %v428, %v426
    %v715 = vpack.c.b16 %v429, %v427
    %v716 = vpack.c.b16 %v432, %v430
    %v717 = vpack.c.b16 %v433, %v431
    %v718 = vpack.c.b16 %v436, %v434
    %v719 = vpack.c.b16 %v437, %v435
    %v720 = vpack.c.b16 %v440, %v438
    %v721 = vpack.c.b16 %v441, %v439
    %v722 = vpack.c.b16 %v444, %v442
    %v723 = vpack.c.b16 %v445, %v443
    %v724 = vpack.c.b16 %v448, %v446
    %v725 = vpack.c.b16 %v449, %v447
    %v726 = vpack.c.b16 %v452, %v450
    %v727 = vpack.c.b16 %v453, %v451
    %v728 = vpack.c.b16 %v456, %v454
    %v729 = vpack.c.b16 %v457, %v455
    %v730 = vpack.c.b16 %v460, %v458
    %v731 = vpack.c.b16 %v461, %v459
    %v732 = vpack.c.b16 %v464, %v462
    %v733 = vpack.c.b16 %v465, %v463
    %v734 = vpack.c.b16 %v468, %v466
    %v735 = vpack.c.b16 %v469, %v467
    %v736 = vpack.c.b16 %v472, %v470
    %v737 = vpack.c.b16 %v473, %v471
    %v738 = vpack.c.b16 %v476, %v474
    %v739 = vpack.c.b16 %v477, %v475
    %v740 = vpack.c.b16 %v480, %v478
    %v741 = vpack.c.b16 %v481, %v479
    %v742 = vpack.c.b16 %v484, %v482
    %v743 = vpack.c.b16 %v485, %v483
    %v744 = vpack.c.b16 %v488, %v486
    %v745 = vpack.c.b16 %v489, %v487
    %v746 = vpack.c.b16 %v492, %v490
    %v747 = vpack.c.b16 %v493, %v491
    %v748 = vpack.c.b16 %v496, %v494
    %v749 = vpack.c.b16 %v497, %v495
    %v750 = vpack.c.b16 %v500, %v498
    %v751 = vpack.c.b16 %v501, %v499
    %v752 = vpack.c.b16 %v504, %v502
    %v753 = vpack.c.b16 %v505, %v503
    %v754 = vpack.c.b16 %v508, %v506
    %v755 = vpack.c.b16 %v509, %v507
    %v756 = vpack.c.b16 %v512, %v510
    %v757 = vpack.c.b16 %v513, %v511
    %v758 = vpack.c.b16 %v516, %v514
    %v759 = vpack.c.b16 %v517, %v515
    %v760 = vpack.c.b16 %v520, %v518
    %v761 = vpack.c.b16 %v521, %v519
    %v762 = vpack.c.b16 %v524, %v522
    %v763 = vpack.c.b16 %v525, %v523
    %v764 = vpack.c.b16 %v528, %v526
    %v765 = vpack.c.b16 %v529, %v527
    %v766 = vpack.c.b16 %v532, %v530
    %v767 = vpack.c.b16 %v533, %v531
    %v768 = vpack.c.b16 %v536, %v534
    %v769 = vpack.c.b16 %v537, %v535
    %v770 = vpack.c.b16 %v540, %v538
    %v771 = vpack.c.b16 %v541, %v539
    %v772 = vpack.c.b16 %v544, %v542
    %v773 = vpack.c.b16 %v545, %v543
    %v774 = vpack.c.b16 %v548, %v546
    %v775 = vpack.c.b16 %v549, %v547
    %v776 = vpack.c.b16 %v552, %v550
    %v777 = vpack.c.b16 %v553, %v551
    %v778 = vpack.c.b16 %v556, %v554
    %v779 = vpack.c.b16 %v557, %v555
    %v780 = vpack.c.b16 %v560, %v558
    %v781 = vpack.c.b16 %v561, %v559
    %v782 = vpack.c.b16 %v564, %v562
    %v783 = vpack.c.b16 %v565, %v563
    %v784 = vpack.c.b16 %v568, %v566
    %v785 = vpack.c.b16 %v569, %v567
    %v786 = vpack.c.b16 %v572, %v570
    %v787 = vpack.c.b16 %v573, %v571
    %v788 = vpack.c.b16 %v576, %v574
    %v789 = vpack.c.b16 %v577, %v575
    %v790 = vpack.c.b16 %v580, %v578
    %v791 = vpack.c.b16 %v581, %v579
    %v792 = vpack.c.b16 %v584, %v582
    %v793 = vpack.c.b16 %v585, %v583
    %v794 = vpack.c.b16 %v588, %v586
    %v795 = vpack.c.b16 %v589, %v587
    %v796 = vpack.c.b16 %v592, %v590
    %v797 = vpack.c.b16 %v593, %v591
    %v798 = vpack.c.b16 %v596, %v594
    %v799 = vpack.c.b16 %v597, %v595
    %v800 = vpack.c.b16 %v600, %v598
    %v801 = vpack.c.b16 %v601, %v599
    %v802 = vpack.c.b16 %v604, %v602
    %v803 = vpack.c.b16 %v605, %v603
    %v804 = vpack.c.b16 %v608, %v606
    %v805 = vpack.c.b16 %v609, %v607
    %v806 = vpack.c.b16 %v612, %v610
    %v807 = vpack.c.b16 %v613, %v611
    %v808 = vpack.c.b16 %v616, %v614
    %v809 = vpack.c.b16 %v617, %v615
    %v810 = vpack.c.b16 %v620, %v618
    %v811 = vpack.c.b16 %v621, %v619
    %v812 = vpack.c.b16 %v624, %v622
    %v813 = vpack.c.b16 %v625, %v623
    %v814 = vpack.c.b16 %v628, %v626
    %v815 = vpack.c.b16 %v629, %v627
    %v816 = vpack.c.b16 %v632, %v630
    %v817 = vpack.c.b16 %v633, %v631
    %v818 = vpack.c.b16 %v636, %v634
    %v819 = vpack.c.b16 %v637, %v635
    %v820 = vpack.c.b16 %v640, %v638
    %v821 = vpack.c.b16 %v641, %v639
    %v822 = vpack.c.b16 %v644, %v642
    %v823 = vpack.c.b16 %v645, %v643
    %v824 = vpack.c.b16 %v648, %v646
    %v825 = vpack.c.b16 %v649, %v647
    %v826 = vpack.c.b16 %v652, %v650
    %v827 = vpack.c.b16 %v653, %v651
    %v828 = vpack.c.b16 %v656, %v654
    %v829 = vpack.c.b16 %v657, %v655
    %v830 = vpack.c.b16 %v660, %v658
    %v831 = vpack.c.b16 %v661, %v659
    %v832 = vpack.c.b16 %v664, %v662
    %v833 = vpack.c.b16 %v665, %v663
    %v834 = vpack.c.b16 %v668, %v666
    %v835 = vpack.c.b16 %v669, %v667
    %v836 = vpack.c.b16 %v672, %v670
    %v837 = vpack.c.b16 %v673, %v671
    %v838 = vpack.c.b16 %v676, %v674
    %v839 = vpack.c.b16 %v677, %v675
    %v840 = vpack.c.b16 %v680, %v678
    %v841 = vpack.c.b16 %v681, %v679
    %v842 = vpack.c.b16 %v684, %v682
    %v843 = vpack.c.b16 %v685, %v683
    %v844 = vpack.c.b16 %v688, %v686
    %v845 = vpack.c.b16 %v689, %v687
    %v846 = vpack.c.b16 %v692, %v690
    %v847 = vpack.c.b16 %v693, %v691
    %v848 = vpack.c.b16 %v696, %v694
    %v849 = vpack.c.b16 %v697, %v695
    %v850 = vpack.c.b16 %v700, %v698
    %v851 = vpack.c.b16 %v701, %v699
    %v852 = vpack.c.b16 %v704, %v702
    %v853 = vpack.c.b16 %v705, %v703
    %v854 = vpack.c.b16 %v708, %v706
    %v855 = vpack.c.b16 %v709, %v707
    %v856 = vpack.c.b16 %v712, %v710
    %v857 = vpack.c.b16 %v713, %v711
    %1002 = vmatprep.subr.bf16.mxu0 %v715
    %1003 = vmatpush1.bf16.msra.mxu0 %v714
    %1004 = vmatprep.subr.bf16.mxu0 %v717
    %1005 = vmatpush1.bf16.msra.mxu0 %v716
    %1006 = vmatprep.subr.bf16.mxu0 %v719
    %1007 = vmatpush1.bf16.msra.mxu0 %v718
    %1008 = vmatprep.subr.bf16.mxu0 %v721
    %1009 = vmatpush1.bf16.msra.mxu0 %v720
    %1010 = vmatprep.subr.bf16.mxu0 %v723
    %1011 = vmatpush1.bf16.msra.mxu0 %v722
    %1012 = vmatprep.subr.bf16.mxu0 %v725
    %1013 = vmatpush1.bf16.msra.mxu0 %v724
    %1014 = vmatprep.subr.bf16.mxu0 %v727
    %1015 = vmatpush1.bf16.msra.mxu0 %v726
    %1016 = vmatprep.subr.bf16.mxu0 %v729
    %1017 = vmatpush1.bf16.msra.mxu0 %v728
    %1018 = vmatprep.subr.bf16.mxu0 %v731
    %1019 = vmatpush1.bf16.msra.mxu0 %v730
    %1020 = vmatprep.subr.bf16.mxu0 %v733
    %1021 = vmatpush1.bf16.msra.mxu0 %v732
    %1022 = vmatprep.subr.bf16.mxu0 %v735
    %1023 = vmatpush1.bf16.msra.mxu0 %v734
    %1024 = vmatprep.subr.bf16.mxu0 %v737
    %1025 = vmatpush1.bf16.msra.mxu0 %v736
    %1026 = vmatprep.subr.bf16.mxu0 %v739
    %1027 = vmatpush1.bf16.msra.mxu0 %v738
    %1028 = vmatprep.subr.bf16.mxu0 %v741
    %1029 = vmatpush1.bf16.msra.mxu0 %v740
    %1030 = vmatprep.subr.bf16.mxu0 %v743
    %1031 = vmatpush1.bf16.msra.mxu0 %v742
    %1032 = vmatprep.subr.bf16.mxu0 %v745
    %1033 = vmatpush1.bf16.msra.mxu0 %v744
    %1034 = vmatprep.mubr.bf16.mxu0 %v247
    %1035 = vmatmul.mubr.bf16.gmra.mrb[0].mxu0 %v246
    %v1036 = vpop.f32.mrb[0].mxu0
    %v1037 = vadd.f32 0.0, %v1036
    %v1038 = vpop.f32.mrb[0].mxu0
    %v1039 = vadd.f32 0.0, %v1038
    %v1040 = vpop.f32.mrb[0].mxu0
    %v1041 = vadd.f32 0.0, %v1040
    %v1042 = vpop.f32.mrb[0].mxu0
    %v1043 = vadd.f32 0.0, %v1042
    %1044 = vmatprep.mubr.bf16.mxu0 %v256
    %1045 = vmatmul.mubr.bf16.gmra.mrb[0].mxu0 %v255
    %v1046 = vpop.f32.mrb[0].mxu0
    %v1047 = vadd.f32 0.0, %v1046
    %v1048 = vpop.f32.mrb[0].mxu0
    %v1049 = vadd.f32 0.0, %v1048
    %v1050 = vpop.f32.mrb[0].mxu0
    %v1051 = vadd.f32 0.0, %v1050
    %v1052 = vpop.f32.mrb[0].mxu0
    %v1053 = vadd.f32 0.0, %v1052
    %1054 = vdwg.mxu0
    %1055 = vmatprep.subr.bf16.mxu0 %v747
    %1056 = vmatpush1.bf16.msra.mxu0 %v746
    %1057 = vmatprep.subr.bf16.mxu0 %v749
    %1058 = vmatpush1.bf16.msra.mxu0 %v748
    %1059 = vmatprep.subr.bf16.mxu0 %v751
    %1060 = vmatpush1.bf16.msra.mxu0 %v750
    %1061 = vmatprep.subr.bf16.mxu0 %v753
    %1062 = vmatpush1.bf16.msra.mxu0 %v752
    %1063 = vmatprep.subr.bf16.mxu0 %v755
    %1064 = vmatpush1.bf16.msra.mxu0 %v754
    %1065 = vmatprep.subr.bf16.mxu0 %v757
    %1066 = vmatpush1.bf16.msra.mxu0 %v756
    %1067 = vmatprep.subr.bf16.mxu0 %v759
    %1068 = vmatpush1.bf16.msra.mxu0 %v758
    %1069 = vmatprep.subr.bf16.mxu0 %v761
    %1070 = vmatpush1.bf16.msra.mxu0 %v760
    %1071 = vmatprep.subr.bf16.mxu0 %v763
    %1072 = vmatpush1.bf16.msra.mxu0 %v762
    %1073 = vmatprep.subr.bf16.mxu0 %v765
    %1074 = vmatpush1.bf16.msra.mxu0 %v764
    %1075 = vmatprep.subr.bf16.mxu0 %v767
    %1076 = vmatpush1.bf16.msra.mxu0 %v766
    %1077 = vmatprep.subr.bf16.mxu0 %v769
    %1078 = vmatpush1.bf16.msra.mxu0 %v768
    %1079 = vmatprep.subr.bf16.mxu0 %v771
    %1080 = vmatpush1.bf16.msra.mxu0 %v770
    %1081 = vmatprep.subr.bf16.mxu0 %v773
    %1082 = vmatpush1.bf16.msra.mxu0 %v772
    %1083 = vmatprep.subr.bf16.mxu0 %v775
    %1084 = vmatpush1.bf16.msra.mxu0 %v774
    %1085 = vmatprep.subr.bf16.mxu0 %v777
    %1086 = vmatpush1.bf16.msra.mxu0 %v776
    %1087 = vmatprep.mubr.bf16.mxu0 %v249
    %1088 = vmatmul.mubr.bf16.gmra.mrb[0].mxu0 %v248
    %v1089 = vpop.f32.mrb[0].mxu0
    %v1090 = vadd.f32 %v1037, %v1089
    %v1091 = vpop.f32.mrb[0].mxu0
    %v1092 = vadd.f32 %v1039, %v1091
    %v1093 = vpop.f32.mrb[0].mxu0
    %v1094 = vadd.f32 %v1041, %v1093
    %v1095 = vpop.f32.mrb[0].mxu0
    %v1096 = vadd.f32 %v1043, %v1095
    %1097 = vmatprep.mubr.bf16.mxu0 %v258
    %1098 = vmatmul.mubr.bf16.gmra.mrb[0].mxu0 %v257
    %v1099 = vpop.f32.mrb[0].mxu0
    %v1100 = vadd.f32 %v1047, %v1099
    %v1101 = vpop.f32.mrb[0].mxu0
    %v1102 = vadd.f32 %v1049, %v1101
    %v1103 = vpop.f32.mrb[0].mxu0
    %v1104 = vadd.f32 %v1051, %v1103
    %v1105 = vpop.f32.mrb[0].mxu0
    %v1106 = vadd.f32 %v1053, %v1105
    %1107 = vdwg.mxu0
    %1108 = vmatprep.subr.bf16.mxu0 %v779
    %1109 = vmatpush1.bf16.msra.mxu0 %v778
    %1110 = vmatprep.subr.bf16.mxu0 %v781
    %1111 = vmatpush1.bf16.msra.mxu0 %v780
    %1112 = vmatprep.subr.bf16.mxu0 %v783
    %1113 = vmatpush1.bf16.msra.mxu0 %v782
    %1114 = vmatprep.subr.bf16.mxu0 %v785
    %1115 = vmatpush1.bf16.msra.mxu0 %v784
    %1116 = vmatprep.subr.bf16.mxu0 %v787
    %1117 = vmatpush1.bf16.msra.mxu0 %v786
    %1118 = vmatprep.subr.bf16.mxu0 %v789
    %1119 = vmatpush1.bf16.msra.mxu0 %v788
    %1120 = vmatprep.subr.bf16.mxu0 %v791
    %1121 = vmatpush1.bf16.msra.mxu0 %v790
    %1122 = vmatprep.subr.bf16.mxu0 %v793
    %1123 = vmatpush1.bf16.msra.mxu0 %v792
    %1124 = vmatprep.subr.bf16.mxu0 %v795
    %1125 = vmatpush1.bf16.msra.mxu0 %v794
    %1126 = vmatprep.subr.bf16.mxu0 %v797
    %1127 = vmatpush1.bf16.msra.mxu0 %v796
    %1128 = vmatprep.subr.bf16.mxu0 %v799
    %1129 = vmatpush1.bf16.msra.mxu0 %v798
    %1130 = vmatprep.subr.bf16.mxu0 %v801
    %1131 = vmatpush1.bf16.msra.mxu0 %v800
    %1132 = vmatprep.subr.bf16.mxu0 %v803
    %1133 = vmatpush1.bf16.msra.mxu0 %v802
    %1134 = vmatprep.subr.bf16.mxu0 %v805
    %1135 = vmatpush1.bf16.msra.mxu0 %v804
    %1136 = vmatprep.subr.bf16.mxu0 %v807
    %1137 = vmatpush1.bf16.msra.mxu0 %v806
    %1138 = vmatprep.subr.bf16.mxu0 %v809
    %1139 = vmatpush1.bf16.msra.mxu0 %v808
    %1140 = vmatprep.mubr.bf16.mxu0 %v251
    %1141 = vmatmul.mubr.bf16.gmra.mrb[0].mxu0 %v250
    %v1142 = vpop.f32.mrb[0].mxu0
    %v1143 = vadd.f32 %v1090, %v1142
    %v1144 = vpop.f32.mrb[0].mxu0
    %v1145 = vadd.f32 %v1092, %v1144
    %v1146 = vpop.f32.mrb[0].mxu0
    %v1147 = vadd.f32 %v1094, %v1146
    %v1148 = vpop.f32.mrb[0].mxu0
    %v1149 = vadd.f32 %v1096, %v1148
    %1150 = vmatprep.mubr.bf16.mxu0 %v260
    %1151 = vmatmul.mubr.bf16.gmra.mrb[0].mxu0 %v259
    %v1152 = vpop.f32.mrb[0].mxu0
    %v1153 = vadd.f32 %v1100, %v1152
    %v1154 = vpop.f32.mrb[0].mxu0
    %v1155 = vadd.f32 %v1102, %v1154
    %v1156 = vpop.f32.mrb[0].mxu0
    %v1157 = vadd.f32 %v1104, %v1156
    %v1158 = vpop.f32.mrb[0].mxu0
    %v1159 = vadd.f32 %v1106, %v1158
    %1160 = vdwg.mxu0
    %1161 = vmatprep.subr.bf16.mxu0 %v811
    %1162 = vmatpush1.bf16.msra.mxu0 %v810
    %1163 = vmatprep.subr.bf16.mxu0 %v813
    %1164 = vmatpush1.bf16.msra.mxu0 %v812
    %1165 = vmatprep.subr.bf16.mxu0 %v815
    %1166 = vmatpush1.bf16.msra.mxu0 %v814
    %1167 = vmatprep.subr.bf16.mxu0 %v817
    %1168 = vmatpush1.bf16.msra.mxu0 %v816
    %1169 = vmatprep.subr.bf16.mxu0 %v819
    %1170 = vmatpush1.bf16.msra.mxu0 %v818
    %1171 = vmatprep.subr.bf16.mxu0 %v821
    %1172 = vmatpush1.bf16.msra.mxu0 %v820
    %1173 = vmatprep.subr.bf16.mxu0 %v823
    %1174 = vmatpush1.bf16.msra.mxu0 %v822
    %1175 = vmatprep.subr.bf16.mxu0 %v825
    %1176 = vmatpush1.bf16.msra.mxu0 %v824
    %1177 = vmatprep.subr.bf16.mxu0 %v827
    %1178 = vmatpush1.bf16.msra.mxu0 %v826
    %1179 = vmatprep.subr.bf16.mxu0 %v829
    %1180 = vmatpush1.bf16.msra.mxu0 %v828
    %1181 = vmatprep.subr.bf16.mxu0 %v831
    %1182 = vmatpush1.bf16.msra.mxu0 %v830
    %1183 = vmatprep.subr.bf16.mxu0 %v833
    %1184 = vmatpush1.bf16.msra.mxu0 %v832
    %1185 = vmatprep.subr.bf16.mxu0 %v835
    %1186 = vmatpush1.bf16.msra.mxu0 %v834
    %1187 = vmatprep.subr.bf16.mxu0 %v837
    %1188 = vmatpush1.bf16.msra.mxu0 %v836
    %1189 = vmatprep.subr.bf16.mxu0 %v839
    %1190 = vmatpush1.bf16.msra.mxu0 %v838
    %1191 = vmatprep.subr.bf16.mxu0 %v841
    %1192 = vmatpush1.bf16.msra.mxu0 %v840
    %1193 = vmatprep.mubr.bf16.mxu0 %v253
    %1194 = vmatmul.mubr.bf16.gmra.mrb[0].mxu0 %v252
    %v1195 = vpop.f32.mrb[0].mxu0
    %v1196 = vadd.f32 %v1143, %v1195
    %v1197 = vpop.f32.mrb[0].mxu0
    %v1198 = vadd.f32 %v1145, %v1197
    %v1199 = vpop.f32.mrb[0].mxu0
    %v1200 = vadd.f32 %v1147, %v1199
    %v1201 = vpop.f32.mrb[0].mxu0
    %v1202 = vadd.f32 %v1149, %v1201
    %1203 = vmatprep.mubr.bf16.mxu0 %v262
    %1204 = vmatmul.mubr.bf16.gmra.mrb[0].mxu0 %v261
    %v1205 = vpop.f32.mrb[0].mxu0
    %v1206 = vadd.f32 %v1153, %v1205
    %v1207 = vpop.f32.mrb[0].mxu0
    %v1208 = vadd.f32 %v1155, %v1207
    %v1209 = vpop.f32.mrb[0].mxu0
    %v1210 = vadd.f32 %v1157, %v1209
    %v1211 = vpop.f32.mrb[0].mxu0
    %v1212 = vadd.f32 %v1159, %v1211
    %1213 = vdwg.mxu0
    %1214 = vmatprep.subr.bf16.mxu0 %v843
    %1215 = vmatpush1.bf16.msra.mxu0 %v842
    %1216 = vmatprep.subr.bf16.mxu0 %v845
    %1217 = vmatpush1.bf16.msra.mxu0 %v844
    %1218 = vmatprep.subr.bf16.mxu0 %v847
    %1219 = vmatpush1.bf16.msra.mxu0 %v846
    %1220 = vmatprep.subr.bf16.mxu0 %v849
    %1221 = vmatpush1.bf16.msra.mxu0 %v848
    %1222 = vmatprep.subr.bf16.mxu0 %v851
    %1223 = vmatpush1.bf16.msra.mxu0 %v850
    %1224 = vmatprep.subr.bf16.mxu0 %v853
    %1225 = vmatpush1.bf16.msra.mxu0 %v852
    %1226 = vmatprep.subr.bf16.mxu0 %v855
    %1227 = vmatpush1.bf16.msra.mxu0 %v854
    %1228 = vmatprep.subr.bf16.mxu0 %v857
    %1229 = vmatpush1.bf16.msra.mxu0 %v856
    %1230 = vmatprep.subr.bf16.mxu0 0
    %1231 = vmatpush1.bf16.msra.mxu0 0
    %1232 = vmatprep.subr.bf16.mxu0 0
    %1233 = vmatpush1.bf16.msra.mxu0 0
    %1234 = vmatprep.subr.bf16.mxu0 0
    %1235 = vmatpush1.bf16.msra.mxu0 0
    %1236 = vmatprep.subr.bf16.mxu0 0
    %1237 = vmatpush1.bf16.msra.mxu0 0
    %1238 = vmatprep.subr.bf16.mxu0 0
    %1239 = vmatpush1.bf16.msra.mxu0 0
    %1240 = vmatprep.subr.bf16.mxu0 0
    %1241 = vmatpush1.bf16.msra.mxu0 0
    %1242 = vmatprep.subr.bf16.mxu0 0
    %1243 = vmatpush1.bf16.msra.mxu0 0
    %1244 = vmatprep.subr.bf16.mxu0 0
    %1245 = vmatpush1.bf16.msra.mxu0 0
    %1246 = vmatprep.mubr.bf16.mxu0 0
    %1247 = vmatmul.mubr.bf16.gmra.mrb[0].mxu0 %v254
    %v1248 = vpop.f32.mrb[0].mxu0
    %v1249 = vadd.f32 %v1196, %v1248
    %v1250 = vpop.f32.mrb[0].mxu0
    %v1251 = vadd.f32 %v1198, %v1250
    %v1252 = vpop.f32.mrb[0].mxu0
    %v1253 = vadd.f32 %v1200, %v1252
    %v1254 = vpop.f32.mrb[0].mxu0
    %v1255 = vadd.f32 %v1202, %v1254
    %1256 = vmatprep.mubr.bf16.mxu0 0
    %1257 = vmatmul.mubr.bf16.gmra.mrb[0].mxu0 %v263
    %v1258 = vpop.f32.mrb[0].mxu0
    %v1259 = vadd.f32 %v1206, %v1258
    %v1260 = vpop.f32.mrb[0].mxu0
    %v1261 = vadd.f32 %v1208, %v1260
    %v1262 = vpop.f32.mrb[0].mxu0
    %v1263 = vadd.f32 %v1210, %v1262
    %v1264 = vpop.f32.mrb[0].mxu0
    %v1265 = vadd.f32 %v1212, %v1264
    %1266 = vdwg.mxu0
    %v1267 = vadd.f32 %v1249, %v1253
    %v1268 = vadd.f32 %v1267, %v1259
    %v1269 = vadd.f32 %v1268, %v1263
    %v1270 = vrot.slane %v1269, 4
    %v1271 = vadd.f32 %v1269, %v1270
    %v1272 = vrot.slane %v1271, 2
    %v1273 = vadd.f32 %v1271, %v1272
    %v1274 = vrot.slane %v1273, 1
    %v1275 = vadd.f32 %v1273, %v1274
    %v1276 = vadd.f32 %v1251, %v1255
    %v1277 = vadd.f32 %v1276, %v1261
    %v1278 = vadd.f32 %v1277, %v1265
    %v1279 = vrot.slane %v1278, 4
    %v1280 = vadd.f32 %v1278, %v1279
    %v1281 = vrot.slane %v1280, 2
    %v1282 = vadd.f32 %v1280, %v1281
    %v1283 = vrot.slane %v1282, 1
    %v1284 = vadd.f32 %v1282, %v1283
    %v1285 = vmul.f32 %v1249, %v1249
    %v1286 = vmul.f32 %v1251, %v1251
    %v1287 = vmul.f32 %v1253, %v1253
    %v1288 = vmul.f32 %v1255, %v1255
    %v1289 = vmul.f32 %v1259, %v1259
    %v1290 = vmul.f32 %v1261, %v1261
    %v1291 = vmul.f32 %v1263, %v1263
    %v1292 = vmul.f32 %v1265, %v1265
    %v1293 = vadd.f32 %v1285, %v1287
    %v1294 = vadd.f32 %v1293, %v1289
    %v1295 = vadd.f32 %v1294, %v1291
    %v1296 = vrot.slane %v1295, 4
    %v1297 = vadd.f32 %v1295, %v1296
    %v1298 = vrot.slane %v1297, 2
    %v1299 = vadd.f32 %v1297, %v1298
    %v1300 = vrot.slane %v1299, 1
    %v1301 = vadd.f32 %v1299, %v1300
    %v1302 = vadd.f32 %v1286, %v1288
    %v1303 = vadd.f32 %v1302, %v1290
    %v1304 = vadd.f32 %v1303, %v1292
    %v1305 = vrot.slane %v1304, 4
    %v1306 = vadd.f32 %v1304, %v1305
    %v1307 = vrot.slane %v1306, 2
    %v1308 = vadd.f32 %v1306, %v1307
    %v1309 = vrot.slane %v1308, 1
    %v1310 = vadd.f32 %v1308, %v1309
    %1311 = vrot.lane.b32.xlu0 %v1275, 64
    %v1312 = vpop.permute.xlu0 %1311
    %1313 = vrot.lane.b32.xlu0 %v1284, 64
    %v1314 = vpop.permute.xlu0 %1313
    %v1315 = vlaneseq
    %v1316 = vand.u32 %v1315, 127
    %vm1317 = vcmp.lt.s32.totalorder %v1316, 64
    %v1318 = vsel %vm1317, %v1312, %v1314
    %v1319 = vsel %vm1317, %v1314, %v1312
    %v1320 = vadd.f32 %v1275, %v1319
    %v1321 = vadd.f32 %v1284, %v1318
    %1322 = vrot.lane.b32.xlu0 %v1301, 64
    %v1323 = vpop.permute.xlu0 %1322
    %1324 = vrot.lane.b32.xlu0 %v1310, 64
    %v1325 = vpop.permute.xlu0 %1324
    %v1326 = vsel %vm1317, %v1323, %v1325
    %v1327 = vsel %vm1317, %v1325, %v1323
    %v1328 = vadd.f32 %v1301, %v1327
    %v1329 = vadd.f32 %v1310, %v1326
    %v1330 = vadd.f32 %v1320, %v1321
    %v1331 = vadd.f32 %v1328, %v1329
    %v1332 = vmul.f32 %v1330, 0.0078125
    %v1333 = vmul.f32 %v1331, 0.0078125
    %v1334 = vmul.f32 %v1332, %v1332
    %v1335 = vsub.f32 %v1333, %v1334
    %v1336 = vmax.f32 %v1335, 0.0
    %v1337 = vadd.f32 %v1336, 1e-05
    %v1338 = vrsqrt.pop %v1337
    %v1339 = vlaneseq
    %v1340 = vshrl.u32 %v1339, 7
    %v1341 = vsub.s32 0, %v1340
    %v1342 = vrot.slane %v1332, %v1341
    %v1343 = vsub.f32 %v1249, %v1342
    %v1344 = vsub.f32 %v1251, %v1342
    %v1345 = vsub.f32 %v1253, %v1342
    %v1346 = vsub.f32 %v1255, %v1342
    %v1347 = vsub.f32 %v1259, %v1342
    %v1348 = vsub.f32 %v1261, %v1342
    %v1349 = vsub.f32 %v1263, %v1342
    %v1350 = vsub.f32 %v1265, %v1342
    %v1351 = vlaneseq
    %v1352 = vshrl.u32 %v1351, 7
    %v1353 = vsub.s32 0, %v1352
    %v1354 = vrot.slane %v1338, %v1353
    %v1355 = vmul.f32 %v1343, %v1354
    %v1356 = vmul.f32 %v1344, %v1354
    %v1357 = vmul.f32 %v1345, %v1354
    %v1358 = vmul.f32 %v1346, %v1354
    %v1359 = vmul.f32 %v1347, %v1354
    %v1360 = vmul.f32 %v1348, %v1354
    %v1361 = vmul.f32 %v1349, %v1354
    %v1362 = vmul.f32 %v1350, %v1354
    %v1363 = vmax.f32 %v1355, 0.0
    %v1364 = vmax.f32 %v1356, 0.0
    %v1365 = vmax.f32 %v1357, 0.0
    %v1366 = vmax.f32 %v1358, 0.0
    %v1367 = vmax.f32 %v1359, 0.0
    %v1368 = vmax.f32 %v1360, 0.0
    %v1369 = vmax.f32 %v1361, 0.0
    %v1370 = vmax.f32 %v1362, 0.0
    %v1371 = vpack.c.bf16 %v1365, %v1363
    %v1372 = vpack.c.bf16 %v1366, %v1364
    %v1373 = vpack.c.bf16 %v1369, %v1367
    %v1374 = vpack.c.bf16 %v1370, %v1368
    %v1379 = vunpack.c.l.b16 %v1371
    %v1380 = vunpack.c.l.b16 %v1372
    %v1381 = vunpack.c.h.b16 %v1371
    %v1382 = vunpack.c.h.b16 %v1372
    %v1383 = vunpack.c.l.b16 %v1373
    %v1384 = vunpack.c.l.b16 %v1374
    %v1385 = vunpack.c.h.b16 %v1373
    %v1386 = vunpack.c.h.b16 %v1374
    %v1387 = vpack.c.b16 %v1380, %v1379
    %v1388 = vpack.c.b16 %v1382, %v1381
    %v1389 = vpack.c.b16 %v1384, %v1383
    %v1390 = vpack.c.b16 %v1386, %v1385
    %1395 = vst [vmem:[%s2] sm:$0xff] %v1387
    %1396 = vst [vmem:[%s2 + $0x8] sm:$0xff] %v1388
    %1397 = vst [vmem:[%s2 + $0x10] sm:$0xff] %v1389
    %1398 = vst [vmem:[%s2 + $0x18] sm:$0xff] %v1390
    // Predicated region
    $region14: #{decoder_forward.6} parent=1 // pred_check
      _
    $region15: #{decoder_forward.6} parent=1 // pred_check_branch
      %1400 = sbr.rel (0) target = $region17
    $region16: #{decoder_forward.6} parent=1 // pred_region
      _
    $region17: #{decoder_forward.6} parent=1 // pred_fallthru
      _
    // Predicated region
    $region18: #{decoder_forward.6} parent=1 // pred_check
      _
    $region19: #{decoder_forward.6} parent=1 // pred_check_branch
      %1402 = sbr.rel (0) target = $region21
    $region20: #{decoder_forward.6} parent=1 // pred_region
      _
    $region21: #{decoder_forward.6} parent=1 // pred_fallthru
      _
    %1403 = vsyncpa [#allocation3], 1

// kernel: decoder_forward.7
$region0: #{decoder_forward.7}
  #allocation0 [shape = 'u32[]', space=smem, size = 0x4, offset = 0x4, fixed_abs, tag = 'smem constant byte address 0x4 - core index']
  #allocation1 [shape = 'u32[144,128]{1,0:T(1,128)}', space=vmem, size = 0x12000, scoped, tag = 'internal scratch']
  %s0 = inlined_call_operand.vmem [shape: bf16[128,576], index: 0, kind: input, shape index: {}]
  %s1 = inlined_call_operand.hbm [shape: bf16[576,128], index: 1, kind: input, shape index: {}]
  %s2 = inlined_call_operand.vmem [shape: bf16[128,128], index: 2, kind: output, shape index: {}]
  %s3 = sld [smem:[#allocation0]]
  $region22: #{decoder_forward.7} parent=0
    _
  %s5 = ssub.s32 1, %s3
  %s6 = scalar_select 0, %s5, %s3
  $region1: #{decoder_forward.7} parent=0
    #allocation2 [shape = 'u8[147456]{0}', space=vmem, size = 0x24000, scoped, tag = 'input window, operand 1, single buffered']
    #allocation3 [shape = 's32[1]{0}', space=sflag, size = 0x4, scoped, tag = 'scoped memory for decoder_forward.7']
    %7 = vsyncpa [#allocation3], 0
    // Predicated region
    $region2: #{decoder_forward.7} parent=1 // pred_check
      _
    $region3: #{decoder_forward.7} parent=1 // pred_check_branch
      %9 = sbr.rel (0) target = $region5
    $region4: #{decoder_forward.7} parent=1 // pred_region
      _
    $region5: #{decoder_forward.7} parent=1 // pred_fallthru
      _
    // Predicated region
    $region6: #{decoder_forward.7} parent=1 // pred_check
      _
    $region7: #{decoder_forward.7} parent=1 // pred_check_branch
      %11 = sbr.rel (0) target = $region9
    $region8: #{decoder_forward.7} parent=1 // pred_region
      %s13 = ssub.s32 4608, 4608
      %14 = vsyncadd [#allocation3], %s13
      %s15 = sshll.u32 [#allocation2], 4
      %s16 = int_to_ptr.vmem [resolvable:$true] %s15
      %21 = dma.hbm_to_vmem [thread:$0]  %s1, 4608, %s16, [#allocation3], 64, 64, 4
    $region9: #{decoder_forward.7} parent=1 // pred_fallthru
      _
    // Predicated region
    $region10: #{decoder_forward.7} parent=1 // pred_check
      _
    $region11: #{decoder_forward.7} parent=1 // pred_check_branch
      %23 = sbr.rel (0) target = $region13
    $region12: #{decoder_forward.7} parent=1 // pred_region
      %24 = dma.done [#allocation3], 4608
    $region13: #{decoder_forward.7} parent=1 // pred_fallthru
      _
    %v26 = vld [vmem:[%s0] sm:$0xff]
    %v27 = vld [vmem:[%s0 + $0x8] sm:$0xff]
    %v28 = vld [vmem:[%s0 + $0x10] sm:$0xf]
    %v29 = vld [vmem:[%s0 + $0x14] sm:$0xff]
    %v30 = vld [vmem:[%s0 + $0x1c] sm:$0xff]
    %v31 = vld [vmem:[%s0 + $0x24] sm:$0xf]
    %v32 = vld [vmem:[%s0 + $0x28] sm:$0xff]
    %v33 = vld [vmem:[%s0 + $0x30] sm:$0xff]
    %v34 = vld [vmem:[%s0 + $0x38] sm:$0xf]
    %v35 = vld [vmem:[%s0 + $0x3c] sm:$0xff]
    %v36 = vld [vmem:[%s0 + $0x44] sm:$0xff]
    %v37 = vld [vmem:[%s0 + $0x4c] sm:$0xf]
    %v38 = vld [vmem:[%s0 + $0x50] sm:$0xff]
    %v39 = vld [vmem:[%s0 + $0x58] sm:$0xff]
    %v40 = vld [vmem:[%s0 + $0x60] sm:$0xf]
    %v41 = vld [vmem:[%s0 + $0x64] sm:$0xff]
    %v42 = vld [vmem:[%s0 + $0x6c] sm:$0xff]
    %v43 = vld [vmem:[%s0 + $0x74] sm:$0xf]
    %v44 = vld [vmem:[%s0 + $0x78] sm:$0xff]
    %v45 = vld [vmem:[%s0 + $0x80] sm:$0xff]
    %v46 = vld [vmem:[%s0 + $0x88] sm:$0xf]
    %v47 = vld [vmem:[%s0 + $0x8c] sm:$0xff]
    %v48 = vld [vmem:[%s0 + $0x94] sm:$0xff]
    %v49 = vld [vmem:[%s0 + $0x9c] sm:$0xf]
    %v50 = vld [vmem:[%s0 + $0xa0] sm:$0xff]
    %v51 = vld [vmem:[%s0 + $0xa8] sm:$0xff]
    %v52 = vld [vmem:[%s0 + $0xb0] sm:$0xf]
    %v53 = vld [vmem:[%s0 + $0xb4] sm:$0xff]
    %v54 = vld [vmem:[%s0 + $0xbc] sm:$0xff]
    %v55 = vld [vmem:[%s0 + $0xc4] sm:$0xf]
    %v56 = vld [vmem:[%s0 + $0xc8] sm:$0xff]
    %v57 = vld [vmem:[%s0 + $0xd0] sm:$0xff]
    %v58 = vld [vmem:[%s0 + $0xd8] sm:$0xf]
    %v59 = vld [vmem:[%s0 + $0xdc] sm:$0xff]
    %v60 = vld [vmem:[%s0 + $0xe4] sm:$0xff]
    %v61 = vld [vmem:[%s0 + $0xec] sm:$0xf]
    %v62 = vld [vmem:[%s0 + $0xf0] sm:$0xff]
    %v63 = vld [vmem:[%s0 + $0xf8] sm:$0xff]
    %v64 = vld [vmem:[%s0 + $0x100] sm:$0xf]
    %v65 = vld [vmem:[%s0 + $0x104] sm:$0xff]
    %v66 = vld [vmem:[%s0 + $0x10c] sm:$0xff]
    %v67 = vld [vmem:[%s0 + $0x114] sm:$0xf]
    %v68 = vld [vmem:[%s0 + $0x118] sm:$0xff]
    %v69 = vld [vmem:[%s0 + $0x120] sm:$0xff]
    %v70 = vld [vmem:[%s0 + $0x128] sm:$0xf]
    %v71 = vld [vmem:[%s0 + $0x12c] sm:$0xff]
    %v72 = vld [vmem:[%s0 + $0x134] sm:$0xff]
    %v73 = vld [vmem:[%s0 + $0x13c] sm:$0xf]
    %v74 = vld [vmem:[#allocation2] sm:$0xf]
    %v75 = vld [vmem:[#allocation2 + $0x4] sm:$0xf]
    %v76 = vld [vmem:[#allocation2 + $0x8] sm:$0xf]
    %v77 = vld [vmem:[#allocation2 + $0xc] sm:$0xf]
    %v78 = vld [vmem:[#allocation2 + $0x10] sm:$0xf]
    %v79 = vld [vmem:[#allocation2 + $0x14] sm:$0xf]
    %v80 = vld [vmem:[#allocation2 + $0x18] sm:$0xf]
    %v81 = vld [vmem:[#allocation2 + $0x1c] sm:$0xf]
    %v82 = vld [vmem:[#allocation2 + $0x20] sm:$0xf]
    %v83 = vld [vmem:[#allocation2 + $0x24] sm:$0xf]
    %v84 = vld [vmem:[#allocation2 + $0x28] sm:$0xf]
    %v85 = vld [vmem:[#allocation2 + $0x2c] sm:$0xf]
    %v86 = vld [vmem:[#allocation2 + $0x30] sm:$0xf]
    %v87 = vld [vmem:[#allocation2 + $0x34] sm:$0xf]
    %v88 = vld [vmem:[#allocation2 + $0x38] sm:$0xf]
    %v89 = vld [vmem:[#allocation2 + $0x3c] sm:$0xf]
    %v90 = vld [vmem:[#allocation2 + $0x40] sm:$0xf]
    %v91 = vld [vmem:[#allocation2 + $0x44] sm:$0xf]
    %v92 = vld [vmem:[#allocation2 + $0x48] sm:$0xf]
    %v93 = vld [vmem:[#allocation2 + $0x4c] sm:$0xf]
    %v94 = vld [vmem:[#allocation2 + $0x50] sm:$0xf]
    %v95 = vld [vmem:[#allocation2 + $0x54] sm:$0xf]
    %v96 = vld [vmem:[#allocation2 + $0x58] sm:$0xf]
    %v97 = vld [vmem:[#allocation2 + $0x5c] sm:$0xf]
    %v98 = vld [vmem:[#allocation2 + $0x60] sm:$0xf]
    %v99 = vld [vmem:[#allocation2 + $0x64] sm:$0xf]
    %v100 = vld [vmem:[#allocation2 + $0x68] sm:$0xf]
    %v101 = vld [vmem:[#allocation2 + $0x6c] sm:$0xf]
    %v102 = vld [vmem:[#allocation2 + $0x70] sm:$0xf]
    %v103 = vld [vmem:[#allocation2 + $0x74] sm:$0xf]
    %v104 = vld [vmem:[#allocation2 + $0x78] sm:$0xf]
    %v105 = vld [vmem:[#allocation2 + $0x7c] sm:$0xf]
    %v106 = vld [vmem:[#allocation2 + $0x80] sm:$0xf]
    %v107 = vld [vmem:[#allocation2 + $0x84] sm:$0xf]
    %v108 = vld [vmem:[#allocation2 + $0x88] sm:$0xf]
    %v109 = vld [vmem:[#allocation2 + $0x8c] sm:$0xf]
    %v110 = vld [vmem:[#allocation2 + $0x90] sm:$0xf]
    %v111 = vld [vmem:[#allocation2 + $0x94] sm:$0xf]
    %v112 = vld [vmem:[#allocation2 + $0x98] sm:$0xf]
    %v113 = vld [vmem:[#allocation2 + $0x9c] sm:$0xf]
    %v114 = vld [vmem:[#allocation2 + $0xa0] sm:$0xf]
    %v115 = vld [vmem:[#allocation2 + $0xa4] sm:$0xf]
    %v116 = vld [vmem:[#allocation2 + $0xa8] sm:$0xf]
    %v117 = vld [vmem:[#allocation2 + $0xac] sm:$0xf]
    %v118 = vld [vmem:[#allocation2 + $0xb0] sm:$0xf]
    %v119 = vld [vmem:[#allocation2 + $0xb4] sm:$0xf]
    %v120 = vld [vmem:[#allocation2 + $0xb8] sm:$0xf]
    %v121 = vld [vmem:[#allocation2 + $0xbc] sm:$0xf]
    %v122 = vld [vmem:[#allocation2 + $0xc0] sm:$0xf]
    %v123 = vld [vmem:[#allocation2 + $0xc4] sm:$0xf]
    %v124 = vld [vmem:[#allocation2 + $0xc8] sm:$0xf]
    %v125 = vld [vmem:[#allocation2 + $0xcc] sm:$0xf]
    %v126 = vld [vmem:[#allocation2 + $0xd0] sm:$0xf]
    %v127 = vld [vmem:[#allocation2 + $0xd4] sm:$0xf]
    %v128 = vld [vmem:[#allocation2 + $0xd8] sm:$0xf]
    %v129 = vld [vmem:[#allocation2 + $0xdc] sm:$0xf]
    %v130 = vld [vmem:[#allocation2 + $0xe0] sm:$0xf]
    %v131 = vld [vmem:[#allocation2 + $0xe4] sm:$0xf]
    %v132 = vld [vmem:[#allocation2 + $0xe8] sm:$0xf]
    %v133 = vld [vmem:[#allocation2 + $0xec] sm:$0xf]
    %v134 = vld [vmem:[#allocation2 + $0xf0] sm:$0xf]
    %v135 = vld [vmem:[#allocation2 + $0xf4] sm:$0xf]
    %v136 = vld [vmem:[#allocation2 + $0xf8] sm:$0xf]
    %v137 = vld [vmem:[#allocation2 + $0xfc] sm:$0xf]
    %v138 = vld [vmem:[#allocation2 + $0x100] sm:$0xf]
    %v139 = vld [vmem:[#allocation2 + $0x104] sm:$0xf]
    %v140 = vld [vmem:[#allocation2 + $0x108] sm:$0xf]
    %v141 = vld [vmem:[#allocation2 + $0x10c] sm:$0xf]
    %v142 = vld [vmem:[#allocation2 + $0x110] sm:$0xf]
    %v143 = vld [vmem:[#allocation2 + $0x114] sm:$0xf]
    %v144 = vld [vmem:[#allocation2 + $0x118] sm:$0xf]
    %v145 = vld [vmem:[#allocation2 + $0x11c] sm:$0xf]
    %v194 = vunpack.c.l.b16 %v26
    %v195 = vunpack.c.h.b16 %v26
    %v196 = vunpack.c.l.b16 %v27
    %v197 = vunpack.c.h.b16 %v27
    %v198 = vunpack.c.l.b16 %v28
    %v199 = vunpack.c.l.b16 %v29
    %v200 = vunpack.c.h.b16 %v29
    %v201 = vunpack.c.l.b16 %v30
    %v202 = vunpack.c.h.b16 %v30
    %v203 = vunpack.c.l.b16 %v31
    %v204 = vunpack.c.l.b16 %v32
    %v205 = vunpack.c.h.b16 %v32
    %v206 = vunpack.c.l.b16 %v33
    %v207 = vunpack.c.h.b16 %v33
    %v208 = vunpack.c.l.b16 %v34
    %v209 = vunpack.c.l.b16 %v35
    %v210 = vunpack.c.h.b16 %v35
    %v211 = vunpack.c.l.b16 %v36
    %v212 = vunpack.c.h.b16 %v36
    %v213 = vunpack.c.l.b16 %v37
    %v214 = vunpack.c.l.b16 %v38
    %v215 = vunpack.c.h.b16 %v38
    %v216 = vunpack.c.l.b16 %v39
    %v217 = vunpack.c.h.b16 %v39
    %v218 = vunpack.c.l.b16 %v40
    %v219 = vunpack.c.l.b16 %v41
    %v220 = vunpack.c.h.b16 %v41
    %v221 = vunpack.c.l.b16 %v42
    %v222 = vunpack.c.h.b16 %v42
    %v223 = vunpack.c.l.b16 %v43
    %v224 = vunpack.c.l.b16 %v44
    %v225 = vunpack.c.h.b16 %v44
    %v226 = vunpack.c.l.b16 %v45
    %v227 = vunpack.c.h.b16 %v45
    %v228 = vunpack.c.l.b16 %v46
    %v229 = vunpack.c.l.b16 %v47
    %v230 = vunpack.c.h.b16 %v47
    %v231 = vunpack.c.l.b16 %v48
    %v232 = vunpack.c.h.b16 %v48
    %v233 = vunpack.c.l.b16 %v49
    %v234 = vunpack.c.l.b16 %v50
    %v235 = vunpack.c.h.b16 %v50
    %v236 = vunpack.c.l.b16 %v51
    %v237 = vunpack.c.h.b16 %v51
    %v238 = vunpack.c.l.b16 %v52
    %v239 = vunpack.c.l.b16 %v53
    %v240 = vunpack.c.h.b16 %v53
    %v241 = vunpack.c.l.b16 %v54
    %v242 = vunpack.c.h.b16 %v54
    %v243 = vunpack.c.l.b16 %v55
    %v244 = vunpack.c.l.b16 %v56
    %v245 = vunpack.c.h.b16 %v56
    %v246 = vunpack.c.l.b16 %v57
    %v247 = vunpack.c.h.b16 %v57
    %v248 = vunpack.c.l.b16 %v58
    %v249 = vunpack.c.l.b16 %v59
    %v250 = vunpack.c.h.b16 %v59
    %v251 = vunpack.c.l.b16 %v60
    %v252 = vunpack.c.h.b16 %v60
    %v253 = vunpack.c.l.b16 %v61
    %v254 = vunpack.c.l.b16 %v62
    %v255 = vunpack.c.h.b16 %v62
    %v256 = vunpack.c.l.b16 %v63
    %v257 = vunpack.c.h.b16 %v63
    %v258 = vunpack.c.l.b16 %v64
    %v259 = vunpack.c.l.b16 %v65
    %v260 = vunpack.c.h.b16 %v65
    %v261 = vunpack.c.l.b16 %v66
    %v262 = vunpack.c.h.b16 %v66
    %v263 = vunpack.c.l.b16 %v67
    %v264 = vunpack.c.l.b16 %v68
    %v265 = vunpack.c.h.b16 %v68
    %v266 = vunpack.c.l.b16 %v69
    %v267 = vunpack.c.h.b16 %v69
    %v268 = vunpack.c.l.b16 %v70
    %v269 = vunpack.c.l.b16 %v71
    %v270 = vunpack.c.h.b16 %v71
    %v271 = vunpack.c.l.b16 %v72
    %v272 = vunpack.c.h.b16 %v72
    %v273 = vunpack.c.l.b16 %v73
    %v274 = vpack.c.b16 %v199, %v194
    %v275 = vpack.c.b16 %v200, %v195
    %v276 = vpack.c.b16 %v201, %v196
    %v277 = vpack.c.b16 %v202, %v197
    %v278 = vpack.c.b16 %v203, %v198
    %v279 = vpack.c.b16 %v209, %v204
    %v280 = vpack.c.b16 %v210, %v205
    %v281 = vpack.c.b16 %v211, %v206
    %v282 = vpack.c.b16 %v212, %v207
    %v283 = vpack.c.b16 %v213, %v208
    %v284 = vpack.c.b16 %v219, %v214
    %v285 = vpack.c.b16 %v220, %v215
    %v286 = vpack.c.b16 %v221, %v216
    %v287 = vpack.c.b16 %v222, %v217
    %v288 = vpack.c.b16 %v223, %v218
    %v289 = vpack.c.b16 %v229, %v224
    %v290 = vpack.c.b16 %v230, %v225
    %v291 = vpack.c.b16 %v231, %v226
    %v292 = vpack.c.b16 %v232, %v227
    %v293 = vpack.c.b16 %v233, %v228
    %v294 = vpack.c.b16 %v239, %v234
    %v295 = vpack.c.b16 %v240, %v235
    %v296 = vpack.c.b16 %v241, %v236
    %v297 = vpack.c.b16 %v242, %v237
    %v298 = vpack.c.b16 %v243, %v238
    %v299 = vpack.c.b16 %v249, %v244
    %v300 = vpack.c.b16 %v250, %v245
    %v301 = vpack.c.b16 %v251, %v246
    %v302 = vpack.c.b16 %v252, %v247
    %v303 = vpack.c.b16 %v253, %v248
    %v304 = vpack.c.b16 %v259, %v254
    %v305 = vpack.c.b16 %v260, %v255
    %v306 = vpack.c.b16 %v261, %v256
    %v307 = vpack.c.b16 %v262, %v257
    %v308 = vpack.c.b16 %v263, %v258
    %v309 = vpack.c.b16 %v269, %v264
    %v310 = vpack.c.b16 %v270, %v265
    %v311 = vpack.c.b16 %v271, %v266
    %v312 = vpack.c.b16 %v272, %v267
    %v313 = vpack.c.b16 %v273, %v268
    %v418 = vunpack.c.l.b16 %v74
    %v419 = vunpack.c.l.b16 %v75
    %v420 = vunpack.c.l.b16 %v76
    %v421 = vunpack.c.l.b16 %v77
    %v422 = vunpack.c.l.b16 %v78
    %v423 = vunpack.c.l.b16 %v79
    %v424 = vunpack.c.l.b16 %v80
    %v425 = vunpack.c.l.b16 %v81
    %v426 = vunpack.c.l.b16 %v82
    %v427 = vunpack.c.l.b16 %v83
    %v428 = vunpack.c.l.b16 %v84
    %v429 = vunpack.c.l.b16 %v85
    %v430 = vunpack.c.l.b16 %v86
    %v431 = vunpack.c.l.b16 %v87
    %v432 = vunpack.c.l.b16 %v88
    %v433 = vunpack.c.l.b16 %v89
    %v434 = vunpack.c.l.b16 %v90
    %v435 = vunpack.c.l.b16 %v91
    %v436 = vunpack.c.l.b16 %v92
    %v437 = vunpack.c.l.b16 %v93
    %v438 = vunpack.c.l.b16 %v94
    %v439 = vunpack.c.l.b16 %v95
    %v440 = vunpack.c.l.b16 %v96
    %v441 = vunpack.c.l.b16 %v97
    %v442 = vunpack.c.l.b16 %v98
    %v443 = vunpack.c.l.b16 %v99
    %v444 = vunpack.c.l.b16 %v100
    %v445 = vunpack.c.l.b16 %v101
    %v446 = vunpack.c.l.b16 %v102
    %v447 = vunpack.c.l.b16 %v103
    %v448 = vunpack.c.l.b16 %v104
    %v449 = vunpack.c.l.b16 %v105
    %v450 = vunpack.c.l.b16 %v106
    %v451 = vunpack.c.l.b16 %v107
    %v452 = vunpack.c.l.b16 %v108
    %v453 = vunpack.c.l.b16 %v109
    %v454 = vunpack.c.l.b16 %v110
    %v455 = vunpack.c.l.b16 %v111
    %v456 = vunpack.c.l.b16 %v112
    %v457 = vunpack.c.l.b16 %v113
    %v458 = vunpack.c.l.b16 %v114
    %v459 = vunpack.c.l.b16 %v115
    %v460 = vunpack.c.l.b16 %v116
    %v461 = vunpack.c.l.b16 %v117
    %v462 = vunpack.c.l.b16 %v118
    %v463 = vunpack.c.l.b16 %v119
    %v464 = vunpack.c.l.b16 %v120
    %v465 = vunpack.c.l.b16 %v121
    %v466 = vunpack.c.l.b16 %v122
    %v467 = vunpack.c.l.b16 %v123
    %v468 = vunpack.c.l.b16 %v124
    %v469 = vunpack.c.l.b16 %v125
    %v470 = vunpack.c.l.b16 %v126
    %v471 = vunpack.c.l.b16 %v127
    %v472 = vunpack.c.l.b16 %v128
    %v473 = vunpack.c.l.b16 %v129
    %v474 = vunpack.c.l.b16 %v130
    %v475 = vunpack.c.l.b16 %v131
    %v476 = vunpack.c.l.b16 %v132
    %v477 = vunpack.c.l.b16 %v133
    %v478 = vunpack.c.l.b16 %v134
    %v479 = vunpack.c.l.b16 %v135
    %v480 = vunpack.c.l.b16 %v136
    %v481 = vunpack.c.l.b16 %v137
    %v482 = vunpack.c.l.b16 %v138
    %v483 = vunpack.c.l.b16 %v139
    %v484 = vunpack.c.l.b16 %v140
    %v485 = vunpack.c.l.b16 %v141
    %v486 = vunpack.c.l.b16 %v142
    %v487 = vunpack.c.l.b16 %v143
    %v488 = vunpack.c.l.b16 %v144
    %v489 = vunpack.c.l.b16 %v145
    %v490 = vpack.c.b16 %v419, %v418
    %v491 = vpack.c.b16 %v421, %v420
    %v492 = vpack.c.b16 %v423, %v422
    %v493 = vpack.c.b16 %v425, %v424
    %v494 = vpack.c.b16 %v427, %v426
    %v495 = vpack.c.b16 %v429, %v428
    %v496 = vpack.c.b16 %v431, %v430
    %v497 = vpack.c.b16 %v433, %v432
    %v498 = vpack.c.b16 %v435, %v434
    %v499 = vpack.c.b16 %v437, %v436
    %v500 = vpack.c.b16 %v439, %v438
    %v501 = vpack.c.b16 %v441, %v440
    %v502 = vpack.c.b16 %v443, %v442
    %v503 = vpack.c.b16 %v445, %v444
    %v504 = vpack.c.b16 %v447, %v446
    %v505 = vpack.c.b16 %v449, %v448
    %v506 = vpack.c.b16 %v451, %v450
    %v507 = vpack.c.b16 %v453, %v452
    %v508 = vpack.c.b16 %v455, %v454
    %v509 = vpack.c.b16 %v457, %v456
    %v510 = vpack.c.b16 %v459, %v458
    %v511 = vpack.c.b16 %v461, %v460
    %v512 = vpack.c.b16 %v463, %v462
    %v513 = vpack.c.b16 %v465, %v464
    %v514 = vpack.c.b16 %v467, %v466
    %v515 = vpack.c.b16 %v469, %v468
    %v516 = vpack.c.b16 %v471, %v470
    %v517 = vpack.c.b16 %v473, %v472
    %v518 = vpack.c.b16 %v475, %v474
    %v519 = vpack.c.b16 %v477, %v476
    %v520 = vpack.c.b16 %v479, %v478
    %v521 = vpack.c.b16 %v481, %v480
    %v522 = vpack.c.b16 %v483, %v482
    %v523 = vpack.c.b16 %v485, %v484
    %v524 = vpack.c.b16 %v487, %v486
    %v525 = vpack.c.b16 %v489, %v488
    %vm562 = vcmask 523264
    %v564 = vsel %vm562, %v278, 0
    %v567 = vsel %vm562, %v283, 0
    %v570 = vsel %vm562, %v288, 0
    %v573 = vsel %vm562, %v293, 0
    %v576 = vsel %vm562, %v298, 0
    %v579 = vsel %vm562, %v303, 0
    %v582 = vsel %vm562, %v308, 0
    %v585 = vsel %vm562, %v313, 0
    %587 = vmatprep.subr.bf16.mxu0 0
    %588 = vmatpush1.bf16.msra.mxu0 %v490
    %589 = vmatprep.subr.bf16.mxu0 0
    %590 = vmatpush1.bf16.msra.mxu0 %v491
    %591 = vmatprep.subr.bf16.mxu0 0
    %592 = vmatpush1.bf16.msra.mxu0 %v492
    %593 = vmatprep.subr.bf16.mxu0 0
    %594 = vmatpush1.bf16.msra.mxu0 %v493
    %595 = vmatprep.subr.bf16.mxu0 0
    %596 = vmatpush1.bf16.msra.mxu0 %v494
    %597 = vmatprep.subr.bf16.mxu0 0
    %598 = vmatpush1.bf16.msra.mxu0 %v495
    %599 = vmatprep.subr.bf16.mxu0 0
    %600 = vmatpush1.bf16.msra.mxu0 %v496
    %601 = vmatprep.subr.bf16.mxu0 0
    %602 = vmatpush1.bf16.msra.mxu0 %v497
    %603 = vmatprep.subr.bf16.mxu0 0
    %604 = vmatpush1.bf16.msra.mxu0 %v498
    %605 = vmatprep.subr.bf16.mxu0 0
    %606 = vmatpush1.bf16.msra.mxu0 %v499
    %607 = vmatprep.subr.bf16.mxu0 0
    %608 = vmatpush1.bf16.msra.mxu0 %v500
    %609 = vmatprep.subr.bf16.mxu0 0
    %610 = vmatpush1.bf16.msra.mxu0 %v501
    %611 = vmatprep.subr.bf16.mxu0 0
    %612 = vmatpush1.bf16.msra.mxu0 %v502
    %613 = vmatprep.subr.bf16.mxu0 0
    %614 = vmatpush1.bf16.msra.mxu0 %v503
    %615 = vmatprep.subr.bf16.mxu0 0
    %616 = vmatpush1.bf16.msra.mxu0 %v504
    %617 = vmatprep.subr.bf16.mxu0 0
    %618 = vmatpush1.bf16.msra.mxu0 %v505
    %619 = vmatprep.mubr.bf16.mxu0 %v275
    %620 = vmatmul.mubr.bf16.gmra.mrb[0].mxu0 %v274
    %v621 = vpop.f32.mrb[0].mxu0
    %v622 = vadd.f32 0.0, %v621
    %v623 = vpop.f32.mrb[0].mxu0
    %v624 = vpop.f32.mrb[0].mxu0
    %v625 = vadd.f32 0.0, %v624
    %v626 = vpop.f32.mrb[0].mxu0
    %627 = vmatprep.mubr.bf16.mxu0 %v280
    %628 = vmatmul.mubr.bf16.gmra.mrb[0].mxu0 %v279
    %v629 = vpop.f32.mrb[0].mxu0
    %v630 = vadd.f32 0.0, %v629
    %v631 = vpop.f32.mrb[0].mxu0
    %v632 = vpop.f32.mrb[0].mxu0
    %v633 = vadd.f32 0.0, %v632
    %v634 = vpop.f32.mrb[0].mxu0
    %635 = vmatprep.mubr.bf16.mxu0 %v285
    %636 = vmatmul.mubr.bf16.gmra.mrb[0].mxu0 %v284
    %v637 = vpop.f32.mrb[0].mxu0
    %v638 = vadd.f32 0.0, %v637
    %v639 = vpop.f32.mrb[0].mxu0
    %v640 = vpop.f32.mrb[0].mxu0
    %v641 = vadd.f32 0.0, %v640
    %v642 = vpop.f32.mrb[0].mxu0
    %643 = vmatprep.mubr.bf16.mxu0 %v290
    %644 = vmatmul.mubr.bf16.gmra.mrb[0].mxu0 %v289
    %v645 = vpop.f32.mrb[0].mxu0
    %v646 = vadd.f32 0.0, %v645
    %v647 = vpop.f32.mrb[0].mxu0
    %v648 = vpop.f32.mrb[0].mxu0
    %v649 = vadd.f32 0.0, %v648
    %v650 = vpop.f32.mrb[0].mxu0
    %651 = vmatprep.mubr.bf16.mxu0 %v295
    %652 = vmatmul.mubr.bf16.gmra.mrb[0].mxu0 %v294
    %v653 = vpop.f32.mrb[0].mxu0
    %v654 = vadd.f32 0.0, %v653
    %v655 = vpop.f32.mrb[0].mxu0
    %v656 = vpop.f32.mrb[0].mxu0
    %v657 = vadd.f32 0.0, %v656
    %v658 = vpop.f32.mrb[0].mxu0
    %659 = vmatprep.mubr.bf16.mxu0 %v300
    %660 = vmatmul.mubr.bf16.gmra.mrb[0].mxu0 %v299
    %v661 = vpop.f32.mrb[0].mxu0
    %v662 = vadd.f32 0.0, %v661
    %v663 = vpop.f32.mrb[0].mxu0
    %v664 = vpop.f32.mrb[0].mxu0
    %v665 = vadd.f32 0.0, %v664
    %v666 = vpop.f32.mrb[0].mxu0
    %667 = vmatprep.mubr.bf16.mxu0 %v305
    %668 = vmatmul.mubr.bf16.gmra.mrb[0].mxu0 %v304
    %v669 = vpop.f32.mrb[0].mxu0
    %v670 = vadd.f32 0.0, %v669
    %v671 = vpop.f32.mrb[0].mxu0
    %v672 = vpop.f32.mrb[0].mxu0
    %v673 = vadd.f32 0.0, %v672
    %v674 = vpop.f32.mrb[0].mxu0
    %675 = vmatprep.mubr.bf16.mxu0 %v310
    %676 = vmatmul.mubr.bf16.gmra.mrb[0].mxu0 %v309
    %v677 = vpop.f32.mrb[0].mxu0
    %v678 = vadd.f32 0.0, %v677
    %v679 = vpop.f32.mrb[0].mxu0
    %v680 = vpop.f32.mrb[0].mxu0
    %v681 = vadd.f32 0.0, %v680
    %v682 = vpop.f32.mrb[0].mxu0
    %683 = vdwg.mxu0
    %684 = vmatprep.subr.bf16.mxu0 0
    %685 = vmatpush1.bf16.msra.mxu0 %v506
    %686 = vmatprep.subr.bf16.mxu0 0
    %687 = vmatpush1.bf16.msra.mxu0 %v507
    %688 = vmatprep.subr.bf16.mxu0 0
    %689 = vmatpush1.bf16.msra.mxu0 %v508
    %690 = vmatprep.subr.bf16.mxu0 0
    %691 = vmatpush1.bf16.msra.mxu0 %v509
    %692 = vmatprep.subr.bf16.mxu0 0
    %693 = vmatpush1.bf16.msra.mxu0 %v510
    %694 = vmatprep.subr.bf16.mxu0 0
    %695 = vmatpush1.bf16.msra.mxu0 %v511
    %696 = vmatprep.subr.bf16.mxu0 0
    %697 = vmatpush1.bf16.msra.mxu0 %v512
    %698 = vmatprep.subr.bf16.mxu0 0
    %699 = vmatpush1.bf16.msra.mxu0 %v513
    %700 = vmatprep.subr.bf16.mxu0 0
    %701 = vmatpush1.bf16.msra.mxu0 %v514
    %702 = vmatprep.subr.bf16.mxu0 0
    %703 = vmatpush1.bf16.msra.mxu0 %v515
    %704 = vmatprep.subr.bf16.mxu0 0
    %705 = vmatpush1.bf16.msra.mxu0 %v516
    %706 = vmatprep.subr.bf16.mxu0 0
    %707 = vmatpush1.bf16.msra.mxu0 %v517
    %708 = vmatprep.subr.bf16.mxu0 0
    %709 = vmatpush1.bf16.msra.mxu0 %v518
    %710 = vmatprep.subr.bf16.mxu0 0
    %711 = vmatpush1.bf16.msra.mxu0 %v519
    %712 = vmatprep.subr.bf16.mxu0 0
    %713 = vmatpush1.bf16.msra.mxu0 %v520
    %714 = vmatprep.subr.bf16.mxu0 0
    %715 = vmatpush1.bf16.msra.mxu0 %v521
    %716 = vmatprep.mubr.bf16.mxu0 %v277
    %717 = vmatmul.mubr.bf16.gmra.mrb[0].mxu0 %v276
    %v718 = vpop.f32.mrb[0].mxu0
    %v719 = vadd.f32 %v622, %v718
    %v720 = vpop.f32.mrb[0].mxu0
    %v721 = vpop.f32.mrb[0].mxu0
    %v722 = vadd.f32 %v625, %v721
    %v723 = vpop.f32.mrb[0].mxu0
    %724 = vmatprep.mubr.bf16.mxu0 %v282
    %725 = vmatmul.mubr.bf16.gmra.mrb[0].mxu0 %v281
    %v726 = vpop.f32.mrb[0].mxu0
    %v727 = vadd.f32 %v630, %v726
    %v728 = vpop.f32.mrb[0].mxu0
    %v729 = vpop.f32.mrb[0].mxu0
    %v730 = vadd.f32 %v633, %v729
    %v731 = vpop.f32.mrb[0].mxu0
    %732 = vmatprep.mubr.bf16.mxu0 %v287
    %733 = vmatmul.mubr.bf16.gmra.mrb[0].mxu0 %v286
    %v734 = vpop.f32.mrb[0].mxu0
    %v735 = vadd.f32 %v638, %v734
    %v736 = vpop.f32.mrb[0].mxu0
    %v737 = vpop.f32.mrb[0].mxu0
    %v738 = vadd.f32 %v641, %v737
    %v739 = vpop.f32.mrb[0].mxu0
    %740 = vmatprep.mubr.bf16.mxu0 %v292
    %741 = vmatmul.mubr.bf16.gmra.mrb[0].mxu0 %v291
    %v742 = vpop.f32.mrb[0].mxu0
    %v743 = vadd.f32 %v646, %v742
    %v744 = vpop.f32.mrb[0].mxu0
    %v745 = vpop.f32.mrb[0].mxu0
    %v746 = vadd.f32 %v649, %v745
    %v747 = vpop.f32.mrb[0].mxu0
    %748 = vmatprep.mubr.bf16.mxu0 %v297
    %749 = vmatmul.mubr.bf16.gmra.mrb[0].mxu0 %v296
    %v750 = vpop.f32.mrb[0].mxu0
    %v751 = vadd.f32 %v654, %v750
    %v752 = vpop.f32.mrb[0].mxu0
    %v753 = vpop.f32.mrb[0].mxu0
    %v754 = vadd.f32 %v657, %v753
    %v755 = vpop.f32.mrb[0].mxu0
    %756 = vmatprep.mubr.bf16.mxu0 %v302
    %757 = vmatmul.mubr.bf16.gmra.mrb[0].mxu0 %v301
    %v758 = vpop.f32.mrb[0].mxu0
    %v759 = vadd.f32 %v662, %v758
    %v760 = vpop.f32.mrb[0].mxu0
    %v761 = vpop.f32.mrb[0].mxu0
    %v762 = vadd.f32 %v665, %v761
    %v763 = vpop.f32.mrb[0].mxu0
    %764 = vmatprep.mubr.bf16.mxu0 %v307
    %765 = vmatmul.mubr.bf16.gmra.mrb[0].mxu0 %v306
    %v766 = vpop.f32.mrb[0].mxu0
    %v767 = vadd.f32 %v670, %v766
    %v768 = vpop.f32.mrb[0].mxu0
    %v769 = vpop.f32.mrb[0].mxu0
    %v770 = vadd.f32 %v673, %v769
    %v771 = vpop.f32.mrb[0].mxu0
    %772 = vmatprep.mubr.bf16.mxu0 %v312
    %773 = vmatmul.mubr.bf16.gmra.mrb[0].mxu0 %v311
    %v774 = vpop.f32.mrb[0].mxu0
    %v775 = vadd.f32 %v678, %v774
    %v776 = vpop.f32.mrb[0].mxu0
    %v777 = vpop.f32.mrb[0].mxu0
    %v778 = vadd.f32 %v681, %v777
    %v779 = vpop.f32.mrb[0].mxu0
    %780 = vdwg.mxu0
    %781 = vmatprep.subr.bf16.mxu0 0
    %782 = vmatpush1.bf16.msra.mxu0 %v522
    %783 = vmatprep.subr.bf16.mxu0 0
    %784 = vmatpush1.bf16.msra.mxu0 %v523
    %785 = vmatprep.subr.bf16.mxu0 0
    %786 = vmatpush1.bf16.msra.mxu0 %v524
    %787 = vmatprep.subr.bf16.mxu0 0
    %788 = vmatpush1.bf16.msra.mxu0 %v525
    %789 = vmatprep.subr.bf16.mxu0 0
    %790 = vmatpush1.bf16.msra.mxu0 0
    %791 = vmatprep.subr.bf16.mxu0 0
    %792 = vmatpush1.bf16.msra.mxu0 0
    %793 = vmatprep.subr.bf16.mxu0 0
    %794 = vmatpush1.bf16.msra.mxu0 0
    %795 = vmatprep.subr.bf16.mxu0 0
    %796 = vmatpush1.bf16.msra.mxu0 0
    %797 = vmatprep.subr.bf16.mxu0 0
    %798 = vmatpush1.bf16.msra.mxu0 0
    %799 = vmatprep.subr.bf16.mxu0 0
    %800 = vmatpush1.bf16.msra.mxu0 0
    %801 = vmatprep.subr.bf16.mxu0 0
    %802 = vmatpush1.bf16.msra.mxu0 0
    %803 = vmatprep.subr.bf16.mxu0 0
    %804 = vmatpush1.bf16.msra.mxu0 0
    %805 = vmatprep.subr.bf16.mxu0 0
    %806 = vmatpush1.bf16.msra.mxu0 0
    %807 = vmatprep.subr.bf16.mxu0 0
    %808 = vmatpush1.bf16.msra.mxu0 0
    %809 = vmatprep.subr.bf16.mxu0 0
    %810 = vmatpush1.bf16.msra.mxu0 0
    %811 = vmatprep.subr.bf16.mxu0 0
    %812 = vmatpush1.bf16.msra.mxu0 0
    %813 = vmatprep.mubr.bf16.mxu0 0
    %814 = vmatmul.mubr.bf16.gmra.mrb[0].mxu0 %v564
    %v815 = vpop.f32.mrb[0].mxu0
    %v816 = vadd.f32 %v719, %v815
    %v817 = vpop.f32.mrb[0].mxu0
    %v818 = vpop.f32.mrb[0].mxu0
    %v819 = vadd.f32 %v722, %v818
    %v820 = vpop.f32.mrb[0].mxu0
    %821 = vmatprep.mubr.bf16.mxu0 0
    %822 = vmatmul.mubr.bf16.gmra.mrb[0].mxu0 %v567
    %v823 = vpop.f32.mrb[0].mxu0
    %v824 = vadd.f32 %v727, %v823
    %v825 = vpop.f32.mrb[0].mxu0
    %v826 = vpop.f32.mrb[0].mxu0
    %v827 = vadd.f32 %v730, %v826
    %v828 = vpop.f32.mrb[0].mxu0
    %829 = vmatprep.mubr.bf16.mxu0 0
    %830 = vmatmul.mubr.bf16.gmra.mrb[0].mxu0 %v570
    %v831 = vpop.f32.mrb[0].mxu0
    %v832 = vadd.f32 %v735, %v831
    %v833 = vpop.f32.mrb[0].mxu0
    %v834 = vpop.f32.mrb[0].mxu0
    %v835 = vadd.f32 %v738, %v834
    %v836 = vpop.f32.mrb[0].mxu0
    %837 = vmatprep.mubr.bf16.mxu0 0
    %838 = vmatmul.mubr.bf16.gmra.mrb[0].mxu0 %v573
    %v839 = vpop.f32.mrb[0].mxu0
    %v840 = vadd.f32 %v743, %v839
    %v841 = vpop.f32.mrb[0].mxu0
    %v842 = vpop.f32.mrb[0].mxu0
    %v843 = vadd.f32 %v746, %v842
    %v844 = vpop.f32.mrb[0].mxu0
    %845 = vmatprep.mubr.bf16.mxu0 0
    %846 = vmatmul.mubr.bf16.gmra.mrb[0].mxu0 %v576
    %v847 = vpop.f32.mrb[0].mxu0
    %v848 = vadd.f32 %v751, %v847
    %v849 = vpop.f32.mrb[0].mxu0
    %v850 = vpop.f32.mrb[0].mxu0
    %v851 = vadd.f32 %v754, %v850
    %v852 = vpop.f32.mrb[0].mxu0
    %853 = vmatprep.mubr.bf16.mxu0 0
    %854 = vmatmul.mubr.bf16.gmra.mrb[0].mxu0 %v579
    %v855 = vpop.f32.mrb[0].mxu0
    %v856 = vadd.f32 %v759, %v855
    %v857 = vpop.f32.mrb[0].mxu0
    %v858 = vpop.f32.mrb[0].mxu0
    %v859 = vadd.f32 %v762, %v858
    %v860 = vpop.f32.mrb[0].mxu0
    %861 = vmatprep.mubr.bf16.mxu0 0
    %862 = vmatmul.mubr.bf16.gmra.mrb[0].mxu0 %v582
    %v863 = vpop.f32.mrb[0].mxu0
    %v864 = vadd.f32 %v767, %v863
    %v865 = vpop.f32.mrb[0].mxu0
    %v866 = vpop.f32.mrb[0].mxu0
    %v867 = vadd.f32 %v770, %v866
    %v868 = vpop.f32.mrb[0].mxu0
    %869 = vmatprep.mubr.bf16.mxu0 0
    %870 = vmatmul.mubr.bf16.gmra.mrb[0].mxu0 %v585
    %v871 = vpop.f32.mrb[0].mxu0
    %v872 = vadd.f32 %v775, %v871
    %v873 = vpop.f32.mrb[0].mxu0
    %v874 = vpop.f32.mrb[0].mxu0
    %v875 = vadd.f32 %v778, %v874
    %v876 = vpop.f32.mrb[0].mxu0
    %877 = vdwg.mxu0
    %v878 = vadd.f32 %v816, %v819
    %v879 = vadd.f32 %v878, %v824
    %v880 = vadd.f32 %v879, %v827
    %v881 = vadd.f32 %v880, %v832
    %v882 = vadd.f32 %v881, %v835
    %v883 = vadd.f32 %v882, %v840
    %v884 = vadd.f32 %v883, %v843
    %v885 = vadd.f32 %v884, %v848
    %v886 = vadd.f32 %v885, %v851
    %v887 = vadd.f32 %v886, %v856
    %v888 = vadd.f32 %v887, %v859
    %v889 = vadd.f32 %v888, %v864
    %v890 = vadd.f32 %v889, %v867
    %v891 = vadd.f32 %v890, %v872
    %v892 = vadd.f32 %v891, %v875
    %v893 = vrot.slane %v892, 4
    %v894 = vadd.f32 %v892, %v893
    %v895 = vrot.slane %v894, 2
    %v896 = vadd.f32 %v894, %v895
    %v897 = vrot.slane %v896, 1
    %v898 = vadd.f32 %v896, %v897
    %v899 = vmul.f32 %v816, %v816
    %v900 = vmul.f32 %v819, %v819
    %v901 = vmul.f32 %v824, %v824
    %v902 = vmul.f32 %v827, %v827
    %v903 = vmul.f32 %v832, %v832
    %v904 = vmul.f32 %v835, %v835
    %v905 = vmul.f32 %v840, %v840
    %v906 = vmul.f32 %v843, %v843
    %v907 = vmul.f32 %v848, %v848
    %v908 = vmul.f32 %v851, %v851
    %v909 = vmul.f32 %v856, %v856
    %v910 = vmul.f32 %v859, %v859
    %v911 = vmul.f32 %v864, %v864
    %v912 = vmul.f32 %v867, %v867
    %v913 = vmul.f32 %v872, %v872
    %v914 = vmul.f32 %v875, %v875
    %v915 = vadd.f32 %v899, %v900
    %v916 = vadd.f32 %v915, %v901
    %v917 = vadd.f32 %v916, %v902
    %v918 = vadd.f32 %v917, %v903
    %v919 = vadd.f32 %v918, %v904
    %v920 = vadd.f32 %v919, %v905
    %v921 = vadd.f32 %v920, %v906
    %v922 = vadd.f32 %v921, %v907
    %v923 = vadd.f32 %v922, %v908
    %v924 = vadd.f32 %v923, %v909
    %v925 = vadd.f32 %v924, %v910
    %v926 = vadd.f32 %v925, %v911
    %v927 = vadd.f32 %v926, %v912
    %v928 = vadd.f32 %v927, %v913
    %v929 = vadd.f32 %v928, %v914
    %v930 = vrot.slane %v929, 4
    %v931 = vadd.f32 %v929, %v930
    %v932 = vrot.slane %v931, 2
    %v933 = vadd.f32 %v931, %v932
    %v934 = vrot.slane %v933, 1
    %v935 = vadd.f32 %v933, %v934
    %936 = vrot.lane.b32.xlu0 %v898, 32
    %v937 = vpop.permute.xlu0 %936
    %v938 = vadd.f32 %v898, %v937
    %939 = vrot.lane.b32.xlu0 %v935, 32
    %v940 = vpop.permute.xlu0 %939
    %v941 = vadd.f32 %v935, %v940
    %942 = vrot.lane.b32.xlu0 %v938, 64
    %v943 = vpop.permute.xlu0 %942
    %v944 = vadd.f32 %v938, %v943
    %945 = vrot.lane.b32.xlu0 %v941, 64
    %v946 = vpop.permute.xlu0 %945
    %v947 = vadd.f32 %v941, %v946
    %v948 = vmul.f32 %v944, 0.001953125
    %v949 = vmul.f32 %v947, 0.001953125
    %v950 = vmul.f32 %v948, %v948
    %v951 = vsub.f32 %v949, %v950
    %v952 = vmax.f32 %v951, 0.0
    %v953 = vadd.f32 %v952, 1e-05
    %v954 = vrsqrt.pop %v953
    %v955 = vlaneseq
    %v956 = vshrl.u32 %v955, 7
    %v957 = vsub.s32 0, %v956
    %v958 = vrot.slane %v948, %v957
    %v959 = vsub.f32 %v816, %v958
    %v960 = vsub.f32 %v819, %v958
    %v961 = vsub.f32 %v824, %v958
    %v962 = vsub.f32 %v827, %v958
    %v963 = vsub.f32 %v832, %v958
    %v964 = vsub.f32 %v835, %v958
    %v965 = vsub.f32 %v840, %v958
    %v966 = vsub.f32 %v843, %v958
    %v967 = vsub.f32 %v848, %v958
    %v968 = vsub.f32 %v851, %v958
    %v969 = vsub.f32 %v856, %v958
    %v970 = vsub.f32 %v859, %v958
    %v971 = vsub.f32 %v864, %v958
    %v972 = vsub.f32 %v867, %v958
    %v973 = vsub.f32 %v872, %v958
    %v974 = vsub.f32 %v875, %v958
    %v975 = vlaneseq
    %v976 = vshrl.u32 %v975, 7
    %v977 = vsub.s32 0, %v976
    %v978 = vrot.slane %v954, %v977
    %v979 = vmul.f32 %v959, %v978
    %v980 = vmul.f32 %v960, %v978
    %v981 = vmul.f32 %v961, %v978
    %v982 = vmul.f32 %v962, %v978
    %v983 = vmul.f32 %v963, %v978
    %v984 = vmul.f32 %v964, %v978
    %v985 = vmul.f32 %v965, %v978
    %v986 = vmul.f32 %v966, %v978
    %v987 = vmul.f32 %v967, %v978
    %v988 = vmul.f32 %v968, %v978
    %v989 = vmul.f32 %v969, %v978
    %v990 = vmul.f32 %v970, %v978
    %v991 = vmul.f32 %v971, %v978
    %v992 = vmul.f32 %v972, %v978
    %v993 = vmul.f32 %v973, %v978
    %v994 = vmul.f32 %v974, %v978
    %v995 = vmax.f32 %v979, 0.0
    %v996 = vmax.f32 %v980, 0.0
    %v997 = vmax.f32 %v981, 0.0
    %v998 = vmax.f32 %v982, 0.0
    %v999 = vmax.f32 %v983, 0.0
    %v1000 = vmax.f32 %v984, 0.0
    %v1001 = vmax.f32 %v985, 0.0
    %v1002 = vmax.f32 %v986, 0.0
    %v1003 = vmax.f32 %v987, 0.0
    %v1004 = vmax.f32 %v988, 0.0
    %v1005 = vmax.f32 %v989, 0.0
    %v1006 = vmax.f32 %v990, 0.0
    %v1007 = vmax.f32 %v991, 0.0
    %v1008 = vmax.f32 %v992, 0.0
    %v1009 = vmax.f32 %v993, 0.0
    %v1010 = vmax.f32 %v994, 0.0
    %v1011 = vpack.c.bf16 %v996, %v995
    %v1012 = vpack.c.bf16 %v998, %v997
    %v1013 = vpack.c.bf16 %v1000, %v999
    %v1014 = vpack.c.bf16 %v1002, %v1001
    %v1015 = vpack.c.bf16 %v1004, %v1003
    %v1016 = vpack.c.bf16 %v1006, %v1005
    %v1017 = vpack.c.bf16 %v1008, %v1007
    %v1018 = vpack.c.bf16 %v1010, %v1009
    %v1027 = vunpack.c.l.b16 %v1011
    %v1028 = vunpack.c.h.b16 %v1011
    %v1029 = vunpack.c.l.b16 %v1012
    %v1030 = vunpack.c.h.b16 %v1012
    %v1031 = vunpack.c.l.b16 %v1013
    %v1032 = vunpack.c.h.b16 %v1013
    %v1033 = vunpack.c.l.b16 %v1014
    %v1034 = vunpack.c.h.b16 %v1014
    %v1035 = vunpack.c.l.b16 %v1015
    %v1036 = vunpack.c.h.b16 %v1015
    %v1037 = vunpack.c.l.b16 %v1016
    %v1038 = vunpack.c.h.b16 %v1016
    %v1039 = vunpack.c.l.b16 %v1017
    %v1040 = vunpack.c.h.b16 %v1017
    %v1041 = vunpack.c.l.b16 %v1018
    %v1042 = vunpack.c.h.b16 %v1018
    %v1043 = vpack.c.b16 %v1027, %v1027
    %v1044 = vpack.c.b16 %v1028, %v1028
    %v1045 = vpack.c.b16 %v1029, %v1029
    %v1046 = vpack.c.b16 %v1030, %v1030
    %v1047 = vpack.c.b16 %v1031, %v1031
    %v1048 = vpack.c.b16 %v1032, %v1032
    %v1049 = vpack.c.b16 %v1033, %v1033
    %v1050 = vpack.c.b16 %v1034, %v1034
    %v1051 = vpack.c.b16 %v1035, %v1035
    %v1052 = vpack.c.b16 %v1036, %v1036
    %v1053 = vpack.c.b16 %v1037, %v1037
    %v1054 = vpack.c.b16 %v1038, %v1038
    %v1055 = vpack.c.b16 %v1039, %v1039
    %v1056 = vpack.c.b16 %v1040, %v1040
    %v1057 = vpack.c.b16 %v1041, %v1041
    %v1058 = vpack.c.b16 %v1042, %v1042
    %1075 = vst [vmem:[%s2] sm:$0xf] %v1043
    %1076 = vst [vmem:[%s2 + $0x4] sm:$0xf] %v1044
    %1077 = vst [vmem:[%s2 + $0x8] sm:$0xf] %v1045
    %1078 = vst [vmem:[%s2 + $0xc] sm:$0xf] %v1046
    %1079 = vst [vmem:[%s2 + $0x10] sm:$0xf] %v1047
    %1080 = vst [vmem:[%s2 + $0x14] sm:$0xf] %v1048
    %1081 = vst [vmem:[%s2 + $0x18] sm:$0xf] %v1049
    %1082 = vst [vmem:[%s2 + $0x1c] sm:$0xf] %v1050
    %1083 = vst [vmem:[%s2 + $0x20] sm:$0xf] %v1051
    %1084 = vst [vmem:[%s2 + $0x24] sm:$0xf] %v1052
    %1085 = vst [vmem:[%s2 + $0x28] sm:$0xf] %v1053
    %1086 = vst [vmem:[%s2 + $0x2c] sm:$0xf] %v1054
    %1087 = vst [vmem:[%s2 + $0x30] sm:$0xf] %v1055
    %1088 = vst [vmem:[%s2 + $0x34] sm:$0xf] %v1056
    %1089 = vst [vmem:[%s2 + $0x38] sm:$0xf] %v1057
    %1090 = vst [vmem:[%s2 + $0x3c] sm:$0xf] %v1058
    // Predicated region
    $region14: #{decoder_forward.7} parent=1 // pred_check
      _
    $region15: #{decoder_forward.7} parent=1 // pred_check_branch
      %1092 = sbr.rel (0) target = $region17
    $region16: #{decoder_forward.7} parent=1 // pred_region
      _
    $region17: #{decoder_forward.7} parent=1 // pred_fallthru
      _
    // Predicated region
    $region18: #{decoder_forward.7} parent=1 // pred_check
      _
    $region19: #{decoder_forward.7} parent=1 // pred_check_branch
      %1094 = sbr.rel (0) target = $region21
    $region20: #{decoder_forward.7} parent=1 // pred_region
      _
    $region21: #{decoder_forward.7} parent=1 // pred_fallthru
      _
    %1095 = vsyncpa [#allocation3], 1

// kernel: decoder_forward.8
$region0: #{decoder_forward.8}
  #allocation0 [shape = 'u32[]', space=smem, size = 0x4, offset = 0x4, fixed_abs, tag = 'smem constant byte address 0x4 - core index']
  #allocation1 [shape = 'u32[144,128]{1,0:T(1,128)}', space=vmem, size = 0x12000, scoped, tag = 'internal scratch']
  %s0 = inlined_call_operand.vmem [shape: bf16[512,288], index: 0, kind: input, shape index: {}]
  %s1 = inlined_call_operand.hbm [shape: bf16[288,128], index: 1, kind: input, shape index: {}]
  %s2 = inlined_call_operand.vmem [shape: bf16[512,128], index: 2, kind: output, shape index: {}]
  %s3 = sld [smem:[#allocation0]]
  $region22: #{decoder_forward.8} parent=0
    _
  %s5 = ssub.s32 1, %s3
  %s6 = scalar_select 0, %s5, %s3
  $region1: #{decoder_forward.8} parent=0
    #allocation2 [shape = 'u8[73728]{0}', space=vmem, size = 0x12000, scoped, tag = 'input window, operand 1, single buffered']
    #allocation3 [shape = 's32[1]{0}', space=sflag, size = 0x4, scoped, tag = 'scoped memory for decoder_forward.8']
    %7 = vsyncpa [#allocation3], 0
    // Predicated region
    $region2: #{decoder_forward.8} parent=1 // pred_check
      _
    $region3: #{decoder_forward.8} parent=1 // pred_check_branch
      %9 = sbr.rel (0) target = $region5
    $region4: #{decoder_forward.8} parent=1 // pred_region
      _
    $region5: #{decoder_forward.8} parent=1 // pred_fallthru
      _
    // Predicated region
    $region6: #{decoder_forward.8} parent=1 // pred_check
      _
    $region7: #{decoder_forward.8} parent=1 // pred_check_branch
      %11 = sbr.rel (0) target = $region9
    $region8: #{decoder_forward.8} parent=1 // pred_region
      %s13 = ssub.s32 2304, 2304
      %14 = vsyncadd [#allocation3], %s13
      %s15 = sshll.u32 [#allocation2], 4
      %s16 = int_to_ptr.vmem [resolvable:$true] %s15
      %21 = dma.hbm_to_vmem [thread:$0]  %s1, 2304, %s16, [#allocation3], 64, 64, 4
    $region9: #{decoder_forward.8} parent=1 // pred_fallthru
      _
    // Predicated region
    $region10: #{decoder_forward.8} parent=1 // pred_check
      _
    $region11: #{decoder_forward.8} parent=1 // pred_check_branch
      %23 = sbr.rel (0) target = $region13
    $region12: #{decoder_forward.8} parent=1 // pred_region
      %24 = dma.done [#allocation3], 2304
    $region13: #{decoder_forward.8} parent=1 // pred_fallthru
      _
    %v26 = vld [vmem:[%s0] sm:$0xff]
    %v27 = vld [vmem:[%s0 + $0x8] sm:$0xf]
    %v28 = vld [vmem:[%s0 + $0xc] sm:$0xff]
    %v29 = vld [vmem:[%s0 + $0x14] sm:$0xf]
    %v30 = vld [vmem:[%s0 + $0x18] sm:$0xff]
    %v31 = vld [vmem:[%s0 + $0x20] sm:$0xf]
    %v32 = vld [vmem:[%s0 + $0x24] sm:$0xff]
    %v33 = vld [vmem:[%s0 + $0x2c] sm:$0xf]
    %v34 = vld [vmem:[%s0 + $0x30] sm:$0xff]
    %v35 = vld [vmem:[%s0 + $0x38] sm:$0xf]
    %v36 = vld [vmem:[%s0 + $0x3c] sm:$0xff]
    %v37 = vld [vmem:[%s0 + $0x44] sm:$0xf]
    %v38 = vld [vmem:[%s0 + $0x48] sm:$0xff]
    %v39 = vld [vmem:[%s0 + $0x50] sm:$0xf]
    %v40 = vld [vmem:[%s0 + $0x54] sm:$0xff]
    %v41 = vld [vmem:[%s0 + $0x5c] sm:$0xf]
    %v42 = vld [vmem:[%s0 + $0x60] sm:$0xff]
    %v43 = vld [vmem:[%s0 + $0x68] sm:$0xf]
    %v44 = vld [vmem:[%s0 + $0x6c] sm:$0xff]
    %v45 = vld [vmem:[%s0 + $0x74] sm:$0xf]
    %v46 = vld [vmem:[%s0 + $0x78] sm:$0xff]
    %v47 = vld [vmem:[%s0 + $0x80] sm:$0xf]
    %v48 = vld [vmem:[%s0 + $0x84] sm:$0xff]
    %v49 = vld [vmem:[%s0 + $0x8c] sm:$0xf]
    %v50 = vld [vmem:[%s0 + $0x90] sm:$0xff]
    %v51 = vld [vmem:[%s0 + $0x98] sm:$0xf]
    %v52 = vld [vmem:[%s0 + $0x9c] sm:$0xff]
    %v53 = vld [vmem:[%s0 + $0xa4] sm:$0xf]
    %v54 = vld [vmem:[%s0 + $0xa8] sm:$0xff]
    %v55 = vld [vmem:[%s0 + $0xb0] sm:$0xf]
    %v56 = vld [vmem:[%s0 + $0xb4] sm:$0xff]
    %v57 = vld [vmem:[%s0 + $0xbc] sm:$0xf]
    %v58 = vld [vmem:[%s0 + $0xc0] sm:$0xff]
    %v59 = vld [vmem:[%s0 + $0xc8] sm:$0xf]
    %v60 = vld [vmem:[%s0 + $0xcc] sm:$0xff]
    %v61 = vld [vmem:[%s0 + $0xd4] sm:$0xf]
    %v62 = vld [vmem:[%s0 + $0xd8] sm:$0xff]
    %v63 = vld [vmem:[%s0 + $0xe0] sm:$0xf]
    %v64 = vld [vmem:[%s0 + $0xe4] sm:$0xff]
    %v65 = vld [vmem:[%s0 + $0xec] sm:$0xf]
    %v66 = vld [vmem:[%s0 + $0xf0] sm:$0xff]
    %v67 = vld [vmem:[%s0 + $0xf8] sm:$0xf]
    %v68 = vld [vmem:[%s0 + $0xfc] sm:$0xff]
    %v69 = vld [vmem:[%s0 + $0x104] sm:$0xf]
    %v70 = vld [vmem:[%s0 + $0x108] sm:$0xff]
    %v71 = vld [vmem:[%s0 + $0x110] sm:$0xf]
    %v72 = vld [vmem:[%s0 + $0x114] sm:$0xff]
    %v73 = vld [vmem:[%s0 + $0x11c] sm:$0xf]
    %v74 = vld [vmem:[%s0 + $0x120] sm:$0xff]
    %v75 = vld [vmem:[%s0 + $0x128] sm:$0xf]
    %v76 = vld [vmem:[%s0 + $0x12c] sm:$0xff]
    %v77 = vld [vmem:[%s0 + $0x134] sm:$0xf]
    %v78 = vld [vmem:[%s0 + $0x138] sm:$0xff]
    %v79 = vld [vmem:[%s0 + $0x140] sm:$0xf]
    %v80 = vld [vmem:[%s0 + $0x144] sm:$0xff]
    %v81 = vld [vmem:[%s0 + $0x14c] sm:$0xf]
    %v82 = vld [vmem:[%s0 + $0x150] sm:$0xff]
    %v83 = vld [vmem:[%s0 + $0x158] sm:$0xf]
    %v84 = vld [vmem:[%s0 + $0x15c] sm:$0xff]
    %v85 = vld [vmem:[%s0 + $0x164] sm:$0xf]
    %v86 = vld [vmem:[%s0 + $0x168] sm:$0xff]
    %v87 = vld [vmem:[%s0 + $0x170] sm:$0xf]
    %v88 = vld [vmem:[%s0 + $0x174] sm:$0xff]
    %v89 = vld [vmem:[%s0 + $0x17c] sm:$0xf]
    %v90 = vld [vmem:[%s0 + $0x180] sm:$0xff]
    %v91 = vld [vmem:[%s0 + $0x188] sm:$0xf]
    %v92 = vld [vmem:[%s0 + $0x18c] sm:$0xff]
    %v93 = vld [vmem:[%s0 + $0x194] sm:$0xf]
    %v94 = vld [vmem:[%s0 + $0x198] sm:$0xff]
    %v95 = vld [vmem:[%s0 + $0x1a0] sm:$0xf]
    %v96 = vld [vmem:[%s0 + $0x1a4] sm:$0xff]
    %v97 = vld [vmem:[%s0 + $0x1ac] sm:$0xf]
    %v98 = vld [vmem:[%s0 + $0x1b0] sm:$0xff]
    %v99 = vld [vmem:[%s0 + $0x1b8] sm:$0xf]
    %v100 = vld [vmem:[%s0 + $0x1bc] sm:$0xff]
    %v101 = vld [vmem:[%s0 + $0x1c4] sm:$0xf]
    %v102 = vld [vmem:[%s0 + $0x1c8] sm:$0xff]
    %v103 = vld [vmem:[%s0 + $0x1d0] sm:$0xf]
    %v104 = vld [vmem:[%s0 + $0x1d4] sm:$0xff]
    %v105 = vld [vmem:[%s0 + $0x1dc] sm:$0xf]
    %v106 = vld [vmem:[%s0 + $0x1e0] sm:$0xff]
    %v107 = vld [vmem:[%s0 + $0x1e8] sm:$0xf]
    %v108 = vld [vmem:[%s0 + $0x1ec] sm:$0xff]
    %v109 = vld [vmem:[%s0 + $0x1f4] sm:$0xf]
    %v110 = vld [vmem:[%s0 + $0x1f8] sm:$0xff]
    %v111 = vld [vmem:[%s0 + $0x200] sm:$0xf]
    %v112 = vld [vmem:[%s0 + $0x204] sm:$0xff]
    %v113 = vld [vmem:[%s0 + $0x20c] sm:$0xf]
    %v114 = vld [vmem:[%s0 + $0x210] sm:$0xff]
    %v115 = vld [vmem:[%s0 + $0x218] sm:$0xf]
    %v116 = vld [vmem:[%s0 + $0x21c] sm:$0xff]
    %v117 = vld [vmem:[%s0 + $0x224] sm:$0xf]
    %v118 = vld [vmem:[%s0 + $0x228] sm:$0xff]
    %v119 = vld [vmem:[%s0 + $0x230] sm:$0xf]
    %v120 = vld [vmem:[%s0 + $0x234] sm:$0xff]
    %v121 = vld [vmem:[%s0 + $0x23c] sm:$0xf]
    %v122 = vld [vmem:[%s0 + $0x240] sm:$0xff]
    %v123 = vld [vmem:[%s0 + $0x248] sm:$0xf]
    %v124 = vld [vmem:[%s0 + $0x24c] sm:$0xff]
    %v125 = vld [vmem:[%s0 + $0x254] sm:$0xf]
    %v126 = vld [vmem:[%s0 + $0x258] sm:$0xff]
    %v127 = vld [vmem:[%s0 + $0x260] sm:$0xf]
    %v128 = vld [vmem:[%s0 + $0x264] sm:$0xff]
    %v129 = vld [vmem:[%s0 + $0x26c] sm:$0xf]
    %v130 = vld [vmem:[%s0 + $0x270] sm:$0xff]
    %v131 = vld [vmem:[%s0 + $0x278] sm:$0xf]
    %v132 = vld [vmem:[%s0 + $0x27c] sm:$0xff]
    %v133 = vld [vmem:[%s0 + $0x284] sm:$0xf]
    %v134 = vld [vmem:[%s0 + $0x288] sm:$0xff]
    %v135 = vld [vmem:[%s0 + $0x290] sm:$0xf]
    %v136 = vld [vmem:[%s0 + $0x294] sm:$0xff]
    %v137 = vld [vmem:[%s0 + $0x29c] sm:$0xf]
    %v138 = vld [vmem:[%s0 + $0x2a0] sm:$0xff]
    %v139 = vld [vmem:[%s0 + $0x2a8] sm:$0xf]
    %v140 = vld [vmem:[%s0 + $0x2ac] sm:$0xff]
    %v141 = vld [vmem:[%s0 + $0x2b4] sm:$0xf]
    %v142 = vld [vmem:[%s0 + $0x2b8] sm:$0xff]
    %v143 = vld [vmem:[%s0 + $0x2c0] sm:$0xf]
    %v144 = vld [vmem:[%s0 + $0x2c4] sm:$0xff]
    %v145 = vld [vmem:[%s0 + $0x2cc] sm:$0xf]
    %v146 = vld [vmem:[%s0 + $0x2d0] sm:$0xff]
    %v147 = vld [vmem:[%s0 + $0x2d8] sm:$0xf]
    %v148 = vld [vmem:[%s0 + $0x2dc] sm:$0xff]
    %v149 = vld [vmem:[%s0 + $0x2e4] sm:$0xf]
    %v150 = vld [vmem:[%s0 + $0x2e8] sm:$0xff]
    %v151 = vld [vmem:[%s0 + $0x2f0] sm:$0xf]
    %v152 = vld [vmem:[%s0 + $0x2f4] sm:$0xff]
    %v153 = vld [vmem:[%s0 + $0x2fc] sm:$0xf]
    %v154 = vld [vmem:[#allocation2] sm:$0xf]
    %v155 = vld [vmem:[#allocation2 + $0x4] sm:$0xf]
    %v156 = vld [vmem:[#allocation2 + $0x8] sm:$0xf]
    %v157 = vld [vmem:[#allocation2 + $0xc] sm:$0xf]
    %v158 = vld [vmem:[#allocation2 + $0x10] sm:$0xf]
    %v159 = vld [vmem:[#allocation2 + $0x14] sm:$0xf]
    %v160 = vld [vmem:[#allocation2 + $0x18] sm:$0xf]
    %v161 = vld [vmem:[#allocation2 + $0x1c] sm:$0xf]
    %v162 = vld [vmem:[#allocation2 + $0x20] sm:$0xf]
    %v163 = vld [vmem:[#allocation2 + $0x24] sm:$0xf]
    %v164 = vld [vmem:[#allocation2 + $0x28] sm:$0xf]
    %v165 = vld [vmem:[#allocation2 + $0x2c] sm:$0xf]
    %v166 = vld [vmem:[#allocation2 + $0x30] sm:$0xf]
    %v167 = vld [vmem:[#allocation2 + $0x34] sm:$0xf]
    %v168 = vld [vmem:[#allocation2 + $0x38] sm:$0xf]
    %v169 = vld [vmem:[#allocation2 + $0x3c] sm:$0xf]
    %v170 = vld [vmem:[#allocation2 + $0x40] sm:$0xf]
    %v171 = vld [vmem:[#allocation2 + $0x44] sm:$0xf]
    %v172 = vld [vmem:[#allocation2 + $0x48] sm:$0xf]
    %v173 = vld [vmem:[#allocation2 + $0x4c] sm:$0xf]
    %v174 = vld [vmem:[#allocation2 + $0x50] sm:$0xf]
    %v175 = vld [vmem:[#allocation2 + $0x54] sm:$0xf]
    %v176 = vld [vmem:[#allocation2 + $0x58] sm:$0xf]
    %v177 = vld [vmem:[#allocation2 + $0x5c] sm:$0xf]
    %v178 = vld [vmem:[#allocation2 + $0x60] sm:$0xf]
    %v179 = vld [vmem:[#allocation2 + $0x64] sm:$0xf]
    %v180 = vld [vmem:[#allocation2 + $0x68] sm:$0xf]
    %v181 = vld [vmem:[#allocation2 + $0x6c] sm:$0xf]
    %v182 = vld [vmem:[#allocation2 + $0x70] sm:$0xf]
    %v183 = vld [vmem:[#allocation2 + $0x74] sm:$0xf]
    %v184 = vld [vmem:[#allocation2 + $0x78] sm:$0xf]
    %v185 = vld [vmem:[#allocation2 + $0x7c] sm:$0xf]
    %v186 = vld [vmem:[#allocation2 + $0x80] sm:$0xf]
    %v187 = vld [vmem:[#allocation2 + $0x84] sm:$0xf]
    %v188 = vld [vmem:[#allocation2 + $0x88] sm:$0xf]
    %v189 = vld [vmem:[#allocation2 + $0x8c] sm:$0xf]
    %v318 = vunpack.c.l.b16 %v26
    %v319 = vunpack.c.h.b16 %v26
    %v320 = vunpack.c.l.b16 %v27
    %v321 = vunpack.c.l.b16 %v28
    %v322 = vunpack.c.h.b16 %v28
    %v323 = vunpack.c.l.b16 %v29
    %v324 = vunpack.c.l.b16 %v30
    %v325 = vunpack.c.h.b16 %v30
    %v326 = vunpack.c.l.b16 %v31
    %v327 = vunpack.c.l.b16 %v32
    %v328 = vunpack.c.h.b16 %v32
    %v329 = vunpack.c.l.b16 %v33
    %v330 = vunpack.c.l.b16 %v34
    %v331 = vunpack.c.h.b16 %v34
    %v332 = vunpack.c.l.b16 %v35
    %v333 = vunpack.c.l.b16 %v36
    %v334 = vunpack.c.h.b16 %v36
    %v335 = vunpack.c.l.b16 %v37
    %v336 = vunpack.c.l.b16 %v38
    %v337 = vunpack.c.h.b16 %v38
    %v338 = vunpack.c.l.b16 %v39
    %v339 = vunpack.c.l.b16 %v40
    %v340 = vunpack.c.h.b16 %v40
    %v341 = vunpack.c.l.b16 %v41
    %v342 = vunpack.c.l.b16 %v42
    %v343 = vunpack.c.h.b16 %v42
    %v344 = vunpack.c.l.b16 %v43
    %v345 = vunpack.c.l.b16 %v44
    %v346 = vunpack.c.h.b16 %v44
    %v347 = vunpack.c.l.b16 %v45
    %v348 = vunpack.c.l.b16 %v46
    %v349 = vunpack.c.h.b16 %v46
    %v350 = vunpack.c.l.b16 %v47
    %v351 = vunpack.c.l.b16 %v48
    %v352 = vunpack.c.h.b16 %v48
    %v353 = vunpack.c.l.b16 %v49
    %v354 = vunpack.c.l.b16 %v50
    %v355 = vunpack.c.h.b16 %v50
    %v356 = vunpack.c.l.b16 %v51
    %v357 = vunpack.c.l.b16 %v52
    %v358 = vunpack.c.h.b16 %v52
    %v359 = vunpack.c.l.b16 %v53
    %v360 = vunpack.c.l.b16 %v54
    %v361 = vunpack.c.h.b16 %v54
    %v362 = vunpack.c.l.b16 %v55
    %v363 = vunpack.c.l.b16 %v56
    %v364 = vunpack.c.h.b16 %v56
    %v365 = vunpack.c.l.b16 %v57
    %v366 = vunpack.c.l.b16 %v58
    %v367 = vunpack.c.h.b16 %v58
    %v368 = vunpack.c.l.b16 %v59
    %v369 = vunpack.c.l.b16 %v60
    %v370 = vunpack.c.h.b16 %v60
    %v371 = vunpack.c.l.b16 %v61
    %v372 = vunpack.c.l.b16 %v62
    %v373 = vunpack.c.h.b16 %v62
    %v374 = vunpack.c.l.b16 %v63
    %v375 = vunpack.c.l.b16 %v64
    %v376 = vunpack.c.h.b16 %v64
    %v377 = vunpack.c.l.b16 %v65
    %v378 = vunpack.c.l.b16 %v66
    %v379 = vunpack.c.h.b16 %v66
    %v380 = vunpack.c.l.b16 %v67
    %v381 = vunpack.c.l.b16 %v68
    %v382 = vunpack.c.h.b16 %v68
    %v383 = vunpack.c.l.b16 %v69
    %v384 = vunpack.c.l.b16 %v70
    %v385 = vunpack.c.h.b16 %v70
    %v386 = vunpack.c.l.b16 %v71
    %v387 = vunpack.c.l.b16 %v72
    %v388 = vunpack.c.h.b16 %v72
    %v389 = vunpack.c.l.b16 %v73
    %v390 = vunpack.c.l.b16 %v74
    %v391 = vunpack.c.h.b16 %v74
    %v392 = vunpack.c.l.b16 %v75
    %v393 = vunpack.c.l.b16 %v76
    %v394 = vunpack.c.h.b16 %v76
    %v395 = vunpack.c.l.b16 %v77
    %v396 = vunpack.c.l.b16 %v78
    %v397 = vunpack.c.h.b16 %v78
    %v398 = vunpack.c.l.b16 %v79
    %v399 = vunpack.c.l.b16 %v80
    %v400 = vunpack.c.h.b16 %v80
    %v401 = vunpack.c.l.b16 %v81
    %v402 = vunpack.c.l.b16 %v82
    %v403 = vunpack.c.h.b16 %v82
    %v404 = vunpack.c.l.b16 %v83
    %v405 = vunpack.c.l.b16 %v84
    %v406 = vunpack.c.h.b16 %v84
    %v407 = vunpack.c.l.b16 %v85
    %v408 = vunpack.c.l.b16 %v86
    %v409 = vunpack.c.h.b16 %v86
    %v410 = vunpack.c.l.b16 %v87
    %v411 = vunpack.c.l.b16 %v88
    %v412 = vunpack.c.h.b16 %v88
    %v413 = vunpack.c.l.b16 %v89
    %v414 = vunpack.c.l.b16 %v90
    %v415 = vunpack.c.h.b16 %v90
    %v416 = vunpack.c.l.b16 %v91
    %v417 = vunpack.c.l.b16 %v92
    %v418 = vunpack.c.h.b16 %v92
    %v419 = vunpack.c.l.b16 %v93
    %v420 = vunpack.c.l.b16 %v94
    %v421 = vunpack.c.h.b16 %v94
    %v422 = vunpack.c.l.b16 %v95
    %v423 = vunpack.c.l.b16 %v96
    %v424 = vunpack.c.h.b16 %v96
    %v425 = vunpack.c.l.b16 %v97
    %v426 = vunpack.c.l.b16 %v98
    %v427 = vunpack.c.h.b16 %v98
    %v428 = vunpack.c.l.b16 %v99
    %v429 = vunpack.c.l.b16 %v100
    %v430 = vunpack.c.h.b16 %v100
    %v431 = vunpack.c.l.b16 %v101
    %v432 = vunpack.c.l.b16 %v102
    %v433 = vunpack.c.h.b16 %v102
    %v434 = vunpack.c.l.b16 %v103
    %v435 = vunpack.c.l.b16 %v104
    %v436 = vunpack.c.h.b16 %v104
    %v437 = vunpack.c.l.b16 %v105
    %v438 = vunpack.c.l.b16 %v106
    %v439 = vunpack.c.h.b16 %v106
    %v440 = vunpack.c.l.b16 %v107
    %v441 = vunpack.c.l.b16 %v108
    %v442 = vunpack.c.h.b16 %v108
    %v443 = vunpack.c.l.b16 %v109
    %v444 = vunpack.c.l.b16 %v110
    %v445 = vunpack.c.h.b16 %v110
    %v446 = vunpack.c.l.b16 %v111
    %v447 = vunpack.c.l.b16 %v112
    %v448 = vunpack.c.h.b16 %v112
    %v449 = vunpack.c.l.b16 %v113
    %v450 = vunpack.c.l.b16 %v114
    %v451 = vunpack.c.h.b16 %v114
    %v452 = vunpack.c.l.b16 %v115
    %v453 = vunpack.c.l.b16 %v116
    %v454 = vunpack.c.h.b16 %v116
    %v455 = vunpack.c.l.b16 %v117
    %v456 = vunpack.c.l.b16 %v118
    %v457 = vunpack.c.h.b16 %v118
    %v458 = vunpack.c.l.b16 %v119
    %v459 = vunpack.c.l.b16 %v120
    %v460 = vunpack.c.h.b16 %v120
    %v461 = vunpack.c.l.b16 %v121
    %v462 = vunpack.c.l.b16 %v122
    %v463 = vunpack.c.h.b16 %v122
    %v464 = vunpack.c.l.b16 %v123
    %v465 = vunpack.c.l.b16 %v124
    %v466 = vunpack.c.h.b16 %v124
    %v467 = vunpack.c.l.b16 %v125
    %v468 = vunpack.c.l.b16 %v126
    %v469 = vunpack.c.h.b16 %v126
    %v470 = vunpack.c.l.b16 %v127
    %v471 = vunpack.c.l.b16 %v128
    %v472 = vunpack.c.h.b16 %v128
    %v473 = vunpack.c.l.b16 %v129
    %v474 = vunpack.c.l.b16 %v130
    %v475 = vunpack.c.h.b16 %v130
    %v476 = vunpack.c.l.b16 %v131
    %v477 = vunpack.c.l.b16 %v132
    %v478 = vunpack.c.h.b16 %v132
    %v479 = vunpack.c.l.b16 %v133
    %v480 = vunpack.c.l.b16 %v134
    %v481 = vunpack.c.h.b16 %v134
    %v482 = vunpack.c.l.b16 %v135
    %v483 = vunpack.c.l.b16 %v136
    %v484 = vunpack.c.h.b16 %v136
    %v485 = vunpack.c.l.b16 %v137
    %v486 = vunpack.c.l.b16 %v138
    %v487 = vunpack.c.h.b16 %v138
    %v488 = vunpack.c.l.b16 %v139
    %v489 = vunpack.c.l.b16 %v140
    %v490 = vunpack.c.h.b16 %v140
    %v491 = vunpack.c.l.b16 %v141
    %v492 = vunpack.c.l.b16 %v142
    %v493 = vunpack.c.h.b16 %v142
    %v494 = vunpack.c.l.b16 %v143
    %v495 = vunpack.c.l.b16 %v144
    %v496 = vunpack.c.h.b16 %v144
    %v497 = vunpack.c.l.b16 %v145
    %v498 = vunpack.c.l.b16 %v146
    %v499 = vunpack.c.h.b16 %v146
    %v500 = vunpack.c.l.b16 %v147
    %v501 = vunpack.c.l.b16 %v148
    %v502 = vunpack.c.h.b16 %v148
    %v503 = vunpack.c.l.b16 %v149
    %v504 = vunpack.c.l.b16 %v150
    %v505 = vunpack.c.h.b16 %v150
    %v506 = vunpack.c.l.b16 %v151
    %v507 = vunpack.c.l.b16 %v152
    %v508 = vunpack.c.h.b16 %v152
    %v509 = vunpack.c.l.b16 %v153
    %v510 = vpack.c.b16 %v321, %v318
    %v511 = vpack.c.b16 %v322, %v319
    %v512 = vpack.c.b16 %v323, %v320
    %v513 = vpack.c.b16 %v327, %v324
    %v514 = vpack.c.b16 %v328, %v325
    %v515 = vpack.c.b16 %v329, %v326
    %v516 = vpack.c.b16 %v333, %v330
    %v517 = vpack.c.b16 %v334, %v331
    %v518 = vpack.c.b16 %v335, %v332
    %v519 = vpack.c.b16 %v339, %v336
    %v520 = vpack.c.b16 %v340, %v337
    %v521 = vpack.c.b16 %v341, %v338
    %v522 = vpack.c.b16 %v345, %v342
    %v523 = vpack.c.b16 %v346, %v343
    %v524 = vpack.c.b16 %v347, %v344
    %v525 = vpack.c.b16 %v351, %v348
    %v526 = vpack.c.b16 %v352, %v349
    %v527 = vpack.c.b16 %v353, %v350
    %v528 = vpack.c.b16 %v357, %v354
    %v529 = vpack.c.b16 %v358, %v355
    %v530 = vpack.c.b16 %v359, %v356
    %v531 = vpack.c.b16 %v363, %v360
    %v532 = vpack.c.b16 %v364, %v361
    %v533 = vpack.c.b16 %v365, %v362
    %v534 = vpack.c.b16 %v369, %v366
    %v535 = vpack.c.b16 %v370, %v367
    %v536 = vpack.c.b16 %v371, %v368
    %v537 = vpack.c.b16 %v375, %v372
    %v538 = vpack.c.b16 %v376, %v373
    %v539 = vpack.c.b16 %v377, %v374
    %v540 = vpack.c.b16 %v381, %v378
    %v541 = vpack.c.b16 %v382, %v379
    %v542 = vpack.c.b16 %v383, %v380
    %v543 = vpack.c.b16 %v387, %v384
    %v544 = vpack.c.b16 %v388, %v385
    %v545 = vpack.c.b16 %v389, %v386
    %v546 = vpack.c.b16 %v393, %v390
    %v547 = vpack.c.b16 %v394, %v391
    %v548 = vpack.c.b16 %v395, %v392
    %v549 = vpack.c.b16 %v399, %v396
    %v550 = vpack.c.b16 %v400, %v397
    %v551 = vpack.c.b16 %v401, %v398
    %v552 = vpack.c.b16 %v405, %v402
    %v553 = vpack.c.b16 %v406, %v403
    %v554 = vpack.c.b16 %v407, %v404
    %v555 = vpack.c.b16 %v411, %v408
    %v556 = vpack.c.b16 %v412, %v409
    %v557 = vpack.c.b16 %v413, %v410
    %v558 = vpack.c.b16 %v417, %v414
    %v559 = vpack.c.b16 %v418, %v415
    %v560 = vpack.c.b16 %v419, %v416
    %v561 = vpack.c.b16 %v423, %v420
    %v562 = vpack.c.b16 %v424, %v421
    %v563 = vpack.c.b16 %v425, %v422
    %v564 = vpack.c.b16 %v429, %v426
    %v565 = vpack.c.b16 %v430, %v427
    %v566 = vpack.c.b16 %v431, %v428
    %v567 = vpack.c.b16 %v435, %v432
    %v568 = vpack.c.b16 %v436, %v433
    %v569 = vpack.c.b16 %v437, %v434
    %v570 = vpack.c.b16 %v441, %v438
    %v571 = vpack.c.b16 %v442, %v439
    %v572 = vpack.c.b16 %v443, %v440
    %v573 = vpack.c.b16 %v447, %v444
    %v574 = vpack.c.b16 %v448, %v445
    %v575 = vpack.c.b16 %v449, %v446
    %v576 = vpack.c.b16 %v453, %v450
    %v577 = vpack.c.b16 %v454, %v451
    %v578 = vpack.c.b16 %v455, %v452
    %v579 = vpack.c.b16 %v459, %v456
    %v580 = vpack.c.b16 %v460, %v457
    %v581 = vpack.c.b16 %v461, %v458
    %v582 = vpack.c.b16 %v465, %v462
    %v583 = vpack.c.b16 %v466, %v463
    %v584 = vpack.c.b16 %v467, %v464
    %v585 = vpack.c.b16 %v471, %v468
    %v586 = vpack.c.b16 %v472, %v469
    %v587 = vpack.c.b16 %v473, %v470
    %v588 = vpack.c.b16 %v477, %v474
    %v589 = vpack.c.b16 %v478, %v475
    %v590 = vpack.c.b16 %v479, %v476
    %v591 = vpack.c.b16 %v483, %v480
    %v592 = vpack.c.b16 %v484, %v481
    %v593 = vpack.c.b16 %v485, %v482
    %v594 = vpack.c.b16 %v489, %v486
    %v595 = vpack.c.b16 %v490, %v487
    %v596 = vpack.c.b16 %v491, %v488
    %v597 = vpack.c.b16 %v495, %v492
    %v598 = vpack.c.b16 %v496, %v493
    %v599 = vpack.c.b16 %v497, %v494
    %v600 = vpack.c.b16 %v501, %v498
    %v601 = vpack.c.b16 %v502, %v499
    %v602 = vpack.c.b16 %v503, %v500
    %v603 = vpack.c.b16 %v507, %v504
    %v604 = vpack.c.b16 %v508, %v505
    %v605 = vpack.c.b16 %v509, %v506
    %v706 = vunpack.c.l.b16 %v154
    %v707 = vunpack.c.l.b16 %v155
    %v708 = vunpack.c.l.b16 %v156
    %v709 = vunpack.c.l.b16 %v157
    %v710 = vunpack.c.l.b16 %v158
    %v711 = vunpack.c.l.b16 %v159
    %v712 = vunpack.c.l.b16 %v160
    %v713 = vunpack.c.l.b16 %v161
    %v714 = vunpack.c.l.b16 %v162
    %v715 = vunpack.c.l.b16 %v163
    %v716 = vunpack.c.l.b16 %v164
    %v717 = vunpack.c.l.b16 %v165
    %v718 = vunpack.c.l.b16 %v166
    %v719 = vunpack.c.l.b16 %v167
    %v720 = vunpack.c.l.b16 %v168
    %v721 = vunpack.c.l.b16 %v169
    %v722 = vunpack.c.l.b16 %v170
    %v723 = vunpack.c.l.b16 %v171
    %v724 = vunpack.c.l.b16 %v172
    %v725 = vunpack.c.l.b16 %v173
    %v726 = vunpack.c.l.b16 %v174
    %v727 = vunpack.c.l.b16 %v175
    %v728 = vunpack.c.l.b16 %v176
    %v729 = vunpack.c.l.b16 %v177
    %v730 = vunpack.c.l.b16 %v178
    %v731 = vunpack.c.l.b16 %v179
    %v732 = vunpack.c.l.b16 %v180
    %v733 = vunpack.c.l.b16 %v181
    %v734 = vunpack.c.l.b16 %v182
    %v735 = vunpack.c.l.b16 %v183
    %v736 = vunpack.c.l.b16 %v184
    %v737 = vunpack.c.l.b16 %v185
    %v738 = vunpack.c.l.b16 %v186
    %v739 = vunpack.c.l.b16 %v187
    %v740 = vunpack.c.l.b16 %v188
    %v741 = vunpack.c.l.b16 %v189
    %v742 = vpack.c.b16 %v707, %v706
    %v743 = vpack.c.b16 %v709, %v708
    %v744 = vpack.c.b16 %v711, %v710
    %v745 = vpack.c.b16 %v713, %v712
    %v746 = vpack.c.b16 %v715, %v714
    %v747 = vpack.c.b16 %v717, %v716
    %v748 = vpack.c.b16 %v719, %v718
    %v749 = vpack.c.b16 %v721, %v720
    %v750 = vpack.c.b16 %v723, %v722
    %v751 = vpack.c.b16 %v725, %v724
    %v752 = vpack.c.b16 %v727, %v726
    %v753 = vpack.c.b16 %v729, %v728
    %v754 = vpack.c.b16 %v731, %v730
    %v755 = vpack.c.b16 %v733, %v732
    %v756 = vpack.c.b16 %v735, %v734
    %v757 = vpack.c.b16 %v737, %v736
    %v758 = vpack.c.b16 %v739, %v738
    %v759 = vpack.c.b16 %v741, %v740
    %vm778 = vcmask 261120
    %v780 = vsel %vm778, %v512, 0
    %v783 = vsel %vm778, %v515, 0
    %v786 = vsel %vm778, %v518, 0
    %v789 = vsel %vm778, %v521, 0
    %v792 = vsel %vm778, %v524, 0
    %v795 = vsel %vm778, %v527, 0
    %v798 = vsel %vm778, %v530, 0
    %v801 = vsel %vm778, %v533, 0
    %v804 = vsel %vm778, %v536, 0
    %v807 = vsel %vm778, %v539, 0
    %v810 = vsel %vm778, %v542, 0
    %v813 = vsel %vm778, %v545, 0
    %v816 = vsel %vm778, %v548, 0
    %v819 = vsel %vm778, %v551, 0
    %v822 = vsel %vm778, %v554, 0
    %v825 = vsel %vm778, %v557, 0
    %v828 = vsel %vm778, %v560, 0
    %v831 = vsel %vm778, %v563, 0
    %v834 = vsel %vm778, %v566, 0
    %v837 = vsel %vm778, %v569, 0
    %v840 = vsel %vm778, %v572, 0
    %v843 = vsel %vm778, %v575, 0
    %v846 = vsel %vm778, %v578, 0
    %v849 = vsel %vm778, %v581, 0
    %v852 = vsel %vm778, %v584, 0
    %v855 = vsel %vm778, %v587, 0
    %v858 = vsel %vm778, %v590, 0
    %v861 = vsel %vm778, %v593, 0
    %v864 = vsel %vm778, %v596, 0
    %v867 = vsel %vm778, %v599, 0
    %v870 = vsel %vm778, %v602, 0
    %v873 = vsel %vm778, %v605, 0
    %875 = vmatprep.subr.bf16.mxu0 0
    %876 = vmatpush1.bf16.msra.mxu0 %v742
    %877 = vmatprep.subr.bf16.mxu0 0
    %878 = vmatpush1.bf16.msra.mxu0 %v743
    %879 = vmatprep.subr.bf16.mxu0 0
    %880 = vmatpush1.bf16.msra.mxu0 %v744
    %881 = vmatprep.subr.bf16.mxu0 0
    %882 = vmatpush1.bf16.msra.mxu0 %v745
    %883 = vmatprep.subr.bf16.mxu0 0
    %884 = vmatpush1.bf16.msra.mxu0 %v746
    %885 = vmatprep.subr.bf16.mxu0 0
    %886 = vmatpush1.bf16.msra.mxu0 %v747
    %887 = vmatprep.subr.bf16.mxu0 0
    %888 = vmatpush1.bf16.msra.mxu0 %v748
    %889 = vmatprep.subr.bf16.mxu0 0
    %890 = vmatpush1.bf16.msra.mxu0 %v749
    %891 = vmatprep.subr.bf16.mxu0 0
    %892 = vmatpush1.bf16.msra.mxu0 %v750
    %893 = vmatprep.subr.bf16.mxu0 0
    %894 = vmatpush1.bf16.msra.mxu0 %v751
    %895 = vmatprep.subr.bf16.mxu0 0
    %896 = vmatpush1.bf16.msra.mxu0 %v752
    %897 = vmatprep.subr.bf16.mxu0 0
    %898 = vmatpush1.bf16.msra.mxu0 %v753
    %899 = vmatprep.subr.bf16.mxu0 0
    %900 = vmatpush1.bf16.msra.mxu0 %v754
    %901 = vmatprep.subr.bf16.mxu0 0
    %902 = vmatpush1.bf16.msra.mxu0 %v755
    %903 = vmatprep.subr.bf16.mxu0 0
    %904 = vmatpush1.bf16.msra.mxu0 %v756
    %905 = vmatprep.subr.bf16.mxu0 0
    %906 = vmatpush1.bf16.msra.mxu0 %v757
    %907 = vmatprep.mubr.bf16.mxu0 %v511
    %908 = vmatmul.mubr.bf16.gmra.mrb[0].mxu0 %v510
    %v909 = vpop.f32.mrb[0].mxu0
    %v910 = vadd.f32 0.0, %v909
    %v911 = vpop.f32.mrb[0].mxu0
    %v912 = vpop.f32.mrb[0].mxu0
    %v913 = vadd.f32 0.0, %v912
    %v914 = vpop.f32.mrb[0].mxu0
    %915 = vmatprep.mubr.bf16.mxu0 %v514
    %916 = vmatmul.mubr.bf16.gmra.mrb[0].mxu0 %v513
    %v917 = vpop.f32.mrb[0].mxu0
    %v918 = vadd.f32 0.0, %v917
    %v919 = vpop.f32.mrb[0].mxu0
    %v920 = vpop.f32.mrb[0].mxu0
    %v921 = vadd.f32 0.0, %v920
    %v922 = vpop.f32.mrb[0].mxu0
    %923 = vmatprep.mubr.bf16.mxu0 %v517
    %924 = vmatmul.mubr.bf16.gmra.mrb[0].mxu0 %v516
    %v925 = vpop.f32.mrb[0].mxu0
    %v926 = vadd.f32 0.0, %v925
    %v927 = vpop.f32.mrb[0].mxu0
    %v928 = vpop.f32.mrb[0].mxu0
    %v929 = vadd.f32 0.0, %v928
    %v930 = vpop.f32.mrb[0].mxu0
    %931 = vmatprep.mubr.bf16.mxu0 %v520
    %932 = vmatmul.mubr.bf16.gmra.mrb[0].mxu0 %v519
    %v933 = vpop.f32.mrb[0].mxu0
    %v934 = vadd.f32 0.0, %v933
    %v935 = vpop.f32.mrb[0].mxu0
    %v936 = vpop.f32.mrb[0].mxu0
    %v937 = vadd.f32 0.0, %v936
    %v938 = vpop.f32.mrb[0].mxu0
    %939 = vmatprep.mubr.bf16.mxu0 %v523
    %940 = vmatmul.mubr.bf16.gmra.mrb[0].mxu0 %v522
    %v941 = vpop.f32.mrb[0].mxu0
    %v942 = vadd.f32 0.0, %v941
    %v943 = vpop.f32.mrb[0].mxu0
    %v944 = vpop.f32.mrb[0].mxu0
    %v945 = vadd.f32 0.0, %v944
    %v946 = vpop.f32.mrb[0].mxu0
    %947 = vmatprep.mubr.bf16.mxu0 %v526
    %948 = vmatmul.mubr.bf16.gmra.mrb[0].mxu0 %v525
    %v949 = vpop.f32.mrb[0].mxu0
    %v950 = vadd.f32 0.0, %v949
    %v951 = vpop.f32.mrb[0].mxu0
    %v952 = vpop.f32.mrb[0].mxu0
    %v953 = vadd.f32 0.0, %v952
    %v954 = vpop.f32.mrb[0].mxu0
    %955 = vmatprep.mubr.bf16.mxu0 %v529
    %956 = vmatmul.mubr.bf16.gmra.mrb[0].mxu0 %v528
    %v957 = vpop.f32.mrb[0].mxu0
    %v958 = vadd.f32 0.0, %v957
    %v959 = vpop.f32.mrb[0].mxu0
    %v960 = vpop.f32.mrb[0].mxu0
    %v961 = vadd.f32 0.0, %v960
    %v962 = vpop.f32.mrb[0].mxu0
    %963 = vmatprep.mubr.bf16.mxu0 %v532
    %964 = vmatmul.mubr.bf16.gmra.mrb[0].mxu0 %v531
    %v965 = vpop.f32.mrb[0].mxu0
    %v966 = vadd.f32 0.0, %v965
    %v967 = vpop.f32.mrb[0].mxu0
    %v968 = vpop.f32.mrb[0].mxu0
    %v969 = vadd.f32 0.0, %v968
    %v970 = vpop.f32.mrb[0].mxu0
    %971 = vmatprep.mubr.bf16.mxu0 %v535
    %972 = vmatmul.mubr.bf16.gmra.mrb[0].mxu0 %v534
    %v973 = vpop.f32.mrb[0].mxu0
    %v974 = vadd.f32 0.0, %v973
    %v975 = vpop.f32.mrb[0].mxu0
    %v976 = vpop.f32.mrb[0].mxu0
    %v977 = vadd.f32 0.0, %v976
    %v978 = vpop.f32.mrb[0].mxu0
    %979 = vmatprep.mubr.bf16.mxu0 %v538
    %980 = vmatmul.mubr.bf16.gmra.mrb[0].mxu0 %v537
    %v981 = vpop.f32.mrb[0].mxu0
    %v982 = vadd.f32 0.0, %v981
    %v983 = vpop.f32.mrb[0].mxu0
    %v984 = vpop.f32.mrb[0].mxu0
    %v985 = vadd.f32 0.0, %v984
    %v986 = vpop.f32.mrb[0].mxu0
    %987 = vmatprep.mubr.bf16.mxu0 %v541
    %988 = vmatmul.mubr.bf16.gmra.mrb[0].mxu0 %v540
    %v989 = vpop.f32.mrb[0].mxu0
    %v990 = vadd.f32 0.0, %v989
    %v991 = vpop.f32.mrb[0].mxu0
    %v992 = vpop.f32.mrb[0].mxu0
    %v993 = vadd.f32 0.0, %v992
    %v994 = vpop.f32.mrb[0].mxu0
    %995 = vmatprep.mubr.bf16.mxu0 %v544
    %996 = vmatmul.mubr.bf16.gmra.mrb[0].mxu0 %v543
    %v997 = vpop.f32.mrb[0].mxu0
    %v998 = vadd.f32 0.0, %v997
    %v999 = vpop.f32.mrb[0].mxu0
    %v1000 = vpop.f32.mrb[0].mxu0
    %v1001 = vadd.f32 0.0, %v1000
    %v1002 = vpop.f32.mrb[0].mxu0
    %1003 = vmatprep.mubr.bf16.mxu0 %v547
    %1004 = vmatmul.mubr.bf16.gmra.mrb[0].mxu0 %v546
    %v1005 = vpop.f32.mrb[0].mxu0
    %v1006 = vadd.f32 0.0, %v1005
    %v1007 = vpop.f32.mrb[0].mxu0
    %v1008 = vpop.f32.mrb[0].mxu0
    %v1009 = vadd.f32 0.0, %v1008
    %v1010 = vpop.f32.mrb[0].mxu0
    %1011 = vmatprep.mubr.bf16.mxu0 %v550
    %1012 = vmatmul.mubr.bf16.gmra.mrb[0].mxu0 %v549
    %v1013 = vpop.f32.mrb[0].mxu0
    %v1014 = vadd.f32 0.0, %v1013
    %v1015 = vpop.f32.mrb[0].mxu0
    %v1016 = vpop.f32.mrb[0].mxu0
    %v1017 = vadd.f32 0.0, %v1016
    %v1018 = vpop.f32.mrb[0].mxu0
    %1019 = vmatprep.mubr.bf16.mxu0 %v553
    %1020 = vmatmul.mubr.bf16.gmra.mrb[0].mxu0 %v552
    %v1021 = vpop.f32.mrb[0].mxu0
    %v1022 = vadd.f32 0.0, %v1021
    %v1023 = vpop.f32.mrb[0].mxu0
    %v1024 = vpop.f32.mrb[0].mxu0
    %v1025 = vadd.f32 0.0, %v1024
    %v1026 = vpop.f32.mrb[0].mxu0
    %1027 = vmatprep.mubr.bf16.mxu0 %v556
    %1028 = vmatmul.mubr.bf16.gmra.mrb[0].mxu0 %v555
    %v1029 = vpop.f32.mrb[0].mxu0
    %v1030 = vadd.f32 0.0, %v1029
    %v1031 = vpop.f32.mrb[0].mxu0
    %v1032 = vpop.f32.mrb[0].mxu0
    %v1033 = vadd.f32 0.0, %v1032
    %v1034 = vpop.f32.mrb[0].mxu0
    %1035 = vmatprep.mubr.bf16.mxu0 %v559
    %1036 = vmatmul.mubr.bf16.gmra.mrb[0].mxu0 %v558
    %v1037 = vpop.f32.mrb[0].mxu0
    %v1038 = vadd.f32 0.0, %v1037
    %v1039 = vpop.f32.mrb[0].mxu0
    %v1040 = vpop.f32.mrb[0].mxu0
    %v1041 = vadd.f32 0.0, %v1040
    %v1042 = vpop.f32.mrb[0].mxu0
    %1043 = vmatprep.mubr.bf16.mxu0 %v562
    %1044 = vmatmul.mubr.bf16.gmra.mrb[0].mxu0 %v561
    %v1045 = vpop.f32.mrb[0].mxu0
    %v1046 = vadd.f32 0.0, %v1045
    %v1047 = vpop.f32.mrb[0].mxu0
    %v1048 = vpop.f32.mrb[0].mxu0
    %v1049 = vadd.f32 0.0, %v1048
    %v1050 = vpop.f32.mrb[0].mxu0
    %1051 = vmatprep.mubr.bf16.mxu0 %v565
    %1052 = vmatmul.mubr.bf16.gmra.mrb[0].mxu0 %v564
    %v1053 = vpop.f32.mrb[0].mxu0
    %v1054 = vadd.f32 0.0, %v1053
    %v1055 = vpop.f32.mrb[0].mxu0
    %v1056 = vpop.f32.mrb[0].mxu0
    %v1057 = vadd.f32 0.0, %v1056
    %v1058 = vpop.f32.mrb[0].mxu0
    %1059 = vmatprep.mubr.bf16.mxu0 %v568
    %1060 = vmatmul.mubr.bf16.gmra.mrb[0].mxu0 %v567
    %v1061 = vpop.f32.mrb[0].mxu0
    %v1062 = vadd.f32 0.0, %v1061
    %v1063 = vpop.f32.mrb[0].mxu0
    %v1064 = vpop.f32.mrb[0].mxu0
    %v1065 = vadd.f32 0.0, %v1064
    %v1066 = vpop.f32.mrb[0].mxu0
    %1067 = vmatprep.mubr.bf16.mxu0 %v571
    %1068 = vmatmul.mubr.bf16.gmra.mrb[0].mxu0 %v570
    %v1069 = vpop.f32.mrb[0].mxu0
    %v1070 = vadd.f32 0.0, %v1069
    %v1071 = vpop.f32.mrb[0].mxu0
    %v1072 = vpop.f32.mrb[0].mxu0
    %v1073 = vadd.f32 0.0, %v1072
    %v1074 = vpop.f32.mrb[0].mxu0
    %1075 = vmatprep.mubr.bf16.mxu0 %v574
    %1076 = vmatmul.mubr.bf16.gmra.mrb[0].mxu0 %v573
    %v1077 = vpop.f32.mrb[0].mxu0
    %v1078 = vadd.f32 0.0, %v1077
    %v1079 = vpop.f32.mrb[0].mxu0
    %v1080 = vpop.f32.mrb[0].mxu0
    %v1081 = vadd.f32 0.0, %v1080
    %v1082 = vpop.f32.mrb[0].mxu0
    %1083 = vmatprep.mubr.bf16.mxu0 %v577
    %1084 = vmatmul.mubr.bf16.gmra.mrb[0].mxu0 %v576
    %v1085 = vpop.f32.mrb[0].mxu0
    %v1086 = vadd.f32 0.0, %v1085
    %v1087 = vpop.f32.mrb[0].mxu0
    %v1088 = vpop.f32.mrb[0].mxu0
    %v1089 = vadd.f32 0.0, %v1088
    %v1090 = vpop.f32.mrb[0].mxu0
    %1091 = vmatprep.mubr.bf16.mxu0 %v580
    %1092 = vmatmul.mubr.bf16.gmra.mrb[0].mxu0 %v579
    %v1093 = vpop.f32.mrb[0].mxu0
    %v1094 = vadd.f32 0.0, %v1093
    %v1095 = vpop.f32.mrb[0].mxu0
    %v1096 = vpop.f32.mrb[0].mxu0
    %v1097 = vadd.f32 0.0, %v1096
    %v1098 = vpop.f32.mrb[0].mxu0
    %1099 = vmatprep.mubr.bf16.mxu0 %v583
    %1100 = vmatmul.mubr.bf16.gmra.mrb[0].mxu0 %v582
    %v1101 = vpop.f32.mrb[0].mxu0
    %v1102 = vadd.f32 0.0, %v1101
    %v1103 = vpop.f32.mrb[0].mxu0
    %v1104 = vpop.f32.mrb[0].mxu0
    %v1105 = vadd.f32 0.0, %v1104
    %v1106 = vpop.f32.mrb[0].mxu0
    %1107 = vmatprep.mubr.bf16.mxu0 %v586
    %1108 = vmatmul.mubr.bf16.gmra.mrb[0].mxu0 %v585
    %v1109 = vpop.f32.mrb[0].mxu0
    %v1110 = vadd.f32 0.0, %v1109
    %v1111 = vpop.f32.mrb[0].mxu0
    %v1112 = vpop.f32.mrb[0].mxu0
    %v1113 = vadd.f32 0.0, %v1112
    %v1114 = vpop.f32.mrb[0].mxu0
    %1115 = vmatprep.mubr.bf16.mxu0 %v589
    %1116 = vmatmul.mubr.bf16.gmra.mrb[0].mxu0 %v588
    %v1117 = vpop.f32.mrb[0].mxu0
    %v1118 = vadd.f32 0.0, %v1117
    %v1119 = vpop.f32.mrb[0].mxu0
    %v1120 = vpop.f32.mrb[0].mxu0
    %v1121 = vadd.f32 0.0, %v1120
    %v1122 = vpop.f32.mrb[0].mxu0
    %1123 = vmatprep.mubr.bf16.mxu0 %v592
    %1124 = vmatmul.mubr.bf16.gmra.mrb[0].mxu0 %v591
    %v1125 = vpop.f32.mrb[0].mxu0
    %v1126 = vadd.f32 0.0, %v1125
    %v1127 = vpop.f32.mrb[0].mxu0
    %v1128 = vpop.f32.mrb[0].mxu0
    %v1129 = vadd.f32 0.0, %v1128
    %v1130 = vpop.f32.mrb[0].mxu0
    %1131 = vmatprep.mubr.bf16.mxu0 %v595
    %1132 = vmatmul.mubr.bf16.gmra.mrb[0].mxu0 %v594
    %v1133 = vpop.f32.mrb[0].mxu0
    %v1134 = vadd.f32 0.0, %v1133
    %v1135 = vpop.f32.mrb[0].mxu0
    %v1136 = vpop.f32.mrb[0].mxu0
    %v1137 = vadd.f32 0.0, %v1136
    %v1138 = vpop.f32.mrb[0].mxu0
    %1139 = vmatprep.mubr.bf16.mxu0 %v598
    %1140 = vmatmul.mubr.bf16.gmra.mrb[0].mxu0 %v597
    %v1141 = vpop.f32.mrb[0].mxu0
    %v1142 = vadd.f32 0.0, %v1141
    %v1143 = vpop.f32.mrb[0].mxu0
    %v1144 = vpop.f32.mrb[0].mxu0
    %v1145 = vadd.f32 0.0, %v1144
    %v1146 = vpop.f32.mrb[0].mxu0
    %1147 = vmatprep.mubr.bf16.mxu0 %v601
    %1148 = vmatmul.mubr.bf16.gmra.mrb[0].mxu0 %v600
    %v1149 = vpop.f32.mrb[0].mxu0
    %v1150 = vadd.f32 0.0, %v1149
    %v1151 = vpop.f32.mrb[0].mxu0
    %v1152 = vpop.f32.mrb[0].mxu0
    %v1153 = vadd.f32 0.0, %v1152
    %v1154 = vpop.f32.mrb[0].mxu0
    %1155 = vmatprep.mubr.bf16.mxu0 %v604
    %1156 = vmatmul.mubr.bf16.gmra.mrb[0].mxu0 %v603
    %v1157 = vpop.f32.mrb[0].mxu0
    %v1158 = vadd.f32 0.0, %v1157
    %v1159 = vpop.f32.mrb[0].mxu0
    %v1160 = vpop.f32.mrb[0].mxu0
    %v1161 = vadd.f32 0.0, %v1160
    %v1162 = vpop.f32.mrb[0].mxu0
    %1163 = vdwg.mxu0
    %1164 = vmatprep.subr.bf16.mxu0 0
    %1165 = vmatpush1.bf16.msra.mxu0 %v758
    %1166 = vmatprep.subr.bf16.mxu0 0
    %1167 = vmatpush1.bf16.msra.mxu0 %v759
    %1168 = vmatprep.subr.bf16.mxu0 0
    %1169 = vmatpush1.bf16.msra.mxu0 0
    %1170 = vmatprep.subr.bf16.mxu0 0
    %1171 = vmatpush1.bf16.msra.mxu0 0
    %1172 = vmatprep.subr.bf16.mxu0 0
    %1173 = vmatpush1.bf16.msra.mxu0 0
    %1174 = vmatprep.subr.bf16.mxu0 0
    %1175 = vmatpush1.bf16.msra.mxu0 0
    %1176 = vmatprep.subr.bf16.mxu0 0
    %1177 = vmatpush1.bf16.msra.mxu0 0
    %1178 = vmatprep.subr.bf16.mxu0 0
    %1179 = vmatpush1.bf16.msra.mxu0 0
    %1180 = vmatprep.subr.bf16.mxu0 0
    %1181 = vmatpush1.bf16.msra.mxu0 0
    %1182 = vmatprep.subr.bf16.mxu0 0
    %1183 = vmatpush1.bf16.msra.mxu0 0
    %1184 = vmatprep.subr.bf16.mxu0 0
    %1185 = vmatpush1.bf16.msra.mxu0 0
    %1186 = vmatprep.subr.bf16.mxu0 0
    %1187 = vmatpush1.bf16.msra.mxu0 0
    %1188 = vmatprep.subr.bf16.mxu0 0
    %1189 = vmatpush1.bf16.msra.mxu0 0
    %1190 = vmatprep.subr.bf16.mxu0 0
    %1191 = vmatpush1.bf16.msra.mxu0 0
    %1192 = vmatprep.subr.bf16.mxu0 0
    %1193 = vmatpush1.bf16.msra.mxu0 0
    %1194 = vmatprep.subr.bf16.mxu0 0
    %1195 = vmatpush1.bf16.msra.mxu0 0
    %1196 = vmatprep.mubr.bf16.mxu0 0
    %1197 = vmatmul.mubr.bf16.gmra.mrb[0].mxu0 %v780
    %v1198 = vpop.f32.mrb[0].mxu0
    %v1199 = vadd.f32 %v910, %v1198
    %v1200 = vpop.f32.mrb[0].mxu0
    %v1201 = vpop.f32.mrb[0].mxu0
    %v1202 = vadd.f32 %v913, %v1201
    %v1203 = vpop.f32.mrb[0].mxu0
    %1204 = vmatprep.mubr.bf16.mxu0 0
    %1205 = vmatmul.mubr.bf16.gmra.mrb[0].mxu0 %v783
    %v1206 = vpop.f32.mrb[0].mxu0
    %v1207 = vadd.f32 %v918, %v1206
    %v1208 = vpop.f32.mrb[0].mxu0
    %v1209 = vpop.f32.mrb[0].mxu0
    %v1210 = vadd.f32 %v921, %v1209
    %v1211 = vpop.f32.mrb[0].mxu0
    %1212 = vmatprep.mubr.bf16.mxu0 0
    %1213 = vmatmul.mubr.bf16.gmra.mrb[0].mxu0 %v786
    %v1214 = vpop.f32.mrb[0].mxu0
    %v1215 = vadd.f32 %v926, %v1214
    %v1216 = vpop.f32.mrb[0].mxu0
    %v1217 = vpop.f32.mrb[0].mxu0
    %v1218 = vadd.f32 %v929, %v1217
    %v1219 = vpop.f32.mrb[0].mxu0
    %1220 = vmatprep.mubr.bf16.mxu0 0
    %1221 = vmatmul.mubr.bf16.gmra.mrb[0].mxu0 %v789
    %v1222 = vpop.f32.mrb[0].mxu0
    %v1223 = vadd.f32 %v934, %v1222
    %v1224 = vpop.f32.mrb[0].mxu0
    %v1225 = vpop.f32.mrb[0].mxu0
    %v1226 = vadd.f32 %v937, %v1225
    %v1227 = vpop.f32.mrb[0].mxu0
    %1228 = vmatprep.mubr.bf16.mxu0 0
    %1229 = vmatmul.mubr.bf16.gmra.mrb[0].mxu0 %v792
    %v1230 = vpop.f32.mrb[0].mxu0
    %v1231 = vadd.f32 %v942, %v1230
    %v1232 = vpop.f32.mrb[0].mxu0
    %v1233 = vpop.f32.mrb[0].mxu0
    %v1234 = vadd.f32 %v945, %v1233
    %v1235 = vpop.f32.mrb[0].mxu0
    %1236 = vmatprep.mubr.bf16.mxu0 0
    %1237 = vmatmul.mubr.bf16.gmra.mrb[0].mxu0 %v795
    %v1238 = vpop.f32.mrb[0].mxu0
    %v1239 = vadd.f32 %v950, %v1238
    %v1240 = vpop.f32.mrb[0].mxu0
    %v1241 = vpop.f32.mrb[0].mxu0
    %v1242 = vadd.f32 %v953, %v1241
    %v1243 = vpop.f32.mrb[0].mxu0
    %1244 = vmatprep.mubr.bf16.mxu0 0
    %1245 = vmatmul.mubr.bf16.gmra.mrb[0].mxu0 %v798
    %v1246 = vpop.f32.mrb[0].mxu0
    %v1247 = vadd.f32 %v958, %v1246
    %v1248 = vpop.f32.mrb[0].mxu0
    %v1249 = vpop.f32.mrb[0].mxu0
    %v1250 = vadd.f32 %v961, %v1249
    %v1251 = vpop.f32.mrb[0].mxu0
    %1252 = vmatprep.mubr.bf16.mxu0 0
    %1253 = vmatmul.mubr.bf16.gmra.mrb[0].mxu0 %v801
    %v1254 = vpop.f32.mrb[0].mxu0
    %v1255 = vadd.f32 %v966, %v1254
    %v1256 = vpop.f32.mrb[0].mxu0
    %v1257 = vpop.f32.mrb[0].mxu0
    %v1258 = vadd.f32 %v969, %v1257
    %v1259 = vpop.f32.mrb[0].mxu0
    %1260 = vmatprep.mubr.bf16.mxu0 0
    %1261 = vmatmul.mubr.bf16.gmra.mrb[0].mxu0 %v804
    %v1262 = vpop.f32.mrb[0].mxu0
    %v1263 = vadd.f32 %v974, %v1262
    %v1264 = vpop.f32.mrb[0].mxu0
    %v1265 = vpop.f32.mrb[0].mxu0
    %v1266 = vadd.f32 %v977, %v1265
    %v1267 = vpop.f32.mrb[0].mxu0
    %1268 = vmatprep.mubr.bf16.mxu0 0
    %1269 = vmatmul.mubr.bf16.gmra.mrb[0].mxu0 %v807
    %v1270 = vpop.f32.mrb[0].mxu0
    %v1271 = vadd.f32 %v982, %v1270
    %v1272 = vpop.f32.mrb[0].mxu0
    %v1273 = vpop.f32.mrb[0].mxu0
    %v1274 = vadd.f32 %v985, %v1273
    %v1275 = vpop.f32.mrb[0].mxu0
    %1276 = vmatprep.mubr.bf16.mxu0 0
    %1277 = vmatmul.mubr.bf16.gmra.mrb[0].mxu0 %v810
    %v1278 = vpop.f32.mrb[0].mxu0
    %v1279 = vadd.f32 %v990, %v1278
    %v1280 = vpop.f32.mrb[0].mxu0
    %v1281 = vpop.f32.mrb[0].mxu0
    %v1282 = vadd.f32 %v993, %v1281
    %v1283 = vpop.f32.mrb[0].mxu0
    %1284 = vmatprep.mubr.bf16.mxu0 0
    %1285 = vmatmul.mubr.bf16.gmra.mrb[0].mxu0 %v813
    %v1286 = vpop.f32.mrb[0].mxu0
    %v1287 = vadd.f32 %v998, %v1286
    %v1288 = vpop.f32.mrb[0].mxu0
    %v1289 = vpop.f32.mrb[0].mxu0
    %v1290 = vadd.f32 %v1001, %v1289
    %v1291 = vpop.f32.mrb[0].mxu0
    %1292 = vmatprep.mubr.bf16.mxu0 0
    %1293 = vmatmul.mubr.bf16.gmra.mrb[0].mxu0 %v816
    %v1294 = vpop.f32.mrb[0].mxu0
    %v1295 = vadd.f32 %v1006, %v1294
    %v1296 = vpop.f32.mrb[0].mxu0
    %v1297 = vpop.f32.mrb[0].mxu0
    %v1298 = vadd.f32 %v1009, %v1297
    %v1299 = vpop.f32.mrb[0].mxu0
    %1300 = vmatprep.mubr.bf16.mxu0 0
    %1301 = vmatmul.mubr.bf16.gmra.mrb[0].mxu0 %v819
    %v1302 = vpop.f32.mrb[0].mxu0
    %v1303 = vadd.f32 %v1014, %v1302
    %v1304 = vpop.f32.mrb[0].mxu0
    %v1305 = vpop.f32.mrb[0].mxu0
    %v1306 = vadd.f32 %v1017, %v1305
    %v1307 = vpop.f32.mrb[0].mxu0
    %1308 = vmatprep.mubr.bf16.mxu0 0
    %1309 = vmatmul.mubr.bf16.gmra.mrb[0].mxu0 %v822
    %v1310 = vpop.f32.mrb[0].mxu0
    %v1311 = vadd.f32 %v1022, %v1310
    %v1312 = vpop.f32.mrb[0].mxu0
    %v1313 = vpop.f32.mrb[0].mxu0
    %v1314 = vadd.f32 %v1025, %v1313
    %v1315 = vpop.f32.mrb[0].mxu0
    %1316 = vmatprep.mubr.bf16.mxu0 0
    %1317 = vmatmul.mubr.bf16.gmra.mrb[0].mxu0 %v825
    %v1318 = vpop.f32.mrb[0].mxu0
    %v1319 = vadd.f32 %v1030, %v1318
    %v1320 = vpop.f32.mrb[0].mxu0
    %v1321 = vpop.f32.mrb[0].mxu0
    %v1322 = vadd.f32 %v1033, %v1321
    %v1323 = vpop.f32.mrb[0].mxu0
    %1324 = vmatprep.mubr.bf16.mxu0 0
    %1325 = vmatmul.mubr.bf16.gmra.mrb[0].mxu0 %v828
    %v1326 = vpop.f32.mrb[0].mxu0
    %v1327 = vadd.f32 %v1038, %v1326
    %v1328 = vpop.f32.mrb[0].mxu0
    %v1329 = vpop.f32.mrb[0].mxu0
    %v1330 = vadd.f32 %v1041, %v1329
    %v1331 = vpop.f32.mrb[0].mxu0
    %1332 = vmatprep.mubr.bf16.mxu0 0
    %1333 = vmatmul.mubr.bf16.gmra.mrb[0].mxu0 %v831
    %v1334 = vpop.f32.mrb[0].mxu0
    %v1335 = vadd.f32 %v1046, %v1334
    %v1336 = vpop.f32.mrb[0].mxu0
    %v1337 = vpop.f32.mrb[0].mxu0
    %v1338 = vadd.f32 %v1049, %v1337
    %v1339 = vpop.f32.mrb[0].mxu0
    %1340 = vmatprep.mubr.bf16.mxu0 0
    %1341 = vmatmul.mubr.bf16.gmra.mrb[0].mxu0 %v834
    %v1342 = vpop.f32.mrb[0].mxu0
    %v1343 = vadd.f32 %v1054, %v1342
    %v1344 = vpop.f32.mrb[0].mxu0
    %v1345 = vpop.f32.mrb[0].mxu0
    %v1346 = vadd.f32 %v1057, %v1345
    %v1347 = vpop.f32.mrb[0].mxu0
    %1348 = vmatprep.mubr.bf16.mxu0 0
    %1349 = vmatmul.mubr.bf16.gmra.mrb[0].mxu0 %v837
    %v1350 = vpop.f32.mrb[0].mxu0
    %v1351 = vadd.f32 %v1062, %v1350
    %v1352 = vpop.f32.mrb[0].mxu0
    %v1353 = vpop.f32.mrb[0].mxu0
    %v1354 = vadd.f32 %v1065, %v1353
    %v1355 = vpop.f32.mrb[0].mxu0
    %1356 = vmatprep.mubr.bf16.mxu0 0
    %1357 = vmatmul.mubr.bf16.gmra.mrb[0].mxu0 %v840
    %v1358 = vpop.f32.mrb[0].mxu0
    %v1359 = vadd.f32 %v1070, %v1358
    %v1360 = vpop.f32.mrb[0].mxu0
    %v1361 = vpop.f32.mrb[0].mxu0
    %v1362 = vadd.f32 %v1073, %v1361
    %v1363 = vpop.f32.mrb[0].mxu0
    %1364 = vmatprep.mubr.bf16.mxu0 0
    %1365 = vmatmul.mubr.bf16.gmra.mrb[0].mxu0 %v843
    %v1366 = vpop.f32.mrb[0].mxu0
    %v1367 = vadd.f32 %v1078, %v1366
    %v1368 = vpop.f32.mrb[0].mxu0
    %v1369 = vpop.f32.mrb[0].mxu0
    %v1370 = vadd.f32 %v1081, %v1369
    %v1371 = vpop.f32.mrb[0].mxu0
    %1372 = vmatprep.mubr.bf16.mxu0 0
    %1373 = vmatmul.mubr.bf16.gmra.mrb[0].mxu0 %v846
    %v1374 = vpop.f32.mrb[0].mxu0
    %v1375 = vadd.f32 %v1086, %v1374
    %v1376 = vpop.f32.mrb[0].mxu0
    %v1377 = vpop.f32.mrb[0].mxu0
    %v1378 = vadd.f32 %v1089, %v1377
    %v1379 = vpop.f32.mrb[0].mxu0
    %1380 = vmatprep.mubr.bf16.mxu0 0
    %1381 = vmatmul.mubr.bf16.gmra.mrb[0].mxu0 %v849
    %v1382 = vpop.f32.mrb[0].mxu0
    %v1383 = vadd.f32 %v1094, %v1382
    %v1384 = vpop.f32.mrb[0].mxu0
    %v1385 = vpop.f32.mrb[0].mxu0
    %v1386 = vadd.f32 %v1097, %v1385
    %v1387 = vpop.f32.mrb[0].mxu0
    %1388 = vmatprep.mubr.bf16.mxu0 0
    %1389 = vmatmul.mubr.bf16.gmra.mrb[0].mxu0 %v852
    %v1390 = vpop.f32.mrb[0].mxu0
    %v1391 = vadd.f32 %v1102, %v1390
    %v1392 = vpop.f32.mrb[0].mxu0
    %v1393 = vpop.f32.mrb[0].mxu0
    %v1394 = vadd.f32 %v1105, %v1393
    %v1395 = vpop.f32.mrb[0].mxu0
    %1396 = vmatprep.mubr.bf16.mxu0 0
    %1397 = vmatmul.mubr.bf16.gmra.mrb[0].mxu0 %v855
    %v1398 = vpop.f32.mrb[0].mxu0
    %v1399 = vadd.f32 %v1110, %v1398
    %v1400 = vpop.f32.mrb[0].mxu0
    %v1401 = vpop.f32.mrb[0].mxu0
    %v1402 = vadd.f32 %v1113, %v1401
    %v1403 = vpop.f32.mrb[0].mxu0
    %1404 = vmatprep.mubr.bf16.mxu0 0
    %1405 = vmatmul.mubr.bf16.gmra.mrb[0].mxu0 %v858
    %v1406 = vpop.f32.mrb[0].mxu0
    %v1407 = vadd.f32 %v1118, %v1406
    %v1408 = vpop.f32.mrb[0].mxu0
    %v1409 = vpop.f32.mrb[0].mxu0
    %v1410 = vadd.f32 %v1121, %v1409
    %v1411 = vpop.f32.mrb[0].mxu0
    %1412 = vmatprep.mubr.bf16.mxu0 0
    %1413 = vmatmul.mubr.bf16.gmra.mrb[0].mxu0 %v861
    %v1414 = vpop.f32.mrb[0].mxu0
    %v1415 = vadd.f32 %v1126, %v1414
    %v1416 = vpop.f32.mrb[0].mxu0
    %v1417 = vpop.f32.mrb[0].mxu0
    %v1418 = vadd.f32 %v1129, %v1417
    %v1419 = vpop.f32.mrb[0].mxu0
    %1420 = vmatprep.mubr.bf16.mxu0 0
    %1421 = vmatmul.mubr.bf16.gmra.mrb[0].mxu0 %v864
    %v1422 = vpop.f32.mrb[0].mxu0
    %v1423 = vadd.f32 %v1134, %v1422
    %v1424 = vpop.f32.mrb[0].mxu0
    %v1425 = vpop.f32.mrb[0].mxu0
    %v1426 = vadd.f32 %v1137, %v1425
    %v1427 = vpop.f32.mrb[0].mxu0
    %1428 = vmatprep.mubr.bf16.mxu0 0
    %1429 = vmatmul.mubr.bf16.gmra.mrb[0].mxu0 %v867
    %v1430 = vpop.f32.mrb[0].mxu0
    %v1431 = vadd.f32 %v1142, %v1430
    %v1432 = vpop.f32.mrb[0].mxu0
    %v1433 = vpop.f32.mrb[0].mxu0
    %v1434 = vadd.f32 %v1145, %v1433
    %v1435 = vpop.f32.mrb[0].mxu0
    %1436 = vmatprep.mubr.bf16.mxu0 0
    %1437 = vmatmul.mubr.bf16.gmra.mrb[0].mxu0 %v870
    %v1438 = vpop.f32.mrb[0].mxu0
    %v1439 = vadd.f32 %v1150, %v1438
    %v1440 = vpop.f32.mrb[0].mxu0
    %v1441 = vpop.f32.mrb[0].mxu0
    %v1442 = vadd.f32 %v1153, %v1441
    %v1443 = vpop.f32.mrb[0].mxu0
    %1444 = vmatprep.mubr.bf16.mxu0 0
    %1445 = vmatmul.mubr.bf16.gmra.mrb[0].mxu0 %v873
    %v1446 = vpop.f32.mrb[0].mxu0
    %v1447 = vadd.f32 %v1158, %v1446
    %v1448 = vpop.f32.mrb[0].mxu0
    %v1449 = vpop.f32.mrb[0].mxu0
    %v1450 = vadd.f32 %v1161, %v1449
    %v1451 = vpop.f32.mrb[0].mxu0
    %1452 = vdwg.mxu0
    %v1453 = vadd.f32 %v1199, %v1202
    %v1454 = vadd.f32 %v1453, %v1207
    %v1455 = vadd.f32 %v1454, %v1210
    %v1456 = vadd.f32 %v1455, %v1215
    %v1457 = vadd.f32 %v1456, %v1218
    %v1458 = vadd.f32 %v1457, %v1223
    %v1459 = vadd.f32 %v1458, %v1226
    %v1460 = vadd.f32 %v1459, %v1231
    %v1461 = vadd.f32 %v1460, %v1234
    %v1462 = vadd.f32 %v1461, %v1239
    %v1463 = vadd.f32 %v1462, %v1242
    %v1464 = vadd.f32 %v1463, %v1247
    %v1465 = vadd.f32 %v1464, %v1250
    %v1466 = vadd.f32 %v1465, %v1255
    %v1467 = vadd.f32 %v1466, %v1258
    %v1468 = vadd.f32 %v1467, %v1263
    %v1469 = vadd.f32 %v1468, %v1266
    %v1470 = vadd.f32 %v1469, %v1271
    %v1471 = vadd.f32 %v1470, %v1274
    %v1472 = vadd.f32 %v1471, %v1279
    %v1473 = vadd.f32 %v1472, %v1282
    %v1474 = vadd.f32 %v1473, %v1287
    %v1475 = vadd.f32 %v1474, %v1290
    %v1476 = vadd.f32 %v1475, %v1295
    %v1477 = vadd.f32 %v1476, %v1298
    %v1478 = vadd.f32 %v1477, %v1303
    %v1479 = vadd.f32 %v1478, %v1306
    %v1480 = vadd.f32 %v1479, %v1311
    %v1481 = vadd.f32 %v1480, %v1314
    %v1482 = vadd.f32 %v1481, %v1319
    %v1483 = vadd.f32 %v1482, %v1322
    %v1484 = vadd.f32 %v1483, %v1327
    %v1485 = vadd.f32 %v1484, %v1330
    %v1486 = vadd.f32 %v1485, %v1335
    %v1487 = vadd.f32 %v1486, %v1338
    %v1488 = vadd.f32 %v1487, %v1343
    %v1489 = vadd.f32 %v1488, %v1346
    %v1490 = vadd.f32 %v1489, %v1351
    %v1491 = vadd.f32 %v1490, %v1354
    %v1492 = vadd.f32 %v1491, %v1359
    %v1493 = vadd.f32 %v1492, %v1362
    %v1494 = vadd.f32 %v1493, %v1367
    %v1495 = vadd.f32 %v1494, %v1370
    %v1496 = vadd.f32 %v1495, %v1375
    %v1497 = vadd.f32 %v1496, %v1378
    %v1498 = vadd.f32 %v1497, %v1383
    %v1499 = vadd.f32 %v1498, %v1386
    %v1500 = vadd.f32 %v1499, %v1391
    %v1501 = vadd.f32 %v1500, %v1394
    %v1502 = vadd.f32 %v1501, %v1399
    %v1503 = vadd.f32 %v1502, %v1402
    %v1504 = vadd.f32 %v1503, %v1407
    %v1505 = vadd.f32 %v1504, %v1410
    %v1506 = vadd.f32 %v1505, %v1415
    %v1507 = vadd.f32 %v1506, %v1418
    %v1508 = vadd.f32 %v1507, %v1423
    %v1509 = vadd.f32 %v1508, %v1426
    %v1510 = vadd.f32 %v1509, %v1431
    %v1511 = vadd.f32 %v1510, %v1434
    %v1512 = vadd.f32 %v1511, %v1439
    %v1513 = vadd.f32 %v1512, %v1442
    %v1514 = vadd.f32 %v1513, %v1447
    %v1515 = vadd.f32 %v1514, %v1450
    %v1516 = vrot.slane %v1515, 4
    %v1517 = vadd.f32 %v1515, %v1516
    %v1518 = vrot.slane %v1517, 2
    %v1519 = vadd.f32 %v1517, %v1518
    %v1520 = vrot.slane %v1519, 1
    %v1521 = vadd.f32 %v1519, %v1520
    %v1522 = vmul.f32 %v1199, %v1199
    %v1523 = vmul.f32 %v1202, %v1202
    %v1524 = vmul.f32 %v1207, %v1207
    %v1525 = vmul.f32 %v1210, %v1210
    %v1526 = vmul.f32 %v1215, %v1215
    %v1527 = vmul.f32 %v1218, %v1218
    %v1528 = vmul.f32 %v1223, %v1223
    %v1529 = vmul.f32 %v1226, %v1226
    %v1530 = vmul.f32 %v1231, %v1231
    %v1531 = vmul.f32 %v1234, %v1234
    %v1532 = vmul.f32 %v1239, %v1239
    %v1533 = vmul.f32 %v1242, %v1242
    %v1534 = vmul.f32 %v1247, %v1247
    %v1535 = vmul.f32 %v1250, %v1250
    %v1536 = vmul.f32 %v1255, %v1255
    %v1537 = vmul.f32 %v1258, %v1258
    %v1538 = vmul.f32 %v1263, %v1263
    %v1539 = vmul.f32 %v1266, %v1266
    %v1540 = vmul.f32 %v1271, %v1271
    %v1541 = vmul.f32 %v1274, %v1274
    %v1542 = vmul.f32 %v1279, %v1279
    %v1543 = vmul.f32 %v1282, %v1282
    %v1544 = vmul.f32 %v1287, %v1287
    %v1545 = vmul.f32 %v1290, %v1290
    %v1546 = vmul.f32 %v1295, %v1295
    %v1547 = vmul.f32 %v1298, %v1298
    %v1548 = vmul.f32 %v1303, %v1303
    %v1549 = vmul.f32 %v1306, %v1306
    %v1550 = vmul.f32 %v1311, %v1311
    %v1551 = vmul.f32 %v1314, %v1314
    %v1552 = vmul.f32 %v1319, %v1319
    %v1553 = vmul.f32 %v1322, %v1322
    %v1554 = vmul.f32 %v1327, %v1327
    %v1555 = vmul.f32 %v1330, %v1330
    %v1556 = vmul.f32 %v1335, %v1335
    %v1557 = vmul.f32 %v1338, %v1338
    %v1558 = vmul.f32 %v1343, %v1343
    %v1559 = vmul.f32 %v1346, %v1346
    %v1560 = vmul.f32 %v1351, %v1351
    %v1561 = vmul.f32 %v1354, %v1354
    %v1562 = vmul.f32 %v1359, %v1359
    %v1563 = vmul.f32 %v1362, %v1362
    %v1564 = vmul.f32 %v1367, %v1367
    %v1565 = vmul.f32 %v1370, %v1370
    %v1566 = vmul.f32 %v1375, %v1375
    %v1567 = vmul.f32 %v1378, %v1378
    %v1568 = vmul.f32 %v1383, %v1383
    %v1569 = vmul.f32 %v1386, %v1386
    %v1570 = vmul.f32 %v1391, %v1391
    %v1571 = vmul.f32 %v1394, %v1394
    %v1572 = vmul.f32 %v1399, %v1399
    %v1573 = vmul.f32 %v1402, %v1402
    %v1574 = vmul.f32 %v1407, %v1407
    %v1575 = vmul.f32 %v1410, %v1410
    %v1576 = vmul.f32 %v1415, %v1415
    %v1577 = vmul.f32 %v1418, %v1418
    %v1578 = vmul.f32 %v1423, %v1423
    %v1579 = vmul.f32 %v1426, %v1426
    %v1580 = vmul.f32 %v1431, %v1431
    %v1581 = vmul.f32 %v1434, %v1434
    %v1582 = vmul.f32 %v1439, %v1439
    %v1583 = vmul.f32 %v1442, %v1442
    %v1584 = vmul.f32 %v1447, %v1447
    %v1585 = vmul.f32 %v1450, %v1450
    %v1586 = vadd.f32 %v1522, %v1523
    %v1587 = vadd.f32 %v1586, %v1524
    %v1588 = vadd.f32 %v1587, %v1525
    %v1589 = vadd.f32 %v1588, %v1526
    %v1590 = vadd.f32 %v1589, %v1527
    %v1591 = vadd.f32 %v1590, %v1528
    %v1592 = vadd.f32 %v1591, %v1529
    %v1593 = vadd.f32 %v1592, %v1530
    %v1594 = vadd.f32 %v1593, %v1531
    %v1595 = vadd.f32 %v1594, %v1532
    %v1596 = vadd.f32 %v1595, %v1533
    %v1597 = vadd.f32 %v1596, %v1534
    %v1598 = vadd.f32 %v1597, %v1535
    %v1599 = vadd.f32 %v1598, %v1536
    %v1600 = vadd.f32 %v1599, %v1537
    %v1601 = vadd.f32 %v1600, %v1538
    %v1602 = vadd.f32 %v1601, %v1539
    %v1603 = vadd.f32 %v1602, %v1540
    %v1604 = vadd.f32 %v1603, %v1541
    %v1605 = vadd.f32 %v1604, %v1542
    %v1606 = vadd.f32 %v1605, %v1543
    %v1607 = vadd.f32 %v1606, %v1544
    %v1608 = vadd.f32 %v1607, %v1545
    %v1609 = vadd.f32 %v1608, %v1546
    %v1610 = vadd.f32 %v1609, %v1547
    %v1611 = vadd.f32 %v1610, %v1548
    %v1612 = vadd.f32 %v1611, %v1549
    %v1613 = vadd.f32 %v1612, %v1550
    %v1614 = vadd.f32 %v1613, %v1551
    %v1615 = vadd.f32 %v1614, %v1552
    %v1616 = vadd.f32 %v1615, %v1553
    %v1617 = vadd.f32 %v1616, %v1554
    %v1618 = vadd.f32 %v1617, %v1555
    %v1619 = vadd.f32 %v1618, %v1556
    %v1620 = vadd.f32 %v1619, %v1557
    %v1621 = vadd.f32 %v1620, %v1558
    %v1622 = vadd.f32 %v1621, %v1559
    %v1623 = vadd.f32 %v1622, %v1560
    %v1624 = vadd.f32 %v1623, %v1561
    %v1625 = vadd.f32 %v1624, %v1562
    %v1626 = vadd.f32 %v1625, %v1563
    %v1627 = vadd.f32 %v1626, %v1564
    %v1628 = vadd.f32 %v1627, %v1565
    %v1629 = vadd.f32 %v1628, %v1566
    %v1630 = vadd.f32 %v1629, %v1567
    %v1631 = vadd.f32 %v1630, %v1568
    %v1632 = vadd.f32 %v1631, %v1569
    %v1633 = vadd.f32 %v1632, %v1570
    %v1634 = vadd.f32 %v1633, %v1571
    %v1635 = vadd.f32 %v1634, %v1572
    %v1636 = vadd.f32 %v1635, %v1573
    %v1637 = vadd.f32 %v1636, %v1574
    %v1638 = vadd.f32 %v1637, %v1575
    %v1639 = vadd.f32 %v1638, %v1576
    %v1640 = vadd.f32 %v1639, %v1577
    %v1641 = vadd.f32 %v1640, %v1578
    %v1642 = vadd.f32 %v1641, %v1579
    %v1643 = vadd.f32 %v1642, %v1580
    %v1644 = vadd.f32 %v1643, %v1581
    %v1645 = vadd.f32 %v1644, %v1582
    %v1646 = vadd.f32 %v1645, %v1583
    %v1647 = vadd.f32 %v1646, %v1584
    %v1648 = vadd.f32 %v1647, %v1585
    %v1649 = vrot.slane %v1648, 4
    %v1650 = vadd.f32 %v1648, %v1649
    %v1651 = vrot.slane %v1650, 2
    %v1652 = vadd.f32 %v1650, %v1651
    %v1653 = vrot.slane %v1652, 1
    %v1654 = vadd.f32 %v1652, %v1653
    %1655 = vrot.lane.b32.xlu0 %v1521, 16
    %v1656 = vpop.permute.xlu0 %1655
    %v1657 = vadd.f32 %v1521, %v1656
    %1658 = vrot.lane.b32.xlu0 %v1654, 16
    %v1659 = vpop.permute.xlu0 %1658
    %v1660 = vadd.f32 %v1654, %v1659
    %1661 = vrot.lane.b32.xlu0 %v1657, 32
    %v1662 = vpop.permute.xlu0 %1661
    %v1663 = vadd.f32 %v1657, %v1662
    %1664 = vrot.lane.b32.xlu0 %v1660, 32
    %v1665 = vpop.permute.xlu0 %1664
    %v1666 = vadd.f32 %v1660, %v1665
    %1667 = vrot.lane.b32.xlu0 %v1663, 64
    %v1668 = vpop.permute.xlu0 %1667
    %v1669 = vadd.f32 %v1663, %v1668
    %1670 = vrot.lane.b32.xlu0 %v1666, 64
    %v1671 = vpop.permute.xlu0 %1670
    %v1672 = vadd.f32 %v1666, %v1671
    %v1673 = vmul.f32 %v1669, 0.00048828125
    %v1674 = vmul.f32 %v1672, 0.00048828125
    %v1675 = vmul.f32 %v1673, %v1673
    %v1676 = vsub.f32 %v1674, %v1675
    %v1677 = vmax.f32 %v1676, 0.0
    %v1678 = vadd.f32 %v1677, 1e-05
    %v1679 = vrsqrt.pop %v1678
    %v1680 = vlaneseq
    %v1681 = vshrl.u32 %v1680, 7
    %v1682 = vsub.s32 0, %v1681
    %v1683 = vrot.slane %v1673, %v1682
    %v1684 = vsub.f32 %v1199, %v1683
    %v1685 = vsub.f32 %v1202, %v1683
    %v1686 = vsub.f32 %v1207, %v1683
    %v1687 = vsub.f32 %v1210, %v1683
    %v1688 = vsub.f32 %v1215, %v1683
    %v1689 = vsub.f32 %v1218, %v1683
    %v1690 = vsub.f32 %v1223, %v1683
    %v1691 = vsub.f32 %v1226, %v1683
    %v1692 = vsub.f32 %v1231, %v1683
    %v1693 = vsub.f32 %v1234, %v1683
    %v1694 = vsub.f32 %v1239, %v1683
    %v1695 = vsub.f32 %v1242, %v1683
    %v1696 = vsub.f32 %v1247, %v1683
    %v1697 = vsub.f32 %v1250, %v1683
    %v1698 = vsub.f32 %v1255, %v1683
    %v1699 = vsub.f32 %v1258, %v1683
    %v1700 = vsub.f32 %v1263, %v1683
    %v1701 = vsub.f32 %v1266, %v1683
    %v1702 = vsub.f32 %v1271, %v1683
    %v1703 = vsub.f32 %v1274, %v1683
    %v1704 = vsub.f32 %v1279, %v1683
    %v1705 = vsub.f32 %v1282, %v1683
    %v1706 = vsub.f32 %v1287, %v1683
    %v1707 = vsub.f32 %v1290, %v1683
    %v1708 = vsub.f32 %v1295, %v1683
    %v1709 = vsub.f32 %v1298, %v1683
    %v1710 = vsub.f32 %v1303, %v1683
    %v1711 = vsub.f32 %v1306, %v1683
    %v1712 = vsub.f32 %v1311, %v1683
    %v1713 = vsub.f32 %v1314, %v1683
    %v1714 = vsub.f32 %v1319, %v1683
    %v1715 = vsub.f32 %v1322, %v1683
    %v1716 = vsub.f32 %v1327, %v1683
    %v1717 = vsub.f32 %v1330, %v1683
    %v1718 = vsub.f32 %v1335, %v1683
    %v1719 = vsub.f32 %v1338, %v1683
    %v1720 = vsub.f32 %v1343, %v1683
    %v1721 = vsub.f32 %v1346, %v1683
    %v1722 = vsub.f32 %v1351, %v1683
    %v1723 = vsub.f32 %v1354, %v1683
    %v1724 = vsub.f32 %v1359, %v1683
    %v1725 = vsub.f32 %v1362, %v1683
    %v1726 = vsub.f32 %v1367, %v1683
    %v1727 = vsub.f32 %v1370, %v1683
    %v1728 = vsub.f32 %v1375, %v1683
    %v1729 = vsub.f32 %v1378, %v1683
    %v1730 = vsub.f32 %v1383, %v1683
    %v1731 = vsub.f32 %v1386, %v1683
    %v1732 = vsub.f32 %v1391, %v1683
    %v1733 = vsub.f32 %v1394, %v1683
    %v1734 = vsub.f32 %v1399, %v1683
    %v1735 = vsub.f32 %v1402, %v1683
    %v1736 = vsub.f32 %v1407, %v1683
    %v1737 = vsub.f32 %v1410, %v1683
    %v1738 = vsub.f32 %v1415, %v1683
    %v1739 = vsub.f32 %v1418, %v1683
    %v1740 = vsub.f32 %v1423, %v1683
    %v1741 = vsub.f32 %v1426, %v1683
    %v1742 = vsub.f32 %v1431, %v1683
    %v1743 = vsub.f32 %v1434, %v1683
    %v1744 = vsub.f32 %v1439, %v1683
    %v1745 = vsub.f32 %v1442, %v1683
    %v1746 = vsub.f32 %v1447, %v1683
    %v1747 = vsub.f32 %v1450, %v1683
    %v1748 = vlaneseq
    %v1749 = vshrl.u32 %v1748, 7
    %v1750 = vsub.s32 0, %v1749
    %v1751 = vrot.slane %v1679, %v1750
    %v1752 = vmul.f32 %v1684, %v1751
    %v1753 = vmul.f32 %v1685, %v1751
    %v1754 = vmul.f32 %v1686, %v1751
    %v1755 = vmul.f32 %v1687, %v1751
    %v1756 = vmul.f32 %v1688, %v1751
    %v1757 = vmul.f32 %v1689, %v1751
    %v1758 = vmul.f32 %v1690, %v1751
    %v1759 = vmul.f32 %v1691, %v1751
    %v1760 = vmul.f32 %v1692, %v1751
    %v1761 = vmul.f32 %v1693, %v1751
    %v1762 = vmul.f32 %v1694, %v1751
    %v1763 = vmul.f32 %v1695, %v1751
    %v1764 = vmul.f32 %v1696, %v1751
    %v1765 = vmul.f32 %v1697, %v1751
    %v1766 = vmul.f32 %v1698, %v1751
    %v1767 = vmul.f32 %v1699, %v1751
    %v1768 = vmul.f32 %v1700, %v1751
    %v1769 = vmul.f32 %v1701, %v1751
    %v1770 = vmul.f32 %v1702, %v1751
    %v1771 = vmul.f32 %v1703, %v1751
    %v1772 = vmul.f32 %v1704, %v1751
    %v1773 = vmul.f32 %v1705, %v1751
    %v1774 = vmul.f32 %v1706, %v1751
    %v1775 = vmul.f32 %v1707, %v1751
    %v1776 = vmul.f32 %v1708, %v1751
    %v1777 = vmul.f32 %v1709, %v1751
    %v1778 = vmul.f32 %v1710, %v1751
    %v1779 = vmul.f32 %v1711, %v1751
    %v1780 = vmul.f32 %v1712, %v1751
    %v1781 = vmul.f32 %v1713, %v1751
    %v1782 = vmul.f32 %v1714, %v1751
    %v1783 = vmul.f32 %v1715, %v1751
    %v1784 = vmul.f32 %v1716, %v1751
    %v1785 = vmul.f32 %v1717, %v1751
    %v1786 = vmul.f32 %v1718, %v1751
    %v1787 = vmul.f32 %v1719, %v1751
    %v1788 = vmul.f32 %v1720, %v1751
    %v1789 = vmul.f32 %v1721, %v1751
    %v1790 = vmul.f32 %v1722, %v1751
    %v1791 = vmul.f32 %v1723, %v1751
    %v1792 = vmul.f32 %v1724, %v1751
    %v1793 = vmul.f32 %v1725, %v1751
    %v1794 = vmul.f32 %v1726, %v1751
    %v1795 = vmul.f32 %v1727, %v1751
    %v1796 = vmul.f32 %v1728, %v1751
    %v1797 = vmul.f32 %v1729, %v1751
    %v1798 = vmul.f32 %v1730, %v1751
    %v1799 = vmul.f32 %v1731, %v1751
    %v1800 = vmul.f32 %v1732, %v1751
    %v1801 = vmul.f32 %v1733, %v1751
    %v1802 = vmul.f32 %v1734, %v1751
    %v1803 = vmul.f32 %v1735, %v1751
    %v1804 = vmul.f32 %v1736, %v1751
    %v1805 = vmul.f32 %v1737, %v1751
    %v1806 = vmul.f32 %v1738, %v1751
    %v1807 = vmul.f32 %v1739, %v1751
    %v1808 = vmul.f32 %v1740, %v1751
    %v1809 = vmul.f32 %v1741, %v1751
    %v1810 = vmul.f32 %v1742, %v1751
    %v1811 = vmul.f32 %v1743, %v1751
    %v1812 = vmul.f32 %v1744, %v1751
    %v1813 = vmul.f32 %v1745, %v1751
    %v1814 = vmul.f32 %v1746, %v1751
    %v1815 = vmul.f32 %v1747, %v1751
    %v1816 = vmax.f32 %v1752, 0.0
    %v1817 = vmax.f32 %v1753, 0.0
    %v1818 = vmax.f32 %v1754, 0.0
    %v1819 = vmax.f32 %v1755, 0.0
    %v1820 = vmax.f32 %v1756, 0.0
    %v1821 = vmax.f32 %v1757, 0.0
    %v1822 = vmax.f32 %v1758, 0.0
    %v1823 = vmax.f32 %v1759, 0.0
    %v1824 = vmax.f32 %v1760, 0.0
    %v1825 = vmax.f32 %v1761, 0.0
    %v1826 = vmax.f32 %v1762, 0.0
    %v1827 = vmax.f32 %v1763, 0.0
    %v1828 = vmax.f32 %v1764, 0.0
    %v1829 = vmax.f32 %v1765, 0.0
    %v1830 = vmax.f32 %v1766, 0.0
    %v1831 = vmax.f32 %v1767, 0.0
    %v1832 = vmax.f32 %v1768, 0.0
    %v1833 = vmax.f32 %v1769, 0.0
    %v1834 = vmax.f32 %v1770, 0.0
    %v1835 = vmax.f32 %v1771, 0.0
    %v1836 = vmax.f32 %v1772, 0.0
    %v1837 = vmax.f32 %v1773, 0.0
    %v1838 = vmax.f32 %v1774, 0.0
    %v1839 = vmax.f32 %v1775, 0.0
    %v1840 = vmax.f32 %v1776, 0.0
    %v1841 = vmax.f32 %v1777, 0.0
    %v1842 = vmax.f32 %v1778, 0.0
    %v1843 = vmax.f32 %v1779, 0.0
    %v1844 = vmax.f32 %v1780, 0.0
    %v1845 = vmax.f32 %v1781, 0.0
    %v1846 = vmax.f32 %v1782, 0.0
    %v1847 = vmax.f32 %v1783, 0.0
    %v1848 = vmax.f32 %v1784, 0.0
    %v1849 = vmax.f32 %v1785, 0.0
    %v1850 = vmax.f32 %v1786, 0.0
    %v1851 = vmax.f32 %v1787, 0.0
    %v1852 = vmax.f32 %v1788, 0.0
    %v1853 = vmax.f32 %v1789, 0.0
    %v1854 = vmax.f32 %v1790, 0.0
    %v1855 = vmax.f32 %v1791, 0.0
    %v1856 = vmax.f32 %v1792, 0.0
    %v1857 = vmax.f32 %v1793, 0.0
    %v1858 = vmax.f32 %v1794, 0.0
    %v1859 = vmax.f32 %v1795, 0.0
    %v1860 = vmax.f32 %v1796, 0.0
    %v1861 = vmax.f32 %v1797, 0.0
    %v1862 = vmax.f32 %v1798, 0.0
    %v1863 = vmax.f32 %v1799, 0.0
    %v1864 = vmax.f32 %v1800, 0.0
    %v1865 = vmax.f32 %v1801, 0.0
    %v1866 = vmax.f32 %v1802, 0.0
    %v1867 = vmax.f32 %v1803, 0.0
    %v1868 = vmax.f32 %v1804, 0.0
    %v1869 = vmax.f32 %v1805, 0.0
    %v1870 = vmax.f32 %v1806, 0.0
    %v1871 = vmax.f32 %v1807, 0.0
    %v1872 = vmax.f32 %v1808, 0.0
    %v1873 = vmax.f32 %v1809, 0.0
    %v1874 = vmax.f32 %v1810, 0.0
    %v1875 = vmax.f32 %v1811, 0.0
    %v1876 = vmax.f32 %v1812, 0.0
    %v1877 = vmax.f32 %v1813, 0.0
    %v1878 = vmax.f32 %v1814, 0.0
    %v1879 = vmax.f32 %v1815, 0.0
    %v1880 = vpack.c.bf16 %v1817, %v1816
    %v1881 = vpack.c.bf16 %v1819, %v1818
    %v1882 = vpack.c.bf16 %v1821, %v1820
    %v1883 = vpack.c.bf16 %v1823, %v1822
    %v1884 = vpack.c.bf16 %v1825, %v1824
    %v1885 = vpack.c.bf16 %v1827, %v1826
    %v1886 = vpack.c.bf16 %v1829, %v1828
    %v1887 = vpack.c.bf16 %v1831, %v1830
    %v1888 = vpack.c.bf16 %v1833, %v1832
    %v1889 = vpack.c.bf16 %v1835, %v1834
    %v1890 = vpack.c.bf16 %v1837, %v1836
    %v1891 = vpack.c.bf16 %v1839, %v1838
    %v1892 = vpack.c.bf16 %v1841, %v1840
    %v1893 = vpack.c.bf16 %v1843, %v1842
    %v1894 = vpack.c.bf16 %v1845, %v1844
    %v1895 = vpack.c.bf16 %v1847, %v1846
    %v1896 = vpack.c.bf16 %v1849, %v1848
    %v1897 = vpack.c.bf16 %v1851, %v1850
    %v1898 = vpack.c.bf16 %v1853, %v1852
    %v1899 = vpack.c.bf16 %v1855, %v1854
    %v1900 = vpack.c.bf16 %v1857, %v1856
    %v1901 = vpack.c.bf16 %v1859, %v1858
    %v1902 = vpack.c.bf16 %v1861, %v1860
    %v1903 = vpack.c.bf16 %v1863, %v1862
    %v1904 = vpack.c.bf16 %v1865, %v1864
    %v1905 = vpack.c.bf16 %v1867, %v1866
    %v1906 = vpack.c.bf16 %v1869, %v1868
    %v1907 = vpack.c.bf16 %v1871, %v1870
    %v1908 = vpack.c.bf16 %v1873, %v1872
    %v1909 = vpack.c.bf16 %v1875, %v1874
    %v1910 = vpack.c.bf16 %v1877, %v1876
    %v1911 = vpack.c.bf16 %v1879, %v1878
    %v1944 = vunpack.c.l.b16 %v1880
    %v1945 = vunpack.c.h.b16 %v1880
    %v1946 = vunpack.c.l.b16 %v1881
    %v1947 = vunpack.c.h.b16 %v1881
    %v1948 = vunpack.c.l.b16 %v1882
    %v1949 = vunpack.c.h.b16 %v1882
    %v1950 = vunpack.c.l.b16 %v1883
    %v1951 = vunpack.c.h.b16 %v1883
    %v1952 = vunpack.c.l.b16 %v1884
    %v1953 = vunpack.c.h.b16 %v1884
    %v1954 = vunpack.c.l.b16 %v1885
    %v1955 = vunpack.c.h.b16 %v1885
    %v1956 = vunpack.c.l.b16 %v1886
    %v1957 = vunpack.c.h.b16 %v1886
    %v1958 = vunpack.c.l.b16 %v1887
    %v1959 = vunpack.c.h.b16 %v1887
    %v1960 = vunpack.c.l.b16 %v1888
    %v1961 = vunpack.c.h.b16 %v1888
    %v1962 = vunpack.c.l.b16 %v1889
    %v1963 = vunpack.c.h.b16 %v1889
    %v1964 = vunpack.c.l.b16 %v1890
    %v1965 = vunpack.c.h.b16 %v1890
    %v1966 = vunpack.c.l.b16 %v1891
    %v1967 = vunpack.c.h.b16 %v1891
    %v1968 = vunpack.c.l.b16 %v1892
    %v1969 = vunpack.c.h.b16 %v1892
    %v1970 = vunpack.c.l.b16 %v1893
    %v1971 = vunpack.c.h.b16 %v1893
    %v1972 = vunpack.c.l.b16 %v1894
    %v1973 = vunpack.c.h.b16 %v1894
    %v1974 = vunpack.c.l.b16 %v1895
    %v1975 = vunpack.c.h.b16 %v1895
    %v1976 = vunpack.c.l.b16 %v1896
    %v1977 = vunpack.c.h.b16 %v1896
    %v1978 = vunpack.c.l.b16 %v1897
    %v1979 = vunpack.c.h.b16 %v1897
    %v1980 = vunpack.c.l.b16 %v1898
    %v1981 = vunpack.c.h.b16 %v1898
    %v1982 = vunpack.c.l.b16 %v1899
    %v1983 = vunpack.c.h.b16 %v1899
    %v1984 = vunpack.c.l.b16 %v1900
    %v1985 = vunpack.c.h.b16 %v1900
    %v1986 = vunpack.c.l.b16 %v1901
    %v1987 = vunpack.c.h.b16 %v1901
    %v1988 = vunpack.c.l.b16 %v1902
    %v1989 = vunpack.c.h.b16 %v1902
    %v1990 = vunpack.c.l.b16 %v1903
    %v1991 = vunpack.c.h.b16 %v1903
    %v1992 = vunpack.c.l.b16 %v1904
    %v1993 = vunpack.c.h.b16 %v1904
    %v1994 = vunpack.c.l.b16 %v1905
    %v1995 = vunpack.c.h.b16 %v1905
    %v1996 = vunpack.c.l.b16 %v1906
    %v1997 = vunpack.c.h.b16 %v1906
    %v1998 = vunpack.c.l.b16 %v1907
    %v1999 = vunpack.c.h.b16 %v1907
    %v2000 = vunpack.c.l.b16 %v1908
    %v2001 = vunpack.c.h.b16 %v1908
    %v2002 = vunpack.c.l.b16 %v1909
    %v2003 = vunpack.c.h.b16 %v1909
    %v2004 = vunpack.c.l.b16 %v1910
    %v2005 = vunpack.c.h.b16 %v1910
    %v2006 = vunpack.c.l.b16 %v1911
    %v2007 = vunpack.c.h.b16 %v1911
    %v2008 = vpack.c.b16 %v1944, %v1944
    %v2009 = vpack.c.b16 %v1945, %v1945
    %v2010 = vpack.c.b16 %v1946, %v1946
    %v2011 = vpack.c.b16 %v1947, %v1947
    %v2012 = vpack.c.b16 %v1948, %v1948
    %v2013 = vpack.c.b16 %v1949, %v1949
    %v2014 = vpack.c.b16 %v1950, %v1950
    %v2015 = vpack.c.b16 %v1951, %v1951
    %v2016 = vpack.c.b16 %v1952, %v1952
    %v2017 = vpack.c.b16 %v1953, %v1953
    %v2018 = vpack.c.b16 %v1954, %v1954
    %v2019 = vpack.c.b16 %v1955, %v1955
    %v2020 = vpack.c.b16 %v1956, %v1956
    %v2021 = vpack.c.b16 %v1957, %v1957
    %v2022 = vpack.c.b16 %v1958, %v1958
    %v2023 = vpack.c.b16 %v1959, %v1959
    %v2024 = vpack.c.b16 %v1960, %v1960
    %v2025 = vpack.c.b16 %v1961, %v1961
    %v2026 = vpack.c.b16 %v1962, %v1962
    %v2027 = vpack.c.b16 %v1963, %v1963
    %v2028 = vpack.c.b16 %v1964, %v1964
    %v2029 = vpack.c.b16 %v1965, %v1965
    %v2030 = vpack.c.b16 %v1966, %v1966
    %v2031 = vpack.c.b16 %v1967, %v1967
    %v2032 = vpack.c.b16 %v1968, %v1968
    %v2033 = vpack.c.b16 %v1969, %v1969
    %v2034 = vpack.c.b16 %v1970, %v1970
    %v2035 = vpack.c.b16 %v1971, %v1971
    %v2036 = vpack.c.b16 %v1972, %v1972
    %v2037 = vpack.c.b16 %v1973, %v1973
    %v2038 = vpack.c.b16 %v1974, %v1974
    %v2039 = vpack.c.b16 %v1975, %v1975
    %v2040 = vpack.c.b16 %v1976, %v1976
    %v2041 = vpack.c.b16 %v1977, %v1977
    %v2042 = vpack.c.b16 %v1978, %v1978
    %v2043 = vpack.c.b16 %v1979, %v1979
    %v2044 = vpack.c.b16 %v1980, %v1980
    %v2045 = vpack.c.b16 %v1981, %v1981
    %v2046 = vpack.c.b16 %v1982, %v1982
    %v2047 = vpack.c.b16 %v1983, %v1983
    %v2048 = vpack.c.b16 %v1984, %v1984
    %v2049 = vpack.c.b16 %v1985, %v1985
    %v2050 = vpack.c.b16 %v1986, %v1986
    %v2051 = vpack.c.b16 %v1987, %v1987
    %v2052 = vpack.c.b16 %v1988, %v1988
    %v2053 = vpack.c.b16 %v1989, %v1989
    %v2054 = vpack.c.b16 %v1990, %v1990
    %v2055 = vpack.c.b16 %v1991, %v1991
    %v2056 = vpack.c.b16 %v1992, %v1992
    %v2057 = vpack.c.b16 %v1993, %v1993
    %v2058 = vpack.c.b16 %v1994, %v1994
    %v2059 = vpack.c.b16 %v1995, %v1995
    %v2060 = vpack.c.b16 %v1996, %v1996
    %v2061 = vpack.c.b16 %v1997, %v1997
    %v2062 = vpack.c.b16 %v1998, %v1998
    %v2063 = vpack.c.b16 %v1999, %v1999
    %v2064 = vpack.c.b16 %v2000, %v2000
    %v2065 = vpack.c.b16 %v2001, %v2001
    %v2066 = vpack.c.b16 %v2002, %v2002
    %v2067 = vpack.c.b16 %v2003, %v2003
    %v2068 = vpack.c.b16 %v2004, %v2004
    %v2069 = vpack.c.b16 %v2005, %v2005
    %v2070 = vpack.c.b16 %v2006, %v2006
    %v2071 = vpack.c.b16 %v2007, %v2007
    %2136 = vst [vmem:[%s2] sm:$0xf] %v2008
    %2137 = vst [vmem:[%s2 + $0x4] sm:$0xf] %v2009
    %2138 = vst [vmem:[%s2 + $0x8] sm:$0xf] %v2010
    %2139 = vst [vmem:[%s2 + $0xc] sm:$0xf] %v2011
    %2140 = vst [vmem:[%s2 + $0x10] sm:$0xf] %v2012
    %2141 = vst [vmem:[%s2 + $0x14] sm:$0xf] %v2013
    %2142 = vst [vmem:[%s2 + $0x18] sm:$0xf] %v2014
    %2143 = vst [vmem:[%s2 + $0x1c] sm:$0xf] %v2015
    %2144 = vst [vmem:[%s2 + $0x20] sm:$0xf] %v2016
    %2145 = vst [vmem:[%s2 + $0x24] sm:$0xf] %v2017
    %2146 = vst [vmem:[%s2 + $0x28] sm:$0xf] %v2018
    %2147 = vst [vmem:[%s2 + $0x2c] sm:$0xf] %v2019
    %2148 = vst [vmem:[%s2 + $0x30] sm:$0xf] %v2020
    %2149 = vst [vmem:[%s2 + $0x34] sm:$0xf] %v2021
    %2150 = vst [vmem:[%s2 + $0x38] sm:$0xf] %v2022
    %2151 = vst [vmem:[%s2 + $0x3c] sm:$0xf] %v2023
    %2152 = vst [vmem:[%s2 + $0x40] sm:$0xf] %v2024
    %2153 = vst [vmem:[%s2 + $0x44] sm:$0xf] %v2025
    %2154 = vst [vmem:[%s2 + $0x48] sm:$0xf] %v2026
    %2155 = vst [vmem:[%s2 + $0x4c] sm:$0xf] %v2027
    %2156 = vst [vmem:[%s2 + $0x50] sm:$0xf] %v2028
    %2157 = vst [vmem:[%s2 + $0x54] sm:$0xf] %v2029
    %2158 = vst [vmem:[%s2 + $0x58] sm:$0xf] %v2030
    %2159 = vst [vmem:[%s2 + $0x5c] sm:$0xf] %v2031
    %2160 = vst [vmem:[%s2 + $0x60] sm:$0xf] %v2032
    %2161 = vst [vmem:[%s2 + $0x64] sm:$0xf] %v2033
    %2162 = vst [vmem:[%s2 + $0x68] sm:$0xf] %v2034
    %2163 = vst [vmem:[%s2 + $0x6c] sm:$0xf] %v2035
    %2164 = vst [vmem:[%s2 + $0x70] sm:$0xf] %v2036
    %2165 = vst [vmem:[%s2 + $0x74] sm:$0xf] %v2037
    %2166 = vst [vmem:[%s2 + $0x78] sm:$0xf] %v2038
    %2167 = vst [vmem:[%s2 + $0x7c] sm:$0xf] %v2039
    %2168 = vst [vmem:[%s2 + $0x80] sm:$0xf] %v2040
    %2169 = vst [vmem:[%s2 + $0x84] sm:$0xf] %v2041
    %2170 = vst [vmem:[%s2 + $0x88] sm:$0xf] %v2042
    %2171 = vst [vmem:[%s2 + $0x8c] sm:$0xf] %v2043
    %2172 = vst [vmem:[%s2 + $0x90] sm:$0xf] %v2044
    %2173 = vst [vmem:[%s2 + $0x94] sm:$0xf] %v2045
    %2174 = vst [vmem:[%s2 + $0x98] sm:$0xf] %v2046
    %2175 = vst [vmem:[%s2 + $0x9c] sm:$0xf] %v2047
    %2176 = vst [vmem:[%s2 + $0xa0] sm:$0xf] %v2048
    %2177 = vst [vmem:[%s2 + $0xa4] sm:$0xf] %v2049
    %2178 = vst [vmem:[%s2 + $0xa8] sm:$0xf] %v2050
    %2179 = vst [vmem:[%s2 + $0xac] sm:$0xf] %v2051
    %2180 = vst [vmem:[%s2 + $0xb0] sm:$0xf] %v2052
    %2181 = vst [vmem:[%s2 + $0xb4] sm:$0xf] %v2053
    %2182 = vst [vmem:[%s2 + $0xb8] sm:$0xf] %v2054
    %2183 = vst [vmem:[%s2 + $0xbc] sm:$0xf] %v2055
    %2184 = vst [vmem:[%s2 + $0xc0] sm:$0xf] %v2056
    %2185 = vst [vmem:[%s2 + $0xc4] sm:$0xf] %v2057
    %2186 = vst [vmem:[%s2 + $0xc8] sm:$0xf] %v2058
    %2187 = vst [vmem:[%s2 + $0xcc] sm:$0xf] %v2059
    %2188 = vst [vmem:[%s2 + $0xd0] sm:$0xf] %v2060
    %2189 = vst [vmem:[%s2 + $0xd4] sm:$0xf] %v2061
    %2190 = vst [vmem:[%s2 + $0xd8] sm:$0xf] %v2062
    %2191 = vst [vmem:[%s2 + $0xdc] sm:$0xf] %v2063
    %2192 = vst [vmem:[%s2 + $0xe0] sm:$0xf] %v2064
    %2193 = vst [vmem:[%s2 + $0xe4] sm:$0xf] %v2065
    %2194 = vst [vmem:[%s2 + $0xe8] sm:$0xf] %v2066
    %2195 = vst [vmem:[%s2 + $0xec] sm:$0xf] %v2067
    %2196 = vst [vmem:[%s2 + $0xf0] sm:$0xf] %v2068
    %2197 = vst [vmem:[%s2 + $0xf4] sm:$0xf] %v2069
    %2198 = vst [vmem:[%s2 + $0xf8] sm:$0xf] %v2070
    %2199 = vst [vmem:[%s2 + $0xfc] sm:$0xf] %v2071
    // Predicated region
    $region14: #{decoder_forward.8} parent=1 // pred_check
      _
    $region15: #{decoder_forward.8} parent=1 // pred_check_branch
      %2201 = sbr.rel (0) target = $region17
    $region16: #{decoder_forward.8} parent=1 // pred_region
      _
    $region17: #{decoder_forward.8} parent=1 // pred_fallthru
      _
    // Predicated region
    $region18: #{decoder_forward.8} parent=1 // pred_check
      _
    $region19: #{decoder_forward.8} parent=1 // pred_check_branch
      %2203 = sbr.rel (0) target = $region21
    $region20: #{decoder_forward.8} parent=1 // pred_region
      _
    $region21: #{decoder_forward.8} parent=1 // pred_fallthru
      _
    %2204 = vsyncpa [#allocation3], 1

// kernel: decoder_forward.9
$region0: #{decoder_forward.9}
  #allocation0 [shape = 'u32[]', space=smem, size = 0x4, offset = 0x4, fixed_abs, tag = 'smem constant byte address 0x4 - core index']
  #allocation1 [shape = 'u32[144,128]{1,0:T(1,128)}', space=vmem, size = 0x12000, scoped, tag = 'internal scratch']
  %s0 = inlined_call_operand.vmem [shape: bf16[2048,144], index: 0, kind: input, shape index: {}]
  %s1 = inlined_call_operand.vmem [shape: bf16[144,128], index: 1, kind: input, shape index: {}]
  %s2 = inlined_call_operand.vmem [shape: f32[1,128], index: 2, kind: input, shape index: {}]
  %s3 = inlined_call_operand.vmem [shape: f32[2048,128], index: 3, kind: output, shape index: {}]
  %s4 = sld [smem:[#allocation0]]
  $region22: #{decoder_forward.9} parent=0
    _
  %s6 = ssub.s32 1, %s4
  %s7 = scalar_select 0, %s6, %s4
  // Predicated region
  $region2: #{decoder_forward.9} parent=0 // pred_check
    _
  $region3: #{decoder_forward.9} parent=0 // pred_check_branch
    %9 = sbr.rel (0) target = $region5
  $region4: #{decoder_forward.9} parent=0 // pred_region
    _
  $region5: #{decoder_forward.9} parent=0 // pred_fallthru
    _
  // Predicated region
  $region6: #{decoder_forward.9} parent=0 // pred_check
    _
  $region7: #{decoder_forward.9} parent=0 // pred_check_branch
    %11 = sbr.rel (0) target = $region9
  $region8: #{decoder_forward.9} parent=0 // pred_region
    _
  $region9: #{decoder_forward.9} parent=0 // pred_fallthru
    _
  // Predicated region
  $region10: #{decoder_forward.9} parent=0 // pred_check
    _
  $region11: #{decoder_forward.9} parent=0 // pred_check_branch
    %13 = sbr.rel (0) target = $region13
  $region12: #{decoder_forward.9} parent=0 // pred_region
    _
  $region13: #{decoder_forward.9} parent=0 // pred_fallthru
    _
  %v15 = vld [vmem:[%s0] sm:$0xff]
  %v16 = vld [vmem:[%s0 + $0x8] sm:$0xff]
  %v17 = vld [vmem:[%s0 + $0x10] sm:$0xff]
  %v18 = vld [vmem:[%s0 + $0x18] sm:$0xff]
  %v19 = vld [vmem:[%s0 + $0x20] sm:$0xff]
  %v20 = vld [vmem:[%s0 + $0x28] sm:$0xff]
  %v21 = vld [vmem:[%s0 + $0x30] sm:$0xff]
  %v22 = vld [vmem:[%s0 + $0x38] sm:$0xff]
  %v23 = vld [vmem:[%s0 + $0x40] sm:$0xff]
  %v24 = vld [vmem:[%s0 + $0x48] sm:$0xff]
  %v25 = vld [vmem:[%s0 + $0x50] sm:$0xff]
  %v26 = vld [vmem:[%s0 + $0x58] sm:$0xff]
  %v27 = vld [vmem:[%s0 + $0x60] sm:$0xff]
  %v28 = vld [vmem:[%s0 + $0x68] sm:$0xff]
  %v29 = vld [vmem:[%s0 + $0x70] sm:$0xff]
  %v30 = vld [vmem:[%s0 + $0x78] sm:$0xff]
  %v31 = vld [vmem:[%s0 + $0x80] sm:$0xff]
  %v32 = vld [vmem:[%s0 + $0x88] sm:$0xff]
  %v33 = vld [vmem:[%s0 + $0x90] sm:$0xff]
  %v34 = vld [vmem:[%s0 + $0x98] sm:$0xff]
  %v35 = vld [vmem:[%s0 + $0xa0] sm:$0xff]
  %v36 = vld [vmem:[%s0 + $0xa8] sm:$0xff]
  %v37 = vld [vmem:[%s0 + $0xb0] sm:$0xff]
  %v38 = vld [vmem:[%s0 + $0xb8] sm:$0xff]
  %v39 = vld [vmem:[%s0 + $0xc0] sm:$0xff]
  %v40 = vld [vmem:[%s0 + $0xc8] sm:$0xff]
  %v41 = vld [vmem:[%s0 + $0xd0] sm:$0xff]
  %v42 = vld [vmem:[%s0 + $0xd8] sm:$0xff]
  %v43 = vld [vmem:[%s0 + $0xe0] sm:$0xff]
  %v44 = vld [vmem:[%s0 + $0xe8] sm:$0xff]
  %v45 = vld [vmem:[%s0 + $0xf0] sm:$0xff]
  %v46 = vld [vmem:[%s0 + $0xf8] sm:$0xff]
  %v47 = vld [vmem:[%s0 + $0x100] sm:$0xff]
  %v48 = vld [vmem:[%s0 + $0x108] sm:$0xff]
  %v49 = vld [vmem:[%s0 + $0x110] sm:$0xff]
  %v50 = vld [vmem:[%s0 + $0x118] sm:$0xff]
  %v51 = vld [vmem:[%s0 + $0x120] sm:$0xff]
  %v52 = vld [vmem:[%s0 + $0x128] sm:$0xff]
  %v53 = vld [vmem:[%s0 + $0x130] sm:$0xff]
  %v54 = vld [vmem:[%s0 + $0x138] sm:$0xff]
  %v55 = vld [vmem:[%s0 + $0x140] sm:$0xff]
  %v56 = vld [vmem:[%s0 + $0x148] sm:$0xff]
  %v57 = vld [vmem:[%s0 + $0x150] sm:$0xff]
  %v58 = vld [vmem:[%s0 + $0x158] sm:$0xff]
  %v59 = vld [vmem:[%s0 + $0x160] sm:$0xff]
  %v60 = vld [vmem:[%s0 + $0x168] sm:$0xff]
  %v61 = vld [vmem:[%s0 + $0x170] sm:$0xff]
  %v62 = vld [vmem:[%s0 + $0x178] sm:$0xff]
  %v63 = vld [vmem:[%s0 + $0x180] sm:$0xff]
  %v64 = vld [vmem:[%s0 + $0x188] sm:$0xff]
  %v65 = vld [vmem:[%s0 + $0x190] sm:$0xff]
  %v66 = vld [vmem:[%s0 + $0x198] sm:$0xff]
  %v67 = vld [vmem:[%s0 + $0x1a0] sm:$0xff]
  %v68 = vld [vmem:[%s0 + $0x1a8] sm:$0xff]
  %v69 = vld [vmem:[%s0 + $0x1b0] sm:$0xff]
  %v70 = vld [vmem:[%s0 + $0x1b8] sm:$0xff]
  %v71 = vld [vmem:[%s0 + $0x1c0] sm:$0xff]
  %v72 = vld [vmem:[%s0 + $0x1c8] sm:$0xff]
  %v73 = vld [vmem:[%s0 + $0x1d0] sm:$0xff]
  %v74 = vld [vmem:[%s0 + $0x1d8] sm:$0xff]
  %v75 = vld [vmem:[%s0 + $0x1e0] sm:$0xff]
  %v76 = vld [vmem:[%s0 + $0x1e8] sm:$0xff]
  %v77 = vld [vmem:[%s0 + $0x1f0] sm:$0xff]
  %v78 = vld [vmem:[%s0 + $0x1f8] sm:$0xff]
  %v79 = vld [vmem:[%s0 + $0x200] sm:$0xff]
  %v80 = vld [vmem:[%s0 + $0x208] sm:$0xff]
  %v81 = vld [vmem:[%s0 + $0x210] sm:$0xff]
  %v82 = vld [vmem:[%s0 + $0x218] sm:$0xff]
  %v83 = vld [vmem:[%s0 + $0x220] sm:$0xff]
  %v84 = vld [vmem:[%s0 + $0x228] sm:$0xff]
  %v85 = vld [vmem:[%s0 + $0x230] sm:$0xff]
  %v86 = vld [vmem:[%s0 + $0x238] sm:$0xff]
  %v87 = vld [vmem:[%s0 + $0x240] sm:$0xff]
  %v88 = vld [vmem:[%s0 + $0x248] sm:$0xff]
  %v89 = vld [vmem:[%s0 + $0x250] sm:$0xff]
  %v90 = vld [vmem:[%s0 + $0x258] sm:$0xff]
  %v91 = vld [vmem:[%s0 + $0x260] sm:$0xff]
  %v92 = vld [vmem:[%s0 + $0x268] sm:$0xff]
  %v93 = vld [vmem:[%s0 + $0x270] sm:$0xff]
  %v94 = vld [vmem:[%s0 + $0x278] sm:$0xff]
  %v95 = vld [vmem:[%s0 + $0x280] sm:$0xff]
  %v96 = vld [vmem:[%s0 + $0x288] sm:$0xff]
  %v97 = vld [vmem:[%s0 + $0x290] sm:$0xff]
  %v98 = vld [vmem:[%s0 + $0x298] sm:$0xff]
  %v99 = vld [vmem:[%s0 + $0x2a0] sm:$0xff]
  %v100 = vld [vmem:[%s0 + $0x2a8] sm:$0xff]
  %v101 = vld [vmem:[%s0 + $0x2b0] sm:$0xff]
  %v102 = vld [vmem:[%s0 + $0x2b8] sm:$0xff]
  %v103 = vld [vmem:[%s0 + $0x2c0] sm:$0xff]
  %v104 = vld [vmem:[%s0 + $0x2c8] sm:$0xff]
  %v105 = vld [vmem:[%s0 + $0x2d0] sm:$0xff]
  %v106 = vld [vmem:[%s0 + $0x2d8] sm:$0xff]
  %v107 = vld [vmem:[%s0 + $0x2e0] sm:$0xff]
  %v108 = vld [vmem:[%s0 + $0x2e8] sm:$0xff]
  %v109 = vld [vmem:[%s0 + $0x2f0] sm:$0xff]
  %v110 = vld [vmem:[%s0 + $0x2f8] sm:$0xff]
  %v111 = vld [vmem:[%s0 + $0x300] sm:$0xff]
  %v112 = vld [vmem:[%s0 + $0x308] sm:$0xff]
  %v113 = vld [vmem:[%s0 + $0x310] sm:$0xff]
  %v114 = vld [vmem:[%s0 + $0x318] sm:$0xff]
  %v115 = vld [vmem:[%s0 + $0x320] sm:$0xff]
  %v116 = vld [vmem:[%s0 + $0x328] sm:$0xff]
  %v117 = vld [vmem:[%s0 + $0x330] sm:$0xff]
  %v118 = vld [vmem:[%s0 + $0x338] sm:$0xff]
  %v119 = vld [vmem:[%s0 + $0x340] sm:$0xff]
  %v120 = vld [vmem:[%s0 + $0x348] sm:$0xff]
  %v121 = vld [vmem:[%s0 + $0x350] sm:$0xff]
  %v122 = vld [vmem:[%s0 + $0x358] sm:$0xff]
  %v123 = vld [vmem:[%s0 + $0x360] sm:$0xff]
  %v124 = vld [vmem:[%s0 + $0x368] sm:$0xff]
  %v125 = vld [vmem:[%s0 + $0x370] sm:$0xff]
  %v126 = vld [vmem:[%s0 + $0x378] sm:$0xff]
  %v127 = vld [vmem:[%s0 + $0x380] sm:$0xff]
  %v128 = vld [vmem:[%s0 + $0x388] sm:$0xff]
  %v129 = vld [vmem:[%s0 + $0x390] sm:$0xff]
  %v130 = vld [vmem:[%s0 + $0x398] sm:$0xff]
  %v131 = vld [vmem:[%s0 + $0x3a0] sm:$0xff]
  %v132 = vld [vmem:[%s0 + $0x3a8] sm:$0xff]
  %v133 = vld [vmem:[%s0 + $0x3b0] sm:$0xff]
  %v134 = vld [vmem:[%s0 + $0x3b8] sm:$0xff]
  %v135 = vld [vmem:[%s0 + $0x3c0] sm:$0xff]
  %v136 = vld [vmem:[%s0 + $0x3c8] sm:$0xff]
  %v137 = vld [vmem:[%s0 + $0x3d0] sm:$0xff]
  %v138 = vld [vmem:[%s0 + $0x3d8] sm:$0xff]
  %v139 = vld [vmem:[%s0 + $0x3e0] sm:$0xff]
  %v140 = vld [vmem:[%s0 + $0x3e8] sm:$0xff]
  %v141 = vld [vmem:[%s0 + $0x3f0] sm:$0xff]
  %v142 = vld [vmem:[%s0 + $0x3f8] sm:$0xff]
  %v143 = vld [vmem:[%s0 + $0x400] sm:$0xff]
  %v144 = vld [vmem:[%s0 + $0x408] sm:$0xff]
  %v145 = vld [vmem:[%s0 + $0x410] sm:$0xff]
  %v146 = vld [vmem:[%s0 + $0x418] sm:$0xff]
  %v147 = vld [vmem:[%s0 + $0x420] sm:$0xff]
  %v148 = vld [vmem:[%s0 + $0x428] sm:$0xff]
  %v149 = vld [vmem:[%s0 + $0x430] sm:$0xff]
  %v150 = vld [vmem:[%s0 + $0x438] sm:$0xff]
  %v151 = vld [vmem:[%s0 + $0x440] sm:$0xff]
  %v152 = vld [vmem:[%s0 + $0x448] sm:$0xff]
  %v153 = vld [vmem:[%s0 + $0x450] sm:$0xff]
  %v154 = vld [vmem:[%s0 + $0x458] sm:$0xff]
  %v155 = vld [vmem:[%s0 + $0x460] sm:$0xff]
  %v156 = vld [vmem:[%s0 + $0x468] sm:$0xff]
  %v157 = vld [vmem:[%s0 + $0x470] sm:$0xff]
  %v158 = vld [vmem:[%s0 + $0x478] sm:$0xff]
  %v159 = vld [vmem:[%s0 + $0x480] sm:$0xff]
  %v160 = vld [vmem:[%s0 + $0x488] sm:$0xff]
  %v161 = vld [vmem:[%s0 + $0x490] sm:$0xff]
  %v162 = vld [vmem:[%s0 + $0x498] sm:$0xff]
  %v163 = vld [vmem:[%s0 + $0x4a0] sm:$0xff]
  %v164 = vld [vmem:[%s0 + $0x4a8] sm:$0xff]
  %v165 = vld [vmem:[%s0 + $0x4b0] sm:$0xff]
  %v166 = vld [vmem:[%s0 + $0x4b8] sm:$0xff]
  %v167 = vld [vmem:[%s0 + $0x4c0] sm:$0xff]
  %v168 = vld [vmem:[%s0 + $0x4c8] sm:$0xff]
  %v169 = vld [vmem:[%s0 + $0x4d0] sm:$0xff]
  %v170 = vld [vmem:[%s0 + $0x4d8] sm:$0xff]
  %v171 = vld [vmem:[%s0 + $0x4e0] sm:$0xff]
  %v172 = vld [vmem:[%s0 + $0x4e8] sm:$0xff]
  %v173 = vld [vmem:[%s0 + $0x4f0] sm:$0xff]
  %v174 = vld [vmem:[%s0 + $0x4f8] sm:$0xff]
  %v175 = vld [vmem:[%s0 + $0x500] sm:$0xff]
  %v176 = vld [vmem:[%s0 + $0x508] sm:$0xff]
  %v177 = vld [vmem:[%s0 + $0x510] sm:$0xff]
  %v178 = vld [vmem:[%s0 + $0x518] sm:$0xff]
  %v179 = vld [vmem:[%s0 + $0x520] sm:$0xff]
  %v180 = vld [vmem:[%s0 + $0x528] sm:$0xff]
  %v181 = vld [vmem:[%s0 + $0x530] sm:$0xff]
  %v182 = vld [vmem:[%s0 + $0x538] sm:$0xff]
  %v183 = vld [vmem:[%s0 + $0x540] sm:$0xff]
  %v184 = vld [vmem:[%s0 + $0x548] sm:$0xff]
  %v185 = vld [vmem:[%s0 + $0x550] sm:$0xff]
  %v186 = vld [vmem:[%s0 + $0x558] sm:$0xff]
  %v187 = vld [vmem:[%s0 + $0x560] sm:$0xff]
  %v188 = vld [vmem:[%s0 + $0x568] sm:$0xff]
  %v189 = vld [vmem:[%s0 + $0x570] sm:$0xff]
  %v190 = vld [vmem:[%s0 + $0x578] sm:$0xff]
  %v191 = vld [vmem:[%s0 + $0x580] sm:$0xff]
  %v192 = vld [vmem:[%s0 + $0x588] sm:$0xff]
  %v193 = vld [vmem:[%s0 + $0x590] sm:$0xff]
  %v194 = vld [vmem:[%s0 + $0x598] sm:$0xff]
  %v195 = vld [vmem:[%s0 + $0x5a0] sm:$0xff]
  %v196 = vld [vmem:[%s0 + $0x5a8] sm:$0xff]
  %v197 = vld [vmem:[%s0 + $0x5b0] sm:$0xff]
  %v198 = vld [vmem:[%s0 + $0x5b8] sm:$0xff]
  %v199 = vld [vmem:[%s0 + $0x5c0] sm:$0xff]
  %v200 = vld [vmem:[%s0 + $0x5c8] sm:$0xff]
  %v201 = vld [vmem:[%s0 + $0x5d0] sm:$0xff]
  %v202 = vld [vmem:[%s0 + $0x5d8] sm:$0xff]
  %v203 = vld [vmem:[%s0 + $0x5e0] sm:$0xff]
  %v204 = vld [vmem:[%s0 + $0x5e8] sm:$0xff]
  %v205 = vld [vmem:[%s0 + $0x5f0] sm:$0xff]
  %v206 = vld [vmem:[%s0 + $0x5f8] sm:$0xff]
  %v207 = vld [vmem:[%s0 + $0x600] sm:$0xff]
  %v208 = vld [vmem:[%s0 + $0x608] sm:$0xff]
  %v209 = vld [vmem:[%s0 + $0x610] sm:$0xff]
  %v210 = vld [vmem:[%s0 + $0x618] sm:$0xff]
  %v211 = vld [vmem:[%s0 + $0x620] sm:$0xff]
  %v212 = vld [vmem:[%s0 + $0x628] sm:$0xff]
  %v213 = vld [vmem:[%s0 + $0x630] sm:$0xff]
  %v214 = vld [vmem:[%s0 + $0x638] sm:$0xff]
  %v215 = vld [vmem:[%s0 + $0x640] sm:$0xff]
  %v216 = vld [vmem:[%s0 + $0x648] sm:$0xff]
  %v217 = vld [vmem:[%s0 + $0x650] sm:$0xff]
  %v218 = vld [vmem:[%s0 + $0x658] sm:$0xff]
  %v219 = vld [vmem:[%s0 + $0x660] sm:$0xff]
  %v220 = vld [vmem:[%s0 + $0x668] sm:$0xff]
  %v221 = vld [vmem:[%s0 + $0x670] sm:$0xff]
  %v222 = vld [vmem:[%s0 + $0x678] sm:$0xff]
  %v223 = vld [vmem:[%s0 + $0x680] sm:$0xff]
  %v224 = vld [vmem:[%s0 + $0x688] sm:$0xff]
  %v225 = vld [vmem:[%s0 + $0x690] sm:$0xff]
  %v226 = vld [vmem:[%s0 + $0x698] sm:$0xff]
  %v227 = vld [vmem:[%s0 + $0x6a0] sm:$0xff]
  %v228 = vld [vmem:[%s0 + $0x6a8] sm:$0xff]
  %v229 = vld [vmem:[%s0 + $0x6b0] sm:$0xff]
  %v230 = vld [vmem:[%s0 + $0x6b8] sm:$0xff]
  %v231 = vld [vmem:[%s0 + $0x6c0] sm:$0xff]
  %v232 = vld [vmem:[%s0 + $0x6c8] sm:$0xff]
  %v233 = vld [vmem:[%s0 + $0x6d0] sm:$0xff]
  %v234 = vld [vmem:[%s0 + $0x6d8] sm:$0xff]
  %v235 = vld [vmem:[%s0 + $0x6e0] sm:$0xff]
  %v236 = vld [vmem:[%s0 + $0x6e8] sm:$0xff]
  %v237 = vld [vmem:[%s0 + $0x6f0] sm:$0xff]
  %v238 = vld [vmem:[%s0 + $0x6f8] sm:$0xff]
  %v239 = vld [vmem:[%s0 + $0x700] sm:$0xff]
  %v240 = vld [vmem:[%s0 + $0x708] sm:$0xff]
  %v241 = vld [vmem:[%s0 + $0x710] sm:$0xff]
  %v242 = vld [vmem:[%s0 + $0x718] sm:$0xff]
  %v243 = vld [vmem:[%s0 + $0x720] sm:$0xff]
  %v244 = vld [vmem:[%s0 + $0x728] sm:$0xff]
  %v245 = vld [vmem:[%s0 + $0x730] sm:$0xff]
  %v246 = vld [vmem:[%s0 + $0x738] sm:$0xff]
  %v247 = vld [vmem:[%s0 + $0x740] sm:$0xff]
  %v248 = vld [vmem:[%s0 + $0x748] sm:$0xff]
  %v249 = vld [vmem:[%s0 + $0x750] sm:$0xff]
  %v250 = vld [vmem:[%s0 + $0x758] sm:$0xff]
  %v251 = vld [vmem:[%s0 + $0x760] sm:$0xff]
  %v252 = vld [vmem:[%s0 + $0x768] sm:$0xff]
  %v253 = vld [vmem:[%s0 + $0x770] sm:$0xff]
  %v254 = vld [vmem:[%s0 + $0x778] sm:$0xff]
  %v255 = vld [vmem:[%s0 + $0x780] sm:$0xff]
  %v256 = vld [vmem:[%s0 + $0x788] sm:$0xff]
  %v257 = vld [vmem:[%s0 + $0x790] sm:$0xff]
  %v258 = vld [vmem:[%s0 + $0x798] sm:$0xff]
  %v259 = vld [vmem:[%s0 + $0x7a0] sm:$0xff]
  %v260 = vld [vmem:[%s0 + $0x7a8] sm:$0xff]
  %v261 = vld [vmem:[%s0 + $0x7b0] sm:$0xff]
  %v262 = vld [vmem:[%s0 + $0x7b8] sm:$0xff]
  %v263 = vld [vmem:[%s0 + $0x7c0] sm:$0xff]
  %v264 = vld [vmem:[%s0 + $0x7c8] sm:$0xff]
  %v265 = vld [vmem:[%s0 + $0x7d0] sm:$0xff]
  %v266 = vld [vmem:[%s0 + $0x7d8] sm:$0xff]
  %v267 = vld [vmem:[%s0 + $0x7e0] sm:$0xff]
  %v268 = vld [vmem:[%s0 + $0x7e8] sm:$0xff]
  %v269 = vld [vmem:[%s0 + $0x7f0] sm:$0xff]
  %v270 = vld [vmem:[%s0 + $0x7f8] sm:$0xff]
  %v271 = vld [vmem:[%s1] sm:$0xf]
  %v272 = vld [vmem:[%s1 + $0x4] sm:$0xf]
  %v273 = vld [vmem:[%s1 + $0x8] sm:$0xf]
  %v274 = vld [vmem:[%s1 + $0xc] sm:$0xf]
  %v275 = vld [vmem:[%s1 + $0x10] sm:$0xf]
  %v276 = vld [vmem:[%s1 + $0x14] sm:$0xf]
  %v277 = vld [vmem:[%s1 + $0x18] sm:$0xf]
  %v278 = vld [vmem:[%s1 + $0x1c] sm:$0xf]
  %v279 = vld [vmem:[%s1 + $0x20] sm:$0xf]
  %v280 = vld [vmem:[%s1 + $0x24] sm:$0xf]
  %v281 = vld [vmem:[%s1 + $0x28] sm:$0xf]
  %v282 = vld [vmem:[%s1 + $0x2c] sm:$0xf]
  %v283 = vld [vmem:[%s1 + $0x30] sm:$0xf]
  %v284 = vld [vmem:[%s1 + $0x34] sm:$0xf]
  %v285 = vld [vmem:[%s1 + $0x38] sm:$0xf]
  %v286 = vld [vmem:[%s1 + $0x3c] sm:$0xf]
  %v287 = vld [vmem:[%s1 + $0x40] sm:$0xf]
  %v288 = vld [vmem:[%s1 + $0x44] sm:$0xf]
  %v289 = vld [vmem:[%s2] sm:$0x1]
  %v291 = vlaneseq
  %v292 = vshrl.u32 %v291, 7
  %v293 = vsub.s32 0, %v292
  %v294 = vrot.slane %v289, %v293
  %v552 = vunpack.c.l.b16 %v15
  %v553 = vunpack.c.h.b16 %v15
  %v554 = vunpack.c.l.b16 %v16
  %v555 = vunpack.c.h.b16 %v16
  %v556 = vunpack.c.l.b16 %v17
  %v557 = vunpack.c.h.b16 %v17
  %v558 = vunpack.c.l.b16 %v18
  %v559 = vunpack.c.h.b16 %v18
  %v560 = vunpack.c.l.b16 %v19
  %v561 = vunpack.c.h.b16 %v19
  %v562 = vunpack.c.l.b16 %v20
  %v563 = vunpack.c.h.b16 %v20
  %v564 = vunpack.c.l.b16 %v21
  %v565 = vunpack.c.h.b16 %v21
  %v566 = vunpack.c.l.b16 %v22
  %v567 = vunpack.c.h.b16 %v22
  %v568 = vunpack.c.l.b16 %v23
  %v569 = vunpack.c.h.b16 %v23
  %v570 = vunpack.c.l.b16 %v24
  %v571 = vunpack.c.h.b16 %v24
  %v572 = vunpack.c.l.b16 %v25
  %v573 = vunpack.c.h.b16 %v25
  %v574 = vunpack.c.l.b16 %v26
  %v575 = vunpack.c.h.b16 %v26
  %v576 = vunpack.c.l.b16 %v27
  %v577 = vunpack.c.h.b16 %v27
  %v578 = vunpack.c.l.b16 %v28
  %v579 = vunpack.c.h.b16 %v28
  %v580 = vunpack.c.l.b16 %v29
  %v581 = vunpack.c.h.b16 %v29
  %v582 = vunpack.c.l.b16 %v30
  %v583 = vunpack.c.h.b16 %v30
  %v584 = vunpack.c.l.b16 %v31
  %v585 = vunpack.c.h.b16 %v31
  %v586 = vunpack.c.l.b16 %v32
  %v587 = vunpack.c.h.b16 %v32
  %v588 = vunpack.c.l.b16 %v33
  %v589 = vunpack.c.h.b16 %v33
  %v590 = vunpack.c.l.b16 %v34
  %v591 = vunpack.c.h.b16 %v34
  %v592 = vunpack.c.l.b16 %v35
  %v593 = vunpack.c.h.b16 %v35
  %v594 = vunpack.c.l.b16 %v36
  %v595 = vunpack.c.h.b16 %v36
  %v596 = vunpack.c.l.b16 %v37
  %v597 = vunpack.c.h.b16 %v37
  %v598 = vunpack.c.l.b16 %v38
  %v599 = vunpack.c.h.b16 %v38
  %v600 = vunpack.c.l.b16 %v39
  %v601 = vunpack.c.h.b16 %v39
  %v602 = vunpack.c.l.b16 %v40
  %v603 = vunpack.c.h.b16 %v40
  %v604 = vunpack.c.l.b16 %v41
  %v605 = vunpack.c.h.b16 %v41
  %v606 = vunpack.c.l.b16 %v42
  %v607 = vunpack.c.h.b16 %v42
  %v608 = vunpack.c.l.b16 %v43
  %v609 = vunpack.c.h.b16 %v43
  %v610 = vunpack.c.l.b16 %v44
  %v611 = vunpack.c.h.b16 %v44
  %v612 = vunpack.c.l.b16 %v45
  %v613 = vunpack.c.h.b16 %v45
  %v614 = vunpack.c.l.b16 %v46
  %v615 = vunpack.c.h.b16 %v46
  %v616 = vunpack.c.l.b16 %v47
  %v617 = vunpack.c.h.b16 %v47
  %v618 = vunpack.c.l.b16 %v48
  %v619 = vunpack.c.h.b16 %v48
  %v620 = vunpack.c.l.b16 %v49
  %v621 = vunpack.c.h.b16 %v49
  %v622 = vunpack.c.l.b16 %v50
  %v623 = vunpack.c.h.b16 %v50
  %v624 = vunpack.c.l.b16 %v51
  %v625 = vunpack.c.h.b16 %v51
  %v626 = vunpack.c.l.b16 %v52
  %v627 = vunpack.c.h.b16 %v52
  %v628 = vunpack.c.l.b16 %v53
  %v629 = vunpack.c.h.b16 %v53
  %v630 = vunpack.c.l.b16 %v54
  %v631 = vunpack.c.h.b16 %v54
  %v632 = vunpack.c.l.b16 %v55
  %v633 = vunpack.c.h.b16 %v55
  %v634 = vunpack.c.l.b16 %v56
  %v635 = vunpack.c.h.b16 %v56
  %v636 = vunpack.c.l.b16 %v57
  %v637 = vunpack.c.h.b16 %v57
  %v638 = vunpack.c.l.b16 %v58
  %v639 = vunpack.c.h.b16 %v58
  %v640 = vunpack.c.l.b16 %v59
  %v641 = vunpack.c.h.b16 %v59
  %v642 = vunpack.c.l.b16 %v60
  %v643 = vunpack.c.h.b16 %v60
  %v644 = vunpack.c.l.b16 %v61
  %v645 = vunpack.c.h.b16 %v61
  %v646 = vunpack.c.l.b16 %v62
  %v647 = vunpack.c.h.b16 %v62
  %v648 = vunpack.c.l.b16 %v63
  %v649 = vunpack.c.h.b16 %v63
  %v650 = vunpack.c.l.b16 %v64
  %v651 = vunpack.c.h.b16 %v64
  %v652 = vunpack.c.l.b16 %v65
  %v653 = vunpack.c.h.b16 %v65
  %v654 = vunpack.c.l.b16 %v66
  %v655 = vunpack.c.h.b16 %v66
  %v656 = vunpack.c.l.b16 %v67
  %v657 = vunpack.c.h.b16 %v67
  %v658 = vunpack.c.l.b16 %v68
  %v659 = vunpack.c.h.b16 %v68
  %v660 = vunpack.c.l.b16 %v69
  %v661 = vunpack.c.h.b16 %v69
  %v662 = vunpack.c.l.b16 %v70
  %v663 = vunpack.c.h.b16 %v70
  %v664 = vunpack.c.l.b16 %v71
  %v665 = vunpack.c.h.b16 %v71
  %v666 = vunpack.c.l.b16 %v72
  %v667 = vunpack.c.h.b16 %v72
  %v668 = vunpack.c.l.b16 %v73
  %v669 = vunpack.c.h.b16 %v73
  %v670 = vunpack.c.l.b16 %v74
  %v671 = vunpack.c.h.b16 %v74
  %v672 = vunpack.c.l.b16 %v75
  %v673 = vunpack.c.h.b16 %v75
  %v674 = vunpack.c.l.b16 %v76
  %v675 = vunpack.c.h.b16 %v76
  %v676 = vunpack.c.l.b16 %v77
  %v677 = vunpack.c.h.b16 %v77
  %v678 = vunpack.c.l.b16 %v78
  %v679 = vunpack.c.h.b16 %v78
  %v680 = vunpack.c.l.b16 %v79
  %v681 = vunpack.c.h.b16 %v79
  %v682 = vunpack.c.l.b16 %v80
  %v683 = vunpack.c.h.b16 %v80
  %v684 = vunpack.c.l.b16 %v81
  %v685 = vunpack.c.h.b16 %v81
  %v686 = vunpack.c.l.b16 %v82
  %v687 = vunpack.c.h.b16 %v82
  %v688 = vunpack.c.l.b16 %v83
  %v689 = vunpack.c.h.b16 %v83
  %v690 = vunpack.c.l.b16 %v84
  %v691 = vunpack.c.h.b16 %v84
  %v692 = vunpack.c.l.b16 %v85
  %v693 = vunpack.c.h.b16 %v85
  %v694 = vunpack.c.l.b16 %v86
  %v695 = vunpack.c.h.b16 %v86
  %v696 = vunpack.c.l.b16 %v87
  %v697 = vunpack.c.h.b16 %v87
  %v698 = vunpack.c.l.b16 %v88
  %v699 = vunpack.c.h.b16 %v88
  %v700 = vunpack.c.l.b16 %v89
  %v701 = vunpack.c.h.b16 %v89
  %v702 = vunpack.c.l.b16 %v90
  %v703 = vunpack.c.h.b16 %v90
  %v704 = vunpack.c.l.b16 %v91
  %v705 = vunpack.c.h.b16 %v91
  %v706 = vunpack.c.l.b16 %v92
  %v707 = vunpack.c.h.b16 %v92
  %v708 = vunpack.c.l.b16 %v93
  %v709 = vunpack.c.h.b16 %v93
  %v710 = vunpack.c.l.b16 %v94
  %v711 = vunpack.c.h.b16 %v94
  %v712 = vunpack.c.l.b16 %v95
  %v713 = vunpack.c.h.b16 %v95
  %v714 = vunpack.c.l.b16 %v96
  %v715 = vunpack.c.h.b16 %v96
  %v716 = vunpack.c.l.b16 %v97
  %v717 = vunpack.c.h.b16 %v97
  %v718 = vunpack.c.l.b16 %v98
  %v719 = vunpack.c.h.b16 %v98
  %v720 = vunpack.c.l.b16 %v99
  %v721 = vunpack.c.h.b16 %v99
  %v722 = vunpack.c.l.b16 %v100
  %v723 = vunpack.c.h.b16 %v100
  %v724 = vunpack.c.l.b16 %v101
  %v725 = vunpack.c.h.b16 %v101
  %v726 = vunpack.c.l.b16 %v102
  %v727 = vunpack.c.h.b16 %v102
  %v728 = vunpack.c.l.b16 %v103
  %v729 = vunpack.c.h.b16 %v103
  %v730 = vunpack.c.l.b16 %v104
  %v731 = vunpack.c.h.b16 %v104
  %v732 = vunpack.c.l.b16 %v105
  %v733 = vunpack.c.h.b16 %v105
  %v734 = vunpack.c.l.b16 %v106
  %v735 = vunpack.c.h.b16 %v106
  %v736 = vunpack.c.l.b16 %v107
  %v737 = vunpack.c.h.b16 %v107
  %v738 = vunpack.c.l.b16 %v108
  %v739 = vunpack.c.h.b16 %v108
  %v740 = vunpack.c.l.b16 %v109
  %v741 = vunpack.c.h.b16 %v109
  %v742 = vunpack.c.l.b16 %v110
  %v743 = vunpack.c.h.b16 %v110
  %v744 = vunpack.c.l.b16 %v111
  %v745 = vunpack.c.h.b16 %v111
  %v746 = vunpack.c.l.b16 %v112
  %v747 = vunpack.c.h.b16 %v112
  %v748 = vunpack.c.l.b16 %v113
  %v749 = vunpack.c.h.b16 %v113
  %v750 = vunpack.c.l.b16 %v114
  %v751 = vunpack.c.h.b16 %v114
  %v752 = vunpack.c.l.b16 %v115
  %v753 = vunpack.c.h.b16 %v115
  %v754 = vunpack.c.l.b16 %v116
  %v755 = vunpack.c.h.b16 %v116
  %v756 = vunpack.c.l.b16 %v117
  %v757 = vunpack.c.h.b16 %v117
  %v758 = vunpack.c.l.b16 %v118
  %v759 = vunpack.c.h.b16 %v118
  %v760 = vunpack.c.l.b16 %v119
  %v761 = vunpack.c.h.b16 %v119
  %v762 = vunpack.c.l.b16 %v120
  %v763 = vunpack.c.h.b16 %v120
  %v764 = vunpack.c.l.b16 %v121
  %v765 = vunpack.c.h.b16 %v121
  %v766 = vunpack.c.l.b16 %v122
  %v767 = vunpack.c.h.b16 %v122
  %v768 = vunpack.c.l.b16 %v123
  %v769 = vunpack.c.h.b16 %v123
  %v770 = vunpack.c.l.b16 %v124
  %v771 = vunpack.c.h.b16 %v124
  %v772 = vunpack.c.l.b16 %v125
  %v773 = vunpack.c.h.b16 %v125
  %v774 = vunpack.c.l.b16 %v126
  %v775 = vunpack.c.h.b16 %v126
  %v776 = vunpack.c.l.b16 %v127
  %v777 = vunpack.c.h.b16 %v127
  %v778 = vunpack.c.l.b16 %v128
  %v779 = vunpack.c.h.b16 %v128
  %v780 = vunpack.c.l.b16 %v129
  %v781 = vunpack.c.h.b16 %v129
  %v782 = vunpack.c.l.b16 %v130
  %v783 = vunpack.c.h.b16 %v130
  %v784 = vunpack.c.l.b16 %v131
  %v785 = vunpack.c.h.b16 %v131
  %v786 = vunpack.c.l.b16 %v132
  %v787 = vunpack.c.h.b16 %v132
  %v788 = vunpack.c.l.b16 %v133
  %v789 = vunpack.c.h.b16 %v133
  %v790 = vunpack.c.l.b16 %v134
  %v791 = vunpack.c.h.b16 %v134
  %v792 = vunpack.c.l.b16 %v135
  %v793 = vunpack.c.h.b16 %v135
  %v794 = vunpack.c.l.b16 %v136
  %v795 = vunpack.c.h.b16 %v136
  %v796 = vunpack.c.l.b16 %v137
  %v797 = vunpack.c.h.b16 %v137
  %v798 = vunpack.c.l.b16 %v138
  %v799 = vunpack.c.h.b16 %v138
  %v800 = vunpack.c.l.b16 %v139
  %v801 = vunpack.c.h.b16 %v139
  %v802 = vunpack.c.l.b16 %v140
  %v803 = vunpack.c.h.b16 %v140
  %v804 = vunpack.c.l.b16 %v141
  %v805 = vunpack.c.h.b16 %v141
  %v806 = vunpack.c.l.b16 %v142
  %v807 = vunpack.c.h.b16 %v142
  %v808 = vunpack.c.l.b16 %v143
  %v809 = vunpack.c.h.b16 %v143
  %v810 = vunpack.c.l.b16 %v144
  %v811 = vunpack.c.h.b16 %v144
  %v812 = vunpack.c.l.b16 %v145
  %v813 = vunpack.c.h.b16 %v145
  %v814 = vunpack.c.l.b16 %v146
  %v815 = vunpack.c.h.b16 %v146
  %v816 = vunpack.c.l.b16 %v147
  %v817 = vunpack.c.h.b16 %v147
  %v818 = vunpack.c.l.b16 %v148
  %v819 = vunpack.c.h.b16 %v148
  %v820 = vunpack.c.l.b16 %v149
  %v821 = vunpack.c.h.b16 %v149
  %v822 = vunpack.c.l.b16 %v150
  %v823 = vunpack.c.h.b16 %v150
  %v824 = vunpack.c.l.b16 %v151
  %v825 = vunpack.c.h.b16 %v151
  %v826 = vunpack.c.l.b16 %v152
  %v827 = vunpack.c.h.b16 %v152
  %v828 = vunpack.c.l.b16 %v153
  %v829 = vunpack.c.h.b16 %v153
  %v830 = vunpack.c.l.b16 %v154
  %v831 = vunpack.c.h.b16 %v154
  %v832 = vunpack.c.l.b16 %v155
  %v833 = vunpack.c.h.b16 %v155
  %v834 = vunpack.c.l.b16 %v156
  %v835 = vunpack.c.h.b16 %v156
  %v836 = vunpack.c.l.b16 %v157
  %v837 = vunpack.c.h.b16 %v157
  %v838 = vunpack.c.l.b16 %v158
  %v839 = vunpack.c.h.b16 %v158
  %v840 = vunpack.c.l.b16 %v159
  %v841 = vunpack.c.h.b16 %v159
  %v842 = vunpack.c.l.b16 %v160
  %v843 = vunpack.c.h.b16 %v160
  %v844 = vunpack.c.l.b16 %v161
  %v845 = vunpack.c.h.b16 %v161
  %v846 = vunpack.c.l.b16 %v162
  %v847 = vunpack.c.h.b16 %v162
  %v848 = vunpack.c.l.b16 %v163
  %v849 = vunpack.c.h.b16 %v163
  %v850 = vunpack.c.l.b16 %v164
  %v851 = vunpack.c.h.b16 %v164
  %v852 = vunpack.c.l.b16 %v165
  %v853 = vunpack.c.h.b16 %v165
  %v854 = vunpack.c.l.b16 %v166
  %v855 = vunpack.c.h.b16 %v166
  %v856 = vunpack.c.l.b16 %v167
  %v857 = vunpack.c.h.b16 %v167
  %v858 = vunpack.c.l.b16 %v168
  %v859 = vunpack.c.h.b16 %v168
  %v860 = vunpack.c.l.b16 %v169
  %v861 = vunpack.c.h.b16 %v169
  %v862 = vunpack.c.l.b16 %v170
  %v863 = vunpack.c.h.b16 %v170
  %v864 = vunpack.c.l.b16 %v171
  %v865 = vunpack.c.h.b16 %v171
  %v866 = vunpack.c.l.b16 %v172
  %v867 = vunpack.c.h.b16 %v172
  %v868 = vunpack.c.l.b16 %v173
  %v869 = vunpack.c.h.b16 %v173
  %v870 = vunpack.c.l.b16 %v174
  %v871 = vunpack.c.h.b16 %v174
  %v872 = vunpack.c.l.b16 %v175
  %v873 = vunpack.c.h.b16 %v175
  %v874 = vunpack.c.l.b16 %v176
  %v875 = vunpack.c.h.b16 %v176
  %v876 = vunpack.c.l.b16 %v177
  %v877 = vunpack.c.h.b16 %v177
  %v878 = vunpack.c.l.b16 %v178
  %v879 = vunpack.c.h.b16 %v178
  %v880 = vunpack.c.l.b16 %v179
  %v881 = vunpack.c.h.b16 %v179
  %v882 = vunpack.c.l.b16 %v180
  %v883 = vunpack.c.h.b16 %v180
  %v884 = vunpack.c.l.b16 %v181
  %v885 = vunpack.c.h.b16 %v181
  %v886 = vunpack.c.l.b16 %v182
  %v887 = vunpack.c.h.b16 %v182
  %v888 = vunpack.c.l.b16 %v183
  %v889 = vunpack.c.h.b16 %v183
  %v890 = vunpack.c.l.b16 %v184
  %v891 = vunpack.c.h.b16 %v184
  %v892 = vunpack.c.l.b16 %v185
  %v893 = vunpack.c.h.b16 %v185
  %v894 = vunpack.c.l.b16 %v186
  %v895 = vunpack.c.h.b16 %v186
  %v896 = vunpack.c.l.b16 %v187
  %v897 = vunpack.c.h.b16 %v187
  %v898 = vunpack.c.l.b16 %v188
  %v899 = vunpack.c.h.b16 %v188
  %v900 = vunpack.c.l.b16 %v189
  %v901 = vunpack.c.h.b16 %v189
  %v902 = vunpack.c.l.b16 %v190
  %v903 = vunpack.c.h.b16 %v190
  %v904 = vunpack.c.l.b16 %v191
  %v905 = vunpack.c.h.b16 %v191
  %v906 = vunpack.c.l.b16 %v192
  %v907 = vunpack.c.h.b16 %v192
  %v908 = vunpack.c.l.b16 %v193
  %v909 = vunpack.c.h.b16 %v193
  %v910 = vunpack.c.l.b16 %v194
  %v911 = vunpack.c.h.b16 %v194
  %v912 = vunpack.c.l.b16 %v195
  %v913 = vunpack.c.h.b16 %v195
  %v914 = vunpack.c.l.b16 %v196
  %v915 = vunpack.c.h.b16 %v196
  %v916 = vunpack.c.l.b16 %v197
  %v917 = vunpack.c.h.b16 %v197
  %v918 = vunpack.c.l.b16 %v198
  %v919 = vunpack.c.h.b16 %v198
  %v920 = vunpack.c.l.b16 %v199
  %v921 = vunpack.c.h.b16 %v199
  %v922 = vunpack.c.l.b16 %v200
  %v923 = vunpack.c.h.b16 %v200
  %v924 = vunpack.c.l.b16 %v201
  %v925 = vunpack.c.h.b16 %v201
  %v926 = vunpack.c.l.b16 %v202
  %v927 = vunpack.c.h.b16 %v202
  %v928 = vunpack.c.l.b16 %v203
  %v929 = vunpack.c.h.b16 %v203
  %v930 = vunpack.c.l.b16 %v204
  %v931 = vunpack.c.h.b16 %v204
  %v932 = vunpack.c.l.b16 %v205
  %v933 = vunpack.c.h.b16 %v205
  %v934 = vunpack.c.l.b16 %v206
  %v935 = vunpack.c.h.b16 %v206
  %v936 = vunpack.c.l.b16 %v207
  %v937 = vunpack.c.h.b16 %v207
  %v938 = vunpack.c.l.b16 %v208
  %v939 = vunpack.c.h.b16 %v208
  %v940 = vunpack.c.l.b16 %v209
  %v941 = vunpack.c.h.b16 %v209
  %v942 = vunpack.c.l.b16 %v210
  %v943 = vunpack.c.h.b16 %v210
  %v944 = vunpack.c.l.b16 %v211
  %v945 = vunpack.c.h.b16 %v211
  %v946 = vunpack.c.l.b16 %v212
  %v947 = vunpack.c.h.b16 %v212
  %v948 = vunpack.c.l.b16 %v213
  %v949 = vunpack.c.h.b16 %v213
  %v950 = vunpack.c.l.b16 %v214
  %v951 = vunpack.c.h.b16 %v214
  %v952 = vunpack.c.l.b16 %v215
  %v953 = vunpack.c.h.b16 %v215
  %v954 = vunpack.c.l.b16 %v216
  %v955 = vunpack.c.h.b16 %v216
  %v956 = vunpack.c.l.b16 %v217
  %v957 = vunpack.c.h.b16 %v217
  %v958 = vunpack.c.l.b16 %v218
  %v959 = vunpack.c.h.b16 %v218
  %v960 = vunpack.c.l.b16 %v219
  %v961 = vunpack.c.h.b16 %v219
  %v962 = vunpack.c.l.b16 %v220
  %v963 = vunpack.c.h.b16 %v220
  %v964 = vunpack.c.l.b16 %v221
  %v965 = vunpack.c.h.b16 %v221
  %v966 = vunpack.c.l.b16 %v222
  %v967 = vunpack.c.h.b16 %v222
  %v968 = vunpack.c.l.b16 %v223
  %v969 = vunpack.c.h.b16 %v223
  %v970 = vunpack.c.l.b16 %v224
  %v971 = vunpack.c.h.b16 %v224
  %v972 = vunpack.c.l.b16 %v225
  %v973 = vunpack.c.h.b16 %v225
  %v974 = vunpack.c.l.b16 %v226
  %v975 = vunpack.c.h.b16 %v226
  %v976 = vunpack.c.l.b16 %v227
  %v977 = vunpack.c.h.b16 %v227
  %v978 = vunpack.c.l.b16 %v228
  %v979 = vunpack.c.h.b16 %v228
  %v980 = vunpack.c.l.b16 %v229
  %v981 = vunpack.c.h.b16 %v229
  %v982 = vunpack.c.l.b16 %v230
  %v983 = vunpack.c.h.b16 %v230
  %v984 = vunpack.c.l.b16 %v231
  %v985 = vunpack.c.h.b16 %v231
  %v986 = vunpack.c.l.b16 %v232
  %v987 = vunpack.c.h.b16 %v232
  %v988 = vunpack.c.l.b16 %v233
  %v989 = vunpack.c.h.b16 %v233
  %v990 = vunpack.c.l.b16 %v234
  %v991 = vunpack.c.h.b16 %v234
  %v992 = vunpack.c.l.b16 %v235
  %v993 = vunpack.c.h.b16 %v235
  %v994 = vunpack.c.l.b16 %v236
  %v995 = vunpack.c.h.b16 %v236
  %v996 = vunpack.c.l.b16 %v237
  %v997 = vunpack.c.h.b16 %v237
  %v998 = vunpack.c.l.b16 %v238
  %v999 = vunpack.c.h.b16 %v238
  %v1000 = vunpack.c.l.b16 %v239
  %v1001 = vunpack.c.h.b16 %v239
  %v1002 = vunpack.c.l.b16 %v240
  %v1003 = vunpack.c.h.b16 %v240
  %v1004 = vunpack.c.l.b16 %v241
  %v1005 = vunpack.c.h.b16 %v241
  %v1006 = vunpack.c.l.b16 %v242
  %v1007 = vunpack.c.h.b16 %v242
  %v1008 = vunpack.c.l.b16 %v243
  %v1009 = vunpack.c.h.b16 %v243
  %v1010 = vunpack.c.l.b16 %v244
  %v1011 = vunpack.c.h.b16 %v244
  %v1012 = vunpack.c.l.b16 %v245
  %v1013 = vunpack.c.h.b16 %v245
  %v1014 = vunpack.c.l.b16 %v246
  %v1015 = vunpack.c.h.b16 %v246
  %v1016 = vunpack.c.l.b16 %v247
  %v1017 = vunpack.c.h.b16 %v247
  %v1018 = vunpack.c.l.b16 %v248
  %v1019 = vunpack.c.h.b16 %v248
  %v1020 = vunpack.c.l.b16 %v249
  %v1021 = vunpack.c.h.b16 %v249
  %v1022 = vunpack.c.l.b16 %v250
  %v1023 = vunpack.c.h.b16 %v250
  %v1024 = vunpack.c.l.b16 %v251
  %v1025 = vunpack.c.h.b16 %v251
  %v1026 = vunpack.c.l.b16 %v252
  %v1027 = vunpack.c.h.b16 %v252
  %v1028 = vunpack.c.l.b16 %v253
  %v1029 = vunpack.c.h.b16 %v253
  %v1030 = vunpack.c.l.b16 %v254
  %v1031 = vunpack.c.h.b16 %v254
  %v1032 = vunpack.c.l.b16 %v255
  %v1033 = vunpack.c.h.b16 %v255
  %v1034 = vunpack.c.l.b16 %v256
  %v1035 = vunpack.c.h.b16 %v256
  %v1036 = vunpack.c.l.b16 %v257
  %v1037 = vunpack.c.h.b16 %v257
  %v1038 = vunpack.c.l.b16 %v258
  %v1039 = vunpack.c.h.b16 %v258
  %v1040 = vunpack.c.l.b16 %v259
  %v1041 = vunpack.c.h.b16 %v259
  %v1042 = vunpack.c.l.b16 %v260
  %v1043 = vunpack.c.h.b16 %v260
  %v1044 = vunpack.c.l.b16 %v261
  %v1045 = vunpack.c.h.b16 %v261
  %v1046 = vunpack.c.l.b16 %v262
  %v1047 = vunpack.c.h.b16 %v262
  %v1048 = vunpack.c.l.b16 %v263
  %v1049 = vunpack.c.h.b16 %v263
  %v1050 = vunpack.c.l.b16 %v264
  %v1051 = vunpack.c.h.b16 %v264
  %v1052 = vunpack.c.l.b16 %v265
  %v1053 = vunpack.c.h.b16 %v265
  %v1054 = vunpack.c.l.b16 %v266
  %v1055 = vunpack.c.h.b16 %v266
  %v1056 = vunpack.c.l.b16 %v267
  %v1057 = vunpack.c.h.b16 %v267
  %v1058 = vunpack.c.l.b16 %v268
  %v1059 = vunpack.c.h.b16 %v268
  %v1060 = vunpack.c.l.b16 %v269
  %v1061 = vunpack.c.h.b16 %v269
  %v1062 = vunpack.c.l.b16 %v270
  %v1063 = vunpack.c.h.b16 %v270
  %v1064 = vpack.c.b16 %v554, %v552
  %v1065 = vpack.c.b16 %v555, %v553
  %v1066 = vpack.c.b16 %v558, %v556
  %v1067 = vpack.c.b16 %v559, %v557
  %v1068 = vpack.c.b16 %v562, %v560
  %v1069 = vpack.c.b16 %v563, %v561
  %v1070 = vpack.c.b16 %v566, %v564
  %v1071 = vpack.c.b16 %v567, %v565
  %v1072 = vpack.c.b16 %v570, %v568
  %v1073 = vpack.c.b16 %v571, %v569
  %v1074 = vpack.c.b16 %v574, %v572
  %v1075 = vpack.c.b16 %v575, %v573
  %v1076 = vpack.c.b16 %v578, %v576
  %v1077 = vpack.c.b16 %v579, %v577
  %v1078 = vpack.c.b16 %v582, %v580
  %v1079 = vpack.c.b16 %v583, %v581
  %v1080 = vpack.c.b16 %v586, %v584
  %v1081 = vpack.c.b16 %v587, %v585
  %v1082 = vpack.c.b16 %v590, %v588
  %v1083 = vpack.c.b16 %v591, %v589
  %v1084 = vpack.c.b16 %v594, %v592
  %v1085 = vpack.c.b16 %v595, %v593
  %v1086 = vpack.c.b16 %v598, %v596
  %v1087 = vpack.c.b16 %v599, %v597
  %v1088 = vpack.c.b16 %v602, %v600
  %v1089 = vpack.c.b16 %v603, %v601
  %v1090 = vpack.c.b16 %v606, %v604
  %v1091 = vpack.c.b16 %v607, %v605
  %v1092 = vpack.c.b16 %v610, %v608
  %v1093 = vpack.c.b16 %v611, %v609
  %v1094 = vpack.c.b16 %v614, %v612
  %v1095 = vpack.c.b16 %v615, %v613
  %v1096 = vpack.c.b16 %v618, %v616
  %v1097 = vpack.c.b16 %v619, %v617
  %v1098 = vpack.c.b16 %v622, %v620
  %v1099 = vpack.c.b16 %v623, %v621
  %v1100 = vpack.c.b16 %v626, %v624
  %v1101 = vpack.c.b16 %v627, %v625
  %v1102 = vpack.c.b16 %v630, %v628
  %v1103 = vpack.c.b16 %v631, %v629
  %v1104 = vpack.c.b16 %v634, %v632
  %v1105 = vpack.c.b16 %v635, %v633
  %v1106 = vpack.c.b16 %v638, %v636
  %v1107 = vpack.c.b16 %v639, %v637
  %v1108 = vpack.c.b16 %v642, %v640
  %v1109 = vpack.c.b16 %v643, %v641
  %v1110 = vpack.c.b16 %v646, %v644
  %v1111 = vpack.c.b16 %v647, %v645
  %v1112 = vpack.c.b16 %v650, %v648
  %v1113 = vpack.c.b16 %v651, %v649
  %v1114 = vpack.c.b16 %v654, %v652
  %v1115 = vpack.c.b16 %v655, %v653
  %v1116 = vpack.c.b16 %v658, %v656
  %v1117 = vpack.c.b16 %v659, %v657
  %v1118 = vpack.c.b16 %v662, %v660
  %v1119 = vpack.c.b16 %v663, %v661
  %v1120 = vpack.c.b16 %v666, %v664
  %v1121 = vpack.c.b16 %v667, %v665
  %v1122 = vpack.c.b16 %v670, %v668
  %v1123 = vpack.c.b16 %v671, %v669
  %v1124 = vpack.c.b16 %v674, %v672
  %v1125 = vpack.c.b16 %v675, %v673
  %v1126 = vpack.c.b16 %v678, %v676
  %v1127 = vpack.c.b16 %v679, %v677
  %v1128 = vpack.c.b16 %v682, %v680
  %v1129 = vpack.c.b16 %v683, %v681
  %v1130 = vpack.c.b16 %v686, %v684
  %v1131 = vpack.c.b16 %v687, %v685
  %v1132 = vpack.c.b16 %v690, %v688
  %v1133 = vpack.c.b16 %v691, %v689
  %v1134 = vpack.c.b16 %v694, %v692
  %v1135 = vpack.c.b16 %v695, %v693
  %v1136 = vpack.c.b16 %v698, %v696
  %v1137 = vpack.c.b16 %v699, %v697
  %v1138 = vpack.c.b16 %v702, %v700
  %v1139 = vpack.c.b16 %v703, %v701
  %v1140 = vpack.c.b16 %v706, %v704
  %v1141 = vpack.c.b16 %v707, %v705
  %v1142 = vpack.c.b16 %v710, %v708
  %v1143 = vpack.c.b16 %v711, %v709
  %v1144 = vpack.c.b16 %v714, %v712
  %v1145 = vpack.c.b16 %v715, %v713
  %v1146 = vpack.c.b16 %v718, %v716
  %v1147 = vpack.c.b16 %v719, %v717
  %v1148 = vpack.c.b16 %v722, %v720
  %v1149 = vpack.c.b16 %v723, %v721
  %v1150 = vpack.c.b16 %v726, %v724
  %v1151 = vpack.c.b16 %v727, %v725
  %v1152 = vpack.c.b16 %v730, %v728
  %v1153 = vpack.c.b16 %v731, %v729
  %v1154 = vpack.c.b16 %v734, %v732
  %v1155 = vpack.c.b16 %v735, %v733
  %v1156 = vpack.c.b16 %v738, %v736
  %v1157 = vpack.c.b16 %v739, %v737
  %v1158 = vpack.c.b16 %v742, %v740
  %v1159 = vpack.c.b16 %v743, %v741
  %v1160 = vpack.c.b16 %v746, %v744
  %v1161 = vpack.c.b16 %v747, %v745
  %v1162 = vpack.c.b16 %v750, %v748
  %v1163 = vpack.c.b16 %v751, %v749
  %v1164 = vpack.c.b16 %v754, %v752
  %v1165 = vpack.c.b16 %v755, %v753
  %v1166 = vpack.c.b16 %v758, %v756
  %v1167 = vpack.c.b16 %v759, %v757
  %v1168 = vpack.c.b16 %v762, %v760
  %v1169 = vpack.c.b16 %v763, %v761
  %v1170 = vpack.c.b16 %v766, %v764
  %v1171 = vpack.c.b16 %v767, %v765
  %v1172 = vpack.c.b16 %v770, %v768
  %v1173 = vpack.c.b16 %v771, %v769
  %v1174 = vpack.c.b16 %v774, %v772
  %v1175 = vpack.c.b16 %v775, %v773
  %v1176 = vpack.c.b16 %v778, %v776
  %v1177 = vpack.c.b16 %v779, %v777
  %v1178 = vpack.c.b16 %v782, %v780
  %v1179 = vpack.c.b16 %v783, %v781
  %v1180 = vpack.c.b16 %v786, %v784
  %v1181 = vpack.c.b16 %v787, %v785
  %v1182 = vpack.c.b16 %v790, %v788
  %v1183 = vpack.c.b16 %v791, %v789
  %v1184 = vpack.c.b16 %v794, %v792
  %v1185 = vpack.c.b16 %v795, %v793
  %v1186 = vpack.c.b16 %v798, %v796
  %v1187 = vpack.c.b16 %v799, %v797
  %v1188 = vpack.c.b16 %v802, %v800
  %v1189 = vpack.c.b16 %v803, %v801
  %v1190 = vpack.c.b16 %v806, %v804
  %v1191 = vpack.c.b16 %v807, %v805
  %v1192 = vpack.c.b16 %v810, %v808
  %v1193 = vpack.c.b16 %v811, %v809
  %v1194 = vpack.c.b16 %v814, %v812
  %v1195 = vpack.c.b16 %v815, %v813
  %v1196 = vpack.c.b16 %v818, %v816
  %v1197 = vpack.c.b16 %v819, %v817
  %v1198 = vpack.c.b16 %v822, %v820
  %v1199 = vpack.c.b16 %v823, %v821
  %v1200 = vpack.c.b16 %v826, %v824
  %v1201 = vpack.c.b16 %v827, %v825
  %v1202 = vpack.c.b16 %v830, %v828
  %v1203 = vpack.c.b16 %v831, %v829
  %v1204 = vpack.c.b16 %v834, %v832
  %v1205 = vpack.c.b16 %v835, %v833
  %v1206 = vpack.c.b16 %v838, %v836
  %v1207 = vpack.c.b16 %v839, %v837
  %v1208 = vpack.c.b16 %v842, %v840
  %v1209 = vpack.c.b16 %v843, %v841
  %v1210 = vpack.c.b16 %v846, %v844
  %v1211 = vpack.c.b16 %v847, %v845
  %v1212 = vpack.c.b16 %v850, %v848
  %v1213 = vpack.c.b16 %v851, %v849
  %v1214 = vpack.c.b16 %v854, %v852
  %v1215 = vpack.c.b16 %v855, %v853
  %v1216 = vpack.c.b16 %v858, %v856
  %v1217 = vpack.c.b16 %v859, %v857
  %v1218 = vpack.c.b16 %v862, %v860
  %v1219 = vpack.c.b16 %v863, %v861
  %v1220 = vpack.c.b16 %v866, %v864
  %v1221 = vpack.c.b16 %v867, %v865
  %v1222 = vpack.c.b16 %v870, %v868
  %v1223 = vpack.c.b16 %v871, %v869
  %v1224 = vpack.c.b16 %v874, %v872
  %v1225 = vpack.c.b16 %v875, %v873
  %v1226 = vpack.c.b16 %v878, %v876
  %v1227 = vpack.c.b16 %v879, %v877
  %v1228 = vpack.c.b16 %v882, %v880
  %v1229 = vpack.c.b16 %v883, %v881
  %v1230 = vpack.c.b16 %v886, %v884
  %v1231 = vpack.c.b16 %v887, %v885
  %v1232 = vpack.c.b16 %v890, %v888
  %v1233 = vpack.c.b16 %v891, %v889
  %v1234 = vpack.c.b16 %v894, %v892
  %v1235 = vpack.c.b16 %v895, %v893
  %v1236 = vpack.c.b16 %v898, %v896
  %v1237 = vpack.c.b16 %v899, %v897
  %v1238 = vpack.c.b16 %v902, %v900
  %v1239 = vpack.c.b16 %v903, %v901
  %v1240 = vpack.c.b16 %v906, %v904
  %v1241 = vpack.c.b16 %v907, %v905
  %v1242 = vpack.c.b16 %v910, %v908
  %v1243 = vpack.c.b16 %v911, %v909
  %v1244 = vpack.c.b16 %v914, %v912
  %v1245 = vpack.c.b16 %v915, %v913
  %v1246 = vpack.c.b16 %v918, %v916
  %v1247 = vpack.c.b16 %v919, %v917
  %v1248 = vpack.c.b16 %v922, %v920
  %v1249 = vpack.c.b16 %v923, %v921
  %v1250 = vpack.c.b16 %v926, %v924
  %v1251 = vpack.c.b16 %v927, %v925
  %v1252 = vpack.c.b16 %v930, %v928
  %v1253 = vpack.c.b16 %v931, %v929
  %v1254 = vpack.c.b16 %v934, %v932
  %v1255 = vpack.c.b16 %v935, %v933
  %v1256 = vpack.c.b16 %v938, %v936
  %v1257 = vpack.c.b16 %v939, %v937
  %v1258 = vpack.c.b16 %v942, %v940
  %v1259 = vpack.c.b16 %v943, %v941
  %v1260 = vpack.c.b16 %v946, %v944
  %v1261 = vpack.c.b16 %v947, %v945
  %v1262 = vpack.c.b16 %v950, %v948
  %v1263 = vpack.c.b16 %v951, %v949
  %v1264 = vpack.c.b16 %v954, %v952
  %v1265 = vpack.c.b16 %v955, %v953
  %v1266 = vpack.c.b16 %v958, %v956
  %v1267 = vpack.c.b16 %v959, %v957
  %v1268 = vpack.c.b16 %v962, %v960
  %v1269 = vpack.c.b16 %v963, %v961
  %v1270 = vpack.c.b16 %v966, %v964
  %v1271 = vpack.c.b16 %v967, %v965
  %v1272 = vpack.c.b16 %v970, %v968
  %v1273 = vpack.c.b16 %v971, %v969
  %v1274 = vpack.c.b16 %v974, %v972
  %v1275 = vpack.c.b16 %v975, %v973
  %v1276 = vpack.c.b16 %v978, %v976
  %v1277 = vpack.c.b16 %v979, %v977
  %v1278 = vpack.c.b16 %v982, %v980
  %v1279 = vpack.c.b16 %v983, %v981
  %v1280 = vpack.c.b16 %v986, %v984
  %v1281 = vpack.c.b16 %v987, %v985
  %v1282 = vpack.c.b16 %v990, %v988
  %v1283 = vpack.c.b16 %v991, %v989
  %v1284 = vpack.c.b16 %v994, %v992
  %v1285 = vpack.c.b16 %v995, %v993
  %v1286 = vpack.c.b16 %v998, %v996
  %v1287 = vpack.c.b16 %v999, %v997
  %v1288 = vpack.c.b16 %v1002, %v1000
  %v1289 = vpack.c.b16 %v1003, %v1001
  %v1290 = vpack.c.b16 %v1006, %v1004
  %v1291 = vpack.c.b16 %v1007, %v1005
  %v1292 = vpack.c.b16 %v1010, %v1008
  %v1293 = vpack.c.b16 %v1011, %v1009
  %v1294 = vpack.c.b16 %v1014, %v1012
  %v1295 = vpack.c.b16 %v1015, %v1013
  %v1296 = vpack.c.b16 %v1018, %v1016
  %v1297 = vpack.c.b16 %v1019, %v1017
  %v1298 = vpack.c.b16 %v1022, %v1020
  %v1299 = vpack.c.b16 %v1023, %v1021
  %v1300 = vpack.c.b16 %v1026, %v1024
  %v1301 = vpack.c.b16 %v1027, %v1025
  %v1302 = vpack.c.b16 %v1030, %v1028
  %v1303 = vpack.c.b16 %v1031, %v1029
  %v1304 = vpack.c.b16 %v1034, %v1032
  %v1305 = vpack.c.b16 %v1035, %v1033
  %v1306 = vpack.c.b16 %v1038, %v1036
  %v1307 = vpack.c.b16 %v1039, %v1037
  %v1308 = vpack.c.b16 %v1042, %v1040
  %v1309 = vpack.c.b16 %v1043, %v1041
  %v1310 = vpack.c.b16 %v1046, %v1044
  %v1311 = vpack.c.b16 %v1047, %v1045
  %v1312 = vpack.c.b16 %v1050, %v1048
  %v1313 = vpack.c.b16 %v1051, %v1049
  %v1314 = vpack.c.b16 %v1054, %v1052
  %v1315 = vpack.c.b16 %v1055, %v1053
  %v1316 = vpack.c.b16 %v1058, %v1056
  %v1317 = vpack.c.b16 %v1059, %v1057
  %v1318 = vpack.c.b16 %v1062, %v1060
  %v1319 = vpack.c.b16 %v1063, %v1061
  %v1466 = vunpack.c.l.b16 %v271
  %v1467 = vunpack.c.l.b16 %v272
  %v1468 = vunpack.c.l.b16 %v273
  %v1469 = vunpack.c.l.b16 %v274
  %v1470 = vunpack.c.l.b16 %v275
  %v1471 = vunpack.c.l.b16 %v276
  %v1472 = vunpack.c.l.b16 %v277
  %v1473 = vunpack.c.l.b16 %v278
  %v1474 = vunpack.c.l.b16 %v279
  %v1475 = vunpack.c.l.b16 %v280
  %v1476 = vunpack.c.l.b16 %v281
  %v1477 = vunpack.c.l.b16 %v282
  %v1478 = vunpack.c.l.b16 %v283
  %v1479 = vunpack.c.l.b16 %v284
  %v1480 = vunpack.c.l.b16 %v285
  %v1481 = vunpack.c.l.b16 %v286
  %v1482 = vunpack.c.l.b16 %v287
  %v1483 = vunpack.c.l.b16 %v288
  %v1484 = vpack.c.b16 %v1467, %v1466
  %v1485 = vpack.c.b16 %v1469, %v1468
  %v1486 = vpack.c.b16 %v1471, %v1470
  %v1487 = vpack.c.b16 %v1473, %v1472
  %v1488 = vpack.c.b16 %v1475, %v1474
  %v1489 = vpack.c.b16 %v1477, %v1476
  %v1490 = vpack.c.b16 %v1479, %v1478
  %v1491 = vpack.c.b16 %v1481, %v1480
  %v1492 = vpack.c.b16 %v1483, %v1482
  %vm1502 = vcmask 130048
  %v1504 = vsel %vm1502, %v1065, 0
  %v1507 = vsel %vm1502, %v1067, 0
  %v1510 = vsel %vm1502, %v1069, 0
  %v1513 = vsel %vm1502, %v1071, 0
  %v1516 = vsel %vm1502, %v1073, 0
  %v1519 = vsel %vm1502, %v1075, 0
  %v1522 = vsel %vm1502, %v1077, 0
  %v1525 = vsel %vm1502, %v1079, 0
  %v1528 = vsel %vm1502, %v1081, 0
  %v1531 = vsel %vm1502, %v1083, 0
  %v1534 = vsel %vm1502, %v1085, 0
  %v1537 = vsel %vm1502, %v1087, 0
  %v1540 = vsel %vm1502, %v1089, 0
  %v1543 = vsel %vm1502, %v1091, 0
  %v1546 = vsel %vm1502, %v1093, 0
  %v1549 = vsel %vm1502, %v1095, 0
  %v1552 = vsel %vm1502, %v1097, 0
  %v1555 = vsel %vm1502, %v1099, 0
  %v1558 = vsel %vm1502, %v1101, 0
  %v1561 = vsel %vm1502, %v1103, 0
  %v1564 = vsel %vm1502, %v1105, 0
  %v1567 = vsel %vm1502, %v1107, 0
  %v1570 = vsel %vm1502, %v1109, 0
  %v1573 = vsel %vm1502, %v1111, 0
  %v1576 = vsel %vm1502, %v1113, 0
  %v1579 = vsel %vm1502, %v1115, 0
  %v1582 = vsel %vm1502, %v1117, 0
  %v1585 = vsel %vm1502, %v1119, 0
  %v1588 = vsel %vm1502, %v1121, 0
  %v1591 = vsel %vm1502, %v1123, 0
  %v1594 = vsel %vm1502, %v1125, 0
  %v1597 = vsel %vm1502, %v1127, 0
  %v1600 = vsel %vm1502, %v1129, 0
  %v1603 = vsel %vm1502, %v1131, 0
  %v1606 = vsel %vm1502, %v1133, 0
  %v1609 = vsel %vm1502, %v1135, 0
  %v1612 = vsel %vm1502, %v1137, 0
  %v1615 = vsel %vm1502, %v1139, 0
  %v1618 = vsel %vm1502, %v1141, 0
  %v1621 = vsel %vm1502, %v1143, 0
  %v1624 = vsel %vm1502, %v1145, 0
  %v1627 = vsel %vm1502, %v1147, 0
  %v1630 = vsel %vm1502, %v1149, 0
  %v1633 = vsel %vm1502, %v1151, 0
  %v1636 = vsel %vm1502, %v1153, 0
  %v1639 = vsel %vm1502, %v1155, 0
  %v1642 = vsel %vm1502, %v1157, 0
  %v1645 = vsel %vm1502, %v1159, 0
  %v1648 = vsel %vm1502, %v1161, 0
  %v1651 = vsel %vm1502, %v1163, 0
  %v1654 = vsel %vm1502, %v1165, 0
  %v1657 = vsel %vm1502, %v1167, 0
  %v1660 = vsel %vm1502, %v1169, 0
  %v1663 = vsel %vm1502, %v1171, 0
  %v1666 = vsel %vm1502, %v1173, 0
  %v1669 = vsel %vm1502, %v1175, 0
  %v1672 = vsel %vm1502, %v1177, 0
  %v1675 = vsel %vm1502, %v1179, 0
  %v1678 = vsel %vm1502, %v1181, 0
  %v1681 = vsel %vm1502, %v1183, 0
  %v1684 = vsel %vm1502, %v1185, 0
  %v1687 = vsel %vm1502, %v1187, 0
  %v1690 = vsel %vm1502, %v1189, 0
  %v1693 = vsel %vm1502, %v1191, 0
  %v1696 = vsel %vm1502, %v1193, 0
  %v1699 = vsel %vm1502, %v1195, 0
  %v1702 = vsel %vm1502, %v1197, 0
  %v1705 = vsel %vm1502, %v1199, 0
  %v1708 = vsel %vm1502, %v1201, 0
  %v1711 = vsel %vm1502, %v1203, 0
  %v1714 = vsel %vm1502, %v1205, 0
  %v1717 = vsel %vm1502, %v1207, 0
  %v1720 = vsel %vm1502, %v1209, 0
  %v1723 = vsel %vm1502, %v1211, 0
  %v1726 = vsel %vm1502, %v1213, 0
  %v1729 = vsel %vm1502, %v1215, 0
  %v1732 = vsel %vm1502, %v1217, 0
  %v1735 = vsel %vm1502, %v1219, 0
  %v1738 = vsel %vm1502, %v1221, 0
  %v1741 = vsel %vm1502, %v1223, 0
  %v1744 = vsel %vm1502, %v1225, 0
  %v1747 = vsel %vm1502, %v1227, 0
  %v1750 = vsel %vm1502, %v1229, 0
  %v1753 = vsel %vm1502, %v1231, 0
  %v1756 = vsel %vm1502, %v1233, 0
  %v1759 = vsel %vm1502, %v1235, 0
  %v1762 = vsel %vm1502, %v1237, 0
  %v1765 = vsel %vm1502, %v1239, 0
  %v1768 = vsel %vm1502, %v1241, 0
  %v1771 = vsel %vm1502, %v1243, 0
  %v1774 = vsel %vm1502, %v1245, 0
  %v1777 = vsel %vm1502, %v1247, 0
  %v1780 = vsel %vm1502, %v1249, 0
  %v1783 = vsel %vm1502, %v1251, 0
  %v1786 = vsel %vm1502, %v1253, 0
  %v1789 = vsel %vm1502, %v1255, 0
  %v1792 = vsel %vm1502, %v1257, 0
  %v1795 = vsel %vm1502, %v1259, 0
  %v1798 = vsel %vm1502, %v1261, 0
  %v1801 = vsel %vm1502, %v1263, 0
  %v1804 = vsel %vm1502, %v1265, 0
  %v1807 = vsel %vm1502, %v1267, 0
  %v1810 = vsel %vm1502, %v1269, 0
  %v1813 = vsel %vm1502, %v1271, 0
  %v1816 = vsel %vm1502, %v1273, 0
  %v1819 = vsel %vm1502, %v1275, 0
  %v1822 = vsel %vm1502, %v1277, 0
  %v1825 = vsel %vm1502, %v1279, 0
  %v1828 = vsel %vm1502, %v1281, 0
  %v1831 = vsel %vm1502, %v1283, 0
  %v1834 = vsel %vm1502, %v1285, 0
  %v1837 = vsel %vm1502, %v1287, 0
  %v1840 = vsel %vm1502, %v1289, 0
  %v1843 = vsel %vm1502, %v1291, 0
  %v1846 = vsel %vm1502, %v1293, 0
  %v1849 = vsel %vm1502, %v1295, 0
  %v1852 = vsel %vm1502, %v1297, 0
  %v1855 = vsel %vm1502, %v1299, 0
  %v1858 = vsel %vm1502, %v1301, 0
  %v1861 = vsel %vm1502, %v1303, 0
  %v1864 = vsel %vm1502, %v1305, 0
  %v1867 = vsel %vm1502, %v1307, 0
  %v1870 = vsel %vm1502, %v1309, 0
  %v1873 = vsel %vm1502, %v1311, 0
  %v1876 = vsel %vm1502, %v1313, 0
  %v1879 = vsel %vm1502, %v1315, 0
  %v1882 = vsel %vm1502, %v1317, 0
  %v1885 = vsel %vm1502, %v1319, 0
  %1887 = vmatprep.subr.bf16.mxu0 0
  %1888 = vmatpush1.bf16.msra.mxu0 %v1484
  %1889 = vmatprep.subr.bf16.mxu0 0
  %1890 = vmatpush1.bf16.msra.mxu0 %v1485
  %1891 = vmatprep.subr.bf16.mxu0 0
  %1892 = vmatpush1.bf16.msra.mxu0 %v1486
  %1893 = vmatprep.subr.bf16.mxu0 0
  %1894 = vmatpush1.bf16.msra.mxu0 %v1487
  %1895 = vmatprep.subr.bf16.mxu0 0
  %1896 = vmatpush1.bf16.msra.mxu0 %v1488
  %1897 = vmatprep.subr.bf16.mxu0 0
  %1898 = vmatpush1.bf16.msra.mxu0 %v1489
  %1899 = vmatprep.subr.bf16.mxu0 0
  %1900 = vmatpush1.bf16.msra.mxu0 %v1490
  %1901 = vmatprep.subr.bf16.mxu0 0
  %1902 = vmatpush1.bf16.msra.mxu0 %v1491
  %1903 = vmatprep.subr.bf16.mxu0 0
  %1904 = vmatpush1.bf16.msra.mxu0 %v1492
  %1905 = vmatprep.subr.bf16.mxu0 0
  %1906 = vmatpush1.bf16.msra.mxu0 0
  %1907 = vmatprep.subr.bf16.mxu0 0
  %1908 = vmatpush1.bf16.msra.mxu0 0
  %1909 = vmatprep.subr.bf16.mxu0 0
  %1910 = vmatpush1.bf16.msra.mxu0 0
  %1911 = vmatprep.subr.bf16.mxu0 0
  %1912 = vmatpush1.bf16.msra.mxu0 0
  %1913 = vmatprep.subr.bf16.mxu0 0
  %1914 = vmatpush1.bf16.msra.mxu0 0
  %1915 = vmatprep.subr.bf16.mxu0 0
  %1916 = vmatpush1.bf16.msra.mxu0 0
  %1917 = vmatprep.subr.bf16.mxu0 0
  %1918 = vmatpush1.bf16.msra.mxu0 0
  %1919 = vmatprep.mubr.bf16.mxu0 %v1504
  %1920 = vmatmul.mubr.bf16.gmra.mrb[0].mxu0 %v1064
  %v1921 = vpop.f32.mrb[0].mxu0
  %v1922 = vadd.f32 %v294, %v1921
  %v1923 = vpop.f32.mrb[0].mxu0
  %v1924 = vpop.f32.mrb[0].mxu0
  %v1925 = vadd.f32 %v294, %v1924
  %v1926 = vpop.f32.mrb[0].mxu0
  %1927 = vmatprep.mubr.bf16.mxu0 %v1507
  %1928 = vmatmul.mubr.bf16.gmra.mrb[0].mxu0 %v1066
  %v1929 = vpop.f32.mrb[0].mxu0
  %v1930 = vadd.f32 %v294, %v1929
  %v1931 = vpop.f32.mrb[0].mxu0
  %v1932 = vpop.f32.mrb[0].mxu0
  %v1933 = vadd.f32 %v294, %v1932
  %v1934 = vpop.f32.mrb[0].mxu0
  %1935 = vmatprep.mubr.bf16.mxu0 %v1510
  %1936 = vmatmul.mubr.bf16.gmra.mrb[0].mxu0 %v1068
  %v1937 = vpop.f32.mrb[0].mxu0
  %v1938 = vadd.f32 %v294, %v1937
  %v1939 = vpop.f32.mrb[0].mxu0
  %v1940 = vpop.f32.mrb[0].mxu0
  %v1941 = vadd.f32 %v294, %v1940
  %v1942 = vpop.f32.mrb[0].mxu0
  %1943 = vmatprep.mubr.bf16.mxu0 %v1513
  %1944 = vmatmul.mubr.bf16.gmra.mrb[0].mxu0 %v1070
  %v1945 = vpop.f32.mrb[0].mxu0
  %v1946 = vadd.f32 %v294, %v1945
  %v1947 = vpop.f32.mrb[0].mxu0
  %v1948 = vpop.f32.mrb[0].mxu0
  %v1949 = vadd.f32 %v294, %v1948
  %v1950 = vpop.f32.mrb[0].mxu0
  %1951 = vmatprep.mubr.bf16.mxu0 %v1516
  %1952 = vmatmul.mubr.bf16.gmra.mrb[0].mxu0 %v1072
  %v1953 = vpop.f32.mrb[0].mxu0
  %v1954 = vadd.f32 %v294, %v1953
  %v1955 = vpop.f32.mrb[0].mxu0
  %v1956 = vpop.f32.mrb[0].mxu0
  %v1957 = vadd.f32 %v294, %v1956
  %v1958 = vpop.f32.mrb[0].mxu0
  %1959 = vmatprep.mubr.bf16.mxu0 %v1519
  %1960 = vmatmul.mubr.bf16.gmra.mrb[0].mxu0 %v1074
  %v1961 = vpop.f32.mrb[0].mxu0
  %v1962 = vadd.f32 %v294, %v1961
  %v1963 = vpop.f32.mrb[0].mxu0
  %v1964 = vpop.f32.mrb[0].mxu0
  %v1965 = vadd.f32 %v294, %v1964
  %v1966 = vpop.f32.mrb[0].mxu0
  %1967 = vmatprep.mubr.bf16.mxu0 %v1522
  %1968 = vmatmul.mubr.bf16.gmra.mrb[0].mxu0 %v1076
  %v1969 = vpop.f32.mrb[0].mxu0
  %v1970 = vadd.f32 %v294, %v1969
  %v1971 = vpop.f32.mrb[0].mxu0
  %v1972 = vpop.f32.mrb[0].mxu0
  %v1973 = vadd.f32 %v294, %v1972
  %v1974 = vpop.f32.mrb[0].mxu0
  %1975 = vmatprep.mubr.bf16.mxu0 %v1525
  %1976 = vmatmul.mubr.bf16.gmra.mrb[0].mxu0 %v1078
  %v1977 = vpop.f32.mrb[0].mxu0
  %v1978 = vadd.f32 %v294, %v1977
  %v1979 = vpop.f32.mrb[0].mxu0
  %v1980 = vpop.f32.mrb[0].mxu0
  %v1981 = vadd.f32 %v294, %v1980
  %v1982 = vpop.f32.mrb[0].mxu0
  %1983 = vmatprep.mubr.bf16.mxu0 %v1528
  %1984 = vmatmul.mubr.bf16.gmra.mrb[0].mxu0 %v1080
  %v1985 = vpop.f32.mrb[0].mxu0
  %v1986 = vadd.f32 %v294, %v1985
  %v1987 = vpop.f32.mrb[0].mxu0
  %v1988 = vpop.f32.mrb[0].mxu0
  %v1989 = vadd.f32 %v294, %v1988
  %v1990 = vpop.f32.mrb[0].mxu0
  %1991 = vmatprep.mubr.bf16.mxu0 %v1531
  %1992 = vmatmul.mubr.bf16.gmra.mrb[0].mxu0 %v1082
  %v1993 = vpop.f32.mrb[0].mxu0
  %v1994 = vadd.f32 %v294, %v1993
  %v1995 = vpop.f32.mrb[0].mxu0
  %v1996 = vpop.f32.mrb[0].mxu0
  %v1997 = vadd.f32 %v294, %v1996
  %v1998 = vpop.f32.mrb[0].mxu0
  %1999 = vmatprep.mubr.bf16.mxu0 %v1534
  %2000 = vmatmul.mubr.bf16.gmra.mrb[0].mxu0 %v1084
  %v2001 = vpop.f32.mrb[0].mxu0
  %v2002 = vadd.f32 %v294, %v2001
  %v2003 = vpop.f32.mrb[0].mxu0
  %v2004 = vpop.f32.mrb[0].mxu0
  %v2005 = vadd.f32 %v294, %v2004
  %v2006 = vpop.f32.mrb[0].mxu0
  %2007 = vmatprep.mubr.bf16.mxu0 %v1537
  %2008 = vmatmul.mubr.bf16.gmra.mrb[0].mxu0 %v1086
  %v2009 = vpop.f32.mrb[0].mxu0
  %v2010 = vadd.f32 %v294, %v2009
  %v2011 = vpop.f32.mrb[0].mxu0
  %v2012 = vpop.f32.mrb[0].mxu0
  %v2013 = vadd.f32 %v294, %v2012
  %v2014 = vpop.f32.mrb[0].mxu0
  %2015 = vmatprep.mubr.bf16.mxu0 %v1540
  %2016 = vmatmul.mubr.bf16.gmra.mrb[0].mxu0 %v1088
  %v2017 = vpop.f32.mrb[0].mxu0
  %v2018 = vadd.f32 %v294, %v2017
  %v2019 = vpop.f32.mrb[0].mxu0
  %v2020 = vpop.f32.mrb[0].mxu0
  %v2021 = vadd.f32 %v294, %v2020
  %v2022 = vpop.f32.mrb[0].mxu0
  %2023 = vmatprep.mubr.bf16.mxu0 %v1543
  %2024 = vmatmul.mubr.bf16.gmra.mrb[0].mxu0 %v1090
  %v2025 = vpop.f32.mrb[0].mxu0
  %v2026 = vadd.f32 %v294, %v2025
  %v2027 = vpop.f32.mrb[0].mxu0
  %v2028 = vpop.f32.mrb[0].mxu0
  %v2029 = vadd.f32 %v294, %v2028
  %v2030 = vpop.f32.mrb[0].mxu0
  %2031 = vmatprep.mubr.bf16.mxu0 %v1546
  %2032 = vmatmul.mubr.bf16.gmra.mrb[0].mxu0 %v1092
  %v2033 = vpop.f32.mrb[0].mxu0
  %v2034 = vadd.f32 %v294, %v2033
  %v2035 = vpop.f32.mrb[0].mxu0
  %v2036 = vpop.f32.mrb[0].mxu0
  %v2037 = vadd.f32 %v294, %v2036
  %v2038 = vpop.f32.mrb[0].mxu0
  %2039 = vmatprep.mubr.bf16.mxu0 %v1549
  %2040 = vmatmul.mubr.bf16.gmra.mrb[0].mxu0 %v1094
  %v2041 = vpop.f32.mrb[0].mxu0
  %v2042 = vadd.f32 %v294, %v2041
  %v2043 = vpop.f32.mrb[0].mxu0
  %v2044 = vpop.f32.mrb[0].mxu0
  %v2045 = vadd.f32 %v294, %v2044
  %v2046 = vpop.f32.mrb[0].mxu0
  %2047 = vmatprep.mubr.bf16.mxu0 %v1552
  %2048 = vmatmul.mubr.bf16.gmra.mrb[0].mxu0 %v1096
  %v2049 = vpop.f32.mrb[0].mxu0
  %v2050 = vadd.f32 %v294, %v2049
  %v2051 = vpop.f32.mrb[0].mxu0
  %v2052 = vpop.f32.mrb[0].mxu0
  %v2053 = vadd.f32 %v294, %v2052
  %v2054 = vpop.f32.mrb[0].mxu0
  %2055 = vmatprep.mubr.bf16.mxu0 %v1555
  %2056 = vmatmul.mubr.bf16.gmra.mrb[0].mxu0 %v1098
  %v2057 = vpop.f32.mrb[0].mxu0
  %v2058 = vadd.f32 %v294, %v2057
  %v2059 = vpop.f32.mrb[0].mxu0
  %v2060 = vpop.f32.mrb[0].mxu0
  %v2061 = vadd.f32 %v294, %v2060
  %v2062 = vpop.f32.mrb[0].mxu0
  %2063 = vmatprep.mubr.bf16.mxu0 %v1558
  %2064 = vmatmul.mubr.bf16.gmra.mrb[0].mxu0 %v1100
  %v2065 = vpop.f32.mrb[0].mxu0
  %v2066 = vadd.f32 %v294, %v2065
  %v2067 = vpop.f32.mrb[0].mxu0
  %v2068 = vpop.f32.mrb[0].mxu0
  %v2069 = vadd.f32 %v294, %v2068
  %v2070 = vpop.f32.mrb[0].mxu0
  %2071 = vmatprep.mubr.bf16.mxu0 %v1561
  %2072 = vmatmul.mubr.bf16.gmra.mrb[0].mxu0 %v1102
  %v2073 = vpop.f32.mrb[0].mxu0
  %v2074 = vadd.f32 %v294, %v2073
  %v2075 = vpop.f32.mrb[0].mxu0
  %v2076 = vpop.f32.mrb[0].mxu0
  %v2077 = vadd.f32 %v294, %v2076
  %v2078 = vpop.f32.mrb[0].mxu0
  %2079 = vmatprep.mubr.bf16.mxu0 %v1564
  %2080 = vmatmul.mubr.bf16.gmra.mrb[0].mxu0 %v1104
  %v2081 = vpop.f32.mrb[0].mxu0
  %v2082 = vadd.f32 %v294, %v2081
  %v2083 = vpop.f32.mrb[0].mxu0
  %v2084 = vpop.f32.mrb[0].mxu0
  %v2085 = vadd.f32 %v294, %v2084
  %v2086 = vpop.f32.mrb[0].mxu0
  %2087 = vmatprep.mubr.bf16.mxu0 %v1567
  %2088 = vmatmul.mubr.bf16.gmra.mrb[0].mxu0 %v1106
  %v2089 = vpop.f32.mrb[0].mxu0
  %v2090 = vadd.f32 %v294, %v2089
  %v2091 = vpop.f32.mrb[0].mxu0
  %v2092 = vpop.f32.mrb[0].mxu0
  %v2093 = vadd.f32 %v294, %v2092
  %v2094 = vpop.f32.mrb[0].mxu0
  %2095 = vmatprep.mubr.bf16.mxu0 %v1570
  %2096 = vmatmul.mubr.bf16.gmra.mrb[0].mxu0 %v1108
  %v2097 = vpop.f32.mrb[0].mxu0
  %v2098 = vadd.f32 %v294, %v2097
  %v2099 = vpop.f32.mrb[0].mxu0
  %v2100 = vpop.f32.mrb[0].mxu0
  %v2101 = vadd.f32 %v294, %v2100
  %v2102 = vpop.f32.mrb[0].mxu0
  %2103 = vmatprep.mubr.bf16.mxu0 %v1573
  %2104 = vmatmul.mubr.bf16.gmra.mrb[0].mxu0 %v1110
  %v2105 = vpop.f32.mrb[0].mxu0
  %v2106 = vadd.f32 %v294, %v2105
  %v2107 = vpop.f32.mrb[0].mxu0
  %v2108 = vpop.f32.mrb[0].mxu0
  %v2109 = vadd.f32 %v294, %v2108
  %v2110 = vpop.f32.mrb[0].mxu0
  %2111 = vmatprep.mubr.bf16.mxu0 %v1576
  %2112 = vmatmul.mubr.bf16.gmra.mrb[0].mxu0 %v1112
  %v2113 = vpop.f32.mrb[0].mxu0
  %v2114 = vadd.f32 %v294, %v2113
  %v2115 = vpop.f32.mrb[0].mxu0
  %v2116 = vpop.f32.mrb[0].mxu0
  %v2117 = vadd.f32 %v294, %v2116
  %v2118 = vpop.f32.mrb[0].mxu0
  %2119 = vmatprep.mubr.bf16.mxu0 %v1579
  %2120 = vmatmul.mubr.bf16.gmra.mrb[0].mxu0 %v1114
  %v2121 = vpop.f32.mrb[0].mxu0
  %v2122 = vadd.f32 %v294, %v2121
  %v2123 = vpop.f32.mrb[0].mxu0
  %v2124 = vpop.f32.mrb[0].mxu0
  %v2125 = vadd.f32 %v294, %v2124
  %v2126 = vpop.f32.mrb[0].mxu0
  %2127 = vmatprep.mubr.bf16.mxu0 %v1582
  %2128 = vmatmul.mubr.bf16.gmra.mrb[0].mxu0 %v1116
  %v2129 = vpop.f32.mrb[0].mxu0
  %v2130 = vadd.f32 %v294, %v2129
  %v2131 = vpop.f32.mrb[0].mxu0
  %v2132 = vpop.f32.mrb[0].mxu0
  %v2133 = vadd.f32 %v294, %v2132
  %v2134 = vpop.f32.mrb[0].mxu0
  %2135 = vmatprep.mubr.bf16.mxu0 %v1585
  %2136 = vmatmul.mubr.bf16.gmra.mrb[0].mxu0 %v1118
  %v2137 = vpop.f32.mrb[0].mxu0
  %v2138 = vadd.f32 %v294, %v2137
  %v2139 = vpop.f32.mrb[0].mxu0
  %v2140 = vpop.f32.mrb[0].mxu0
  %v2141 = vadd.f32 %v294, %v2140
  %v2142 = vpop.f32.mrb[0].mxu0
  %2143 = vmatprep.mubr.bf16.mxu0 %v1588
  %2144 = vmatmul.mubr.bf16.gmra.mrb[0].mxu0 %v1120
  %v2145 = vpop.f32.mrb[0].mxu0
  %v2146 = vadd.f32 %v294, %v2145
  %v2147 = vpop.f32.mrb[0].mxu0
  %v2148 = vpop.f32.mrb[0].mxu0
  %v2149 = vadd.f32 %v294, %v2148
  %v2150 = vpop.f32.mrb[0].mxu0
  %2151 = vmatprep.mubr.bf16.mxu0 %v1591
  %2152 = vmatmul.mubr.bf16.gmra.mrb[0].mxu0 %v1122
  %v2153 = vpop.f32.mrb[0].mxu0
  %v2154 = vadd.f32 %v294, %v2153
  %v2155 = vpop.f32.mrb[0].mxu0
  %v2156 = vpop.f32.mrb[0].mxu0
  %v2157 = vadd.f32 %v294, %v2156
  %v2158 = vpop.f32.mrb[0].mxu0
  %2159 = vmatprep.mubr.bf16.mxu0 %v1594
  %2160 = vmatmul.mubr.bf16.gmra.mrb[0].mxu0 %v1124
  %v2161 = vpop.f32.mrb[0].mxu0
  %v2162 = vadd.f32 %v294, %v2161
  %v2163 = vpop.f32.mrb[0].mxu0
  %v2164 = vpop.f32.mrb[0].mxu0
  %v2165 = vadd.f32 %v294, %v2164
  %v2166 = vpop.f32.mrb[0].mxu0
  %2167 = vmatprep.mubr.bf16.mxu0 %v1597
  %2168 = vmatmul.mubr.bf16.gmra.mrb[0].mxu0 %v1126
  %v2169 = vpop.f32.mrb[0].mxu0
  %v2170 = vadd.f32 %v294, %v2169
  %v2171 = vpop.f32.mrb[0].mxu0
  %v2172 = vpop.f32.mrb[0].mxu0
  %v2173 = vadd.f32 %v294, %v2172
  %v2174 = vpop.f32.mrb[0].mxu0
  %2175 = vmatprep.mubr.bf16.mxu0 %v1600
  %2176 = vmatmul.mubr.bf16.gmra.mrb[0].mxu0 %v1128
  %v2177 = vpop.f32.mrb[0].mxu0
  %v2178 = vadd.f32 %v294, %v2177
  %v2179 = vpop.f32.mrb[0].mxu0
  %v2180 = vpop.f32.mrb[0].mxu0
  %v2181 = vadd.f32 %v294, %v2180
  %v2182 = vpop.f32.mrb[0].mxu0
  %2183 = vmatprep.mubr.bf16.mxu0 %v1603
  %2184 = vmatmul.mubr.bf16.gmra.mrb[0].mxu0 %v1130
  %v2185 = vpop.f32.mrb[0].mxu0
  %v2186 = vadd.f32 %v294, %v2185
  %v2187 = vpop.f32.mrb[0].mxu0
  %v2188 = vpop.f32.mrb[0].mxu0
  %v2189 = vadd.f32 %v294, %v2188
  %v2190 = vpop.f32.mrb[0].mxu0
  %2191 = vmatprep.mubr.bf16.mxu0 %v1606
  %2192 = vmatmul.mubr.bf16.gmra.mrb[0].mxu0 %v1132
  %v2193 = vpop.f32.mrb[0].mxu0
  %v2194 = vadd.f32 %v294, %v2193
  %v2195 = vpop.f32.mrb[0].mxu0
  %v2196 = vpop.f32.mrb[0].mxu0
  %v2197 = vadd.f32 %v294, %v2196
  %v2198 = vpop.f32.mrb[0].mxu0
  %2199 = vmatprep.mubr.bf16.mxu0 %v1609
  %2200 = vmatmul.mubr.bf16.gmra.mrb[0].mxu0 %v1134
  %v2201 = vpop.f32.mrb[0].mxu0
  %v2202 = vadd.f32 %v294, %v2201
  %v2203 = vpop.f32.mrb[0].mxu0
  %v2204 = vpop.f32.mrb[0].mxu0
  %v2205 = vadd.f32 %v294, %v2204
  %v2206 = vpop.f32.mrb[0].mxu0
  %2207 = vmatprep.mubr.bf16.mxu0 %v1612
  %2208 = vmatmul.mubr.bf16.gmra.mrb[0].mxu0 %v1136
  %v2209 = vpop.f32.mrb[0].mxu0
  %v2210 = vadd.f32 %v294, %v2209
  %v2211 = vpop.f32.mrb[0].mxu0
  %v2212 = vpop.f32.mrb[0].mxu0
  %v2213 = vadd.f32 %v294, %v2212
  %v2214 = vpop.f32.mrb[0].mxu0
  %2215 = vmatprep.mubr.bf16.mxu0 %v1615
  %2216 = vmatmul.mubr.bf16.gmra.mrb[0].mxu0 %v1138
  %v2217 = vpop.f32.mrb[0].mxu0
  %v2218 = vadd.f32 %v294, %v2217
  %v2219 = vpop.f32.mrb[0].mxu0
  %v2220 = vpop.f32.mrb[0].mxu0
  %v2221 = vadd.f32 %v294, %v2220
  %v2222 = vpop.f32.mrb[0].mxu0
  %2223 = vmatprep.mubr.bf16.mxu0 %v1618
  %2224 = vmatmul.mubr.bf16.gmra.mrb[0].mxu0 %v1140
  %v2225 = vpop.f32.mrb[0].mxu0
  %v2226 = vadd.f32 %v294, %v2225
  %v2227 = vpop.f32.mrb[0].mxu0
  %v2228 = vpop.f32.mrb[0].mxu0
  %v2229 = vadd.f32 %v294, %v2228
  %v2230 = vpop.f32.mrb[0].mxu0
  %2231 = vmatprep.mubr.bf16.mxu0 %v1621
  %2232 = vmatmul.mubr.bf16.gmra.mrb[0].mxu0 %v1142
  %v2233 = vpop.f32.mrb[0].mxu0
  %v2234 = vadd.f32 %v294, %v2233
  %v2235 = vpop.f32.mrb[0].mxu0
  %v2236 = vpop.f32.mrb[0].mxu0
  %v2237 = vadd.f32 %v294, %v2236
  %v2238 = vpop.f32.mrb[0].mxu0
  %2239 = vmatprep.mubr.bf16.mxu0 %v1624
  %2240 = vmatmul.mubr.bf16.gmra.mrb[0].mxu0 %v1144
  %v2241 = vpop.f32.mrb[0].mxu0
  %v2242 = vadd.f32 %v294, %v2241
  %v2243 = vpop.f32.mrb[0].mxu0
  %v2244 = vpop.f32.mrb[0].mxu0
  %v2245 = vadd.f32 %v294, %v2244
  %v2246 = vpop.f32.mrb[0].mxu0
  %2247 = vmatprep.mubr.bf16.mxu0 %v1627
  %2248 = vmatmul.mubr.bf16.gmra.mrb[0].mxu0 %v1146
  %v2249 = vpop.f32.mrb[0].mxu0
  %v2250 = vadd.f32 %v294, %v2249
  %v2251 = vpop.f32.mrb[0].mxu0
  %v2252 = vpop.f32.mrb[0].mxu0
  %v2253 = vadd.f32 %v294, %v2252
  %v2254 = vpop.f32.mrb[0].mxu0
  %2255 = vmatprep.mubr.bf16.mxu0 %v1630
  %2256 = vmatmul.mubr.bf16.gmra.mrb[0].mxu0 %v1148
  %v2257 = vpop.f32.mrb[0].mxu0
  %v2258 = vadd.f32 %v294, %v2257
  %v2259 = vpop.f32.mrb[0].mxu0
  %v2260 = vpop.f32.mrb[0].mxu0
  %v2261 = vadd.f32 %v294, %v2260
  %v2262 = vpop.f32.mrb[0].mxu0
  %2263 = vmatprep.mubr.bf16.mxu0 %v1633
  %2264 = vmatmul.mubr.bf16.gmra.mrb[0].mxu0 %v1150
  %v2265 = vpop.f32.mrb[0].mxu0
  %v2266 = vadd.f32 %v294, %v2265
  %v2267 = vpop.f32.mrb[0].mxu0
  %v2268 = vpop.f32.mrb[0].mxu0
  %v2269 = vadd.f32 %v294, %v2268
  %v2270 = vpop.f32.mrb[0].mxu0
  %2271 = vmatprep.mubr.bf16.mxu0 %v1636
  %2272 = vmatmul.mubr.bf16.gmra.mrb[0].mxu0 %v1152
  %v2273 = vpop.f32.mrb[0].mxu0
  %v2274 = vadd.f32 %v294, %v2273
  %v2275 = vpop.f32.mrb[0].mxu0
  %v2276 = vpop.f32.mrb[0].mxu0
  %v2277 = vadd.f32 %v294, %v2276
  %v2278 = vpop.f32.mrb[0].mxu0
  %2279 = vmatprep.mubr.bf16.mxu0 %v1639
  %2280 = vmatmul.mubr.bf16.gmra.mrb[0].mxu0 %v1154
  %v2281 = vpop.f32.mrb[0].mxu0
  %v2282 = vadd.f32 %v294, %v2281
  %v2283 = vpop.f32.mrb[0].mxu0
  %v2284 = vpop.f32.mrb[0].mxu0
  %v2285 = vadd.f32 %v294, %v2284
  %v2286 = vpop.f32.mrb[0].mxu0
  %2287 = vmatprep.mubr.bf16.mxu0 %v1642
  %2288 = vmatmul.mubr.bf16.gmra.mrb[0].mxu0 %v1156
  %v2289 = vpop.f32.mrb[0].mxu0
  %v2290 = vadd.f32 %v294, %v2289
  %v2291 = vpop.f32.mrb[0].mxu0
  %v2292 = vpop.f32.mrb[0].mxu0
  %v2293 = vadd.f32 %v294, %v2292
  %v2294 = vpop.f32.mrb[0].mxu0
  %2295 = vmatprep.mubr.bf16.mxu0 %v1645
  %2296 = vmatmul.mubr.bf16.gmra.mrb[0].mxu0 %v1158
  %v2297 = vpop.f32.mrb[0].mxu0
  %v2298 = vadd.f32 %v294, %v2297
  %v2299 = vpop.f32.mrb[0].mxu0
  %v2300 = vpop.f32.mrb[0].mxu0
  %v2301 = vadd.f32 %v294, %v2300
  %v2302 = vpop.f32.mrb[0].mxu0
  %2303 = vmatprep.mubr.bf16.mxu0 %v1648
  %2304 = vmatmul.mubr.bf16.gmra.mrb[0].mxu0 %v1160
  %v2305 = vpop.f32.mrb[0].mxu0
  %v2306 = vadd.f32 %v294, %v2305
  %v2307 = vpop.f32.mrb[0].mxu0
  %v2308 = vpop.f32.mrb[0].mxu0
  %v2309 = vadd.f32 %v294, %v2308
  %v2310 = vpop.f32.mrb[0].mxu0
  %2311 = vmatprep.mubr.bf16.mxu0 %v1651
  %2312 = vmatmul.mubr.bf16.gmra.mrb[0].mxu0 %v1162
  %v2313 = vpop.f32.mrb[0].mxu0
  %v2314 = vadd.f32 %v294, %v2313
  %v2315 = vpop.f32.mrb[0].mxu0
  %v2316 = vpop.f32.mrb[0].mxu0
  %v2317 = vadd.f32 %v294, %v2316
  %v2318 = vpop.f32.mrb[0].mxu0
  %2319 = vmatprep.mubr.bf16.mxu0 %v1654
  %2320 = vmatmul.mubr.bf16.gmra.mrb[0].mxu0 %v1164
  %v2321 = vpop.f32.mrb[0].mxu0
  %v2322 = vadd.f32 %v294, %v2321
  %v2323 = vpop.f32.mrb[0].mxu0
  %v2324 = vpop.f32.mrb[0].mxu0
  %v2325 = vadd.f32 %v294, %v2324
  %v2326 = vpop.f32.mrb[0].mxu0
  %2327 = vmatprep.mubr.bf16.mxu0 %v1657
  %2328 = vmatmul.mubr.bf16.gmra.mrb[0].mxu0 %v1166
  %v2329 = vpop.f32.mrb[0].mxu0
  %v2330 = vadd.f32 %v294, %v2329
  %v2331 = vpop.f32.mrb[0].mxu0
  %v2332 = vpop.f32.mrb[0].mxu0
  %v2333 = vadd.f32 %v294, %v2332
  %v2334 = vpop.f32.mrb[0].mxu0
  %2335 = vmatprep.mubr.bf16.mxu0 %v1660
  %2336 = vmatmul.mubr.bf16.gmra.mrb[0].mxu0 %v1168
  %v2337 = vpop.f32.mrb[0].mxu0
  %v2338 = vadd.f32 %v294, %v2337
  %v2339 = vpop.f32.mrb[0].mxu0
  %v2340 = vpop.f32.mrb[0].mxu0
  %v2341 = vadd.f32 %v294, %v2340
  %v2342 = vpop.f32.mrb[0].mxu0
  %2343 = vmatprep.mubr.bf16.mxu0 %v1663
  %2344 = vmatmul.mubr.bf16.gmra.mrb[0].mxu0 %v1170
  %v2345 = vpop.f32.mrb[0].mxu0
  %v2346 = vadd.f32 %v294, %v2345
  %v2347 = vpop.f32.mrb[0].mxu0
  %v2348 = vpop.f32.mrb[0].mxu0
  %v2349 = vadd.f32 %v294, %v2348
  %v2350 = vpop.f32.mrb[0].mxu0
  %2351 = vmatprep.mubr.bf16.mxu0 %v1666
  %2352 = vmatmul.mubr.bf16.gmra.mrb[0].mxu0 %v1172
  %v2353 = vpop.f32.mrb[0].mxu0
  %v2354 = vadd.f32 %v294, %v2353
  %v2355 = vpop.f32.mrb[0].mxu0
  %v2356 = vpop.f32.mrb[0].mxu0
  %v2357 = vadd.f32 %v294, %v2356
  %v2358 = vpop.f32.mrb[0].mxu0
  %2359 = vmatprep.mubr.bf16.mxu0 %v1669
  %2360 = vmatmul.mubr.bf16.gmra.mrb[0].mxu0 %v1174
  %v2361 = vpop.f32.mrb[0].mxu0
  %v2362 = vadd.f32 %v294, %v2361
  %v2363 = vpop.f32.mrb[0].mxu0
  %v2364 = vpop.f32.mrb[0].mxu0
  %v2365 = vadd.f32 %v294, %v2364
  %v2366 = vpop.f32.mrb[0].mxu0
  %2367 = vmatprep.mubr.bf16.mxu0 %v1672
  %2368 = vmatmul.mubr.bf16.gmra.mrb[0].mxu0 %v1176
  %v2369 = vpop.f32.mrb[0].mxu0
  %v2370 = vadd.f32 %v294, %v2369
  %v2371 = vpop.f32.mrb[0].mxu0
  %v2372 = vpop.f32.mrb[0].mxu0
  %v2373 = vadd.f32 %v294, %v2372
  %v2374 = vpop.f32.mrb[0].mxu0
  %2375 = vmatprep.mubr.bf16.mxu0 %v1675
  %2376 = vmatmul.mubr.bf16.gmra.mrb[0].mxu0 %v1178
  %v2377 = vpop.f32.mrb[0].mxu0
  %v2378 = vadd.f32 %v294, %v2377
  %v2379 = vpop.f32.mrb[0].mxu0
  %v2380 = vpop.f32.mrb[0].mxu0
  %v2381 = vadd.f32 %v294, %v2380
  %v2382 = vpop.f32.mrb[0].mxu0
  %2383 = vmatprep.mubr.bf16.mxu0 %v1678
  %2384 = vmatmul.mubr.bf16.gmra.mrb[0].mxu0 %v1180
  %v2385 = vpop.f32.mrb[0].mxu0
  %v2386 = vadd.f32 %v294, %v2385
  %v2387 = vpop.f32.mrb[0].mxu0
  %v2388 = vpop.f32.mrb[0].mxu0
  %v2389 = vadd.f32 %v294, %v2388
  %v2390 = vpop.f32.mrb[0].mxu0
  %2391 = vmatprep.mubr.bf16.mxu0 %v1681
  %2392 = vmatmul.mubr.bf16.gmra.mrb[0].mxu0 %v1182
  %v2393 = vpop.f32.mrb[0].mxu0
  %v2394 = vadd.f32 %v294, %v2393
  %v2395 = vpop.f32.mrb[0].mxu0
  %v2396 = vpop.f32.mrb[0].mxu0
  %v2397 = vadd.f32 %v294, %v2396
  %v2398 = vpop.f32.mrb[0].mxu0
  %2399 = vmatprep.mubr.bf16.mxu0 %v1684
  %2400 = vmatmul.mubr.bf16.gmra.mrb[0].mxu0 %v1184
  %v2401 = vpop.f32.mrb[0].mxu0
  %v2402 = vadd.f32 %v294, %v2401
  %v2403 = vpop.f32.mrb[0].mxu0
  %v2404 = vpop.f32.mrb[0].mxu0
  %v2405 = vadd.f32 %v294, %v2404
  %v2406 = vpop.f32.mrb[0].mxu0
  %2407 = vmatprep.mubr.bf16.mxu0 %v1687
  %2408 = vmatmul.mubr.bf16.gmra.mrb[0].mxu0 %v1186
  %v2409 = vpop.f32.mrb[0].mxu0
  %v2410 = vadd.f32 %v294, %v2409
  %v2411 = vpop.f32.mrb[0].mxu0
  %v2412 = vpop.f32.mrb[0].mxu0
  %v2413 = vadd.f32 %v294, %v2412
  %v2414 = vpop.f32.mrb[0].mxu0
  %2415 = vmatprep.mubr.bf16.mxu0 %v1690
  %2416 = vmatmul.mubr.bf16.gmra.mrb[0].mxu0 %v1188
  %v2417 = vpop.f32.mrb[0].mxu0
  %v2418 = vadd.f32 %v294, %v2417
  %v2419 = vpop.f32.mrb[0].mxu0
  %v2420 = vpop.f32.mrb[0].mxu0
  %v2421 = vadd.f32 %v294, %v2420
  %v2422 = vpop.f32.mrb[0].mxu0
  %2423 = vmatprep.mubr.bf16.mxu0 %v1693
  %2424 = vmatmul.mubr.bf16.gmra.mrb[0].mxu0 %v1190
  %v2425 = vpop.f32.mrb[0].mxu0
  %v2426 = vadd.f32 %v294, %v2425
  %v2427 = vpop.f32.mrb[0].mxu0
  %v2428 = vpop.f32.mrb[0].mxu0
  %v2429 = vadd.f32 %v294, %v2428
  %v2430 = vpop.f32.mrb[0].mxu0
  %2431 = vmatprep.mubr.bf16.mxu0 %v1696
  %2432 = vmatmul.mubr.bf16.gmra.mrb[0].mxu0 %v1192
  %v2433 = vpop.f32.mrb[0].mxu0
  %v2434 = vadd.f32 %v294, %v2433
  %v2435 = vpop.f32.mrb[0].mxu0
  %v2436 = vpop.f32.mrb[0].mxu0
  %v2437 = vadd.f32 %v294, %v2436
  %v2438 = vpop.f32.mrb[0].mxu0
  %2439 = vmatprep.mubr.bf16.mxu0 %v1699
  %2440 = vmatmul.mubr.bf16.gmra.mrb[0].mxu0 %v1194
  %v2441 = vpop.f32.mrb[0].mxu0
  %v2442 = vadd.f32 %v294, %v2441
  %v2443 = vpop.f32.mrb[0].mxu0
  %v2444 = vpop.f32.mrb[0].mxu0
  %v2445 = vadd.f32 %v294, %v2444
  %v2446 = vpop.f32.mrb[0].mxu0
  %2447 = vmatprep.mubr.bf16.mxu0 %v1702
  %2448 = vmatmul.mubr.bf16.gmra.mrb[0].mxu0 %v1196
  %v2449 = vpop.f32.mrb[0].mxu0
  %v2450 = vadd.f32 %v294, %v2449
  %v2451 = vpop.f32.mrb[0].mxu0
  %v2452 = vpop.f32.mrb[0].mxu0
  %v2453 = vadd.f32 %v294, %v2452
  %v2454 = vpop.f32.mrb[0].mxu0
  %2455 = vmatprep.mubr.bf16.mxu0 %v1705
  %2456 = vmatmul.mubr.bf16.gmra.mrb[0].mxu0 %v1198
  %v2457 = vpop.f32.mrb[0].mxu0
  %v2458 = vadd.f32 %v294, %v2457
  %v2459 = vpop.f32.mrb[0].mxu0
  %v2460 = vpop.f32.mrb[0].mxu0
  %v2461 = vadd.f32 %v294, %v2460
  %v2462 = vpop.f32.mrb[0].mxu0
  %2463 = vmatprep.mubr.bf16.mxu0 %v1708
  %2464 = vmatmul.mubr.bf16.gmra.mrb[0].mxu0 %v1200
  %v2465 = vpop.f32.mrb[0].mxu0
  %v2466 = vadd.f32 %v294, %v2465
  %v2467 = vpop.f32.mrb[0].mxu0
  %v2468 = vpop.f32.mrb[0].mxu0
  %v2469 = vadd.f32 %v294, %v2468
  %v2470 = vpop.f32.mrb[0].mxu0
  %2471 = vmatprep.mubr.bf16.mxu0 %v1711
  %2472 = vmatmul.mubr.bf16.gmra.mrb[0].mxu0 %v1202
  %v2473 = vpop.f32.mrb[0].mxu0
  %v2474 = vadd.f32 %v294, %v2473
  %v2475 = vpop.f32.mrb[0].mxu0
  %v2476 = vpop.f32.mrb[0].mxu0
  %v2477 = vadd.f32 %v294, %v2476
  %v2478 = vpop.f32.mrb[0].mxu0
  %2479 = vmatprep.mubr.bf16.mxu0 %v1714
  %2480 = vmatmul.mubr.bf16.gmra.mrb[0].mxu0 %v1204
  %v2481 = vpop.f32.mrb[0].mxu0
  %v2482 = vadd.f32 %v294, %v2481
  %v2483 = vpop.f32.mrb[0].mxu0
  %v2484 = vpop.f32.mrb[0].mxu0
  %v2485 = vadd.f32 %v294, %v2484
  %v2486 = vpop.f32.mrb[0].mxu0
  %2487 = vmatprep.mubr.bf16.mxu0 %v1717
  %2488 = vmatmul.mubr.bf16.gmra.mrb[0].mxu0 %v1206
  %v2489 = vpop.f32.mrb[0].mxu0
  %v2490 = vadd.f32 %v294, %v2489
  %v2491 = vpop.f32.mrb[0].mxu0
  %v2492 = vpop.f32.mrb[0].mxu0
  %v2493 = vadd.f32 %v294, %v2492
  %v2494 = vpop.f32.mrb[0].mxu0
  %2495 = vmatprep.mubr.bf16.mxu0 %v1720
  %2496 = vmatmul.mubr.bf16.gmra.mrb[0].mxu0 %v1208
  %v2497 = vpop.f32.mrb[0].mxu0
  %v2498 = vadd.f32 %v294, %v2497
  %v2499 = vpop.f32.mrb[0].mxu0
  %v2500 = vpop.f32.mrb[0].mxu0
  %v2501 = vadd.f32 %v294, %v2500
  %v2502 = vpop.f32.mrb[0].mxu0
  %2503 = vmatprep.mubr.bf16.mxu0 %v1723
  %2504 = vmatmul.mubr.bf16.gmra.mrb[0].mxu0 %v1210
  %v2505 = vpop.f32.mrb[0].mxu0
  %v2506 = vadd.f32 %v294, %v2505
  %v2507 = vpop.f32.mrb[0].mxu0
  %v2508 = vpop.f32.mrb[0].mxu0
  %v2509 = vadd.f32 %v294, %v2508
  %v2510 = vpop.f32.mrb[0].mxu0
  %2511 = vmatprep.mubr.bf16.mxu0 %v1726
  %2512 = vmatmul.mubr.bf16.gmra.mrb[0].mxu0 %v1212
  %v2513 = vpop.f32.mrb[0].mxu0
  %v2514 = vadd.f32 %v294, %v2513
  %v2515 = vpop.f32.mrb[0].mxu0
  %v2516 = vpop.f32.mrb[0].mxu0
  %v2517 = vadd.f32 %v294, %v2516
  %v2518 = vpop.f32.mrb[0].mxu0
  %2519 = vmatprep.mubr.bf16.mxu0 %v1729
  %2520 = vmatmul.mubr.bf16.gmra.mrb[0].mxu0 %v1214
  %v2521 = vpop.f32.mrb[0].mxu0
  %v2522 = vadd.f32 %v294, %v2521
  %v2523 = vpop.f32.mrb[0].mxu0
  %v2524 = vpop.f32.mrb[0].mxu0
  %v2525 = vadd.f32 %v294, %v2524
  %v2526 = vpop.f32.mrb[0].mxu0
  %2527 = vmatprep.mubr.bf16.mxu0 %v1732
  %2528 = vmatmul.mubr.bf16.gmra.mrb[0].mxu0 %v1216
  %v2529 = vpop.f32.mrb[0].mxu0
  %v2530 = vadd.f32 %v294, %v2529
  %v2531 = vpop.f32.mrb[0].mxu0
  %v2532 = vpop.f32.mrb[0].mxu0
  %v2533 = vadd.f32 %v294, %v2532
  %v2534 = vpop.f32.mrb[0].mxu0
  %2535 = vmatprep.mubr.bf16.mxu0 %v1735
  %2536 = vmatmul.mubr.bf16.gmra.mrb[0].mxu0 %v1218
  %v2537 = vpop.f32.mrb[0].mxu0
  %v2538 = vadd.f32 %v294, %v2537
  %v2539 = vpop.f32.mrb[0].mxu0
  %v2540 = vpop.f32.mrb[0].mxu0
  %v2541 = vadd.f32 %v294, %v2540
  %v2542 = vpop.f32.mrb[0].mxu0
  %2543 = vmatprep.mubr.bf16.mxu0 %v1738
  %2544 = vmatmul.mubr.bf16.gmra.mrb[0].mxu0 %v1220
  %v2545 = vpop.f32.mrb[0].mxu0
  %v2546 = vadd.f32 %v294, %v2545
  %v2547 = vpop.f32.mrb[0].mxu0
  %v2548 = vpop.f32.mrb[0].mxu0
  %v2549 = vadd.f32 %v294, %v2548
  %v2550 = vpop.f32.mrb[0].mxu0
  %2551 = vmatprep.mubr.bf16.mxu0 %v1741
  %2552 = vmatmul.mubr.bf16.gmra.mrb[0].mxu0 %v1222
  %v2553 = vpop.f32.mrb[0].mxu0
  %v2554 = vadd.f32 %v294, %v2553
  %v2555 = vpop.f32.mrb[0].mxu0
  %v2556 = vpop.f32.mrb[0].mxu0
  %v2557 = vadd.f32 %v294, %v2556
  %v2558 = vpop.f32.mrb[0].mxu0
  %2559 = vmatprep.mubr.bf16.mxu0 %v1744
  %2560 = vmatmul.mubr.bf16.gmra.mrb[0].mxu0 %v1224
  %v2561 = vpop.f32.mrb[0].mxu0
  %v2562 = vadd.f32 %v294, %v2561
  %v2563 = vpop.f32.mrb[0].mxu0
  %v2564 = vpop.f32.mrb[0].mxu0
  %v2565 = vadd.f32 %v294, %v2564
  %v2566 = vpop.f32.mrb[0].mxu0
  %2567 = vmatprep.mubr.bf16.mxu0 %v1747
  %2568 = vmatmul.mubr.bf16.gmra.mrb[0].mxu0 %v1226
  %v2569 = vpop.f32.mrb[0].mxu0
  %v2570 = vadd.f32 %v294, %v2569
  %v2571 = vpop.f32.mrb[0].mxu0
  %v2572 = vpop.f32.mrb[0].mxu0
  %v2573 = vadd.f32 %v294, %v2572
  %v2574 = vpop.f32.mrb[0].mxu0
  %2575 = vmatprep.mubr.bf16.mxu0 %v1750
  %2576 = vmatmul.mubr.bf16.gmra.mrb[0].mxu0 %v1228
  %v2577 = vpop.f32.mrb[0].mxu0
  %v2578 = vadd.f32 %v294, %v2577
  %v2579 = vpop.f32.mrb[0].mxu0
  %v2580 = vpop.f32.mrb[0].mxu0
  %v2581 = vadd.f32 %v294, %v2580
  %v2582 = vpop.f32.mrb[0].mxu0
  %2583 = vmatprep.mubr.bf16.mxu0 %v1753
  %2584 = vmatmul.mubr.bf16.gmra.mrb[0].mxu0 %v1230
  %v2585 = vpop.f32.mrb[0].mxu0
  %v2586 = vadd.f32 %v294, %v2585
  %v2587 = vpop.f32.mrb[0].mxu0
  %v2588 = vpop.f32.mrb[0].mxu0
  %v2589 = vadd.f32 %v294, %v2588
  %v2590 = vpop.f32.mrb[0].mxu0
  %2591 = vmatprep.mubr.bf16.mxu0 %v1756
  %2592 = vmatmul.mubr.bf16.gmra.mrb[0].mxu0 %v1232
  %v2593 = vpop.f32.mrb[0].mxu0
  %v2594 = vadd.f32 %v294, %v2593
  %v2595 = vpop.f32.mrb[0].mxu0
  %v2596 = vpop.f32.mrb[0].mxu0
  %v2597 = vadd.f32 %v294, %v2596
  %v2598 = vpop.f32.mrb[0].mxu0
  %2599 = vmatprep.mubr.bf16.mxu0 %v1759
  %2600 = vmatmul.mubr.bf16.gmra.mrb[0].mxu0 %v1234
  %v2601 = vpop.f32.mrb[0].mxu0
  %v2602 = vadd.f32 %v294, %v2601
  %v2603 = vpop.f32.mrb[0].mxu0
  %v2604 = vpop.f32.mrb[0].mxu0
  %v2605 = vadd.f32 %v294, %v2604
  %v2606 = vpop.f32.mrb[0].mxu0
  %2607 = vmatprep.mubr.bf16.mxu0 %v1762
  %2608 = vmatmul.mubr.bf16.gmra.mrb[0].mxu0 %v1236
  %v2609 = vpop.f32.mrb[0].mxu0
  %v2610 = vadd.f32 %v294, %v2609
  %v2611 = vpop.f32.mrb[0].mxu0
  %v2612 = vpop.f32.mrb[0].mxu0
  %v2613 = vadd.f32 %v294, %v2612
  %v2614 = vpop.f32.mrb[0].mxu0
  %2615 = vmatprep.mubr.bf16.mxu0 %v1765
  %2616 = vmatmul.mubr.bf16.gmra.mrb[0].mxu0 %v1238
  %v2617 = vpop.f32.mrb[0].mxu0
  %v2618 = vadd.f32 %v294, %v2617
  %v2619 = vpop.f32.mrb[0].mxu0
  %v2620 = vpop.f32.mrb[0].mxu0
  %v2621 = vadd.f32 %v294, %v2620
  %v2622 = vpop.f32.mrb[0].mxu0
  %2623 = vmatprep.mubr.bf16.mxu0 %v1768
  %2624 = vmatmul.mubr.bf16.gmra.mrb[0].mxu0 %v1240
  %v2625 = vpop.f32.mrb[0].mxu0
  %v2626 = vadd.f32 %v294, %v2625
  %v2627 = vpop.f32.mrb[0].mxu0
  %v2628 = vpop.f32.mrb[0].mxu0
  %v2629 = vadd.f32 %v294, %v2628
  %v2630 = vpop.f32.mrb[0].mxu0
  %2631 = vmatprep.mubr.bf16.mxu0 %v1771
  %2632 = vmatmul.mubr.bf16.gmra.mrb[0].mxu0 %v1242
  %v2633 = vpop.f32.mrb[0].mxu0
  %v2634 = vadd.f32 %v294, %v2633
  %v2635 = vpop.f32.mrb[0].mxu0
  %v2636 = vpop.f32.mrb[0].mxu0
  %v2637 = vadd.f32 %v294, %v2636
  %v2638 = vpop.f32.mrb[0].mxu0
  %2639 = vmatprep.mubr.bf16.mxu0 %v1774
  %2640 = vmatmul.mubr.bf16.gmra.mrb[0].mxu0 %v1244
  %v2641 = vpop.f32.mrb[0].mxu0
  %v2642 = vadd.f32 %v294, %v2641
  %v2643 = vpop.f32.mrb[0].mxu0
  %v2644 = vpop.f32.mrb[0].mxu0
  %v2645 = vadd.f32 %v294, %v2644
  %v2646 = vpop.f32.mrb[0].mxu0
  %2647 = vmatprep.mubr.bf16.mxu0 %v1777
  %2648 = vmatmul.mubr.bf16.gmra.mrb[0].mxu0 %v1246
  %v2649 = vpop.f32.mrb[0].mxu0
  %v2650 = vadd.f32 %v294, %v2649
  %v2651 = vpop.f32.mrb[0].mxu0
  %v2652 = vpop.f32.mrb[0].mxu0
  %v2653 = vadd.f32 %v294, %v2652
  %v2654 = vpop.f32.mrb[0].mxu0
  %2655 = vmatprep.mubr.bf16.mxu0 %v1780
  %2656 = vmatmul.mubr.bf16.gmra.mrb[0].mxu0 %v1248
  %v2657 = vpop.f32.mrb[0].mxu0
  %v2658 = vadd.f32 %v294, %v2657
  %v2659 = vpop.f32.mrb[0].mxu0
  %v2660 = vpop.f32.mrb[0].mxu0
  %v2661 = vadd.f32 %v294, %v2660
  %v2662 = vpop.f32.mrb[0].mxu0
  %2663 = vmatprep.mubr.bf16.mxu0 %v1783
  %2664 = vmatmul.mubr.bf16.gmra.mrb[0].mxu0 %v1250
  %v2665 = vpop.f32.mrb[0].mxu0
  %v2666 = vadd.f32 %v294, %v2665
  %v2667 = vpop.f32.mrb[0].mxu0
  %v2668 = vpop.f32.mrb[0].mxu0
  %v2669 = vadd.f32 %v294, %v2668
  %v2670 = vpop.f32.mrb[0].mxu0
  %2671 = vmatprep.mubr.bf16.mxu0 %v1786
  %2672 = vmatmul.mubr.bf16.gmra.mrb[0].mxu0 %v1252
  %v2673 = vpop.f32.mrb[0].mxu0
  %v2674 = vadd.f32 %v294, %v2673
  %v2675 = vpop.f32.mrb[0].mxu0
  %v2676 = vpop.f32.mrb[0].mxu0
  %v2677 = vadd.f32 %v294, %v2676
  %v2678 = vpop.f32.mrb[0].mxu0
  %2679 = vmatprep.mubr.bf16.mxu0 %v1789
  %2680 = vmatmul.mubr.bf16.gmra.mrb[0].mxu0 %v1254
  %v2681 = vpop.f32.mrb[0].mxu0
  %v2682 = vadd.f32 %v294, %v2681
  %v2683 = vpop.f32.mrb[0].mxu0
  %v2684 = vpop.f32.mrb[0].mxu0
  %v2685 = vadd.f32 %v294, %v2684
  %v2686 = vpop.f32.mrb[0].mxu0
  %2687 = vmatprep.mubr.bf16.mxu0 %v1792
  %2688 = vmatmul.mubr.bf16.gmra.mrb[0].mxu0 %v1256
  %v2689 = vpop.f32.mrb[0].mxu0
  %v2690 = vadd.f32 %v294, %v2689
  %v2691 = vpop.f32.mrb[0].mxu0
  %v2692 = vpop.f32.mrb[0].mxu0
  %v2693 = vadd.f32 %v294, %v2692
  %v2694 = vpop.f32.mrb[0].mxu0
  %2695 = vmatprep.mubr.bf16.mxu0 %v1795
  %2696 = vmatmul.mubr.bf16.gmra.mrb[0].mxu0 %v1258
  %v2697 = vpop.f32.mrb[0].mxu0
  %v2698 = vadd.f32 %v294, %v2697
  %v2699 = vpop.f32.mrb[0].mxu0
  %v2700 = vpop.f32.mrb[0].mxu0
  %v2701 = vadd.f32 %v294, %v2700
  %v2702 = vpop.f32.mrb[0].mxu0
  %2703 = vmatprep.mubr.bf16.mxu0 %v1798
  %2704 = vmatmul.mubr.bf16.gmra.mrb[0].mxu0 %v1260
  %v2705 = vpop.f32.mrb[0].mxu0
  %v2706 = vadd.f32 %v294, %v2705
  %v2707 = vpop.f32.mrb[0].mxu0
  %v2708 = vpop.f32.mrb[0].mxu0
  %v2709 = vadd.f32 %v294, %v2708
  %v2710 = vpop.f32.mrb[0].mxu0
  %2711 = vmatprep.mubr.bf16.mxu0 %v1801
  %2712 = vmatmul.mubr.bf16.gmra.mrb[0].mxu0 %v1262
  %v2713 = vpop.f32.mrb[0].mxu0
  %v2714 = vadd.f32 %v294, %v2713
  %v2715 = vpop.f32.mrb[0].mxu0
  %v2716 = vpop.f32.mrb[0].mxu0
  %v2717 = vadd.f32 %v294, %v2716
  %v2718 = vpop.f32.mrb[0].mxu0
  %2719 = vmatprep.mubr.bf16.mxu0 %v1804
  %2720 = vmatmul.mubr.bf16.gmra.mrb[0].mxu0 %v1264
  %v2721 = vpop.f32.mrb[0].mxu0
  %v2722 = vadd.f32 %v294, %v2721
  %v2723 = vpop.f32.mrb[0].mxu0
  %v2724 = vpop.f32.mrb[0].mxu0
  %v2725 = vadd.f32 %v294, %v2724
  %v2726 = vpop.f32.mrb[0].mxu0
  %2727 = vmatprep.mubr.bf16.mxu0 %v1807
  %2728 = vmatmul.mubr.bf16.gmra.mrb[0].mxu0 %v1266
  %v2729 = vpop.f32.mrb[0].mxu0
  %v2730 = vadd.f32 %v294, %v2729
  %v2731 = vpop.f32.mrb[0].mxu0
  %v2732 = vpop.f32.mrb[0].mxu0
  %v2733 = vadd.f32 %v294, %v2732
  %v2734 = vpop.f32.mrb[0].mxu0
  %2735 = vmatprep.mubr.bf16.mxu0 %v1810
  %2736 = vmatmul.mubr.bf16.gmra.mrb[0].mxu0 %v1268
  %v2737 = vpop.f32.mrb[0].mxu0
  %v2738 = vadd.f32 %v294, %v2737
  %v2739 = vpop.f32.mrb[0].mxu0
  %v2740 = vpop.f32.mrb[0].mxu0
  %v2741 = vadd.f32 %v294, %v2740
  %v2742 = vpop.f32.mrb[0].mxu0
  %2743 = vmatprep.mubr.bf16.mxu0 %v1813
  %2744 = vmatmul.mubr.bf16.gmra.mrb[0].mxu0 %v1270
  %v2745 = vpop.f32.mrb[0].mxu0
  %v2746 = vadd.f32 %v294, %v2745
  %v2747 = vpop.f32.mrb[0].mxu0
  %v2748 = vpop.f32.mrb[0].mxu0
  %v2749 = vadd.f32 %v294, %v2748
  %v2750 = vpop.f32.mrb[0].mxu0
  %2751 = vmatprep.mubr.bf16.mxu0 %v1816
  %2752 = vmatmul.mubr.bf16.gmra.mrb[0].mxu0 %v1272
  %v2753 = vpop.f32.mrb[0].mxu0
  %v2754 = vadd.f32 %v294, %v2753
  %v2755 = vpop.f32.mrb[0].mxu0
  %v2756 = vpop.f32.mrb[0].mxu0
  %v2757 = vadd.f32 %v294, %v2756
  %v2758 = vpop.f32.mrb[0].mxu0
  %2759 = vmatprep.mubr.bf16.mxu0 %v1819
  %2760 = vmatmul.mubr.bf16.gmra.mrb[0].mxu0 %v1274
  %v2761 = vpop.f32.mrb[0].mxu0
  %v2762 = vadd.f32 %v294, %v2761
  %v2763 = vpop.f32.mrb[0].mxu0
  %v2764 = vpop.f32.mrb[0].mxu0
  %v2765 = vadd.f32 %v294, %v2764
  %v2766 = vpop.f32.mrb[0].mxu0
  %2767 = vmatprep.mubr.bf16.mxu0 %v1822
  %2768 = vmatmul.mubr.bf16.gmra.mrb[0].mxu0 %v1276
  %v2769 = vpop.f32.mrb[0].mxu0
  %v2770 = vadd.f32 %v294, %v2769
  %v2771 = vpop.f32.mrb[0].mxu0
  %v2772 = vpop.f32.mrb[0].mxu0
  %v2773 = vadd.f32 %v294, %v2772
  %v2774 = vpop.f32.mrb[0].mxu0
  %2775 = vmatprep.mubr.bf16.mxu0 %v1825
  %2776 = vmatmul.mubr.bf16.gmra.mrb[0].mxu0 %v1278
  %v2777 = vpop.f32.mrb[0].mxu0
  %v2778 = vadd.f32 %v294, %v2777
  %v2779 = vpop.f32.mrb[0].mxu0
  %v2780 = vpop.f32.mrb[0].mxu0
  %v2781 = vadd.f32 %v294, %v2780
  %v2782 = vpop.f32.mrb[0].mxu0
  %2783 = vmatprep.mubr.bf16.mxu0 %v1828
  %2784 = vmatmul.mubr.bf16.gmra.mrb[0].mxu0 %v1280
  %v2785 = vpop.f32.mrb[0].mxu0
  %v2786 = vadd.f32 %v294, %v2785
  %v2787 = vpop.f32.mrb[0].mxu0
  %v2788 = vpop.f32.mrb[0].mxu0
  %v2789 = vadd.f32 %v294, %v2788
  %v2790 = vpop.f32.mrb[0].mxu0
  %2791 = vmatprep.mubr.bf16.mxu0 %v1831
  %2792 = vmatmul.mubr.bf16.gmra.mrb[0].mxu0 %v1282
  %v2793 = vpop.f32.mrb[0].mxu0
  %v2794 = vadd.f32 %v294, %v2793
  %v2795 = vpop.f32.mrb[0].mxu0
  %v2796 = vpop.f32.mrb[0].mxu0
  %v2797 = vadd.f32 %v294, %v2796
  %v2798 = vpop.f32.mrb[0].mxu0
  %2799 = vmatprep.mubr.bf16.mxu0 %v1834
  %2800 = vmatmul.mubr.bf16.gmra.mrb[0].mxu0 %v1284
  %v2801 = vpop.f32.mrb[0].mxu0
  %v2802 = vadd.f32 %v294, %v2801
  %v2803 = vpop.f32.mrb[0].mxu0
  %v2804 = vpop.f32.mrb[0].mxu0
  %v2805 = vadd.f32 %v294, %v2804
  %v2806 = vpop.f32.mrb[0].mxu0
  %2807 = vmatprep.mubr.bf16.mxu0 %v1837
  %2808 = vmatmul.mubr.bf16.gmra.mrb[0].mxu0 %v1286
  %v2809 = vpop.f32.mrb[0].mxu0
  %v2810 = vadd.f32 %v294, %v2809
  %v2811 = vpop.f32.mrb[0].mxu0
  %v2812 = vpop.f32.mrb[0].mxu0
  %v2813 = vadd.f32 %v294, %v2812
  %v2814 = vpop.f32.mrb[0].mxu0
  %2815 = vmatprep.mubr.bf16.mxu0 %v1840
  %2816 = vmatmul.mubr.bf16.gmra.mrb[0].mxu0 %v1288
  %v2817 = vpop.f32.mrb[0].mxu0
  %v2818 = vadd.f32 %v294, %v2817
  %v2819 = vpop.f32.mrb[0].mxu0
  %v2820 = vpop.f32.mrb[0].mxu0
  %v2821 = vadd.f32 %v294, %v2820
  %v2822 = vpop.f32.mrb[0].mxu0
  %2823 = vmatprep.mubr.bf16.mxu0 %v1843
  %2824 = vmatmul.mubr.bf16.gmra.mrb[0].mxu0 %v1290
  %v2825 = vpop.f32.mrb[0].mxu0
  %v2826 = vadd.f32 %v294, %v2825
  %v2827 = vpop.f32.mrb[0].mxu0
  %v2828 = vpop.f32.mrb[0].mxu0
  %v2829 = vadd.f32 %v294, %v2828
  %v2830 = vpop.f32.mrb[0].mxu0
  %2831 = vmatprep.mubr.bf16.mxu0 %v1846
  %2832 = vmatmul.mubr.bf16.gmra.mrb[0].mxu0 %v1292
  %v2833 = vpop.f32.mrb[0].mxu0
  %v2834 = vadd.f32 %v294, %v2833
  %v2835 = vpop.f32.mrb[0].mxu0
  %v2836 = vpop.f32.mrb[0].mxu0
  %v2837 = vadd.f32 %v294, %v2836
  %v2838 = vpop.f32.mrb[0].mxu0
  %2839 = vmatprep.mubr.bf16.mxu0 %v1849
  %2840 = vmatmul.mubr.bf16.gmra.mrb[0].mxu0 %v1294
  %v2841 = vpop.f32.mrb[0].mxu0
  %v2842 = vadd.f32 %v294, %v2841
  %v2843 = vpop.f32.mrb[0].mxu0
  %v2844 = vpop.f32.mrb[0].mxu0
  %v2845 = vadd.f32 %v294, %v2844
  %v2846 = vpop.f32.mrb[0].mxu0
  %2847 = vmatprep.mubr.bf16.mxu0 %v1852
  %2848 = vmatmul.mubr.bf16.gmra.mrb[0].mxu0 %v1296
  %v2849 = vpop.f32.mrb[0].mxu0
  %v2850 = vadd.f32 %v294, %v2849
  %v2851 = vpop.f32.mrb[0].mxu0
  %v2852 = vpop.f32.mrb[0].mxu0
  %v2853 = vadd.f32 %v294, %v2852
  %v2854 = vpop.f32.mrb[0].mxu0
  %2855 = vmatprep.mubr.bf16.mxu0 %v1855
  %2856 = vmatmul.mubr.bf16.gmra.mrb[0].mxu0 %v1298
  %v2857 = vpop.f32.mrb[0].mxu0
  %v2858 = vadd.f32 %v294, %v2857
  %v2859 = vpop.f32.mrb[0].mxu0
  %v2860 = vpop.f32.mrb[0].mxu0
  %v2861 = vadd.f32 %v294, %v2860
  %v2862 = vpop.f32.mrb[0].mxu0
  %2863 = vmatprep.mubr.bf16.mxu0 %v1858
  %2864 = vmatmul.mubr.bf16.gmra.mrb[0].mxu0 %v1300
  %v2865 = vpop.f32.mrb[0].mxu0
  %v2866 = vadd.f32 %v294, %v2865
  %v2867 = vpop.f32.mrb[0].mxu0
  %v2868 = vpop.f32.mrb[0].mxu0
  %v2869 = vadd.f32 %v294, %v2868
  %v2870 = vpop.f32.mrb[0].mxu0
  %2871 = vmatprep.mubr.bf16.mxu0 %v1861
  %2872 = vmatmul.mubr.bf16.gmra.mrb[0].mxu0 %v1302
  %v2873 = vpop.f32.mrb[0].mxu0
  %v2874 = vadd.f32 %v294, %v2873
  %v2875 = vpop.f32.mrb[0].mxu0
  %v2876 = vpop.f32.mrb[0].mxu0
  %v2877 = vadd.f32 %v294, %v2876
  %v2878 = vpop.f32.mrb[0].mxu0
  %2879 = vmatprep.mubr.bf16.mxu0 %v1864
  %2880 = vmatmul.mubr.bf16.gmra.mrb[0].mxu0 %v1304
  %v2881 = vpop.f32.mrb[0].mxu0
  %v2882 = vadd.f32 %v294, %v2881
  %v2883 = vpop.f32.mrb[0].mxu0
  %v2884 = vpop.f32.mrb[0].mxu0
  %v2885 = vadd.f32 %v294, %v2884
  %v2886 = vpop.f32.mrb[0].mxu0
  %2887 = vmatprep.mubr.bf16.mxu0 %v1867
  %2888 = vmatmul.mubr.bf16.gmra.mrb[0].mxu0 %v1306
  %v2889 = vpop.f32.mrb[0].mxu0
  %v2890 = vadd.f32 %v294, %v2889
  %v2891 = vpop.f32.mrb[0].mxu0
  %v2892 = vpop.f32.mrb[0].mxu0
  %v2893 = vadd.f32 %v294, %v2892
  %v2894 = vpop.f32.mrb[0].mxu0
  %2895 = vmatprep.mubr.bf16.mxu0 %v1870
  %2896 = vmatmul.mubr.bf16.gmra.mrb[0].mxu0 %v1308
  %v2897 = vpop.f32.mrb[0].mxu0
  %v2898 = vadd.f32 %v294, %v2897
  %v2899 = vpop.f32.mrb[0].mxu0
  %v2900 = vpop.f32.mrb[0].mxu0
  %v2901 = vadd.f32 %v294, %v2900
  %v2902 = vpop.f32.mrb[0].mxu0
  %2903 = vmatprep.mubr.bf16.mxu0 %v1873
  %2904 = vmatmul.mubr.bf16.gmra.mrb[0].mxu0 %v1310
  %v2905 = vpop.f32.mrb[0].mxu0
  %v2906 = vadd.f32 %v294, %v2905
  %v2907 = vpop.f32.mrb[0].mxu0
  %v2908 = vpop.f32.mrb[0].mxu0
  %v2909 = vadd.f32 %v294, %v2908
  %v2910 = vpop.f32.mrb[0].mxu0
  %2911 = vmatprep.mubr.bf16.mxu0 %v1876
  %2912 = vmatmul.mubr.bf16.gmra.mrb[0].mxu0 %v1312
  %v2913 = vpop.f32.mrb[0].mxu0
  %v2914 = vadd.f32 %v294, %v2913
  %v2915 = vpop.f32.mrb[0].mxu0
  %v2916 = vpop.f32.mrb[0].mxu0
  %v2917 = vadd.f32 %v294, %v2916
  %v2918 = vpop.f32.mrb[0].mxu0
  %2919 = vmatprep.mubr.bf16.mxu0 %v1879
  %2920 = vmatmul.mubr.bf16.gmra.mrb[0].mxu0 %v1314
  %v2921 = vpop.f32.mrb[0].mxu0
  %v2922 = vadd.f32 %v294, %v2921
  %v2923 = vpop.f32.mrb[0].mxu0
  %v2924 = vpop.f32.mrb[0].mxu0
  %v2925 = vadd.f32 %v294, %v2924
  %v2926 = vpop.f32.mrb[0].mxu0
  %2927 = vmatprep.mubr.bf16.mxu0 %v1882
  %2928 = vmatmul.mubr.bf16.gmra.mrb[0].mxu0 %v1316
  %v2929 = vpop.f32.mrb[0].mxu0
  %v2930 = vadd.f32 %v294, %v2929
  %v2931 = vpop.f32.mrb[0].mxu0
  %v2932 = vpop.f32.mrb[0].mxu0
  %v2933 = vadd.f32 %v294, %v2932
  %v2934 = vpop.f32.mrb[0].mxu0
  %2935 = vmatprep.mubr.bf16.mxu0 %v1885
  %2936 = vmatmul.mubr.bf16.gmra.mrb[0].mxu0 %v1318
  %v2937 = vpop.f32.mrb[0].mxu0
  %v2938 = vadd.f32 %v294, %v2937
  %v2939 = vpop.f32.mrb[0].mxu0
  %v2940 = vpop.f32.mrb[0].mxu0
  %v2941 = vadd.f32 %v294, %v2940
  %v2942 = vpop.f32.mrb[0].mxu0
  %2943 = vdwg.mxu0
  %v2944 = vxor.u32 %v1922, 2147483648
  %v2945 = vxor.u32 %v1925, 2147483648
  %v2946 = vxor.u32 %v1930, 2147483648
  %v2947 = vxor.u32 %v1933, 2147483648
  %v2948 = vxor.u32 %v1938, 2147483648
  %v2949 = vxor.u32 %v1941, 2147483648
  %v2950 = vxor.u32 %v1946, 2147483648
  %v2951 = vxor.u32 %v1949, 2147483648
  %v2952 = vxor.u32 %v1954, 2147483648
  %v2953 = vxor.u32 %v1957, 2147483648
  %v2954 = vxor.u32 %v1962, 2147483648
  %v2955 = vxor.u32 %v1965, 2147483648
  %v2956 = vxor.u32 %v1970, 2147483648
  %v2957 = vxor.u32 %v1973, 2147483648
  %v2958 = vxor.u32 %v1978, 2147483648
  %v2959 = vxor.u32 %v1981, 2147483648
  %v2960 = vxor.u32 %v1986, 2147483648
  %v2961 = vxor.u32 %v1989, 2147483648
  %v2962 = vxor.u32 %v1994, 2147483648
  %v2963 = vxor.u32 %v1997, 2147483648
  %v2964 = vxor.u32 %v2002, 2147483648
  %v2965 = vxor.u32 %v2005, 2147483648
  %v2966 = vxor.u32 %v2010, 2147483648
  %v2967 = vxor.u32 %v2013, 2147483648
  %v2968 = vxor.u32 %v2018, 2147483648
  %v2969 = vxor.u32 %v2021, 2147483648
  %v2970 = vxor.u32 %v2026, 2147483648
  %v2971 = vxor.u32 %v2029, 2147483648
  %v2972 = vxor.u32 %v2034, 2147483648
  %v2973 = vxor.u32 %v2037, 2147483648
  %v2974 = vxor.u32 %v2042, 2147483648
  %v2975 = vxor.u32 %v2045, 2147483648
  %v2976 = vxor.u32 %v2050, 2147483648
  %v2977 = vxor.u32 %v2053, 2147483648
  %v2978 = vxor.u32 %v2058, 2147483648
  %v2979 = vxor.u32 %v2061, 2147483648
  %v2980 = vxor.u32 %v2066, 2147483648
  %v2981 = vxor.u32 %v2069, 2147483648
  %v2982 = vxor.u32 %v2074, 2147483648
  %v2983 = vxor.u32 %v2077, 2147483648
  %v2984 = vxor.u32 %v2082, 2147483648
  %v2985 = vxor.u32 %v2085, 2147483648
  %v2986 = vxor.u32 %v2090, 2147483648
  %v2987 = vxor.u32 %v2093, 2147483648
  %v2988 = vxor.u32 %v2098, 2147483648
  %v2989 = vxor.u32 %v2101, 2147483648
  %v2990 = vxor.u32 %v2106, 2147483648
  %v2991 = vxor.u32 %v2109, 2147483648
  %v2992 = vxor.u32 %v2114, 2147483648
  %v2993 = vxor.u32 %v2117, 2147483648
  %v2994 = vxor.u32 %v2122, 2147483648
  %v2995 = vxor.u32 %v2125, 2147483648
  %v2996 = vxor.u32 %v2130, 2147483648
  %v2997 = vxor.u32 %v2133, 2147483648
  %v2998 = vxor.u32 %v2138, 2147483648
  %v2999 = vxor.u32 %v2141, 2147483648
  %v3000 = vxor.u32 %v2146, 2147483648
  %v3001 = vxor.u32 %v2149, 2147483648
  %v3002 = vxor.u32 %v2154, 2147483648
  %v3003 = vxor.u32 %v2157, 2147483648
  %v3004 = vxor.u32 %v2162, 2147483648
  %v3005 = vxor.u32 %v2165, 2147483648
  %v3006 = vxor.u32 %v2170, 2147483648
  %v3007 = vxor.u32 %v2173, 2147483648
  %v3008 = vxor.u32 %v2178, 2147483648
  %v3009 = vxor.u32 %v2181, 2147483648
  %v3010 = vxor.u32 %v2186, 2147483648
  %v3011 = vxor.u32 %v2189, 2147483648
  %v3012 = vxor.u32 %v2194, 2147483648
  %v3013 = vxor.u32 %v2197, 2147483648
  %v3014 = vxor.u32 %v2202, 2147483648
  %v3015 = vxor.u32 %v2205, 2147483648
  %v3016 = vxor.u32 %v2210, 2147483648
  %v3017 = vxor.u32 %v2213, 2147483648
  %v3018 = vxor.u32 %v2218, 2147483648
  %v3019 = vxor.u32 %v2221, 2147483648
  %v3020 = vxor.u32 %v2226, 2147483648
  %v3021 = vxor.u32 %v2229, 2147483648
  %v3022 = vxor.u32 %v2234, 2147483648
  %v3023 = vxor.u32 %v2237, 2147483648
  %v3024 = vxor.u32 %v2242, 2147483648
  %v3025 = vxor.u32 %v2245, 2147483648
  %v3026 = vxor.u32 %v2250, 2147483648
  %v3027 = vxor.u32 %v2253, 2147483648
  %v3028 = vxor.u32 %v2258, 2147483648
  %v3029 = vxor.u32 %v2261, 2147483648
  %v3030 = vxor.u32 %v2266, 2147483648
  %v3031 = vxor.u32 %v2269, 2147483648
  %v3032 = vxor.u32 %v2274, 2147483648
  %v3033 = vxor.u32 %v2277, 2147483648
  %v3034 = vxor.u32 %v2282, 2147483648
  %v3035 = vxor.u32 %v2285, 2147483648
  %v3036 = vxor.u32 %v2290, 2147483648
  %v3037 = vxor.u32 %v2293, 2147483648
  %v3038 = vxor.u32 %v2298, 2147483648
  %v3039 = vxor.u32 %v2301, 2147483648
  %v3040 = vxor.u32 %v2306, 2147483648
  %v3041 = vxor.u32 %v2309, 2147483648
  %v3042 = vxor.u32 %v2314, 2147483648
  %v3043 = vxor.u32 %v2317, 2147483648
  %v3044 = vxor.u32 %v2322, 2147483648
  %v3045 = vxor.u32 %v2325, 2147483648
  %v3046 = vxor.u32 %v2330, 2147483648
  %v3047 = vxor.u32 %v2333, 2147483648
  %v3048 = vxor.u32 %v2338, 2147483648
  %v3049 = vxor.u32 %v2341, 2147483648
  %v3050 = vxor.u32 %v2346, 2147483648
  %v3051 = vxor.u32 %v2349, 2147483648
  %v3052 = vxor.u32 %v2354, 2147483648
  %v3053 = vxor.u32 %v2357, 2147483648
  %v3054 = vxor.u32 %v2362, 2147483648
  %v3055 = vxor.u32 %v2365, 2147483648
  %v3056 = vxor.u32 %v2370, 2147483648
  %v3057 = vxor.u32 %v2373, 2147483648
  %v3058 = vxor.u32 %v2378, 2147483648
  %v3059 = vxor.u32 %v2381, 2147483648
  %v3060 = vxor.u32 %v2386, 2147483648
  %v3061 = vxor.u32 %v2389, 2147483648
  %v3062 = vxor.u32 %v2394, 2147483648
  %v3063 = vxor.u32 %v2397, 2147483648
  %v3064 = vxor.u32 %v2402, 2147483648
  %v3065 = vxor.u32 %v2405, 2147483648
  %v3066 = vxor.u32 %v2410, 2147483648
  %v3067 = vxor.u32 %v2413, 2147483648
  %v3068 = vxor.u32 %v2418, 2147483648
  %v3069 = vxor.u32 %v2421, 2147483648
  %v3070 = vxor.u32 %v2426, 2147483648
  %v3071 = vxor.u32 %v2429, 2147483648
  %v3072 = vxor.u32 %v2434, 2147483648
  %v3073 = vxor.u32 %v2437, 2147483648
  %v3074 = vxor.u32 %v2442, 2147483648
  %v3075 = vxor.u32 %v2445, 2147483648
  %v3076 = vxor.u32 %v2450, 2147483648
  %v3077 = vxor.u32 %v2453, 2147483648
  %v3078 = vxor.u32 %v2458, 2147483648
  %v3079 = vxor.u32 %v2461, 2147483648
  %v3080 = vxor.u32 %v2466, 2147483648
  %v3081 = vxor.u32 %v2469, 2147483648
  %v3082 = vxor.u32 %v2474, 2147483648
  %v3083 = vxor.u32 %v2477, 2147483648
  %v3084 = vxor.u32 %v2482, 2147483648
  %v3085 = vxor.u32 %v2485, 2147483648
  %v3086 = vxor.u32 %v2490, 2147483648
  %v3087 = vxor.u32 %v2493, 2147483648
  %v3088 = vxor.u32 %v2498, 2147483648
  %v3089 = vxor.u32 %v2501, 2147483648
  %v3090 = vxor.u32 %v2506, 2147483648
  %v3091 = vxor.u32 %v2509, 2147483648
  %v3092 = vxor.u32 %v2514, 2147483648
  %v3093 = vxor.u32 %v2517, 2147483648
  %v3094 = vxor.u32 %v2522, 2147483648
  %v3095 = vxor.u32 %v2525, 2147483648
  %v3096 = vxor.u32 %v2530, 2147483648
  %v3097 = vxor.u32 %v2533, 2147483648
  %v3098 = vxor.u32 %v2538, 2147483648
  %v3099 = vxor.u32 %v2541, 2147483648
  %v3100 = vxor.u32 %v2546, 2147483648
  %v3101 = vxor.u32 %v2549, 2147483648
  %v3102 = vxor.u32 %v2554, 2147483648
  %v3103 = vxor.u32 %v2557, 2147483648
  %v3104 = vxor.u32 %v2562, 2147483648
  %v3105 = vxor.u32 %v2565, 2147483648
  %v3106 = vxor.u32 %v2570, 2147483648
  %v3107 = vxor.u32 %v2573, 2147483648
  %v3108 = vxor.u32 %v2578, 2147483648
  %v3109 = vxor.u32 %v2581, 2147483648
  %v3110 = vxor.u32 %v2586, 2147483648
  %v3111 = vxor.u32 %v2589, 2147483648
  %v3112 = vxor.u32 %v2594, 2147483648
  %v3113 = vxor.u32 %v2597, 2147483648
  %v3114 = vxor.u32 %v2602, 2147483648
  %v3115 = vxor.u32 %v2605, 2147483648
  %v3116 = vxor.u32 %v2610, 2147483648
  %v3117 = vxor.u32 %v2613, 2147483648
  %v3118 = vxor.u32 %v2618, 2147483648
  %v3119 = vxor.u32 %v2621, 2147483648
  %v3120 = vxor.u32 %v2626, 2147483648
  %v3121 = vxor.u32 %v2629, 2147483648
  %v3122 = vxor.u32 %v2634, 2147483648
  %v3123 = vxor.u32 %v2637, 2147483648
  %v3124 = vxor.u32 %v2642, 2147483648
  %v3125 = vxor.u32 %v2645, 2147483648
  %v3126 = vxor.u32 %v2650, 2147483648
  %v3127 = vxor.u32 %v2653, 2147483648
  %v3128 = vxor.u32 %v2658, 2147483648
  %v3129 = vxor.u32 %v2661, 2147483648
  %v3130 = vxor.u32 %v2666, 2147483648
  %v3131 = vxor.u32 %v2669, 2147483648
  %v3132 = vxor.u32 %v2674, 2147483648
  %v3133 = vxor.u32 %v2677, 2147483648
  %v3134 = vxor.u32 %v2682, 2147483648
  %v3135 = vxor.u32 %v2685, 2147483648
  %v3136 = vxor.u32 %v2690, 2147483648
  %v3137 = vxor.u32 %v2693, 2147483648
  %v3138 = vxor.u32 %v2698, 2147483648
  %v3139 = vxor.u32 %v2701, 2147483648
  %v3140 = vxor.u32 %v2706, 2147483648
  %v3141 = vxor.u32 %v2709, 2147483648
  %v3142 = vxor.u32 %v2714, 2147483648
  %v3143 = vxor.u32 %v2717, 2147483648
  %v3144 = vxor.u32 %v2722, 2147483648
  %v3145 = vxor.u32 %v2725, 2147483648
  %v3146 = vxor.u32 %v2730, 2147483648
  %v3147 = vxor.u32 %v2733, 2147483648
  %v3148 = vxor.u32 %v2738, 2147483648
  %v3149 = vxor.u32 %v2741, 2147483648
  %v3150 = vxor.u32 %v2746, 2147483648
  %v3151 = vxor.u32 %v2749, 2147483648
  %v3152 = vxor.u32 %v2754, 2147483648
  %v3153 = vxor.u32 %v2757, 2147483648
  %v3154 = vxor.u32 %v2762, 2147483648
  %v3155 = vxor.u32 %v2765, 2147483648
  %v3156 = vxor.u32 %v2770, 2147483648
  %v3157 = vxor.u32 %v2773, 2147483648
  %v3158 = vxor.u32 %v2778, 2147483648
  %v3159 = vxor.u32 %v2781, 2147483648
  %v3160 = vxor.u32 %v2786, 2147483648
  %v3161 = vxor.u32 %v2789, 2147483648
  %v3162 = vxor.u32 %v2794, 2147483648
  %v3163 = vxor.u32 %v2797, 2147483648
  %v3164 = vxor.u32 %v2802, 2147483648
  %v3165 = vxor.u32 %v2805, 2147483648
  %v3166 = vxor.u32 %v2810, 2147483648
  %v3167 = vxor.u32 %v2813, 2147483648
  %v3168 = vxor.u32 %v2818, 2147483648
  %v3169 = vxor.u32 %v2821, 2147483648
  %v3170 = vxor.u32 %v2826, 2147483648
  %v3171 = vxor.u32 %v2829, 2147483648
  %v3172 = vxor.u32 %v2834, 2147483648
  %v3173 = vxor.u32 %v2837, 2147483648
  %v3174 = vxor.u32 %v2842, 2147483648
  %v3175 = vxor.u32 %v2845, 2147483648
  %v3176 = vxor.u32 %v2850, 2147483648
  %v3177 = vxor.u32 %v2853, 2147483648
  %v3178 = vxor.u32 %v2858, 2147483648
  %v3179 = vxor.u32 %v2861, 2147483648
  %v3180 = vxor.u32 %v2866, 2147483648
  %v3181 = vxor.u32 %v2869, 2147483648
  %v3182 = vxor.u32 %v2874, 2147483648
  %v3183 = vxor.u32 %v2877, 2147483648
  %v3184 = vxor.u32 %v2882, 2147483648
  %v3185 = vxor.u32 %v2885, 2147483648
  %v3186 = vxor.u32 %v2890, 2147483648
  %v3187 = vxor.u32 %v2893, 2147483648
  %v3188 = vxor.u32 %v2898, 2147483648
  %v3189 = vxor.u32 %v2901, 2147483648
  %v3190 = vxor.u32 %v2906, 2147483648
  %v3191 = vxor.u32 %v2909, 2147483648
  %v3192 = vxor.u32 %v2914, 2147483648
  %v3193 = vxor.u32 %v2917, 2147483648
  %v3194 = vxor.u32 %v2922, 2147483648
  %v3195 = vxor.u32 %v2925, 2147483648
  %v3196 = vxor.u32 %v2930, 2147483648
  %v3197 = vxor.u32 %v2933, 2147483648
  %v3198 = vxor.u32 %v2938, 2147483648
  %v3199 = vxor.u32 %v2941, 2147483648
  %v3200 = vmul.f32 %v2944, 1.442695
  %v3201 = vpow.pop %v3200
  %v3202 = vmul.f32 %v2945, 1.442695
  %v3203 = vpow.pop %v3202
  %v3204 = vmul.f32 %v2946, 1.442695
  %v3205 = vpow.pop %v3204
  %v3206 = vmul.f32 %v2947, 1.442695
  %v3207 = vpow.pop %v3206
  %v3208 = vmul.f32 %v2948, 1.442695
  %v3209 = vpow.pop %v3208
  %v3210 = vmul.f32 %v2949, 1.442695
  %v3211 = vpow.pop %v3210
  %v3212 = vmul.f32 %v2950, 1.442695
  %v3213 = vpow.pop %v3212
  %v3214 = vmul.f32 %v2951, 1.442695
  %v3215 = vpow.pop %v3214
  %v3216 = vmul.f32 %v2952, 1.442695
  %v3217 = vpow.pop %v3216
  %v3218 = vmul.f32 %v2953, 1.442695
  %v3219 = vpow.pop %v3218
  %v3220 = vmul.f32 %v2954, 1.442695
  %v3221 = vpow.pop %v3220
  %v3222 = vmul.f32 %v2955, 1.442695
  %v3223 = vpow.pop %v3222
  %v3224 = vmul.f32 %v2956, 1.442695
  %v3225 = vpow.pop %v3224
  %v3226 = vmul.f32 %v2957, 1.442695
  %v3227 = vpow.pop %v3226
  %v3228 = vmul.f32 %v2958, 1.442695
  %v3229 = vpow.pop %v3228
  %v3230 = vmul.f32 %v2959, 1.442695
  %v3231 = vpow.pop %v3230
  %v3232 = vmul.f32 %v2960, 1.442695
  %v3233 = vpow.pop %v3232
  %v3234 = vmul.f32 %v2961, 1.442695
  %v3235 = vpow.pop %v3234
  %v3236 = vmul.f32 %v2962, 1.442695
  %v3237 = vpow.pop %v3236
  %v3238 = vmul.f32 %v2963, 1.442695
  %v3239 = vpow.pop %v3238
  %v3240 = vmul.f32 %v2964, 1.442695
  %v3241 = vpow.pop %v3240
  %v3242 = vmul.f32 %v2965, 1.442695
  %v3243 = vpow.pop %v3242
  %v3244 = vmul.f32 %v2966, 1.442695
  %v3245 = vpow.pop %v3244
  %v3246 = vmul.f32 %v2967, 1.442695
  %v3247 = vpow.pop %v3246
  %v3248 = vmul.f32 %v2968, 1.442695
  %v3249 = vpow.pop %v3248
  %v3250 = vmul.f32 %v2969, 1.442695
  %v3251 = vpow.pop %v3250
  %v3252 = vmul.f32 %v2970, 1.442695
  %v3253 = vpow.pop %v3252
  %v3254 = vmul.f32 %v2971, 1.442695
  %v3255 = vpow.pop %v3254
  %v3256 = vmul.f32 %v2972, 1.442695
  %v3257 = vpow.pop %v3256
  %v3258 = vmul.f32 %v2973, 1.442695
  %v3259 = vpow.pop %v3258
  %v3260 = vmul.f32 %v2974, 1.442695
  %v3261 = vpow.pop %v3260
  %v3262 = vmul.f32 %v2975, 1.442695
  %v3263 = vpow.pop %v3262
  %v3264 = vmul.f32 %v2976, 1.442695
  %v3265 = vpow.pop %v3264
  %v3266 = vmul.f32 %v2977, 1.442695
  %v3267 = vpow.pop %v3266
  %v3268 = vmul.f32 %v2978, 1.442695
  %v3269 = vpow.pop %v3268
  %v3270 = vmul.f32 %v2979, 1.442695
  %v3271 = vpow.pop %v3270
  %v3272 = vmul.f32 %v2980, 1.442695
  %v3273 = vpow.pop %v3272
  %v3274 = vmul.f32 %v2981, 1.442695
  %v3275 = vpow.pop %v3274
  %v3276 = vmul.f32 %v2982, 1.442695
  %v3277 = vpow.pop %v3276
  %v3278 = vmul.f32 %v2983, 1.442695
  %v3279 = vpow.pop %v3278
  %v3280 = vmul.f32 %v2984, 1.442695
  %v3281 = vpow.pop %v3280
  %v3282 = vmul.f32 %v2985, 1.442695
  %v3283 = vpow.pop %v3282
  %v3284 = vmul.f32 %v2986, 1.442695
  %v3285 = vpow.pop %v3284
  %v3286 = vmul.f32 %v2987, 1.442695
  %v3287 = vpow.pop %v3286
  %v3288 = vmul.f32 %v2988, 1.442695
  %v3289 = vpow.pop %v3288
  %v3290 = vmul.f32 %v2989, 1.442695
  %v3291 = vpow.pop %v3290
  %v3292 = vmul.f32 %v2990, 1.442695
  %v3293 = vpow.pop %v3292
  %v3294 = vmul.f32 %v2991, 1.442695
  %v3295 = vpow.pop %v3294
  %v3296 = vmul.f32 %v2992, 1.442695
  %v3297 = vpow.pop %v3296
  %v3298 = vmul.f32 %v2993, 1.442695
  %v3299 = vpow.pop %v3298
  %v3300 = vmul.f32 %v2994, 1.442695
  %v3301 = vpow.pop %v3300
  %v3302 = vmul.f32 %v2995, 1.442695
  %v3303 = vpow.pop %v3302
  %v3304 = vmul.f32 %v2996, 1.442695
  %v3305 = vpow.pop %v3304
  %v3306 = vmul.f32 %v2997, 1.442695
  %v3307 = vpow.pop %v3306
  %v3308 = vmul.f32 %v2998, 1.442695
  %v3309 = vpow.pop %v3308
  %v3310 = vmul.f32 %v2999, 1.442695
  %v3311 = vpow.pop %v3310
  %v3312 = vmul.f32 %v3000, 1.442695
  %v3313 = vpow.pop %v3312
  %v3314 = vmul.f32 %v3001, 1.442695
  %v3315 = vpow.pop %v3314
  %v3316 = vmul.f32 %v3002, 1.442695
  %v3317 = vpow.pop %v3316
  %v3318 = vmul.f32 %v3003, 1.442695
  %v3319 = vpow.pop %v3318
  %v3320 = vmul.f32 %v3004, 1.442695
  %v3321 = vpow.pop %v3320
  %v3322 = vmul.f32 %v3005, 1.442695
  %v3323 = vpow.pop %v3322
  %v3324 = vmul.f32 %v3006, 1.442695
  %v3325 = vpow.pop %v3324
  %v3326 = vmul.f32 %v3007, 1.442695
  %v3327 = vpow.pop %v3326
  %v3328 = vmul.f32 %v3008, 1.442695
  %v3329 = vpow.pop %v3328
  %v3330 = vmul.f32 %v3009, 1.442695
  %v3331 = vpow.pop %v3330
  %v3332 = vmul.f32 %v3010, 1.442695
  %v3333 = vpow.pop %v3332
  %v3334 = vmul.f32 %v3011, 1.442695
  %v3335 = vpow.pop %v3334
  %v3336 = vmul.f32 %v3012, 1.442695
  %v3337 = vpow.pop %v3336
  %v3338 = vmul.f32 %v3013, 1.442695
  %v3339 = vpow.pop %v3338
  %v3340 = vmul.f32 %v3014, 1.442695
  %v3341 = vpow.pop %v3340
  %v3342 = vmul.f32 %v3015, 1.442695
  %v3343 = vpow.pop %v3342
  %v3344 = vmul.f32 %v3016, 1.442695
  %v3345 = vpow.pop %v3344
  %v3346 = vmul.f32 %v3017, 1.442695
  %v3347 = vpow.pop %v3346
  %v3348 = vmul.f32 %v3018, 1.442695
  %v3349 = vpow.pop %v3348
  %v3350 = vmul.f32 %v3019, 1.442695
  %v3351 = vpow.pop %v3350
  %v3352 = vmul.f32 %v3020, 1.442695
  %v3353 = vpow.pop %v3352
  %v3354 = vmul.f32 %v3021, 1.442695
  %v3355 = vpow.pop %v3354
  %v3356 = vmul.f32 %v3022, 1.442695
  %v3357 = vpow.pop %v3356
  %v3358 = vmul.f32 %v3023, 1.442695
  %v3359 = vpow.pop %v3358
  %v3360 = vmul.f32 %v3024, 1.442695
  %v3361 = vpow.pop %v3360
  %v3362 = vmul.f32 %v3025, 1.442695
  %v3363 = vpow.pop %v3362
  %v3364 = vmul.f32 %v3026, 1.442695
  %v3365 = vpow.pop %v3364
  %v3366 = vmul.f32 %v3027, 1.442695
  %v3367 = vpow.pop %v3366
  %v3368 = vmul.f32 %v3028, 1.442695
  %v3369 = vpow.pop %v3368
  %v3370 = vmul.f32 %v3029, 1.442695
  %v3371 = vpow.pop %v3370
  %v3372 = vmul.f32 %v3030, 1.442695
  %v3373 = vpow.pop %v3372
  %v3374 = vmul.f32 %v3031, 1.442695
  %v3375 = vpow.pop %v3374
  %v3376 = vmul.f32 %v3032, 1.442695
  %v3377 = vpow.pop %v3376
  %v3378 = vmul.f32 %v3033, 1.442695
  %v3379 = vpow.pop %v3378
  %v3380 = vmul.f32 %v3034, 1.442695
  %v3381 = vpow.pop %v3380
  %v3382 = vmul.f32 %v3035, 1.442695
  %v3383 = vpow.pop %v3382
  %v3384 = vmul.f32 %v3036, 1.442695
  %v3385 = vpow.pop %v3384
  %v3386 = vmul.f32 %v3037, 1.442695
  %v3387 = vpow.pop %v3386
  %v3388 = vmul.f32 %v3038, 1.442695
  %v3389 = vpow.pop %v3388
  %v3390 = vmul.f32 %v3039, 1.442695
  %v3391 = vpow.pop %v3390
  %v3392 = vmul.f32 %v3040, 1.442695
  %v3393 = vpow.pop %v3392
  %v3394 = vmul.f32 %v3041, 1.442695
  %v3395 = vpow.pop %v3394
  %v3396 = vmul.f32 %v3042, 1.442695
  %v3397 = vpow.pop %v3396
  %v3398 = vmul.f32 %v3043, 1.442695
  %v3399 = vpow.pop %v3398
  %v3400 = vmul.f32 %v3044, 1.442695
  %v3401 = vpow.pop %v3400
  %v3402 = vmul.f32 %v3045, 1.442695
  %v3403 = vpow.pop %v3402
  %v3404 = vmul.f32 %v3046, 1.442695
  %v3405 = vpow.pop %v3404
  %v3406 = vmul.f32 %v3047, 1.442695
  %v3407 = vpow.pop %v3406
  %v3408 = vmul.f32 %v3048, 1.442695
  %v3409 = vpow.pop %v3408
  %v3410 = vmul.f32 %v3049, 1.442695
  %v3411 = vpow.pop %v3410
  %v3412 = vmul.f32 %v3050, 1.442695
  %v3413 = vpow.pop %v3412
  %v3414 = vmul.f32 %v3051, 1.442695
  %v3415 = vpow.pop %v3414
  %v3416 = vmul.f32 %v3052, 1.442695
  %v3417 = vpow.pop %v3416
  %v3418 = vmul.f32 %v3053, 1.442695
  %v3419 = vpow.pop %v3418
  %v3420 = vmul.f32 %v3054, 1.442695
  %v3421 = vpow.pop %v3420
  %v3422 = vmul.f32 %v3055, 1.442695
  %v3423 = vpow.pop %v3422
  %v3424 = vmul.f32 %v3056, 1.442695
  %v3425 = vpow.pop %v3424
  %v3426 = vmul.f32 %v3057, 1.442695
  %v3427 = vpow.pop %v3426
  %v3428 = vmul.f32 %v3058, 1.442695
  %v3429 = vpow.pop %v3428
  %v3430 = vmul.f32 %v3059, 1.442695
  %v3431 = vpow.pop %v3430
  %v3432 = vmul.f32 %v3060, 1.442695
  %v3433 = vpow.pop %v3432
  %v3434 = vmul.f32 %v3061, 1.442695
  %v3435 = vpow.pop %v3434
  %v3436 = vmul.f32 %v3062, 1.442695
  %v3437 = vpow.pop %v3436
  %v3438 = vmul.f32 %v3063, 1.442695
  %v3439 = vpow.pop %v3438
  %v3440 = vmul.f32 %v3064, 1.442695
  %v3441 = vpow.pop %v3440
  %v3442 = vmul.f32 %v3065, 1.442695
  %v3443 = vpow.pop %v3442
  %v3444 = vmul.f32 %v3066, 1.442695
  %v3445 = vpow.pop %v3444
  %v3446 = vmul.f32 %v3067, 1.442695
  %v3447 = vpow.pop %v3446
  %v3448 = vmul.f32 %v3068, 1.442695
  %v3449 = vpow.pop %v3448
  %v3450 = vmul.f32 %v3069, 1.442695
  %v3451 = vpow.pop %v3450
  %v3452 = vmul.f32 %v3070, 1.442695
  %v3453 = vpow.pop %v3452
  %v3454 = vmul.f32 %v3071, 1.442695
  %v3455 = vpow.pop %v3454
  %v3456 = vmul.f32 %v3072, 1.442695
  %v3457 = vpow.pop %v3456
  %v3458 = vmul.f32 %v3073, 1.442695
  %v3459 = vpow.pop %v3458
  %v3460 = vmul.f32 %v3074, 1.442695
  %v3461 = vpow.pop %v3460
  %v3462 = vmul.f32 %v3075, 1.442695
  %v3463 = vpow.pop %v3462
  %v3464 = vmul.f32 %v3076, 1.442695
  %v3465 = vpow.pop %v3464
  %v3466 = vmul.f32 %v3077, 1.442695
  %v3467 = vpow.pop %v3466
  %v3468 = vmul.f32 %v3078, 1.442695
  %v3469 = vpow.pop %v3468
  %v3470 = vmul.f32 %v3079, 1.442695
  %v3471 = vpow.pop %v3470
  %v3472 = vmul.f32 %v3080, 1.442695
  %v3473 = vpow.pop %v3472
  %v3474 = vmul.f32 %v3081, 1.442695
  %v3475 = vpow.pop %v3474
  %v3476 = vmul.f32 %v3082, 1.442695
  %v3477 = vpow.pop %v3476
  %v3478 = vmul.f32 %v3083, 1.442695
  %v3479 = vpow.pop %v3478
  %v3480 = vmul.f32 %v3084, 1.442695
  %v3481 = vpow.pop %v3480
  %v3482 = vmul.f32 %v3085, 1.442695
  %v3483 = vpow.pop %v3482
  %v3484 = vmul.f32 %v3086, 1.442695
  %v3485 = vpow.pop %v3484
  %v3486 = vmul.f32 %v3087, 1.442695
  %v3487 = vpow.pop %v3486
  %v3488 = vmul.f32 %v3088, 1.442695
  %v3489 = vpow.pop %v3488
  %v3490 = vmul.f32 %v3089, 1.442695
  %v3491 = vpow.pop %v3490
  %v3492 = vmul.f32 %v3090, 1.442695
  %v3493 = vpow.pop %v3492
  %v3494 = vmul.f32 %v3091, 1.442695
  %v3495 = vpow.pop %v3494
  %v3496 = vmul.f32 %v3092, 1.442695
  %v3497 = vpow.pop %v3496
  %v3498 = vmul.f32 %v3093, 1.442695
  %v3499 = vpow.pop %v3498
  %v3500 = vmul.f32 %v3094, 1.442695
  %v3501 = vpow.pop %v3500
  %v3502 = vmul.f32 %v3095, 1.442695
  %v3503 = vpow.pop %v3502
  %v3504 = vmul.f32 %v3096, 1.442695
  %v3505 = vpow.pop %v3504
  %v3506 = vmul.f32 %v3097, 1.442695
  %v3507 = vpow.pop %v3506
  %v3508 = vmul.f32 %v3098, 1.442695
  %v3509 = vpow.pop %v3508
  %v3510 = vmul.f32 %v3099, 1.442695
  %v3511 = vpow.pop %v3510
  %v3512 = vmul.f32 %v3100, 1.442695
  %v3513 = vpow.pop %v3512
  %v3514 = vmul.f32 %v3101, 1.442695
  %v3515 = vpow.pop %v3514
  %v3516 = vmul.f32 %v3102, 1.442695
  %v3517 = vpow.pop %v3516
  %v3518 = vmul.f32 %v3103, 1.442695
  %v3519 = vpow.pop %v3518
  %v3520 = vmul.f32 %v3104, 1.442695
  %v3521 = vpow.pop %v3520
  %v3522 = vmul.f32 %v3105, 1.442695
  %v3523 = vpow.pop %v3522
  %v3524 = vmul.f32 %v3106, 1.442695
  %v3525 = vpow.pop %v3524
  %v3526 = vmul.f32 %v3107, 1.442695
  %v3527 = vpow.pop %v3526
  %v3528 = vmul.f32 %v3108, 1.442695
  %v3529 = vpow.pop %v3528
  %v3530 = vmul.f32 %v3109, 1.442695
  %v3531 = vpow.pop %v3530
  %v3532 = vmul.f32 %v3110, 1.442695
  %v3533 = vpow.pop %v3532
  %v3534 = vmul.f32 %v3111, 1.442695
  %v3535 = vpow.pop %v3534
  %v3536 = vmul.f32 %v3112, 1.442695
  %v3537 = vpow.pop %v3536
  %v3538 = vmul.f32 %v3113, 1.442695
  %v3539 = vpow.pop %v3538
  %v3540 = vmul.f32 %v3114, 1.442695
  %v3541 = vpow.pop %v3540
  %v3542 = vmul.f32 %v3115, 1.442695
  %v3543 = vpow.pop %v3542
  %v3544 = vmul.f32 %v3116, 1.442695
  %v3545 = vpow.pop %v3544
  %v3546 = vmul.f32 %v3117, 1.442695
  %v3547 = vpow.pop %v3546
  %v3548 = vmul.f32 %v3118, 1.442695
  %v3549 = vpow.pop %v3548
  %v3550 = vmul.f32 %v3119, 1.442695
  %v3551 = vpow.pop %v3550
  %v3552 = vmul.f32 %v3120, 1.442695
  %v3553 = vpow.pop %v3552
  %v3554 = vmul.f32 %v3121, 1.442695
  %v3555 = vpow.pop %v3554
  %v3556 = vmul.f32 %v3122, 1.442695
  %v3557 = vpow.pop %v3556
  %v3558 = vmul.f32 %v3123, 1.442695
  %v3559 = vpow.pop %v3558
  %v3560 = vmul.f32 %v3124, 1.442695
  %v3561 = vpow.pop %v3560
  %v3562 = vmul.f32 %v3125, 1.442695
  %v3563 = vpow.pop %v3562
  %v3564 = vmul.f32 %v3126, 1.442695
  %v3565 = vpow.pop %v3564
  %v3566 = vmul.f32 %v3127, 1.442695
  %v3567 = vpow.pop %v3566
  %v3568 = vmul.f32 %v3128, 1.442695
  %v3569 = vpow.pop %v3568
  %v3570 = vmul.f32 %v3129, 1.442695
  %v3571 = vpow.pop %v3570
  %v3572 = vmul.f32 %v3130, 1.442695
  %v3573 = vpow.pop %v3572
  %v3574 = vmul.f32 %v3131, 1.442695
  %v3575 = vpow.pop %v3574
  %v3576 = vmul.f32 %v3132, 1.442695
  %v3577 = vpow.pop %v3576
  %v3578 = vmul.f32 %v3133, 1.442695
  %v3579 = vpow.pop %v3578
  %v3580 = vmul.f32 %v3134, 1.442695
  %v3581 = vpow.pop %v3580
  %v3582 = vmul.f32 %v3135, 1.442695
  %v3583 = vpow.pop %v3582
  %v3584 = vmul.f32 %v3136, 1.442695
  %v3585 = vpow.pop %v3584
  %v3586 = vmul.f32 %v3137, 1.442695
  %v3587 = vpow.pop %v3586
  %v3588 = vmul.f32 %v3138, 1.442695
  %v3589 = vpow.pop %v3588
  %v3590 = vmul.f32 %v3139, 1.442695
  %v3591 = vpow.pop %v3590
  %v3592 = vmul.f32 %v3140, 1.442695
  %v3593 = vpow.pop %v3592
  %v3594 = vmul.f32 %v3141, 1.442695
  %v3595 = vpow.pop %v3594
  %v3596 = vmul.f32 %v3142, 1.442695
  %v3597 = vpow.pop %v3596
  %v3598 = vmul.f32 %v3143, 1.442695
  %v3599 = vpow.pop %v3598
  %v3600 = vmul.f32 %v3144, 1.442695
  %v3601 = vpow.pop %v3600
  %v3602 = vmul.f32 %v3145, 1.442695
  %v3603 = vpow.pop %v3602
  %v3604 = vmul.f32 %v3146, 1.442695
  %v3605 = vpow.pop %v3604
  %v3606 = vmul.f32 %v3147, 1.442695
  %v3607 = vpow.pop %v3606
  %v3608 = vmul.f32 %v3148, 1.442695
  %v3609 = vpow.pop %v3608
  %v3610 = vmul.f32 %v3149, 1.442695
  %v3611 = vpow.pop %v3610
  %v3612 = vmul.f32 %v3150, 1.442695
  %v3613 = vpow.pop %v3612
  %v3614 = vmul.f32 %v3151, 1.442695
  %v3615 = vpow.pop %v3614
  %v3616 = vmul.f32 %v3152, 1.442695
  %v3617 = vpow.pop %v3616
  %v3618 = vmul.f32 %v3153, 1.442695
  %v3619 = vpow.pop %v3618
  %v3620 = vmul.f32 %v3154, 1.442695
  %v3621 = vpow.pop %v3620
  %v3622 = vmul.f32 %v3155, 1.442695
  %v3623 = vpow.pop %v3622
  %v3624 = vmul.f32 %v3156, 1.442695
  %v3625 = vpow.pop %v3624
  %v3626 = vmul.f32 %v3157, 1.442695
  %v3627 = vpow.pop %v3626
  %v3628 = vmul.f32 %v3158, 1.442695
  %v3629 = vpow.pop %v3628
  %v3630 = vmul.f32 %v3159, 1.442695
  %v3631 = vpow.pop %v3630
  %v3632 = vmul.f32 %v3160, 1.442695
  %v3633 = vpow.pop %v3632
  %v3634 = vmul.f32 %v3161, 1.442695
  %v3635 = vpow.pop %v3634
  %v3636 = vmul.f32 %v3162, 1.442695
  %v3637 = vpow.pop %v3636
  %v3638 = vmul.f32 %v3163, 1.442695
  %v3639 = vpow.pop %v3638
  %v3640 = vmul.f32 %v3164, 1.442695
  %v3641 = vpow.pop %v3640
  %v3642 = vmul.f32 %v3165, 1.442695
  %v3643 = vpow.pop %v3642
  %v3644 = vmul.f32 %v3166, 1.442695
  %v3645 = vpow.pop %v3644
  %v3646 = vmul.f32 %v3167, 1.442695
  %v3647 = vpow.pop %v3646
  %v3648 = vmul.f32 %v3168, 1.442695
  %v3649 = vpow.pop %v3648
  %v3650 = vmul.f32 %v3169, 1.442695
  %v3651 = vpow.pop %v3650
  %v3652 = vmul.f32 %v3170, 1.442695
  %v3653 = vpow.pop %v3652
  %v3654 = vmul.f32 %v3171, 1.442695
  %v3655 = vpow.pop %v3654
  %v3656 = vmul.f32 %v3172, 1.442695
  %v3657 = vpow.pop %v3656
  %v3658 = vmul.f32 %v3173, 1.442695
  %v3659 = vpow.pop %v3658
  %v3660 = vmul.f32 %v3174, 1.442695
  %v3661 = vpow.pop %v3660
  %v3662 = vmul.f32 %v3175, 1.442695
  %v3663 = vpow.pop %v3662
  %v3664 = vmul.f32 %v3176, 1.442695
  %v3665 = vpow.pop %v3664
  %v3666 = vmul.f32 %v3177, 1.442695
  %v3667 = vpow.pop %v3666
  %v3668 = vmul.f32 %v3178, 1.442695
  %v3669 = vpow.pop %v3668
  %v3670 = vmul.f32 %v3179, 1.442695
  %v3671 = vpow.pop %v3670
  %v3672 = vmul.f32 %v3180, 1.442695
  %v3673 = vpow.pop %v3672
  %v3674 = vmul.f32 %v3181, 1.442695
  %v3675 = vpow.pop %v3674
  %v3676 = vmul.f32 %v3182, 1.442695
  %v3677 = vpow.pop %v3676
  %v3678 = vmul.f32 %v3183, 1.442695
  %v3679 = vpow.pop %v3678
  %v3680 = vmul.f32 %v3184, 1.442695
  %v3681 = vpow.pop %v3680
  %v3682 = vmul.f32 %v3185, 1.442695
  %v3683 = vpow.pop %v3682
  %v3684 = vmul.f32 %v3186, 1.442695
  %v3685 = vpow.pop %v3684
  %v3686 = vmul.f32 %v3187, 1.442695
  %v3687 = vpow.pop %v3686
  %v3688 = vmul.f32 %v3188, 1.442695
  %v3689 = vpow.pop %v3688
  %v3690 = vmul.f32 %v3189, 1.442695
  %v3691 = vpow.pop %v3690
  %v3692 = vmul.f32 %v3190, 1.442695
  %v3693 = vpow.pop %v3692
  %v3694 = vmul.f32 %v3191, 1.442695
  %v3695 = vpow.pop %v3694
  %v3696 = vmul.f32 %v3192, 1.442695
  %v3697 = vpow.pop %v3696
  %v3698 = vmul.f32 %v3193, 1.442695
  %v3699 = vpow.pop %v3698
  %v3700 = vmul.f32 %v3194, 1.442695
  %v3701 = vpow.pop %v3700
  %v3702 = vmul.f32 %v3195, 1.442695
  %v3703 = vpow.pop %v3702
  %v3704 = vmul.f32 %v3196, 1.442695
  %v3705 = vpow.pop %v3704
  %v3706 = vmul.f32 %v3197, 1.442695
  %v3707 = vpow.pop %v3706
  %v3708 = vmul.f32 %v3198, 1.442695
  %v3709 = vpow.pop %v3708
  %v3710 = vmul.f32 %v3199, 1.442695
  %v3711 = vpow.pop %v3710
  %v3712 = vadd.f32 %v3201, 1.0
  %v3713 = vadd.f32 %v3203, 1.0
  %v3714 = vadd.f32 %v3205, 1.0
  %v3715 = vadd.f32 %v3207, 1.0
  %v3716 = vadd.f32 %v3209, 1.0
  %v3717 = vadd.f32 %v3211, 1.0
  %v3718 = vadd.f32 %v3213, 1.0
  %v3719 = vadd.f32 %v3215, 1.0
  %v3720 = vadd.f32 %v3217, 1.0
  %v3721 = vadd.f32 %v3219, 1.0
  %v3722 = vadd.f32 %v3221, 1.0
  %v3723 = vadd.f32 %v3223, 1.0
  %v3724 = vadd.f32 %v3225, 1.0
  %v3725 = vadd.f32 %v3227, 1.0
  %v3726 = vadd.f32 %v3229, 1.0
  %v3727 = vadd.f32 %v3231, 1.0
  %v3728 = vadd.f32 %v3233, 1.0
  %v3729 = vadd.f32 %v3235, 1.0
  %v3730 = vadd.f32 %v3237, 1.0
  %v3731 = vadd.f32 %v3239, 1.0
  %v3732 = vadd.f32 %v3241, 1.0
  %v3733 = vadd.f32 %v3243, 1.0
  %v3734 = vadd.f32 %v3245, 1.0
  %v3735 = vadd.f32 %v3247, 1.0
  %v3736 = vadd.f32 %v3249, 1.0
  %v3737 = vadd.f32 %v3251, 1.0
  %v3738 = vadd.f32 %v3253, 1.0
  %v3739 = vadd.f32 %v3255, 1.0
  %v3740 = vadd.f32 %v3257, 1.0
  %v3741 = vadd.f32 %v3259, 1.0
  %v3742 = vadd.f32 %v3261, 1.0
  %v3743 = vadd.f32 %v3263, 1.0
  %v3744 = vadd.f32 %v3265, 1.0
  %v3745 = vadd.f32 %v3267, 1.0
  %v3746 = vadd.f32 %v3269, 1.0
  %v3747 = vadd.f32 %v3271, 1.0
  %v3748 = vadd.f32 %v3273, 1.0
  %v3749 = vadd.f32 %v3275, 1.0
  %v3750 = vadd.f32 %v3277, 1.0
  %v3751 = vadd.f32 %v3279, 1.0
  %v3752 = vadd.f32 %v3281, 1.0
  %v3753 = vadd.f32 %v3283, 1.0
  %v3754 = vadd.f32 %v3285, 1.0
  %v3755 = vadd.f32 %v3287, 1.0
  %v3756 = vadd.f32 %v3289, 1.0
  %v3757 = vadd.f32 %v3291, 1.0
  %v3758 = vadd.f32 %v3293, 1.0
  %v3759 = vadd.f32 %v3295, 1.0
  %v3760 = vadd.f32 %v3297, 1.0
  %v3761 = vadd.f32 %v3299, 1.0
  %v3762 = vadd.f32 %v3301, 1.0
  %v3763 = vadd.f32 %v3303, 1.0
  %v3764 = vadd.f32 %v3305, 1.0
  %v3765 = vadd.f32 %v3307, 1.0
  %v3766 = vadd.f32 %v3309, 1.0
  %v3767 = vadd.f32 %v3311, 1.0
  %v3768 = vadd.f32 %v3313, 1.0
  %v3769 = vadd.f32 %v3315, 1.0
  %v3770 = vadd.f32 %v3317, 1.0
  %v3771 = vadd.f32 %v3319, 1.0
  %v3772 = vadd.f32 %v3321, 1.0
  %v3773 = vadd.f32 %v3323, 1.0
  %v3774 = vadd.f32 %v3325, 1.0
  %v3775 = vadd.f32 %v3327, 1.0
  %v3776 = vadd.f32 %v3329, 1.0
  %v3777 = vadd.f32 %v3331, 1.0
  %v3778 = vadd.f32 %v3333, 1.0
  %v3779 = vadd.f32 %v3335, 1.0
  %v3780 = vadd.f32 %v3337, 1.0
  %v3781 = vadd.f32 %v3339, 1.0
  %v3782 = vadd.f32 %v3341, 1.0
  %v3783 = vadd.f32 %v3343, 1.0
  %v3784 = vadd.f32 %v3345, 1.0
  %v3785 = vadd.f32 %v3347, 1.0
  %v3786 = vadd.f32 %v3349, 1.0
  %v3787 = vadd.f32 %v3351, 1.0
  %v3788 = vadd.f32 %v3353, 1.0
  %v3789 = vadd.f32 %v3355, 1.0
  %v3790 = vadd.f32 %v3357, 1.0
  %v3791 = vadd.f32 %v3359, 1.0
  %v3792 = vadd.f32 %v3361, 1.0
  %v3793 = vadd.f32 %v3363, 1.0
  %v3794 = vadd.f32 %v3365, 1.0
  %v3795 = vadd.f32 %v3367, 1.0
  %v3796 = vadd.f32 %v3369, 1.0
  %v3797 = vadd.f32 %v3371, 1.0
  %v3798 = vadd.f32 %v3373, 1.0
  %v3799 = vadd.f32 %v3375, 1.0
  %v3800 = vadd.f32 %v3377, 1.0
  %v3801 = vadd.f32 %v3379, 1.0
  %v3802 = vadd.f32 %v3381, 1.0
  %v3803 = vadd.f32 %v3383, 1.0
  %v3804 = vadd.f32 %v3385, 1.0
  %v3805 = vadd.f32 %v3387, 1.0
  %v3806 = vadd.f32 %v3389, 1.0
  %v3807 = vadd.f32 %v3391, 1.0
  %v3808 = vadd.f32 %v3393, 1.0
  %v3809 = vadd.f32 %v3395, 1.0
  %v3810 = vadd.f32 %v3397, 1.0
  %v3811 = vadd.f32 %v3399, 1.0
  %v3812 = vadd.f32 %v3401, 1.0
  %v3813 = vadd.f32 %v3403, 1.0
  %v3814 = vadd.f32 %v3405, 1.0
  %v3815 = vadd.f32 %v3407, 1.0
  %v3816 = vadd.f32 %v3409, 1.0
  %v3817 = vadd.f32 %v3411, 1.0
  %v3818 = vadd.f32 %v3413, 1.0
  %v3819 = vadd.f32 %v3415, 1.0
  %v3820 = vadd.f32 %v3417, 1.0
  %v3821 = vadd.f32 %v3419, 1.0
  %v3822 = vadd.f32 %v3421, 1.0
  %v3823 = vadd.f32 %v3423, 1.0
  %v3824 = vadd.f32 %v3425, 1.0
  %v3825 = vadd.f32 %v3427, 1.0
  %v3826 = vadd.f32 %v3429, 1.0
  %v3827 = vadd.f32 %v3431, 1.0
  %v3828 = vadd.f32 %v3433, 1.0
  %v3829 = vadd.f32 %v3435, 1.0
  %v3830 = vadd.f32 %v3437, 1.0
  %v3831 = vadd.f32 %v3439, 1.0
  %v3832 = vadd.f32 %v3441, 1.0
  %v3833 = vadd.f32 %v3443, 1.0
  %v3834 = vadd.f32 %v3445, 1.0
  %v3835 = vadd.f32 %v3447, 1.0
  %v3836 = vadd.f32 %v3449, 1.0
  %v3837 = vadd.f32 %v3451, 1.0
  %v3838 = vadd.f32 %v3453, 1.0
  %v3839 = vadd.f32 %v3455, 1.0
  %v3840 = vadd.f32 %v3457, 1.0
  %v3841 = vadd.f32 %v3459, 1.0
  %v3842 = vadd.f32 %v3461, 1.0
  %v3843 = vadd.f32 %v3463, 1.0
  %v3844 = vadd.f32 %v3465, 1.0
  %v3845 = vadd.f32 %v3467, 1.0
  %v3846 = vadd.f32 %v3469, 1.0
  %v3847 = vadd.f32 %v3471, 1.0
  %v3848 = vadd.f32 %v3473, 1.0
  %v3849 = vadd.f32 %v3475, 1.0
  %v3850 = vadd.f32 %v3477, 1.0
  %v3851 = vadd.f32 %v3479, 1.0
  %v3852 = vadd.f32 %v3481, 1.0
  %v3853 = vadd.f32 %v3483, 1.0
  %v3854 = vadd.f32 %v3485, 1.0
  %v3855 = vadd.f32 %v3487, 1.0
  %v3856 = vadd.f32 %v3489, 1.0
  %v3857 = vadd.f32 %v3491, 1.0
  %v3858 = vadd.f32 %v3493, 1.0
  %v3859 = vadd.f32 %v3495, 1.0
  %v3860 = vadd.f32 %v3497, 1.0
  %v3861 = vadd.f32 %v3499, 1.0
  %v3862 = vadd.f32 %v3501, 1.0
  %v3863 = vadd.f32 %v3503, 1.0
  %v3864 = vadd.f32 %v3505, 1.0
  %v3865 = vadd.f32 %v3507, 1.0
  %v3866 = vadd.f32 %v3509, 1.0
  %v3867 = vadd.f32 %v3511, 1.0
  %v3868 = vadd.f32 %v3513, 1.0
  %v3869 = vadd.f32 %v3515, 1.0
  %v3870 = vadd.f32 %v3517, 1.0
  %v3871 = vadd.f32 %v3519, 1.0
  %v3872 = vadd.f32 %v3521, 1.0
  %v3873 = vadd.f32 %v3523, 1.0
  %v3874 = vadd.f32 %v3525, 1.0
  %v3875 = vadd.f32 %v3527, 1.0
  %v3876 = vadd.f32 %v3529, 1.0
  %v3877 = vadd.f32 %v3531, 1.0
  %v3878 = vadd.f32 %v3533, 1.0
  %v3879 = vadd.f32 %v3535, 1.0
  %v3880 = vadd.f32 %v3537, 1.0
  %v3881 = vadd.f32 %v3539, 1.0
  %v3882 = vadd.f32 %v3541, 1.0
  %v3883 = vadd.f32 %v3543, 1.0
  %v3884 = vadd.f32 %v3545, 1.0
  %v3885 = vadd.f32 %v3547, 1.0
  %v3886 = vadd.f32 %v3549, 1.0
  %v3887 = vadd.f32 %v3551, 1.0
  %v3888 = vadd.f32 %v3553, 1.0
  %v3889 = vadd.f32 %v3555, 1.0
  %v3890 = vadd.f32 %v3557, 1.0
  %v3891 = vadd.f32 %v3559, 1.0
  %v3892 = vadd.f32 %v3561, 1.0
  %v3893 = vadd.f32 %v3563, 1.0
  %v3894 = vadd.f32 %v3565, 1.0
  %v3895 = vadd.f32 %v3567, 1.0
  %v3896 = vadd.f32 %v3569, 1.0
  %v3897 = vadd.f32 %v3571, 1.0
  %v3898 = vadd.f32 %v3573, 1.0
  %v3899 = vadd.f32 %v3575, 1.0
  %v3900 = vadd.f32 %v3577, 1.0
  %v3901 = vadd.f32 %v3579, 1.0
  %v3902 = vadd.f32 %v3581, 1.0
  %v3903 = vadd.f32 %v3583, 1.0
  %v3904 = vadd.f32 %v3585, 1.0
  %v3905 = vadd.f32 %v3587, 1.0
  %v3906 = vadd.f32 %v3589, 1.0
  %v3907 = vadd.f32 %v3591, 1.0
  %v3908 = vadd.f32 %v3593, 1.0
  %v3909 = vadd.f32 %v3595, 1.0
  %v3910 = vadd.f32 %v3597, 1.0
  %v3911 = vadd.f32 %v3599, 1.0
  %v3912 = vadd.f32 %v3601, 1.0
  %v3913 = vadd.f32 %v3603, 1.0
  %v3914 = vadd.f32 %v3605, 1.0
  %v3915 = vadd.f32 %v3607, 1.0
  %v3916 = vadd.f32 %v3609, 1.0
  %v3917 = vadd.f32 %v3611, 1.0
  %v3918 = vadd.f32 %v3613, 1.0
  %v3919 = vadd.f32 %v3615, 1.0
  %v3920 = vadd.f32 %v3617, 1.0
  %v3921 = vadd.f32 %v3619, 1.0
  %v3922 = vadd.f32 %v3621, 1.0
  %v3923 = vadd.f32 %v3623, 1.0
  %v3924 = vadd.f32 %v3625, 1.0
  %v3925 = vadd.f32 %v3627, 1.0
  %v3926 = vadd.f32 %v3629, 1.0
  %v3927 = vadd.f32 %v3631, 1.0
  %v3928 = vadd.f32 %v3633, 1.0
  %v3929 = vadd.f32 %v3635, 1.0
  %v3930 = vadd.f32 %v3637, 1.0
  %v3931 = vadd.f32 %v3639, 1.0
  %v3932 = vadd.f32 %v3641, 1.0
  %v3933 = vadd.f32 %v3643, 1.0
  %v3934 = vadd.f32 %v3645, 1.0
  %v3935 = vadd.f32 %v3647, 1.0
  %v3936 = vadd.f32 %v3649, 1.0
  %v3937 = vadd.f32 %v3651, 1.0
  %v3938 = vadd.f32 %v3653, 1.0
  %v3939 = vadd.f32 %v3655, 1.0
  %v3940 = vadd.f32 %v3657, 1.0
  %v3941 = vadd.f32 %v3659, 1.0
  %v3942 = vadd.f32 %v3661, 1.0
  %v3943 = vadd.f32 %v3663, 1.0
  %v3944 = vadd.f32 %v3665, 1.0
  %v3945 = vadd.f32 %v3667, 1.0
  %v3946 = vadd.f32 %v3669, 1.0
  %v3947 = vadd.f32 %v3671, 1.0
  %v3948 = vadd.f32 %v3673, 1.0
  %v3949 = vadd.f32 %v3675, 1.0
  %v3950 = vadd.f32 %v3677, 1.0
  %v3951 = vadd.f32 %v3679, 1.0
  %v3952 = vadd.f32 %v3681, 1.0
  %v3953 = vadd.f32 %v3683, 1.0
  %v3954 = vadd.f32 %v3685, 1.0
  %v3955 = vadd.f32 %v3687, 1.0
  %v3956 = vadd.f32 %v3689, 1.0
  %v3957 = vadd.f32 %v3691, 1.0
  %v3958 = vadd.f32 %v3693, 1.0
  %v3959 = vadd.f32 %v3695, 1.0
  %v3960 = vadd.f32 %v3697, 1.0
  %v3961 = vadd.f32 %v3699, 1.0
  %v3962 = vadd.f32 %v3701, 1.0
  %v3963 = vadd.f32 %v3703, 1.0
  %v3964 = vadd.f32 %v3705, 1.0
  %v3965 = vadd.f32 %v3707, 1.0
  %v3966 = vadd.f32 %v3709, 1.0
  %v3967 = vadd.f32 %v3711, 1.0
  %v3968 = vrcp.pop %v3712
  %v3969 = vmul.f32 1.0, %v3968
  %v3970 = vrcp.pop %v3713
  %v3971 = vmul.f32 1.0, %v3970
  %v3972 = vrcp.pop %v3714
  %v3973 = vmul.f32 1.0, %v3972
  %v3974 = vrcp.pop %v3715
  %v3975 = vmul.f32 1.0, %v3974
  %v3976 = vrcp.pop %v3716
  %v3977 = vmul.f32 1.0, %v3976
  %v3978 = vrcp.pop %v3717
  %v3979 = vmul.f32 1.0, %v3978
  %v3980 = vrcp.pop %v3718
  %v3981 = vmul.f32 1.0, %v3980
  %v3982 = vrcp.pop %v3719
  %v3983 = vmul.f32 1.0, %v3982
  %v3984 = vrcp.pop %v3720
  %v3985 = vmul.f32 1.0, %v3984
  %v3986 = vrcp.pop %v3721
  %v3987 = vmul.f32 1.0, %v3986
  %v3988 = vrcp.pop %v3722
  %v3989 = vmul.f32 1.0, %v3988
  %v3990 = vrcp.pop %v3723
  %v3991 = vmul.f32 1.0, %v3990
  %v3992 = vrcp.pop %v3724
  %v3993 = vmul.f32 1.0, %v3992
  %v3994 = vrcp.pop %v3725
  %v3995 = vmul.f32 1.0, %v3994
  %v3996 = vrcp.pop %v3726
  %v3997 = vmul.f32 1.0, %v3996
  %v3998 = vrcp.pop %v3727
  %v3999 = vmul.f32 1.0, %v3998
  %v4000 = vrcp.pop %v3728
  %v4001 = vmul.f32 1.0, %v4000
  %v4002 = vrcp.pop %v3729
  %v4003 = vmul.f32 1.0, %v4002
  %v4004 = vrcp.pop %v3730
  %v4005 = vmul.f32 1.0, %v4004
  %v4006 = vrcp.pop %v3731
  %v4007 = vmul.f32 1.0, %v4006
  %v4008 = vrcp.pop %v3732
  %v4009 = vmul.f32 1.0, %v4008
  %v4010 = vrcp.pop %v3733
  %v4011 = vmul.f32 1.0, %v4010
  %v4012 = vrcp.pop %v3734
  %v4013 = vmul.f32 1.0, %v4012
  %v4014 = vrcp.pop %v3735
  %v4015 = vmul.f32 1.0, %v4014
  %v4016 = vrcp.pop %v3736
  %v4017 = vmul.f32 1.0, %v4016
  %v4018 = vrcp.pop %v3737
  %v4019 = vmul.f32 1.0, %v4018
  %v4020 = vrcp.pop %v3738
  %v4021 = vmul.f32 1.0, %v4020
  %v4022 = vrcp.pop %v3739
  %v4023 = vmul.f32 1.0, %v4022
  %v4024 = vrcp.pop %v3740
  %v4025 = vmul.f32 1.0, %v4024
  %v4026 = vrcp.pop %v3741
  %v4027 = vmul.f32 1.0, %v4026
  %v4028 = vrcp.pop %v3742
  %v4029 = vmul.f32 1.0, %v4028
  %v4030 = vrcp.pop %v3743
  %v4031 = vmul.f32 1.0, %v4030
  %v4032 = vrcp.pop %v3744
  %v4033 = vmul.f32 1.0, %v4032
  %v4034 = vrcp.pop %v3745
  %v4035 = vmul.f32 1.0, %v4034
  %v4036 = vrcp.pop %v3746
  %v4037 = vmul.f32 1.0, %v4036
  %v4038 = vrcp.pop %v3747
  %v4039 = vmul.f32 1.0, %v4038
  %v4040 = vrcp.pop %v3748
  %v4041 = vmul.f32 1.0, %v4040
  %v4042 = vrcp.pop %v3749
  %v4043 = vmul.f32 1.0, %v4042
  %v4044 = vrcp.pop %v3750
  %v4045 = vmul.f32 1.0, %v4044
  %v4046 = vrcp.pop %v3751
  %v4047 = vmul.f32 1.0, %v4046
  %v4048 = vrcp.pop %v3752
  %v4049 = vmul.f32 1.0, %v4048
  %v4050 = vrcp.pop %v3753
  %v4051 = vmul.f32 1.0, %v4050
  %v4052 = vrcp.pop %v3754
  %v4053 = vmul.f32 1.0, %v4052
  %v4054 = vrcp.pop %v3755
  %v4055 = vmul.f32 1.0, %v4054
  %v4056 = vrcp.pop %v3756
  %v4057 = vmul.f32 1.0, %v4056
  %v4058 = vrcp.pop %v3757
  %v4059 = vmul.f32 1.0, %v4058
  %v4060 = vrcp.pop %v3758
  %v4061 = vmul.f32 1.0, %v4060
  %v4062 = vrcp.pop %v3759
  %v4063 = vmul.f32 1.0, %v4062
  %v4064 = vrcp.pop %v3760
  %v4065 = vmul.f32 1.0, %v4064
  %v4066 = vrcp.pop %v3761
  %v4067 = vmul.f32 1.0, %v4066
  %v4068 = vrcp.pop %v3762
  %v4069 = vmul.f32 1.0, %v4068
  %v4070 = vrcp.pop %v3763
  %v4071 = vmul.f32 1.0, %v4070
  %v4072 = vrcp.pop %v3764
  %v4073 = vmul.f32 1.0, %v4072
  %v4074 = vrcp.pop %v3765
  %v4075 = vmul.f32 1.0, %v4074
  %v4076 = vrcp.pop %v3766
  %v4077 = vmul.f32 1.0, %v4076
  %v4078 = vrcp.pop %v3767
  %v4079 = vmul.f32 1.0, %v4078
  %v4080 = vrcp.pop %v3768
  %v4081 = vmul.f32 1.0, %v4080
  %v4082 = vrcp.pop %v3769
  %v4083 = vmul.f32 1.0, %v4082
  %v4084 = vrcp.pop %v3770
  %v4085 = vmul.f32 1.0, %v4084
  %v4086 = vrcp.pop %v3771
  %v4087 = vmul.f32 1.0, %v4086
  %v4088 = vrcp.pop %v3772
  %v4089 = vmul.f32 1.0, %v4088
  %v4090 = vrcp.pop %v3773
  %v4091 = vmul.f32 1.0, %v4090
  %v4092 = vrcp.pop %v3774
  %v4093 = vmul.f32 1.0, %v4092
  %v4094 = vrcp.pop %v3775
  %v4095 = vmul.f32 1.0, %v4094
  %v4096 = vrcp.pop %v3776
  %v4097 = vmul.f32 1.0, %v4096
  %v4098 = vrcp.pop %v3777
  %v4099 = vmul.f32 1.0, %v4098
  %v4100 = vrcp.pop %v3778
  %v4101 = vmul.f32 1.0, %v4100
  %v4102 = vrcp.pop %v3779
  %v4103 = vmul.f32 1.0, %v4102
  %v4104 = vrcp.pop %v3780
  %v4105 = vmul.f32 1.0, %v4104
  %v4106 = vrcp.pop %v3781
  %v4107 = vmul.f32 1.0, %v4106
  %v4108 = vrcp.pop %v3782
  %v4109 = vmul.f32 1.0, %v4108
  %v4110 = vrcp.pop %v3783
  %v4111 = vmul.f32 1.0, %v4110
  %v4112 = vrcp.pop %v3784
  %v4113 = vmul.f32 1.0, %v4112
  %v4114 = vrcp.pop %v3785
  %v4115 = vmul.f32 1.0, %v4114
  %v4116 = vrcp.pop %v3786
  %v4117 = vmul.f32 1.0, %v4116
  %v4118 = vrcp.pop %v3787
  %v4119 = vmul.f32 1.0, %v4118
  %v4120 = vrcp.pop %v3788
  %v4121 = vmul.f32 1.0, %v4120
  %v4122 = vrcp.pop %v3789
  %v4123 = vmul.f32 1.0, %v4122
  %v4124 = vrcp.pop %v3790
  %v4125 = vmul.f32 1.0, %v4124
  %v4126 = vrcp.pop %v3791
  %v4127 = vmul.f32 1.0, %v4126
  %v4128 = vrcp.pop %v3792
  %v4129 = vmul.f32 1.0, %v4128
  %v4130 = vrcp.pop %v3793
  %v4131 = vmul.f32 1.0, %v4130
  %v4132 = vrcp.pop %v3794
  %v4133 = vmul.f32 1.0, %v4132
  %v4134 = vrcp.pop %v3795
  %v4135 = vmul.f32 1.0, %v4134
  %v4136 = vrcp.pop %v3796
  %v4137 = vmul.f32 1.0, %v4136
  %v4138 = vrcp.pop %v3797
  %v4139 = vmul.f32 1.0, %v4138
  %v4140 = vrcp.pop %v3798
  %v4141 = vmul.f32 1.0, %v4140
  %v4142 = vrcp.pop %v3799
  %v4143 = vmul.f32 1.0, %v4142
  %v4144 = vrcp.pop %v3800
  %v4145 = vmul.f32 1.0, %v4144
  %v4146 = vrcp.pop %v3801
  %v4147 = vmul.f32 1.0, %v4146
  %v4148 = vrcp.pop %v3802
  %v4149 = vmul.f32 1.0, %v4148
  %v4150 = vrcp.pop %v3803
  %v4151 = vmul.f32 1.0, %v4150
  %v4152 = vrcp.pop %v3804
  %v4153 = vmul.f32 1.0, %v4152
  %v4154 = vrcp.pop %v3805
  %v4155 = vmul.f32 1.0, %v4154
  %v4156 = vrcp.pop %v3806
  %v4157 = vmul.f32 1.0, %v4156
  %v4158 = vrcp.pop %v3807
  %v4159 = vmul.f32 1.0, %v4158
  %v4160 = vrcp.pop %v3808
  %v4161 = vmul.f32 1.0, %v4160
  %v4162 = vrcp.pop %v3809
  %v4163 = vmul.f32 1.0, %v4162
  %v4164 = vrcp.pop %v3810
  %v4165 = vmul.f32 1.0, %v4164
  %v4166 = vrcp.pop %v3811
  %v4167 = vmul.f32 1.0, %v4166
  %v4168 = vrcp.pop %v3812
  %v4169 = vmul.f32 1.0, %v4168
  %v4170 = vrcp.pop %v3813
  %v4171 = vmul.f32 1.0, %v4170
  %v4172 = vrcp.pop %v3814
  %v4173 = vmul.f32 1.0, %v4172
  %v4174 = vrcp.pop %v3815
  %v4175 = vmul.f32 1.0, %v4174
  %v4176 = vrcp.pop %v3816
  %v4177 = vmul.f32 1.0, %v4176
  %v4178 = vrcp.pop %v3817
  %v4179 = vmul.f32 1.0, %v4178
  %v4180 = vrcp.pop %v3818
  %v4181 = vmul.f32 1.0, %v4180
  %v4182 = vrcp.pop %v3819
  %v4183 = vmul.f32 1.0, %v4182
  %v4184 = vrcp.pop %v3820
  %v4185 = vmul.f32 1.0, %v4184
  %v4186 = vrcp.pop %v3821
  %v4187 = vmul.f32 1.0, %v4186
  %v4188 = vrcp.pop %v3822
  %v4189 = vmul.f32 1.0, %v4188
  %v4190 = vrcp.pop %v3823
  %v4191 = vmul.f32 1.0, %v4190
  %v4192 = vrcp.pop %v3824
  %v4193 = vmul.f32 1.0, %v4192
  %v4194 = vrcp.pop %v3825
  %v4195 = vmul.f32 1.0, %v4194
  %v4196 = vrcp.pop %v3826
  %v4197 = vmul.f32 1.0, %v4196
  %v4198 = vrcp.pop %v3827
  %v4199 = vmul.f32 1.0, %v4198
  %v4200 = vrcp.pop %v3828
  %v4201 = vmul.f32 1.0, %v4200
  %v4202 = vrcp.pop %v3829
  %v4203 = vmul.f32 1.0, %v4202
  %v4204 = vrcp.pop %v3830
  %v4205 = vmul.f32 1.0, %v4204
  %v4206 = vrcp.pop %v3831
  %v4207 = vmul.f32 1.0, %v4206
  %v4208 = vrcp.pop %v3832
  %v4209 = vmul.f32 1.0, %v4208
  %v4210 = vrcp.pop %v3833
  %v4211 = vmul.f32 1.0, %v4210
  %v4212 = vrcp.pop %v3834
  %v4213 = vmul.f32 1.0, %v4212
  %v4214 = vrcp.pop %v3835
  %v4215 = vmul.f32 1.0, %v4214
  %v4216 = vrcp.pop %v3836
  %v4217 = vmul.f32 1.0, %v4216
  %v4218 = vrcp.pop %v3837
  %v4219 = vmul.f32 1.0, %v4218
  %v4220 = vrcp.pop %v3838
  %v4221 = vmul.f32 1.0, %v4220
  %v4222 = vrcp.pop %v3839
  %v4223 = vmul.f32 1.0, %v4222
  %v4224 = vrcp.pop %v3840
  %v4225 = vmul.f32 1.0, %v4224
  %v4226 = vrcp.pop %v3841
  %v4227 = vmul.f32 1.0, %v4226
  %v4228 = vrcp.pop %v3842
  %v4229 = vmul.f32 1.0, %v4228
  %v4230 = vrcp.pop %v3843
  %v4231 = vmul.f32 1.0, %v4230
  %v4232 = vrcp.pop %v3844
  %v4233 = vmul.f32 1.0, %v4232
  %v4234 = vrcp.pop %v3845
  %v4235 = vmul.f32 1.0, %v4234
  %v4236 = vrcp.pop %v3846
  %v4237 = vmul.f32 1.0, %v4236
  %v4238 = vrcp.pop %v3847
  %v4239 = vmul.f32 1.0, %v4238
  %v4240 = vrcp.pop %v3848
  %v4241 = vmul.f32 1.0, %v4240
  %v4242 = vrcp.pop %v3849
  %v4243 = vmul.f32 1.0, %v4242
  %v4244 = vrcp.pop %v3850
  %v4245 = vmul.f32 1.0, %v4244
  %v4246 = vrcp.pop %v3851
  %v4247 = vmul.f32 1.0, %v4246
  %v4248 = vrcp.pop %v3852
  %v4249 = vmul.f32 1.0, %v4248
  %v4250 = vrcp.pop %v3853
  %v4251 = vmul.f32 1.0, %v4250
  %v4252 = vrcp.pop %v3854
  %v4253 = vmul.f32 1.0, %v4252
  %v4254 = vrcp.pop %v3855
  %v4255 = vmul.f32 1.0, %v4254
  %v4256 = vrcp.pop %v3856
  %v4257 = vmul.f32 1.0, %v4256
  %v4258 = vrcp.pop %v3857
  %v4259 = vmul.f32 1.0, %v4258
  %v4260 = vrcp.pop %v3858
  %v4261 = vmul.f32 1.0, %v4260
  %v4262 = vrcp.pop %v3859
  %v4263 = vmul.f32 1.0, %v4262
  %v4264 = vrcp.pop %v3860
  %v4265 = vmul.f32 1.0, %v4264
  %v4266 = vrcp.pop %v3861
  %v4267 = vmul.f32 1.0, %v4266
  %v4268 = vrcp.pop %v3862
  %v4269 = vmul.f32 1.0, %v4268
  %v4270 = vrcp.pop %v3863
  %v4271 = vmul.f32 1.0, %v4270
  %v4272 = vrcp.pop %v3864
  %v4273 = vmul.f32 1.0, %v4272
  %v4274 = vrcp.pop %v3865
  %v4275 = vmul.f32 1.0, %v4274
  %v4276 = vrcp.pop %v3866
  %v4277 = vmul.f32 1.0, %v4276
  %v4278 = vrcp.pop %v3867
  %v4279 = vmul.f32 1.0, %v4278
  %v4280 = vrcp.pop %v3868
  %v4281 = vmul.f32 1.0, %v4280
  %v4282 = vrcp.pop %v3869
  %v4283 = vmul.f32 1.0, %v4282
  %v4284 = vrcp.pop %v3870
  %v4285 = vmul.f32 1.0, %v4284
  %v4286 = vrcp.pop %v3871
  %v4287 = vmul.f32 1.0, %v4286
  %v4288 = vrcp.pop %v3872
  %v4289 = vmul.f32 1.0, %v4288
  %v4290 = vrcp.pop %v3873
  %v4291 = vmul.f32 1.0, %v4290
  %v4292 = vrcp.pop %v3874
  %v4293 = vmul.f32 1.0, %v4292
  %v4294 = vrcp.pop %v3875
  %v4295 = vmul.f32 1.0, %v4294
  %v4296 = vrcp.pop %v3876
  %v4297 = vmul.f32 1.0, %v4296
  %v4298 = vrcp.pop %v3877
  %v4299 = vmul.f32 1.0, %v4298
  %v4300 = vrcp.pop %v3878
  %v4301 = vmul.f32 1.0, %v4300
  %v4302 = vrcp.pop %v3879
  %v4303 = vmul.f32 1.0, %v4302
  %v4304 = vrcp.pop %v3880
  %v4305 = vmul.f32 1.0, %v4304
  %v4306 = vrcp.pop %v3881
  %v4307 = vmul.f32 1.0, %v4306
  %v4308 = vrcp.pop %v3882
  %v4309 = vmul.f32 1.0, %v4308
  %v4310 = vrcp.pop %v3883
  %v4311 = vmul.f32 1.0, %v4310
  %v4312 = vrcp.pop %v3884
  %v4313 = vmul.f32 1.0, %v4312
  %v4314 = vrcp.pop %v3885
  %v4315 = vmul.f32 1.0, %v4314
  %v4316 = vrcp.pop %v3886
  %v4317 = vmul.f32 1.0, %v4316
  %v4318 = vrcp.pop %v3887
  %v4319 = vmul.f32 1.0, %v4318
  %v4320 = vrcp.pop %v3888
  %v4321 = vmul.f32 1.0, %v4320
  %v4322 = vrcp.pop %v3889
  %v4323 = vmul.f32 1.0, %v4322
  %v4324 = vrcp.pop %v3890
  %v4325 = vmul.f32 1.0, %v4324
  %v4326 = vrcp.pop %v3891
  %v4327 = vmul.f32 1.0, %v4326
  %v4328 = vrcp.pop %v3892
  %v4329 = vmul.f32 1.0, %v4328
  %v4330 = vrcp.pop %v3893
  %v4331 = vmul.f32 1.0, %v4330
  %v4332 = vrcp.pop %v3894
  %v4333 = vmul.f32 1.0, %v4332
  %v4334 = vrcp.pop %v3895
  %v4335 = vmul.f32 1.0, %v4334
  %v4336 = vrcp.pop %v3896
  %v4337 = vmul.f32 1.0, %v4336
  %v4338 = vrcp.pop %v3897
  %v4339 = vmul.f32 1.0, %v4338
  %v4340 = vrcp.pop %v3898
  %v4341 = vmul.f32 1.0, %v4340
  %v4342 = vrcp.pop %v3899
  %v4343 = vmul.f32 1.0, %v4342
  %v4344 = vrcp.pop %v3900
  %v4345 = vmul.f32 1.0, %v4344
  %v4346 = vrcp.pop %v3901
  %v4347 = vmul.f32 1.0, %v4346
  %v4348 = vrcp.pop %v3902
  %v4349 = vmul.f32 1.0, %v4348
  %v4350 = vrcp.pop %v3903
  %v4351 = vmul.f32 1.0, %v4350
  %v4352 = vrcp.pop %v3904
  %v4353 = vmul.f32 1.0, %v4352
  %v4354 = vrcp.pop %v3905
  %v4355 = vmul.f32 1.0, %v4354
  %v4356 = vrcp.pop %v3906
  %v4357 = vmul.f32 1.0, %v4356
  %v4358 = vrcp.pop %v3907
  %v4359 = vmul.f32 1.0, %v4358
  %v4360 = vrcp.pop %v3908
  %v4361 = vmul.f32 1.0, %v4360
  %v4362 = vrcp.pop %v3909
  %v4363 = vmul.f32 1.0, %v4362
  %v4364 = vrcp.pop %v3910
  %v4365 = vmul.f32 1.0, %v4364
  %v4366 = vrcp.pop %v3911
  %v4367 = vmul.f32 1.0, %v4366
  %v4368 = vrcp.pop %v3912
  %v4369 = vmul.f32 1.0, %v4368
  %v4370 = vrcp.pop %v3913
  %v4371 = vmul.f32 1.0, %v4370
  %v4372 = vrcp.pop %v3914
  %v4373 = vmul.f32 1.0, %v4372
  %v4374 = vrcp.pop %v3915
  %v4375 = vmul.f32 1.0, %v4374
  %v4376 = vrcp.pop %v3916
  %v4377 = vmul.f32 1.0, %v4376
  %v4378 = vrcp.pop %v3917
  %v4379 = vmul.f32 1.0, %v4378
  %v4380 = vrcp.pop %v3918
  %v4381 = vmul.f32 1.0, %v4380
  %v4382 = vrcp.pop %v3919
  %v4383 = vmul.f32 1.0, %v4382
  %v4384 = vrcp.pop %v3920
  %v4385 = vmul.f32 1.0, %v4384
  %v4386 = vrcp.pop %v3921
  %v4387 = vmul.f32 1.0, %v4386
  %v4388 = vrcp.pop %v3922
  %v4389 = vmul.f32 1.0, %v4388
  %v4390 = vrcp.pop %v3923
  %v4391 = vmul.f32 1.0, %v4390
  %v4392 = vrcp.pop %v3924
  %v4393 = vmul.f32 1.0, %v4392
  %v4394 = vrcp.pop %v3925
  %v4395 = vmul.f32 1.0, %v4394
  %v4396 = vrcp.pop %v3926
  %v4397 = vmul.f32 1.0, %v4396
  %v4398 = vrcp.pop %v3927
  %v4399 = vmul.f32 1.0, %v4398
  %v4400 = vrcp.pop %v3928
  %v4401 = vmul.f32 1.0, %v4400
  %v4402 = vrcp.pop %v3929
  %v4403 = vmul.f32 1.0, %v4402
  %v4404 = vrcp.pop %v3930
  %v4405 = vmul.f32 1.0, %v4404
  %v4406 = vrcp.pop %v3931
  %v4407 = vmul.f32 1.0, %v4406
  %v4408 = vrcp.pop %v3932
  %v4409 = vmul.f32 1.0, %v4408
  %v4410 = vrcp.pop %v3933
  %v4411 = vmul.f32 1.0, %v4410
  %v4412 = vrcp.pop %v3934
  %v4413 = vmul.f32 1.0, %v4412
  %v4414 = vrcp.pop %v3935
  %v4415 = vmul.f32 1.0, %v4414
  %v4416 = vrcp.pop %v3936
  %v4417 = vmul.f32 1.0, %v4416
  %v4418 = vrcp.pop %v3937
  %v4419 = vmul.f32 1.0, %v4418
  %v4420 = vrcp.pop %v3938
  %v4421 = vmul.f32 1.0, %v4420
  %v4422 = vrcp.pop %v3939
  %v4423 = vmul.f32 1.0, %v4422
  %v4424 = vrcp.pop %v3940
  %v4425 = vmul.f32 1.0, %v4424
  %v4426 = vrcp.pop %v3941
  %v4427 = vmul.f32 1.0, %v4426
  %v4428 = vrcp.pop %v3942
  %v4429 = vmul.f32 1.0, %v4428
  %v4430 = vrcp.pop %v3943
  %v4431 = vmul.f32 1.0, %v4430
  %v4432 = vrcp.pop %v3944
  %v4433 = vmul.f32 1.0, %v4432
  %v4434 = vrcp.pop %v3945
  %v4435 = vmul.f32 1.0, %v4434
  %v4436 = vrcp.pop %v3946
  %v4437 = vmul.f32 1.0, %v4436
  %v4438 = vrcp.pop %v3947
  %v4439 = vmul.f32 1.0, %v4438
  %v4440 = vrcp.pop %v3948
  %v4441 = vmul.f32 1.0, %v4440
  %v4442 = vrcp.pop %v3949
  %v4443 = vmul.f32 1.0, %v4442
  %v4444 = vrcp.pop %v3950
  %v4445 = vmul.f32 1.0, %v4444
  %v4446 = vrcp.pop %v3951
  %v4447 = vmul.f32 1.0, %v4446
  %v4448 = vrcp.pop %v3952
  %v4449 = vmul.f32 1.0, %v4448
  %v4450 = vrcp.pop %v3953
  %v4451 = vmul.f32 1.0, %v4450
  %v4452 = vrcp.pop %v3954
  %v4453 = vmul.f32 1.0, %v4452
  %v4454 = vrcp.pop %v3955
  %v4455 = vmul.f32 1.0, %v4454
  %v4456 = vrcp.pop %v3956
  %v4457 = vmul.f32 1.0, %v4456
  %v4458 = vrcp.pop %v3957
  %v4459 = vmul.f32 1.0, %v4458
  %v4460 = vrcp.pop %v3958
  %v4461 = vmul.f32 1.0, %v4460
  %v4462 = vrcp.pop %v3959
  %v4463 = vmul.f32 1.0, %v4462
  %v4464 = vrcp.pop %v3960
  %v4465 = vmul.f32 1.0, %v4464
  %v4466 = vrcp.pop %v3961
  %v4467 = vmul.f32 1.0, %v4466
  %v4468 = vrcp.pop %v3962
  %v4469 = vmul.f32 1.0, %v4468
  %v4470 = vrcp.pop %v3963
  %v4471 = vmul.f32 1.0, %v4470
  %v4472 = vrcp.pop %v3964
  %v4473 = vmul.f32 1.0, %v4472
  %v4474 = vrcp.pop %v3965
  %v4475 = vmul.f32 1.0, %v4474
  %v4476 = vrcp.pop %v3966
  %v4477 = vmul.f32 1.0, %v4476
  %v4478 = vrcp.pop %v3967
  %v4479 = vmul.f32 1.0, %v4478
  %4480 = vst [vmem:[%s3] sm:$0xff] %v3969
  %4481 = vst [vmem:[%s3 + $0x8] sm:$0xff] %v3971
  %4482 = vst [vmem:[%s3 + $0x10] sm:$0xff] %v3973
  %4483 = vst [vmem:[%s3 + $0x18] sm:$0xff] %v3975
  %4484 = vst [vmem:[%s3 + $0x20] sm:$0xff] %v3977
  %4485 = vst [vmem:[%s3 + $0x28] sm:$0xff] %v3979
  %4486 = vst [vmem:[%s3 + $0x30] sm:$0xff] %v3981
  %4487 = vst [vmem:[%s3 + $0x38] sm:$0xff] %v3983
  %4488 = vst [vmem:[%s3 + $0x40] sm:$0xff] %v3985
  %4489 = vst [vmem:[%s3 + $0x48] sm:$0xff] %v3987
  %4490 = vst [vmem:[%s3 + $0x50] sm:$0xff] %v3989
  %4491 = vst [vmem:[%s3 + $0x58] sm:$0xff] %v3991
  %4492 = vst [vmem:[%s3 + $0x60] sm:$0xff] %v3993
  %4493 = vst [vmem:[%s3 + $0x68] sm:$0xff] %v3995
  %4494 = vst [vmem:[%s3 + $0x70] sm:$0xff] %v3997
  %4495 = vst [vmem:[%s3 + $0x78] sm:$0xff] %v3999
  %4496 = vst [vmem:[%s3 + $0x80] sm:$0xff] %v4001
  %4497 = vst [vmem:[%s3 + $0x88] sm:$0xff] %v4003
  %4498 = vst [vmem:[%s3 + $0x90] sm:$0xff] %v4005
  %4499 = vst [vmem:[%s3 + $0x98] sm:$0xff] %v4007
  %4500 = vst [vmem:[%s3 + $0xa0] sm:$0xff] %v4009
  %4501 = vst [vmem:[%s3 + $0xa8] sm:$0xff] %v4011
  %4502 = vst [vmem:[%s3 + $0xb0] sm:$0xff] %v4013
  %4503 = vst [vmem:[%s3 + $0xb8] sm:$0xff] %v4015
  %4504 = vst [vmem:[%s3 + $0xc0] sm:$0xff] %v4017
  %4505 = vst [vmem:[%s3 + $0xc8] sm:$0xff] %v4019
  %4506 = vst [vmem:[%s3 + $0xd0] sm:$0xff] %v4021
  %4507 = vst [vmem:[%s3 + $0xd8] sm:$0xff] %v4023
  %4508 = vst [vmem:[%s3 + $0xe0] sm:$0xff] %v4025
  %4509 = vst [vmem:[%s3 + $0xe8] sm:$0xff] %v4027
  %4510 = vst [vmem:[%s3 + $0xf0] sm:$0xff] %v4029
  %4511 = vst [vmem:[%s3 + $0xf8] sm:$0xff] %v4031
  %4512 = vst [vmem:[%s3 + $0x100] sm:$0xff] %v4033
  %4513 = vst [vmem:[%s3 + $0x108] sm:$0xff] %v4035
  %4514 = vst [vmem:[%s3 + $0x110] sm:$0xff] %v4037
  %4515 = vst [vmem:[%s3 + $0x118] sm:$0xff] %v4039
  %4516 = vst [vmem:[%s3 + $0x120] sm:$0xff] %v4041
  %4517 = vst [vmem:[%s3 + $0x128] sm:$0xff] %v4043
  %4518 = vst [vmem:[%s3 + $0x130] sm:$0xff] %v4045
  %4519 = vst [vmem:[%s3 + $0x138] sm:$0xff] %v4047
  %4520 = vst [vmem:[%s3 + $0x140] sm:$0xff] %v4049
  %4521 = vst [vmem:[%s3 + $0x148] sm:$0xff] %v4051
  %4522 = vst [vmem:[%s3 + $0x150] sm:$0xff] %v4053
  %4523 = vst [vmem:[%s3 + $0x158] sm:$0xff] %v4055
  %4524 = vst [vmem:[%s3 + $0x160] sm:$0xff] %v4057
  %4525 = vst [vmem:[%s3 + $0x168] sm:$0xff] %v4059
  %4526 = vst [vmem:[%s3 + $0x170] sm:$0xff] %v4061
  %4527 = vst [vmem:[%s3 + $0x178] sm:$0xff] %v4063
  %4528 = vst [vmem:[%s3 + $0x180] sm:$0xff] %v4065
  %4529 = vst [vmem:[%s3 + $0x188] sm:$0xff] %v4067
  %4530 = vst [vmem:[%s3 + $0x190] sm:$0xff] %v4069
  %4531 = vst [vmem:[%s3 + $0x198] sm:$0xff] %v4071
  %4532 = vst [vmem:[%s3 + $0x1a0] sm:$0xff] %v4073
  %4533 = vst [vmem:[%s3 + $0x1a8] sm:$0xff] %v4075
  %4534 = vst [vmem:[%s3 + $0x1b0] sm:$0xff] %v4077
  %4535 = vst [vmem:[%s3 + $0x1b8] sm:$0xff] %v4079
  %4536 = vst [vmem:[%s3 + $0x1c0] sm:$0xff] %v4081
  %4537 = vst [vmem:[%s3 + $0x1c8] sm:$0xff] %v4083
  %4538 = vst [vmem:[%s3 + $0x1d0] sm:$0xff] %v4085
  %4539 = vst [vmem:[%s3 + $0x1d8] sm:$0xff] %v4087
  %4540 = vst [vmem:[%s3 + $0x1e0] sm:$0xff] %v4089
  %4541 = vst [vmem:[%s3 + $0x1e8] sm:$0xff] %v4091
  %4542 = vst [vmem:[%s3 + $0x1f0] sm:$0xff] %v4093
  %4543 = vst [vmem:[%s3 + $0x1f8] sm:$0xff] %v4095
  %4544 = vst [vmem:[%s3 + $0x200] sm:$0xff] %v4097
  %4545 = vst [vmem:[%s3 + $0x208] sm:$0xff] %v4099
  %4546 = vst [vmem:[%s3 + $0x210] sm:$0xff] %v4101
  %4547 = vst [vmem:[%s3 + $0x218] sm:$0xff] %v4103
  %4548 = vst [vmem:[%s3 + $0x220] sm:$0xff] %v4105
  %4549 = vst [vmem:[%s3 + $0x228] sm:$0xff] %v4107
  %4550 = vst [vmem:[%s3 + $0x230] sm:$0xff] %v4109
  %4551 = vst [vmem:[%s3 + $0x238] sm:$0xff] %v4111
  %4552 = vst [vmem:[%s3 + $0x240] sm:$0xff] %v4113
  %4553 = vst [vmem:[%s3 + $0x248] sm:$0xff] %v4115
  %4554 = vst [vmem:[%s3 + $0x250] sm:$0xff] %v4117
  %4555 = vst [vmem:[%s3 + $0x258] sm:$0xff] %v4119
  %4556 = vst [vmem:[%s3 + $0x260] sm:$0xff] %v4121
  %4557 = vst [vmem:[%s3 + $0x268] sm:$0xff] %v4123
  %4558 = vst [vmem:[%s3 + $0x270] sm:$0xff] %v4125
  %4559 = vst [vmem:[%s3 + $0x278] sm:$0xff] %v4127
  %4560 = vst [vmem:[%s3 + $0x280] sm:$0xff] %v4129
  %4561 = vst [vmem:[%s3 + $0x288] sm:$0xff] %v4131
  %4562 = vst [vmem:[%s3 + $0x290] sm:$0xff] %v4133
  %4563 = vst [vmem:[%s3 + $0x298] sm:$0xff] %v4135
  %4564 = vst [vmem:[%s3 + $0x2a0] sm:$0xff] %v4137
  %4565 = vst [vmem:[%s3 + $0x2a8] sm:$0xff] %v4139
  %4566 = vst [vmem:[%s3 + $0x2b0] sm:$0xff] %v4141
  %4567 = vst [vmem:[%s3 + $0x2b8] sm:$0xff] %v4143
  %4568 = vst [vmem:[%s3 + $0x2c0] sm:$0xff] %v4145
  %4569 = vst [vmem:[%s3 + $0x2c8] sm:$0xff] %v4147
  %4570 = vst [vmem:[%s3 + $0x2d0] sm:$0xff] %v4149
  %4571 = vst [vmem:[%s3 + $0x2d8] sm:$0xff] %v4151
  %4572 = vst [vmem:[%s3 + $0x2e0] sm:$0xff] %v4153
  %4573 = vst [vmem:[%s3 + $0x2e8] sm:$0xff] %v4155
  %4574 = vst [vmem:[%s3 + $0x2f0] sm:$0xff] %v4157
  %4575 = vst [vmem:[%s3 + $0x2f8] sm:$0xff] %v4159
  %4576 = vst [vmem:[%s3 + $0x300] sm:$0xff] %v4161
  %4577 = vst [vmem:[%s3 + $0x308] sm:$0xff] %v4163
  %4578 = vst [vmem:[%s3 + $0x310] sm:$0xff] %v4165
  %4579 = vst [vmem:[%s3 + $0x318] sm:$0xff] %v4167
  %4580 = vst [vmem:[%s3 + $0x320] sm:$0xff] %v4169
  %4581 = vst [vmem:[%s3 + $0x328] sm:$0xff] %v4171
  %4582 = vst [vmem:[%s3 + $0x330] sm:$0xff] %v4173
  %4583 = vst [vmem:[%s3 + $0x338] sm:$0xff] %v4175
  %4584 = vst [vmem:[%s3 + $0x340] sm:$0xff] %v4177
  %4585 = vst [vmem:[%s3 + $0x348] sm:$0xff] %v4179
  %4586 = vst [vmem:[%s3 + $0x350] sm:$0xff] %v4181
  %4587 = vst [vmem:[%s3 + $0x358] sm:$0xff] %v4183
  %4588 = vst [vmem:[%s3 + $0x360] sm:$0xff] %v4185
  %4589 = vst [vmem:[%s3 + $0x368] sm:$0xff] %v4187
  %4590 = vst [vmem:[%s3 + $0x370] sm:$0xff] %v4189
  %4591 = vst [vmem:[%s3 + $0x378] sm:$0xff] %v4191
  %4592 = vst [vmem:[%s3 + $0x380] sm:$0xff] %v4193
  %4593 = vst [vmem:[%s3 + $0x388] sm:$0xff] %v4195
  %4594 = vst [vmem:[%s3 + $0x390] sm:$0xff] %v4197
  %4595 = vst [vmem:[%s3 + $0x398] sm:$0xff] %v4199
  %4596 = vst [vmem:[%s3 + $0x3a0] sm:$0xff] %v4201
  %4597 = vst [vmem:[%s3 + $0x3a8] sm:$0xff] %v4203
  %4598 = vst [vmem:[%s3 + $0x3b0] sm:$0xff] %v4205
  %4599 = vst [vmem:[%s3 + $0x3b8] sm:$0xff] %v4207
  %4600 = vst [vmem:[%s3 + $0x3c0] sm:$0xff] %v4209
  %4601 = vst [vmem:[%s3 + $0x3c8] sm:$0xff] %v4211
  %4602 = vst [vmem:[%s3 + $0x3d0] sm:$0xff] %v4213
  %4603 = vst [vmem:[%s3 + $0x3d8] sm:$0xff] %v4215
  %4604 = vst [vmem:[%s3 + $0x3e0] sm:$0xff] %v4217
  %4605 = vst [vmem:[%s3 + $0x3e8] sm:$0xff] %v4219
  %4606 = vst [vmem:[%s3 + $0x3f0] sm:$0xff] %v4221
  %4607 = vst [vmem:[%s3 + $0x3f8] sm:$0xff] %v4223
  %4608 = vst [vmem:[%s3 + $0x400] sm:$0xff] %v4225
  %4609 = vst [vmem:[%s3 + $0x408] sm:$0xff] %v4227
  %4610 = vst [vmem:[%s3 + $0x410] sm:$0xff] %v4229
  %4611 = vst [vmem:[%s3 + $0x418] sm:$0xff] %v4231
  %4612 = vst [vmem:[%s3 + $0x420] sm:$0xff] %v4233
  %4613 = vst [vmem:[%s3 + $0x428] sm:$0xff] %v4235
  %4614 = vst [vmem:[%s3 + $0x430] sm:$0xff] %v4237
  %4615 = vst [vmem:[%s3 + $0x438] sm:$0xff] %v4239
  %4616 = vst [vmem:[%s3 + $0x440] sm:$0xff] %v4241
  %4617 = vst [vmem:[%s3 + $0x448] sm:$0xff] %v4243
  %4618 = vst [vmem:[%s3 + $0x450] sm:$0xff] %v4245
  %4619 = vst [vmem:[%s3 + $0x458] sm:$0xff] %v4247
  %4620 = vst [vmem:[%s3 + $0x460] sm:$0xff] %v4249
  %4621 = vst [vmem:[%s3 + $0x468] sm:$0xff] %v4251
  %4622 = vst [vmem:[%s3 + $0x470] sm:$0xff] %v4253
  %4623 = vst [vmem:[%s3 + $0x478] sm:$0xff] %v4255
  %4624 = vst [vmem:[%s3 + $0x480] sm:$0xff] %v4257
  %4625 = vst [vmem:[%s3 + $0x488] sm:$0xff] %v4259
  %4626 = vst [vmem:[%s3 + $0x490] sm:$0xff] %v4261
  %4627 = vst [vmem:[%s3 + $0x498] sm:$0xff] %v4263
  %4628 = vst [vmem:[%s3 + $0x4a0] sm:$0xff] %v4265
  %4629 = vst [vmem:[%s3 + $0x4a8] sm:$0xff] %v4267
  %4630 = vst [vmem:[%s3 + $0x4b0] sm:$0xff] %v4269
  %4631 = vst [vmem:[%s3 + $0x4b8] sm:$0xff] %v4271
  %4632 = vst [vmem:[%s3 + $0x4c0] sm:$0xff] %v4273
  %4633 = vst [vmem:[%s3 + $0x4c8] sm:$0xff] %v4275
  %4634 = vst [vmem:[%s3 + $0x4d0] sm:$0xff] %v4277
  %4635 = vst [vmem:[%s3 + $0x4d8] sm:$0xff] %v4279
  %4636 = vst [vmem:[%s3 + $0x4e0] sm:$0xff] %v4281
  %4637 = vst [vmem:[%s3 + $0x4e8] sm:$0xff] %v4283
  %4638 = vst [vmem:[%s3 + $0x4f0] sm:$0xff] %v4285
  %4639 = vst [vmem:[%s3 + $0x4f8] sm:$0xff] %v4287
  %4640 = vst [vmem:[%s3 + $0x500] sm:$0xff] %v4289
  %4641 = vst [vmem:[%s3 + $0x508] sm:$0xff] %v4291
  %4642 = vst [vmem:[%s3 + $0x510] sm:$0xff] %v4293
  %4643 = vst [vmem:[%s3 + $0x518] sm:$0xff] %v4295
  %4644 = vst [vmem:[%s3 + $0x520] sm:$0xff] %v4297
  %4645 = vst [vmem:[%s3 + $0x528] sm:$0xff] %v4299
  %4646 = vst [vmem:[%s3 + $0x530] sm:$0xff] %v4301
  %4647 = vst [vmem:[%s3 + $0x538] sm:$0xff] %v4303
  %4648 = vst [vmem:[%s3 + $0x540] sm:$0xff] %v4305
  %4649 = vst [vmem:[%s3 + $0x548] sm:$0xff] %v4307
  %4650 = vst [vmem:[%s3 + $0x550] sm:$0xff] %v4309
  %4651 = vst [vmem:[%s3 + $0x558] sm:$0xff] %v4311
  %4652 = vst [vmem:[%s3 + $0x560] sm:$0xff] %v4313
  %4653 = vst [vmem:[%s3 + $0x568] sm:$0xff] %v4315
  %4654 = vst [vmem:[%s3 + $0x570] sm:$0xff] %v4317
  %4655 = vst [vmem:[%s3 + $0x578] sm:$0xff] %v4319
  %4656 = vst [vmem:[%s3 + $0x580] sm:$0xff] %v4321
  %4657 = vst [vmem:[%s3 + $0x588] sm:$0xff] %v4323
  %4658 = vst [vmem:[%s3 + $0x590] sm:$0xff] %v4325
  %4659 = vst [vmem:[%s3 + $0x598] sm:$0xff] %v4327
  %4660 = vst [vmem:[%s3 + $0x5a0] sm:$0xff] %v4329
  %4661 = vst [vmem:[%s3 + $0x5a8] sm:$0xff] %v4331
  %4662 = vst [vmem:[%s3 + $0x5b0] sm:$0xff] %v4333
  %4663 = vst [vmem:[%s3 + $0x5b8] sm:$0xff] %v4335
  %4664 = vst [vmem:[%s3 + $0x5c0] sm:$0xff] %v4337
  %4665 = vst [vmem:[%s3 + $0x5c8] sm:$0xff] %v4339
  %4666 = vst [vmem:[%s3 + $0x5d0] sm:$0xff] %v4341
  %4667 = vst [vmem:[%s3 + $0x5d8] sm:$0xff] %v4343
  %4668 = vst [vmem:[%s3 + $0x5e0] sm:$0xff] %v4345
  %4669 = vst [vmem:[%s3 + $0x5e8] sm:$0xff] %v4347
  %4670 = vst [vmem:[%s3 + $0x5f0] sm:$0xff] %v4349
  %4671 = vst [vmem:[%s3 + $0x5f8] sm:$0xff] %v4351
  %4672 = vst [vmem:[%s3 + $0x600] sm:$0xff] %v4353
  %4673 = vst [vmem:[%s3 + $0x608] sm:$0xff] %v4355
  %4674 = vst [vmem:[%s3 + $0x610] sm:$0xff] %v4357
  %4675 = vst [vmem:[%s3 + $0x618] sm:$0xff] %v4359
  %4676 = vst [vmem:[%s3 + $0x620] sm:$0xff] %v4361
  %4677 = vst [vmem:[%s3 + $0x628] sm:$0xff] %v4363
  %4678 = vst [vmem:[%s3 + $0x630] sm:$0xff] %v4365
  %4679 = vst [vmem:[%s3 + $0x638] sm:$0xff] %v4367
  %4680 = vst [vmem:[%s3 + $0x640] sm:$0xff] %v4369
  %4681 = vst [vmem:[%s3 + $0x648] sm:$0xff] %v4371
  %4682 = vst [vmem:[%s3 + $0x650] sm:$0xff] %v4373
  %4683 = vst [vmem:[%s3 + $0x658] sm:$0xff] %v4375
  %4684 = vst [vmem:[%s3 + $0x660] sm:$0xff] %v4377
  %4685 = vst [vmem:[%s3 + $0x668] sm:$0xff] %v4379
  %4686 = vst [vmem:[%s3 + $0x670] sm:$0xff] %v4381
  %4687 = vst [vmem:[%s3 + $0x678] sm:$0xff] %v4383
  %4688 = vst [vmem:[%s3 + $0x680] sm:$0xff] %v4385
  %4689 = vst [vmem:[%s3 + $0x688] sm:$0xff] %v4387
  %4690 = vst [vmem:[%s3 + $0x690] sm:$0xff] %v4389
  %4691 = vst [vmem:[%s3 + $0x698] sm:$0xff] %v4391
  %4692 = vst [vmem:[%s3 + $0x6a0] sm:$0xff] %v4393
  %4693 = vst [vmem:[%s3 + $0x6a8] sm:$0xff] %v4395
  %4694 = vst [vmem:[%s3 + $0x6b0] sm:$0xff] %v4397
  %4695 = vst [vmem:[%s3 + $0x6b8] sm:$0xff] %v4399
  %4696 = vst [vmem:[%s3 + $0x6c0] sm:$0xff] %v4401
  %4697 = vst [vmem:[%s3 + $0x6c8] sm:$0xff] %v4403
  %4698 = vst [vmem:[%s3 + $0x6d0] sm:$0xff] %v4405
  %4699 = vst [vmem:[%s3 + $0x6d8] sm:$0xff] %v4407
  %4700 = vst [vmem:[%s3 + $0x6e0] sm:$0xff] %v4409
  %4701 = vst [vmem:[%s3 + $0x6e8] sm:$0xff] %v4411
  %4702 = vst [vmem:[%s3 + $0x6f0] sm:$0xff] %v4413
  %4703 = vst [vmem:[%s3 + $0x6f8] sm:$0xff] %v4415
  %4704 = vst [vmem:[%s3 + $0x700] sm:$0xff] %v4417
  %4705 = vst [vmem:[%s3 + $0x708] sm:$0xff] %v4419
  %4706 = vst [vmem:[%s3 + $0x710] sm:$0xff] %v4421
  %4707 = vst [vmem:[%s3 + $0x718] sm:$0xff] %v4423
  %4708 = vst [vmem:[%s3 + $0x720] sm:$0xff] %v4425
  %4709 = vst [vmem:[%s3 + $0x728] sm:$0xff] %v4427
  %4710 = vst [vmem:[%s3 + $0x730] sm:$0xff] %v4429
  %4711 = vst [vmem:[%s3 + $0x738] sm:$0xff] %v4431
  %4712 = vst [vmem:[%s3 + $0x740] sm:$0xff] %v4433
  %4713 = vst [vmem:[%s3 + $0x748] sm:$0xff] %v4435
  %4714 = vst [vmem:[%s3 + $0x750] sm:$0xff] %v4437
  %4715 = vst [vmem:[%s3 + $0x758] sm:$0xff] %v4439
  %4716 = vst [vmem:[%s3 + $0x760] sm:$0xff] %v4441
  %4717 = vst [vmem:[%s3 + $0x768] sm:$0xff] %v4443
  %4718 = vst [vmem:[%s3 + $0x770] sm:$0xff] %v4445
  %4719 = vst [vmem:[%s3 + $0x778] sm:$0xff] %v4447
  %4720 = vst [vmem:[%s3 + $0x780] sm:$0xff] %v4449
  %4721 = vst [vmem:[%s3 + $0x788] sm:$0xff] %v4451
  %4722 = vst [vmem:[%s3 + $0x790] sm:$0xff] %v4453
  %4723 = vst [vmem:[%s3 + $0x798] sm:$0xff] %v4455
  %4724 = vst [vmem:[%s3 + $0x7a0] sm:$0xff] %v4457
  %4725 = vst [vmem:[%s3 + $0x7a8] sm:$0xff] %v4459
  %4726 = vst [vmem:[%s3 + $0x7b0] sm:$0xff] %v4461
  %4727 = vst [vmem:[%s3 + $0x7b8] sm:$0xff] %v4463
  %4728 = vst [vmem:[%s3 + $0x7c0] sm:$0xff] %v4465
  %4729 = vst [vmem:[%s3 + $0x7c8] sm:$0xff] %v4467
  %4730 = vst [vmem:[%s3 + $0x7d0] sm:$0xff] %v4469
  %4731 = vst [vmem:[%s3 + $0x7d8] sm:$0xff] %v4471
  %4732 = vst [vmem:[%s3 + $0x7e0] sm:$0xff] %v4473
  %4733 = vst [vmem:[%s3 + $0x7e8] sm:$0xff] %v4475
  %4734 = vst [vmem:[%s3 + $0x7f0] sm:$0xff] %v4477
  %4735 = vst [vmem:[%s3 + $0x7f8] sm:$0xff] %v4479
  // Predicated region
  $region14: #{decoder_forward.9} parent=0 // pred_check
    _
  $region15: #{decoder_forward.9} parent=0 // pred_check_branch
    %4737 = sbr.rel (0) target = $region17
  $region16: #{decoder_forward.9} parent=0 // pred_region
    _
  $region17: #{decoder_forward.9} parent=0 // pred_fallthru
    _
  // Predicated region
  $region18: #{decoder_forward.9} parent=0 // pred_check
    _
  $region19: #{decoder_forward.9} parent=0 // pred_check_branch
    %4739 = sbr.rel (0) target = $region21
  $region20: #{decoder_forward.9} parent=0 // pred_region
    _
  $region21: #{decoder_forward.9} parent=0 // pred_fallthru
    _

</llo_original>
